<compile_context>
chip_gen: v7x
topology: tpu7x:2x2x1
jax: 0.10.0
libtpu: 0.0.40
codegen_flags: <defaults>
</compile_context>

<pallas_src>
import jax
import jax.numpy as jnp
from jax import lax
from jax.experimental import pallas as pl
from jax.experimental.pallas import tpu as pltpu

BF16 = jnp.bfloat16
F32 = jnp.float32

_WHOLE_VMEM = pl.BlockSpec(memory_space=pltpu.MemorySpace.VMEM)


def _bdot(a, b):
    """MXU matmul: bf16 operands, f32 accumulation."""
    return jnp.dot(a.astype(BF16), b.astype(BF16), preferred_element_type=F32)


def _fdot(a, b):
    """Pure f32 matmul (reference only)."""
    return jnp.dot(a, b, preferred_element_type=F32)


# ----------------------------------------------------------------------------
# LSTM cells
# ----------------------------------------------------------------------------
def _lstm_cell_ifog(gates, c):
    """Kernel cell. Gate columns are pre-permuted to (i, f, o, g) so sigmoid is
    one contiguous [., 3H] slab and tanh one [., H] slab (bigger EUP pushes)."""
    H = c.shape[-1]
    sig = jax.nn.sigmoid(gates[:, :3 * H])
    i = sig[:, 0 * H:1 * H]
    f = sig[:, 1 * H:2 * H]
    o = sig[:, 2 * H:3 * H]
    g = jnp.tanh(gates[:, 3 * H:4 * H])
    c_new = f * c + i * g
    h_new = o * jnp.tanh(c_new)
    return h_new, c_new


def _lstm_cell_ref(gates, c):
    """Reference cell, PyTorch gate order (i, f, g, o)."""
    H = c.shape[-1]
    i = jax.nn.sigmoid(gates[:, 0 * H:1 * H])
    f = jax.nn.sigmoid(gates[:, 1 * H:2 * H])
    g = jnp.tanh(gates[:, 2 * H:3 * H])
    o = jax.nn.sigmoid(gates[:, 3 * H:4 * H])
    c_new = f * c + i * g
    h_new = o * jnp.tanh(c_new)
    return h_new, c_new


# ----------------------------------------------------------------------------
# Tiling / VMEM helpers
# ----------------------------------------------------------------------------
def _round_up(n, m):
    return ((n + m - 1) // m) * m


def _divisor_tile(n, cap):
    """Largest multiple of 8 that divides n and is <= cap (n is a multiple of 8)."""
    t = max((min(cap, n) // 8) * 8, 8)
    while t > 8 and n % t != 0:
        t -= 8
    return t


def _split_for_megacore(tile, n):
    """Prefer >=2 grid steps along the 'parallel' axis (v7x dual TensorCore)
    when halving keeps the tile 8-aligned and reasonably large."""
    if n == tile and tile >= 256 and tile % 16 == 0:
        return tile // 2
    return tile


def _recurrent_tile(B, seq, H, cap=256, act_budget=16 << 20):
    """Batch tile + padded batch for the recurrence. The whole-sequence g1 (f32)
    and o (bf16) blocks are double-buffered, so bt is sized from a VMEM budget
    (v7x: 64 MiB physical), kept a multiple of 8, and halved only to give v7x's
    second TensorCore a grid step."""
    per_row = 2 * seq * (4 * H * 4 + H * 2)          # both buffers, g1 f32 + o bf16
    vmem_cap = max(8, (act_budget // max(per_row, 1)) // 8 * 8)
    cap = max(8, min(cap, vmem_cap))
    b8 = _round_up(B, 8)
    bt = min(cap, b8)
    # Prefer an exact 8-aligned divisor of the padded batch (no wasted rows)
    # as long as the tile stays reasonably large.
    t = bt
    while t >= max(8, bt // 2):
        if b8 % t == 0:
            bt = t
            break
        t -= 8
    B_pad = _round_up(b8, bt)
    if B_pad == bt and bt >= 256 and bt % 16 == 0:   # v7x megacore
        bt //= 2
    return bt, B_pad


def _vmem_limit_bytes(est_bytes):
    """Explicit scoped-VMEM request: 2x margin over the block estimate, floored
    at 32 MiB (v5e's 16 MiB default is too small for big tiles) and capped well
    under v7x's 64 MiB physical VMEM."""
    return int(min(48 << 20, max(32 << 20, 2 * est_bytes)))


# ----------------------------------------------------------------------------
# Kernel 1: batched MLP + layer-1 LSTM input projection (time-independent)
#   [N, in] -> relu(Linear) -> relu(Linear) -> @wih1 + bg1 -> [N, 4H]
# ----------------------------------------------------------------------------
def encoder_proj_kernel(x_ref, w1_ref, b1_ref, w2_ref, b2_ref,
                        wih1_ref, bg1_ref, g_ref):
    h = jnp.maximum(_bdot(x_ref[...], w1_ref[...]) + b1_ref[...], 0.0)
    h = jnp.maximum(_bdot(h, w2_ref[...]) + b2_ref[...], 0.0)
    g_ref[...] = _bdot(h, wih1_ref[...]) + bg1_ref[...]


# ----------------------------------------------------------------------------
# Kernel 2: 2-layer LSTM recurrence, single invocation, fori_loop over time.
#   Layer-2 input/hidden matmuls are fused (K = 2H); bias/weights hoisted.
# ----------------------------------------------------------------------------
def encoder_recurrent_kernel(g1_ref, whh1_ref, w2s_ref, bg2_ref, o_ref):
    seq, bt, _ = g1_ref.shape
    H = o_ref.shape[2]

    # Loop-invariant loads / broadcast hoisted out of the serial recurrence
    # (JAX does not CSE broadcast_in_dim inside the loop body).
    whh1 = whh1_ref[...]
    w2s = w2s_ref[...]                                     # [2H, 4H] stacked
    bg2 = jnp.broadcast_to(bg2_ref[...], (bt, 4 * H))

    def step(t, carry):
        h1, c1, h2, c2 = carry
        gates1 = g1_ref[t] + _bdot(h1, whh1)
        h1, c1 = _lstm_cell_ifog(gates1, c1)
        gates2 = _bdot(jnp.concatenate([h1, h2], axis=-1), w2s) + bg2
        h2, c2 = _lstm_cell_ifog(gates2, c2)
        o_ref[t] = h2.astype(o_ref.dtype)                  # bf16 store
        return (h1, c1, h2, c2)

    z = jnp.zeros((bt, H), F32)
    # Full unroll for short sequences; partial unroll otherwise so the LLO
    # scheduler can overlap layer-2 of step t with layer-1 of step t+1.
    unroll = True if seq <= 16 else 4
    lax.fori_loop(0, seq, step, (z, z, z, z), unroll=unroll)


def encoder_lstm(x, pc, bt):
    seq, B, in_dim = x.shape                 # B already padded to a multiple of 8
    H = pc["w1"].shape[1]
    N = seq * B

    # ---- phase 1: one big GEMM pass over all time steps ---------------------
    xf = x.astype(BF16).reshape(N, in_dim)
    nt = _split_for_megacore(_divisor_tile(N, cap=512), N)
    est_p = (2 * (nt * in_dim * 2 + nt * 4 * H * 4) + nt * H * 4
             + (in_dim * H + H * H + H * 4 * H) * 2 + 6 * H * 4)
    g1 = pl.pallas_call(
        encoder_proj_kernel,
        out_shape=jax.ShapeDtypeStruct((N, 4 * H), F32),
        grid=(N // nt,),
        in_specs=[
            pl.BlockSpec((nt, in_dim), lambda i: (i, 0)),
            _WHOLE_VMEM, _WHOLE_VMEM, _WHOLE_VMEM, _WHOLE_VMEM,
            _WHOLE_VMEM, _WHOLE_VMEM,
        ],
        out_specs=pl.BlockSpec((nt, 4 * H), lambda i: (i, 0)),
        compiler_params=pltpu.CompilerParams(
            dimension_semantics=("parallel",),
            vmem_limit_bytes=_vmem_limit_bytes(est_p)),
    )(xf, pc["w1"], pc["b1"], pc["w2"], pc["b2"], pc["wih1"], pc["bg1"])

    # ---- phase 2: serial recurrence (only h@Whh matmuls remain per step) ----
    est_r = (2 * seq * bt * (4 * H * 4 + H * 2)
             + (H * 4 * H + 2 * H * 4 * H) * 2 + 4 * H * 4)
    # TODO(synk): on v5e with tiny bt, pltpu.matmul_push_rhs could keep whh1 /
    # w2s resident in MXU staging registers across the time loop.
    return pl.pallas_call(
        encoder_recurrent_kernel,
        out_shape=jax.ShapeDtypeStruct((seq, B, H), BF16),
        grid=(B // bt,),
        in_specs=[
            pl.BlockSpec((seq, bt, 4 * H), lambda i: (0, i, 0)),
            _WHOLE_VMEM, _WHOLE_VMEM, _WHOLE_VMEM,
        ],
        out_specs=pl.BlockSpec((seq, bt, H), lambda i: (0, i, 0)),
        compiler_params=pltpu.CompilerParams(
            dimension_semantics=("parallel",),
            vmem_limit_bytes=_vmem_limit_bytes(est_r)),
    )(g1.reshape(seq, B, 4 * H), pc["whh1"], pc["w2s"], pc["bg2"])


# ----------------------------------------------------------------------------
# Kernel 3: autoregressive head over hand positions (grid over N tiles).
#   emb folded into wcomb = wemb @ wih_e; both time-invariant gate halves are
#   hoisted & batched; fc is one matmul; output is a single lane-dense store.
# ----------------------------------------------------------------------------
def ar_head_kernel(ar_ref, o_ref, wcomb_ref, wiho_ref, whh_ref, bg_ref,
                   wfc_ref, bfc_ref, out_ref, hall_ref):
    hand, nt, card = ar_ref.shape
    H = o_ref.shape[1]
    out_pad = wfc_ref.shape[1]

    # Time-independent gate contributions (hoisted out of the hand loop):
    #   "o" half of cat([emb, o]) + gate bias            -> [nt, 4H]
    #   emb half (one-hot @ wcomb), batched over hand    -> [hand*nt, 4H]
    gates_o = _bdot(o_ref[...], wiho_ref[...]) + bg_ref[...]
    emb_gates = _bdot(ar_ref[...].reshape(hand * nt, card), wcomb_ref[...])
    whh = whh_ref[...]

    hx = jnp.zeros((nt, H), F32)
    cx = jnp.zeros((nt, H), F32)
    # hand_size is small (5): static unroll; only hx@whh is on the serial chain.
    for t in range(hand):
        gates = gates_o + emb_gates[t * nt:(t + 1) * nt, :] + _bdot(hx, whh)
        hx, cx = _lstm_cell_ifog(gates, cx)
        hall_ref[t * nt:(t + 1) * nt, :] = hx

    # One batched fc over all hand positions; out_pad is a multiple of 128 so
    # this is a single unmasked, lane-dense store (no 25-lane vst.msk).
    logits = _bdot(hall_ref[...], wfc_ref[...]) + bfc_ref[...]   # [hand*nt, out_pad]
    out_ref[...] = logits.reshape(hand, nt, out_pad)


def ar_head(ar_hand_major, o_flat, pc, hand):
    _, N, card = ar_hand_major.shape
    H = o_flat.shape[1]
    out_pad = pc["wfc"].shape[1]
    nt = _split_for_megacore(_divisor_tile(N, cap=256), N)
    est = (2 * (hand * nt * card * 2 + nt * H * 2 + hand * nt * out_pad * 4)
           + hand * nt * H * 4 + 3 * nt * 4 * H * 4
           + (card * 4 * H + 2 * H * 4 * H + H * out_pad) * 2)
    return pl.pallas_call(
        ar_head_kernel,
        out_shape=jax.ShapeDtypeStruct((hand, N, out_pad), F32),
        grid=(N // nt,),
        in_specs=[
            pl.BlockSpec((hand, nt, card), lambda i: (0, i, 0)),
            pl.BlockSpec((nt, H), lambda i: (i, 0)),
            _WHOLE_VMEM, _WHOLE_VMEM, _WHOLE_VMEM, _WHOLE_VMEM,
            _WHOLE_VMEM, _WHOLE_VMEM,
        ],
        out_specs=pl.BlockSpec((hand, nt, out_pad), lambda i: (0, i, 0)),
        scratch_shapes=[pltpu.VMEM((hand * nt, H), F32)],
        compiler_params=pltpu.CompilerParams(
            dimension_semantics=("parallel",),
            vmem_limit_bytes=_vmem_limit_bytes(est)),
    )(ar_hand_major, o_flat, pc["wcomb"], pc["wih_o"], pc["whh_ar"],
      pc["bg_ar"], pc["wfc"], pc["bfc"])


# ----------------------------------------------------------------------------
# Parameter casting / folding
#   bf16 weights, f32 biases, wcomb = wemb@wih_e, stacked layer-2 weight,
#   gate columns permuted (i,f,g,o) -> (i,f,o,g), fc padded to 128 lanes.
# ----------------------------------------------------------------------------
def _reorder_gates(w):
    H = w.shape[-1] // 4
    return jnp.concatenate([w[..., :2 * H], w[..., 3 * H:4 * H],
                            w[..., 2 * H:3 * H]], axis=-1)


def _cast_params(p, out_pad):
    bf = lambda a: a.astype(BF16)
    r = _reorder_gates
    wcomb = jnp.dot(p["wemb"].astype(BF16), p["wih_e"].astype(BF16),
                    preferred_element_type=F32)
    out_dim = p["wfc"].shape[1]
    pad = out_pad - out_dim
    return dict(
        w1=bf(p["w1"]), b1=p["b1"], w2=bf(p["w2"]), b2=p["b2"],
        wih1=bf(r(p["wih1"])), whh1=bf(r(p["whh1"])), bg1=r(p["bg1"]),
        # layer-2 input & hidden weights fused into one K=2H matmul operand
        w2s=bf(r(jnp.concatenate([p["wih2"], p["whh2"]], axis=0))),
        bg2=r(p["bg2"]),
        wcomb=bf(r(wcomb)), wih_o=bf(r(p["wih_o"])), whh_ar=bf(r(p["whh_ar"])),
        bg_ar=r(p["bg_ar"]),
        wfc=bf(jnp.pad(p["wfc"], ((0, 0), (0, pad)))),
        bfc=jnp.pad(p["bfc"], ((0, 0), (0, pad))),
    )


# ----------------------------------------------------------------------------
# Full forward
# ----------------------------------------------------------------------------
def ar_belief_forward(x, ar_card_in, params, hand_size):
    seq, B, _ = x.shape
    H = params["w1"].shape[1]
    out_dim = params["wfc"].shape[1]
    out_pad = _round_up(out_dim, 128)

    pc = _cast_params(params, out_pad)

    # Pad the batch so every tile is 8-aligned (no degenerate tiles / dropped
    # rows) and so v7x's dual TensorCores can both get grid steps.
    bt, B_pad = _recurrent_tile(B, seq, H)
    if B_pad != B:
        x = jnp.pad(x, ((0, 0), (0, B_pad - B), (0, 0)))
        ar_card_in = jnp.pad(ar_card_in, ((0, 0), (0, B_pad - B), (0, 0)))
    N = seq * B_pad

    o = encoder_lstm(x, pc, bt)                                   # [seq, B_pad, H] bf16
    o_flat = o.reshape(N, H)

    # TODO(synk): ar_card_in is one-hot; passing int32 card indices and gathering
    # rows of wcomb would drop this tensor (and its transpose/DMA) entirely.
    ar = ar_card_in.astype(BF16).reshape(N, hand_size, 25).transpose(1, 0, 2)
    logits = ar_head(ar, o_flat, pc, hand_size)                   # [hand, N, out_pad]

    logits = logits[:, :, :out_dim].transpose(1, 0, 2)            # un-pad + N-major
    logits = logits.reshape(seq, B_pad, hand_size, out_dim)
    return logits[:, :B]


# ----------------------------------------------------------------------------
# Deterministic parameter init (shapes from ARBeliefModel.__init__)
# ----------------------------------------------------------------------------
def init_params(key, in_dim, hid_dim, out_dim):
    emb_dim = hid_dim // 8
    ks = jax.random.split(key, 17)
    s = 0.1

    def w(k, shape):
        return jax.random.normal(k, shape, F32) * s

    return dict(
        w1=w(ks[0], (in_dim, hid_dim)), b1=w(ks[1], (1, hid_dim)),
        w2=w(ks[2], (hid_dim, hid_dim)), b2=w(ks[3], (1, hid_dim)),
        # 2-layer LSTM; bg = b_ih + b_hh pre-summed, gate order (i, f, g, o)
        wih1=w(ks[4], (hid_dim, 4 * hid_dim)), whh1=w(ks[5], (hid_dim, 4 * hid_dim)),
        bg1=w(ks[6], (1, 4 * hid_dim)),
        wih2=w(ks[7], (hid_dim, 4 * hid_dim)), whh2=w(ks[8], (hid_dim, 4 * hid_dim)),
        bg2=w(ks[9], (1, 4 * hid_dim)),
        # emb: Linear(25, hid//8, bias=False)
        wemb=w(ks[10], (25, emb_dim)),
        # auto_regress LSTM: input weight split into [emb | o] halves
        wih_e=w(ks[11], (emb_dim, 4 * hid_dim)), wih_o=w(ks[12], (hid_dim, 4 * hid_dim)),
        whh_ar=w(ks[13], (hid_dim, 4 * hid_dim)), bg_ar=w(ks[14], (1, 4 * hid_dim)),
        # fc: Linear(hid, out)
        wfc=w(ks[15], (hid_dim, out_dim)), bfc=w(ks[16], (1, out_dim)),
    )


# ----------------------------------------------------------------------------
# Pure-JAX references: `dot=_bdot` matches the kernel numerics (tight check),
# `dot=_fdot` is the full-f32 reference (loose sanity check per perf review).
# ----------------------------------------------------------------------------
def reference_forward(x, ar_card_in, p, hand_size, dot):
    seq, B, in_dim = x.shape
    H = p["w1"].shape[1]
    N = seq * B

    h = jnp.maximum(dot(x.reshape(N, in_dim), p["w1"]) + p["b1"], 0.0)
    h = jnp.maximum(dot(h, p["w2"]) + p["b2"], 0.0)
    h = h.reshape(seq, B, H)

    def lstm_scan(inputs, wih, whh, bg):
        def step(carry, xt):
            hh, cc = carry
            gates = dot(xt, wih) + dot(hh, whh) + bg
            hh, cc = _lstm_cell_ref(gates, cc)
            return (hh, cc), hh
        z = jnp.zeros((inputs.shape[1], H), F32)
        _, out = lax.scan(step, (z, z), inputs)
        return out

    o1 = lstm_scan(h, p["wih1"], p["whh1"], p["bg1"])
    o2 = lstm_scan(o1, p["wih2"], p["whh2"], p["bg2"])
    o_flat = o2.reshape(N, H)

    ar = ar_card_in.reshape(N, hand_size, 25)
    hx = jnp.zeros((N, H), F32)
    cx = jnp.zeros((N, H), F32)
    outs = []
    for t in range(hand_size):
        emb_t = dot(ar[:, t, :], p["wemb"])
        gates = (dot(emb_t, p["wih_e"]) + dot(o_flat, p["wih_o"])
                 + dot(hx, p["whh_ar"]) + p["bg_ar"])
        hx, cx = _lstm_cell_ref(gates, cx)
        outs.append(dot(hx, p["wfc"]) + p["bfc"])
    logit = jnp.stack(outs, axis=1)                               # [N, hand, out]
    return logit.reshape(seq, B, hand_size, -1)


if __name__ == "__main__":
    SEQ, B, IN_DIM, HID_DIM, HAND, OUT_DIM = 8, 2, 128, 128, 5, 25
    key = jax.random.PRNGKey(0)
    kx, kc, kp = jax.random.split(key, 3)

    x = jax.random.normal(kx, (SEQ, B, IN_DIM), jnp.float32)              # priv_s
    card_idx = jax.random.randint(kc, (SEQ, B, HAND), 0, 25)
    ar_card_in = jax.nn.one_hot(card_idx, 25, dtype=jnp.float32).reshape(
        SEQ, B, HAND * 25)                                                # own_hand_ar_in

    params = init_params(kp, IN_DIM, HID_DIM, OUT_DIM)

    fwd = jax.jit(ar_belief_forward, static_argnames="hand_size")
    logit = jax.block_until_ready(fwd(x, ar_card_in, params, hand_size=HAND))
    assert logit.shape == (SEQ, B, HAND, OUT_DIM)

    # Tight check vs a reference with identical bf16-matmul / f32-accum numerics.
    ref_bf16 = reference_forward(x, ar_card_in, params, HAND, _bdot)
    err_bf16 = float(jnp.max(jnp.abs(logit - ref_bf16)))
    assert err_bf16 < 5e-3, f"mismatch vs bf16 reference: {err_bf16}"

    # Loose sanity check vs a full-f32 reference (guards gross semantic errors).
    ref_f32 = reference_forward(x, ar_card_in, params, HAND, _fdot)
    err_f32 = float(jnp.max(jnp.abs(logit - ref_f32)))
    assert err_f32 < 0.25, f"gross mismatch vs f32 reference: {err_f32}"

    # TODO(synk): sample()/loss() (multinomial sampling, log_softmax xent) are
    # host-level glue around this forward and are not part of the hot kernel.
    print("KERNEL_OK")
</pallas_src>

<mosaic_0001>
module attributes {stable_mosaic.version = 11 : i64} {
  func.func @encoder_proj_kernel(%arg0: i32, %arg1: memref<64x128xbf16, #tpu.memory_space<vmem>>, %arg2: memref<128x128xbf16, #tpu.memory_space<vmem>>, %arg3: memref<1x128xf32, #tpu.memory_space<vmem>>, %arg4: memref<128x128xbf16, #tpu.memory_space<vmem>>, %arg5: memref<1x128xf32, #tpu.memory_space<vmem>>, %arg6: memref<128x512xbf16, #tpu.memory_space<vmem>>, %arg7: memref<1x512xf32, #tpu.memory_space<vmem>>, %arg8: memref<64x512xf32, #tpu.memory_space<vmem>>) attributes {dimension_semantics = [#tpu.dimension_semantics<parallel>], iteration_bounds = array<i64: 1>, scalar_prefetch = 0 : i64, scratch_operands = 0 : i64, tpu.core_type = #tpu.core_type<tc>, window_params = [{transform_indices = @transform_0, window_bounds = array<i64: 64, 128>}, {pipeline_mode = #tpu.pipeline_mode<synchronous>, transform_indices = @transform_1, window_bounds = array<i64: 128, 128>}, {pipeline_mode = #tpu.pipeline_mode<synchronous>, transform_indices = @transform_2, window_bounds = array<i64: 1, 128>}, {pipeline_mode = #tpu.pipeline_mode<synchronous>, transform_indices = @transform_3, window_bounds = array<i64: 128, 128>}, {pipeline_mode = #tpu.pipeline_mode<synchronous>, transform_indices = @transform_4, window_bounds = array<i64: 1, 128>}, {pipeline_mode = #tpu.pipeline_mode<synchronous>, transform_indices = @transform_5, window_bounds = array<i64: 128, 512>}, {pipeline_mode = #tpu.pipeline_mode<synchronous>, transform_indices = @transform_6, window_bounds = array<i64: 1, 512>}, {transform_indices = @transform_7, window_bounds = array<i64: 64, 512>}]} {
    %c0 = arith.constant 0 : index
    %c0_0 = arith.constant 0 : index
    %0 = vector.load %arg1[%c0, %c0_0] : memref<64x128xbf16, #tpu.memory_space<vmem>>, vector<64x128xbf16>
    %c0_1 = arith.constant 0 : index
    %c0_2 = arith.constant 0 : index
    %1 = vector.load %arg2[%c0_1, %c0_2] : memref<128x128xbf16, #tpu.memory_space<vmem>>, vector<128x128xbf16>
    %cst = arith.constant dense<0.000000e+00> : vector<64x128xf32>
    %2 = tpu.matmul %0, %1, %cst {dimension_numbers = #tpu.dot_dimension_numbers<[1], [0], [0], [1], [0, 0, 1, 1], [], []>} : vector<64x128xbf16>, vector<128x128xbf16>, vector<64x128xf32> -> vector<64x128xf32>
    %c0_3 = arith.constant 0 : index
    %c0_4 = arith.constant 0 : index
    %3 = vector.load %arg3[%c0_3, %c0_4] : memref<1x128xf32, #tpu.memory_space<vmem>>, vector<1x128xf32>
    %4 = vector.broadcast %3 : vector<1x128xf32> to vector<64x128xf32>
    %5 = arith.addf %2, %4 : vector<64x128xf32>
    %cst_5 = arith.constant 0.000000e+00 : f32
    %6 = vector.broadcast %cst_5 : f32 to vector<64x128xf32>
    %7 = arith.maximumf %5, %6 : vector<64x128xf32>
    %c0_6 = arith.constant 0 : index
    %c0_7 = arith.constant 0 : index
    %8 = vector.load %arg4[%c0_6, %c0_7] : memref<128x128xbf16, #tpu.memory_space<vmem>>, vector<128x128xbf16>
    %9 = arith.truncf %7 : vector<64x128xf32> to vector<64x128xbf16>
    %cst_8 = arith.constant dense<0.000000e+00> : vector<64x128xf32>
    %10 = tpu.matmul %9, %8, %cst_8 {dimension_numbers = #tpu.dot_dimension_numbers<[1], [0], [0], [1], [0, 0, 1, 1], [], []>} : vector<64x128xbf16>, vector<128x128xbf16>, vector<64x128xf32> -> vector<64x128xf32>
    %c0_9 = arith.constant 0 : index
    %c0_10 = arith.constant 0 : index
    %11 = vector.load %arg5[%c0_9, %c0_10] : memref<1x128xf32, #tpu.memory_space<vmem>>, vector<1x128xf32>
    %12 = vector.broadcast %11 : vector<1x128xf32> to vector<64x128xf32>
    %13 = arith.addf %10, %12 : vector<64x128xf32>
    %cst_11 = arith.constant 0.000000e+00 : f32
    %14 = vector.broadcast %cst_11 : f32 to vector<64x128xf32>
    %15 = arith.maximumf %13, %14 : vector<64x128xf32>
    %c0_12 = arith.constant 0 : index
    %c0_13 = arith.constant 0 : index
    %16 = vector.load %arg6[%c0_12, %c0_13] : memref<128x512xbf16, #tpu.memory_space<vmem>>, vector<128x512xbf16>
    %17 = arith.truncf %15 : vector<64x128xf32> to vector<64x128xbf16>
    %cst_14 = arith.constant dense<0.000000e+00> : vector<64x512xf32>
    %18 = tpu.matmul %17, %16, %cst_14 {dimension_numbers = #tpu.dot_dimension_numbers<[1], [0], [0], [1], [0, 0, 1, 1], [], []>} : vector<64x128xbf16>, vector<128x512xbf16>, vector<64x512xf32> -> vector<64x512xf32>
    %c0_15 = arith.constant 0 : index
    %c0_16 = arith.constant 0 : index
    %19 = vector.load %arg7[%c0_15, %c0_16] : memref<1x512xf32, #tpu.memory_space<vmem>>, vector<1x512xf32>
    %20 = vector.broadcast %19 : vector<1x512xf32> to vector<64x512xf32>
    %21 = arith.addf %18, %20 : vector<64x512xf32>
    %c0_17 = arith.constant 0 : index
    %c0_18 = arith.constant 0 : index
    %22 = vector.load %arg8[%c0_17, %c0_18] : memref<64x512xf32, #tpu.memory_space<vmem>>, vector<64x512xf32>
    tpu.vector_store %arg8[%c0_17, %c0_18], %21 {strides = array<i32>} : memref<64x512xf32, #tpu.memory_space<vmem>>, vector<64x512xf32>,
    return
  }
  func.func @transform_0(%arg0: i32) -> (i32, i32) {
    %c0_i32 = arith.constant 0 : i32
    %c0_i32_0 = arith.constant 0 : i32
    return %arg0, %c0_i32 : i32, i32
  }
  func.func @transform_1(%arg0: i32) -> (i32, i32) {
    %c0_i32 = arith.constant 0 : i32
    %c0_i32_0 = arith.constant 0 : i32
    %c0_i32_1 = arith.constant 0 : i32
    return %c0_i32, %c0_i32_0 : i32, i32
  }
  func.func @transform_2(%arg0: i32) -> (i32, i32) {
    %c0_i32 = arith.constant 0 : i32
    %c0_i32_0 = arith.constant 0 : i32
    %c0_i32_1 = arith.constant 0 : i32
    return %c0_i32, %c0_i32_0 : i32, i32
  }
  func.func @transform_3(%arg0: i32) -> (i32, i32) {
    %c0_i32 = arith.constant 0 : i32
    %c0_i32_0 = arith.constant 0 : i32
    %c0_i32_1 = arith.constant 0 : i32
    return %c0_i32, %c0_i32_0 : i32, i32
  }
  func.func @transform_4(%arg0: i32) -> (i32, i32) {
    %c0_i32 = arith.constant 0 : i32
    %c0_i32_0 = arith.constant 0 : i32
    %c0_i32_1 = arith.constant 0 : i32
    return %c0_i32, %c0_i32_0 : i32, i32
  }
  func.func @transform_5(%arg0: i32) -> (i32, i32) {
    %c0_i32 = arith.constant 0 : i32
    %c0_i32_0 = arith.constant 0 : i32
    %c0_i32_1 = arith.constant 0 : i32
    return %c0_i32, %c0_i32_0 : i32, i32
  }
  func.func @transform_6(%arg0: i32) -> (i32, i32) {
    %c0_i32 = arith.constant 0 : i32
    %c0_i32_0 = arith.constant 0 : i32
    %c0_i32_1 = arith.constant 0 : i32
    return %c0_i32, %c0_i32_0 : i32, i32
  }
  func.func @transform_7(%arg0: i32) -> (i32, i32) {
    %c0_i32 = arith.constant 0 : i32
    %c0_i32_0 = arith.constant 0 : i32
    return %arg0, %c0_i32 : i32, i32
  }
}

module attributes {stable_mosaic.version = 11 : i64} {
  func.func @encoder_recurrent_kernel(%arg0: i32, %arg1: memref<8x8x512xf32, #tpu.memory_space<vmem>>, %arg2: memref<128x512xbf16, #tpu.memory_space<vmem>>, %arg3: memref<256x512xbf16, #tpu.memory_space<vmem>>, %arg4: memref<1x512xf32, #tpu.memory_space<vmem>>, %arg5: memref<8x8x128xbf16, #tpu.memory_space<vmem>>) attributes {dimension_semantics = [#tpu.dimension_semantics<parallel>], iteration_bounds = array<i64: 1>, scalar_prefetch = 0 : i64, scratch_operands = 0 : i64, tpu.core_type = #tpu.core_type<tc>, window_params = [{transform_indices = @transform_0, window_bounds = array<i64: 8, 8, 512>}, {pipeline_mode = #tpu.pipeline_mode<synchronous>, transform_indices = @transform_1, window_bounds = array<i64: 128, 512>}, {pipeline_mode = #tpu.pipeline_mode<synchronous>, transform_indices = @transform_2, window_bounds = array<i64: 256, 512>}, {pipeline_mode = #tpu.pipeline_mode<synchronous>, transform_indices = @transform_3, window_bounds = array<i64: 1, 512>}, {transform_indices = @transform_4, window_bounds = array<i64: 8, 8, 128>}]} {
    %c0 = arith.constant 0 : index
    %c0_0 = arith.constant 0 : index
    %0 = vector.load %arg2[%c0, %c0_0] : memref<128x512xbf16, #tpu.memory_space<vmem>>, vector<128x512xbf16>
    %c0_1 = arith.constant 0 : index
    %c0_2 = arith.constant 0 : index
    %1 = vector.load %arg3[%c0_1, %c0_2] : memref<256x512xbf16, #tpu.memory_space<vmem>>, vector<256x512xbf16>
    %c0_3 = arith.constant 0 : index
    %c0_4 = arith.constant 0 : index
    %2 = vector.load %arg4[%c0_3, %c0_4] : memref<1x512xf32, #tpu.memory_space<vmem>>, vector<1x512xf32>
    %3 = vector.shape_cast %2 : vector<1x512xf32> to vector<1x512xf32>
    %4 = vector.broadcast %3 : vector<1x512xf32> to vector<8x512xf32>
    %cst = arith.constant 0.000000e+00 : f32
    %5 = vector.broadcast %cst : f32 to vector<8x128xf32>
    %c0_i32 = arith.constant 0 : i32
    %6 = arith.index_cast %c0_i32 : i32 to index
    %c0_5 = arith.constant 0 : index
    %c0_6 = arith.constant 0 : index
    %7 = vector.load %arg1[%6, %c0_5, %c0_6] : memref<8x8x512xf32, #tpu.memory_space<vmem>>, vector<1x8x512xf32>
    %8 = vector.shape_cast %7 : vector<1x8x512xf32> to vector<8x512xf32>
    %9 = arith.truncf %5 : vector<8x128xf32> to vector<8x128xbf16>
    %cst_7 = arith.constant dense<0.000000e+00> : vector<8x512xf32>
    %10 = tpu.matmul %9, %0, %cst_7 {dimension_numbers = #tpu.dot_dimension_numbers<[1], [0], [0], [1], [0, 0, 1, 1], [], []>} : vector<8x128xbf16>, vector<128x512xbf16>, vector<8x512xf32> -> vector<8x512xf32>
    %11 = arith.addf %8, %10 : vector<8x512xf32>
    %12 = vector.extract_strided_slice %11 {offsets = [0, 0], sizes = [8, 384], strides = [1, 1]} : vector<8x512xf32> to vector<8x384xf32>
    %13 = arith.negf %12 : vector<8x384xf32>
    %14 = math.exp %13 : vector<8x384xf32>
    %cst_8 = arith.constant 1.000000e+00 : f32
    %15 = vector.broadcast %cst_8 : f32 to vector<8x384xf32>
    %16 = arith.addf %15, %14 : vector<8x384xf32>
    %17 = arith.divf %15, %16 : vector<8x384xf32>
    %18 = vector.extract_strided_slice %17 {offsets = [0, 0], sizes = [8, 128], strides = [1, 1]} : vector<8x384xf32> to vector<8x128xf32>
    %19 = vector.extract_strided_slice %17 {offsets = [0, 128], sizes = [8, 128], strides = [1, 1]} : vector<8x384xf32> to vector<8x128xf32>
    %20 = vector.extract_strided_slice %17 {offsets = [0, 256], sizes = [8, 128], strides = [1, 1]} : vector<8x384xf32> to vector<8x128xf32>
    %21 = vector.extract_strided_slice %11 {offsets = [0, 384], sizes = [8, 128], strides = [1, 1]} : vector<8x512xf32> to vector<8x128xf32>
    %22 = math.tanh %21 : vector<8x128xf32>
    %23 = arith.mulf %19, %5 : vector<8x128xf32>
    %24 = arith.mulf %18, %22 : vector<8x128xf32>
    %25 = arith.addf %23, %24 : vector<8x128xf32>
    %26 = math.tanh %25 : vector<8x128xf32>
    %27 = arith.mulf %20, %26 : vector<8x128xf32>
    %28 = tpu.concatenate %27, %5 in 1 : vector<8x128xf32>, vector<8x128xf32> -> vector<8x256xf32>
    %29 = arith.truncf %28 : vector<8x256xf32> to vector<8x256xbf16>
    %cst_9 = arith.constant dense<0.000000e+00> : vector<8x512xf32>
    %30 = tpu.matmul %29, %1, %cst_9 {dimension_numbers = #tpu.dot_dimension_numbers<[1], [0], [0], [1], [0, 0, 1, 1], [], []>} : vector<8x256xbf16>, vector<256x512xbf16>, vector<8x512xf32> -> vector<8x512xf32>
    %31 = arith.addf %30, %4 : vector<8x512xf32>
    %32 = vector.extract_strided_slice %31 {offsets = [0, 0], sizes = [8, 384], strides = [1, 1]} : vector<8x512xf32> to vector<8x384xf32>
    %33 = arith.negf %32 : vector<8x384xf32>
    %34 = math.exp %33 : vector<8x384xf32>
    %cst_10 = arith.constant 1.000000e+00 : f32
    %35 = vector.broadcast %cst_10 : f32 to vector<8x384xf32>
    %36 = arith.addf %35, %34 : vector<8x384xf32>
    %37 = arith.divf %35, %36 : vector<8x384xf32>
    %38 = vector.extract_strided_slice %37 {offsets = [0, 0], sizes = [8, 128], strides = [1, 1]} : vector<8x384xf32> to vector<8x128xf32>
    %39 = vector.extract_strided_slice %37 {offsets = [0, 128], sizes = [8, 128], strides = [1, 1]} : vector<8x384xf32> to vector<8x128xf32>
    %40 = vector.extract_strided_slice %37 {offsets = [0, 256], sizes = [8, 128], strides = [1, 1]} : vector<8x384xf32> to vector<8x128xf32>
    %41 = vector.extract_strided_slice %31 {offsets = [0, 384], sizes = [8, 128], strides = [1, 1]} : vector<8x512xf32> to vector<8x128xf32>
    %42 = math.tanh %41 : vector<8x128xf32>
    %43 = arith.mulf %39, %5 : vector<8x128xf32>
    %44 = arith.mulf %38, %42 : vector<8x128xf32>
    %45 = arith.addf %43, %44 : vector<8x128xf32>
    %46 = math.tanh %45 : vector<8x128xf32>
    %47 = arith.mulf %40, %46 : vector<8x128xf32>
    %48 = arith.truncf %47 : vector<8x128xf32> to vector<8x128xbf16>
    %49 = arith.index_cast %c0_i32 : i32 to index
    %c0_11 = arith.constant 0 : index
    %c0_12 = arith.constant 0 : index
    %50 = vector.load %arg5[%49, %c0_11, %c0_12] : memref<8x8x128xbf16, #tpu.memory_space<vmem>>, vector<1x8x128xbf16>
    %51 = vector.shape_cast %50 : vector<1x8x128xbf16> to vector<8x128xbf16>
    %52 = vector.shape_cast %48 : vector<8x128xbf16> to vector<1x8x128xbf16>
    tpu.vector_store %arg5[%49, %c0_11, %c0_12], %52 {strides = array<i32>} : memref<8x8x128xbf16, #tpu.memory_space<vmem>>, vector<1x8x128xbf16>,
    %c1_i32 = arith.constant 1 : i32
    %53 = arith.index_cast %c1_i32 : i32 to index
    %c0_13 = arith.constant 0 : index
    %c0_14 = arith.constant 0 : index
    %54 = vector.load %arg1[%53, %c0_13, %c0_14] : memref<8x8x512xf32, #tpu.memory_space<vmem>>, vector<1x8x512xf32>
    %55 = vector.shape_cast %54 : vector<1x8x512xf32> to vector<8x512xf32>
    %56 = arith.truncf %27 : vector<8x128xf32> to vector<8x128xbf16>
    %cst_15 = arith.constant dense<0.000000e+00> : vector<8x512xf32>
    %57 = tpu.matmul %56, %0, %cst_15 {dimension_numbers = #tpu.dot_dimension_numbers<[1], [0], [0], [1], [0, 0, 1, 1], [], []>} : vector<8x128xbf16>, vector<128x512xbf16>, vector<8x512xf32> -> vector<8x512xf32>
    %58 = arith.addf %55, %57 : vector<8x512xf32>
    %59 = vector.extract_strided_slice %58 {offsets = [0, 0], sizes = [8, 384], strides = [1, 1]} : vector<8x512xf32> to vector<8x384xf32>
    %60 = arith.negf %59 : vector<8x384xf32>
    %61 = math.exp %60 : vector<8x384xf32>
    %cst_16 = arith.constant 1.000000e+00 : f32
    %62 = vector.broadcast %cst_16 : f32 to vector<8x384xf32>
    %63 = arith.addf %62, %61 : vector<8x384xf32>
    %64 = arith.divf %62, %63 : vector<8x384xf32>
    %65 = vector.extract_strided_slice %64 {offsets = [0, 0], sizes = [8, 128], strides = [1, 1]} : vector<8x384xf32> to vector<8x128xf32>
    %66 = vector.extract_strided_slice %64 {offsets = [0, 128], sizes = [8, 128], strides = [1, 1]} : vector<8x384xf32> to vector<8x128xf32>
    %67 = vector.extract_strided_slice %64 {offsets = [0, 256], sizes = [8, 128], strides = [1, 1]} : vector<8x384xf32> to vector<8x128xf32>
    %68 = vector.extract_strided_slice %58 {offsets = [0, 384], sizes = [8, 128], strides = [1, 1]} : vector<8x512xf32> to vector<8x128xf32>
    %69 = math.tanh %68 : vector<8x128xf32>
    %70 = arith.mulf %66, %25 : vector<8x128xf32>
    %71 = arith.mulf %65, %69 : vector<8x128xf32>
    %72 = arith.addf %70, %71 : vector<8x128xf32>
    %73 = math.tanh %72 : vector<8x128xf32>
    %74 = arith.mulf %67, %73 : vector<8x128xf32>
    %75 = tpu.concatenate %74, %47 in 1 : vector<8x128xf32>, vector<8x128xf32> -> vector<8x256xf32>
    %76 = arith.truncf %75 : vector<8x256xf32> to vector<8x256xbf16>
    %cst_17 = arith.constant dense<0.000000e+00> : vector<8x512xf32>
    %77 = tpu.matmul %76, %1, %cst_17 {dimension_numbers = #tpu.dot_dimension_numbers<[1], [0], [0], [1], [0, 0, 1, 1], [], []>} : vector<8x256xbf16>, vector<256x512xbf16>, vector<8x512xf32> -> vector<8x512xf32>
    %78 = arith.addf %77, %4 : vector<8x512xf32>
    %79 = vector.extract_strided_slice %78 {offsets = [0, 0], sizes = [8, 384], strides = [1, 1]} : vector<8x512xf32> to vector<8x384xf32>
    %80 = arith.negf %79 : vector<8x384xf32>
    %81 = math.exp %80 : vector<8x384xf32>
    %cst_18 = arith.constant 1.000000e+00 : f32
    %82 = vector.broadcast %cst_18 : f32 to vector<8x384xf32>
    %83 = arith.addf %82, %81 : vector<8x384xf32>
    %84 = arith.divf %82, %83 : vector<8x384xf32>
    %85 = vector.extract_strided_slice %84 {offsets = [0, 0], sizes = [8, 128], strides = [1, 1]} : vector<8x384xf32> to vector<8x128xf32>
    %86 = vector.extract_strided_slice %84 {offsets = [0, 128], sizes = [8, 128], strides = [1, 1]} : vector<8x384xf32> to vector<8x128xf32>
    %87 = vector.extract_strided_slice %84 {offsets = [0, 256], sizes = [8, 128], strides = [1, 1]} : vector<8x384xf32> to vector<8x128xf32>
    %88 = vector.extract_strided_slice %78 {offsets = [0, 384], sizes = [8, 128], strides = [1, 1]} : vector<8x512xf32> to vector<8x128xf32>
    %89 = math.tanh %88 : vector<8x128xf32>
    %90 = arith.mulf %86, %45 : vector<8x128xf32>
    %91 = arith.mulf %85, %89 : vector<8x128xf32>
    %92 = arith.addf %90, %91 : vector<8x128xf32>
    %93 = math.tanh %92 : vector<8x128xf32>
    %94 = arith.mulf %87, %93 : vector<8x128xf32>
    %95 = arith.truncf %94 : vector<8x128xf32> to vector<8x128xbf16>
    %96 = arith.index_cast %c1_i32 : i32 to index
    %c0_19 = arith.constant 0 : index
    %c0_20 = arith.constant 0 : index
    %97 = vector.load %arg5[%96, %c0_19, %c0_20] : memref<8x8x128xbf16, #tpu.memory_space<vmem>>, vector<1x8x128xbf16>
    %98 = vector.shape_cast %97 : vector<1x8x128xbf16> to vector<8x128xbf16>
    %99 = vector.shape_cast %95 : vector<8x128xbf16> to vector<1x8x128xbf16>
    tpu.vector_store %arg5[%96, %c0_19, %c0_20], %99 {strides = array<i32>} : memref<8x8x128xbf16, #tpu.memory_space<vmem>>, vector<1x8x128xbf16>,
    %c2_i32 = arith.constant 2 : i32
    %100 = arith.index_cast %c2_i32 : i32 to index
    %c0_21 = arith.constant 0 : index
    %c0_22 = arith.constant 0 : index
    %101 = vector.load %arg1[%100, %c0_21, %c0_22] : memref<8x8x512xf32, #tpu.memory_space<vmem>>, vector<1x8x512xf32>
    %102 = vector.shape_cast %101 : vector<1x8x512xf32> to vector<8x512xf32>
    %103 = arith.truncf %74 : vector<8x128xf32> to vector<8x128xbf16>
    %cst_23 = arith.constant dense<0.000000e+00> : vector<8x512xf32>
    %104 = tpu.matmul %103, %0, %cst_23 {dimension_numbers = #tpu.dot_dimension_numbers<[1], [0], [0], [1], [0, 0, 1, 1], [], []>} : vector<8x128xbf16>, vector<128x512xbf16>, vector<8x512xf32> -> vector<8x512xf32>
    %105 = arith.addf %102, %104 : vector<8x512xf32>
    %106 = vector.extract_strided_slice %105 {offsets = [0, 0], sizes = [8, 384], strides = [1, 1]} : vector<8x512xf32> to vector<8x384xf32>
    %107 = arith.negf %106 : vector<8x384xf32>
    %108 = math.exp %107 : vector<8x384xf32>
    %cst_24 = arith.constant 1.000000e+00 : f32
    %109 = vector.broadcast %cst_24 : f32 to vector<8x384xf32>
    %110 = arith.addf %109, %108 : vector<8x384xf32>
    %111 = arith.divf %109, %110 : vector<8x384xf32>
    %112 = vector.extract_strided_slice %111 {offsets = [0, 0], sizes = [8, 128], strides = [1, 1]} : vector<8x384xf32> to vector<8x128xf32>
    %113 = vector.extract_strided_slice %111 {offsets = [0, 128], sizes = [8, 128], strides = [1, 1]} : vector<8x384xf32> to vector<8x128xf32>
    %114 = vector.extract_strided_slice %111 {offsets = [0, 256], sizes = [8, 128], strides = [1, 1]} : vector<8x384xf32> to vector<8x128xf32>
    %115 = vector.extract_strided_slice %105 {offsets = [0, 384], sizes = [8, 128], strides = [1, 1]} : vector<8x512xf32> to vector<8x128xf32>
    %116 = math.tanh %115 : vector<8x128xf32>
    %117 = arith.mulf %113, %72 : vector<8x128xf32>
    %118 = arith.mulf %112, %116 : vector<8x128xf32>
    %119 = arith.addf %117, %118 : vector<8x128xf32>
    %120 = math.tanh %119 : vector<8x128xf32>
    %121 = arith.mulf %114, %120 : vector<8x128xf32>
    %122 = tpu.concatenate %121, %94 in 1 : vector<8x128xf32>, vector<8x128xf32> -> vector<8x256xf32>
    %123 = arith.truncf %122 : vector<8x256xf32> to vector<8x256xbf16>
    %cst_25 = arith.constant dense<0.000000e+00> : vector<8x512xf32>
    %124 = tpu.matmul %123, %1, %cst_25 {dimension_numbers = #tpu.dot_dimension_numbers<[1], [0], [0], [1], [0, 0, 1, 1], [], []>} : vector<8x256xbf16>, vector<256x512xbf16>, vector<8x512xf32> -> vector<8x512xf32>
    %125 = arith.addf %124, %4 : vector<8x512xf32>
    %126 = vector.extract_strided_slice %125 {offsets = [0, 0], sizes = [8, 384], strides = [1, 1]} : vector<8x512xf32> to vector<8x384xf32>
    %127 = arith.negf %126 : vector<8x384xf32>
    %128 = math.exp %127 : vector<8x384xf32>
    %cst_26 = arith.constant 1.000000e+00 : f32
    %129 = vector.broadcast %cst_26 : f32 to vector<8x384xf32>
    %130 = arith.addf %129, %128 : vector<8x384xf32>
    %131 = arith.divf %129, %130 : vector<8x384xf32>
    %132 = vector.extract_strided_slice %131 {offsets = [0, 0], sizes = [8, 128], strides = [1, 1]} : vector<8x384xf32> to vector<8x128xf32>
    %133 = vector.extract_strided_slice %131 {offsets = [0, 128], sizes = [8, 128], strides = [1, 1]} : vector<8x384xf32> to vector<8x128xf32>
    %134 = vector.extract_strided_slice %131 {offsets = [0, 256], sizes = [8, 128], strides = [1, 1]} : vector<8x384xf32> to vector<8x128xf32>
    %135 = vector.extract_strided_slice %125 {offsets = [0, 384], sizes = [8, 128], strides = [1, 1]} : vector<8x512xf32> to vector<8x128xf32>
    %136 = math.tanh %135 : vector<8x128xf32>
    %137 = arith.mulf %133, %92 : vector<8x128xf32>
    %138 = arith.mulf %132, %136 : vector<8x128xf32>
    %139 = arith.addf %137, %138 : vector<8x128xf32>
    %140 = math.tanh %139 : vector<8x128xf32>
    %141 = arith.mulf %134, %140 : vector<8x128xf32>
    %142 = arith.truncf %141 : vector<8x128xf32> to vector<8x128xbf16>
    %143 = arith.index_cast %c2_i32 : i32 to index
    %c0_27 = arith.constant 0 : index
    %c0_28 = arith.constant 0 : index
    %144 = vector.load %arg5[%143, %c0_27, %c0_28] : memref<8x8x128xbf16, #tpu.memory_space<vmem>>, vector<1x8x128xbf16>
    %145 = vector.shape_cast %144 : vector<1x8x128xbf16> to vector<8x128xbf16>
    %146 = vector.shape_cast %142 : vector<8x128xbf16> to vector<1x8x128xbf16>
    tpu.vector_store %arg5[%143, %c0_27, %c0_28], %146 {strides = array<i32>} : memref<8x8x128xbf16, #tpu.memory_space<vmem>>, vector<1x8x128xbf16>,
    %c3_i32 = arith.constant 3 : i32
    %147 = arith.index_cast %c3_i32 : i32 to index
    %c0_29 = arith.constant 0 : index
    %c0_30 = arith.constant 0 : index
    %148 = vector.load %arg1[%147, %c0_29, %c0_30] : memref<8x8x512xf32, #tpu.memory_space<vmem>>, vector<1x8x512xf32>
    %149 = vector.shape_cast %148 : vector<1x8x512xf32> to vector<8x512xf32>
    %150 = arith.truncf %121 : vector<8x128xf32> to vector<8x128xbf16>
    %cst_31 = arith.constant dense<0.000000e+00> : vector<8x512xf32>
    %151 = tpu.matmul %150, %0, %cst_31 {dimension_numbers = #tpu.dot_dimension_numbers<[1], [0], [0], [1], [0, 0, 1, 1], [], []>} : vector<8x128xbf16>, vector<128x512xbf16>, vector<8x512xf32> -> vector<8x512xf32>
    %152 = arith.addf %149, %151 : vector<8x512xf32>
    %153 = vector.extract_strided_slice %152 {offsets = [0, 0], sizes = [8, 384], strides = [1, 1]} : vector<8x512xf32> to vector<8x384xf32>
    %154 = arith.negf %153 : vector<8x384xf32>
    %155 = math.exp %154 : vector<8x384xf32>
    %cst_32 = arith.constant 1.000000e+00 : f32
    %156 = vector.broadcast %cst_32 : f32 to vector<8x384xf32>
    %157 = arith.addf %156, %155 : vector<8x384xf32>
    %158 = arith.divf %156, %157 : vector<8x384xf32>
    %159 = vector.extract_strided_slice %158 {offsets = [0, 0], sizes = [8, 128], strides = [1, 1]} : vector<8x384xf32> to vector<8x128xf32>
    %160 = vector.extract_strided_slice %158 {offsets = [0, 128], sizes = [8, 128], strides = [1, 1]} : vector<8x384xf32> to vector<8x128xf32>
    %161 = vector.extract_strided_slice %158 {offsets = [0, 256], sizes = [8, 128], strides = [1, 1]} : vector<8x384xf32> to vector<8x128xf32>
    %162 = vector.extract_strided_slice %152 {offsets = [0, 384], sizes = [8, 128], strides = [1, 1]} : vector<8x512xf32> to vector<8x128xf32>
    %163 = math.tanh %162 : vector<8x128xf32>
    %164 = arith.mulf %160, %119 : vector<8x128xf32>
    %165 = arith.mulf %159, %163 : vector<8x128xf32>
    %166 = arith.addf %164, %165 : vector<8x128xf32>
    %167 = math.tanh %166 : vector<8x128xf32>
    %168 = arith.mulf %161, %167 : vector<8x128xf32>
    %169 = tpu.concatenate %168, %141 in 1 : vector<8x128xf32>, vector<8x128xf32> -> vector<8x256xf32>
    %170 = arith.truncf %169 : vector<8x256xf32> to vector<8x256xbf16>
    %cst_33 = arith.constant dense<0.000000e+00> : vector<8x512xf32>
    %171 = tpu.matmul %170, %1, %cst_33 {dimension_numbers = #tpu.dot_dimension_numbers<[1], [0], [0], [1], [0, 0, 1, 1], [], []>} : vector<8x256xbf16>, vector<256x512xbf16>, vector<8x512xf32> -> vector<8x512xf32>
    %172 = arith.addf %171, %4 : vector<8x512xf32>
    %173 = vector.extract_strided_slice %172 {offsets = [0, 0], sizes = [8, 384], strides = [1, 1]} : vector<8x512xf32> to vector<8x384xf32>
    %174 = arith.negf %173 : vector<8x384xf32>
    %175 = math.exp %174 : vector<8x384xf32>
    %cst_34 = arith.constant 1.000000e+00 : f32
    %176 = vector.broadcast %cst_34 : f32 to vector<8x384xf32>
    %177 = arith.addf %176, %175 : vector<8x384xf32>
    %178 = arith.divf %176, %177 : vector<8x384xf32>
    %179 = vector.extract_strided_slice %178 {offsets = [0, 0], sizes = [8, 128], strides = [1, 1]} : vector<8x384xf32> to vector<8x128xf32>
    %180 = vector.extract_strided_slice %178 {offsets = [0, 128], sizes = [8, 128], strides = [1, 1]} : vector<8x384xf32> to vector<8x128xf32>
    %181 = vector.extract_strided_slice %178 {offsets = [0, 256], sizes = [8, 128], strides = [1, 1]} : vector<8x384xf32> to vector<8x128xf32>
    %182 = vector.extract_strided_slice %172 {offsets = [0, 384], sizes = [8, 128], strides = [1, 1]} : vector<8x512xf32> to vector<8x128xf32>
    %183 = math.tanh %182 : vector<8x128xf32>
    %184 = arith.mulf %180, %139 : vector<8x128xf32>
    %185 = arith.mulf %179, %183 : vector<8x128xf32>
    %186 = arith.addf %184, %185 : vector<8x128xf32>
    %187 = math.tanh %186 : vector<8x128xf32>
    %188 = arith.mulf %181, %187 : vector<8x128xf32>
    %189 = arith.truncf %188 : vector<8x128xf32> to vector<8x128xbf16>
    %190 = arith.index_cast %c3_i32 : i32 to index
    %c0_35 = arith.constant 0 : index
    %c0_36 = arith.constant 0 : index
    %191 = vector.load %arg5[%190, %c0_35, %c0_36] : memref<8x8x128xbf16, #tpu.memory_space<vmem>>, vector<1x8x128xbf16>
    %192 = vector.shape_cast %191 : vector<1x8x128xbf16> to vector<8x128xbf16>
    %193 = vector.shape_cast %189 : vector<8x128xbf16> to vector<1x8x128xbf16>
    tpu.vector_store %arg5[%190, %c0_35, %c0_36], %193 {strides = array<i32>} : memref<8x8x128xbf16, #tpu.memory_space<vmem>>, vector<1x8x128xbf16>,
    %c4_i32 = arith.constant 4 : i32
    %194 = arith.index_cast %c4_i32 : i32 to index
    %c0_37 = arith.constant 0 : index
    %c0_38 = arith.constant 0 : index
    %195 = vector.load %arg1[%194, %c0_37, %c0_38] : memref<8x8x512xf32, #tpu.memory_space<vmem>>, vector<1x8x512xf32>
    %196 = vector.shape_cast %195 : vector<1x8x512xf32> to vector<8x512xf32>
    %197 = arith.truncf %168 : vector<8x128xf32> to vector<8x128xbf16>
    %cst_39 = arith.constant dense<0.000000e+00> : vector<8x512xf32>
    %198 = tpu.matmul %197, %0, %cst_39 {dimension_numbers = #tpu.dot_dimension_numbers<[1], [0], [0], [1], [0, 0, 1, 1], [], []>} : vector<8x128xbf16>, vector<128x512xbf16>, vector<8x512xf32> -> vector<8x512xf32>
    %199 = arith.addf %196, %198 : vector<8x512xf32>
    %200 = vector.extract_strided_slice %199 {offsets = [0, 0], sizes = [8, 384], strides = [1, 1]} : vector<8x512xf32> to vector<8x384xf32>
    %201 = arith.negf %200 : vector<8x384xf32>
    %202 = math.exp %201 : vector<8x384xf32>
    %cst_40 = arith.constant 1.000000e+00 : f32
    %203 = vector.broadcast %cst_40 : f32 to vector<8x384xf32>
    %204 = arith.addf %203, %202 : vector<8x384xf32>
    %205 = arith.divf %203, %204 : vector<8x384xf32>
    %206 = vector.extract_strided_slice %205 {offsets = [0, 0], sizes = [8, 128], strides = [1, 1]} : vector<8x384xf32> to vector<8x128xf32>
    %207 = vector.extract_strided_slice %205 {offsets = [0, 128], sizes = [8, 128], strides = [1, 1]} : vector<8x384xf32> to vector<8x128xf32>
    %208 = vector.extract_strided_slice %205 {offsets = [0, 256], sizes = [8, 128], strides = [1, 1]} : vector<8x384xf32> to vector<8x128xf32>
    %209 = vector.extract_strided_slice %199 {offsets = [0, 384], sizes = [8, 128], strides = [1, 1]} : vector<8x512xf32> to vector<8x128xf32>
    %210 = math.tanh %209 : vector<8x128xf32>
    %211 = arith.mulf %207, %166 : vector<8x128xf32>
    %212 = arith.mulf %206, %210 : vector<8x128xf32>
    %213 = arith.addf %211, %212 : vector<8x128xf32>
    %214 = math.tanh %213 : vector<8x128xf32>
    %215 = arith.mulf %208, %214 : vector<8x128xf32>
    %216 = tpu.concatenate %215, %188 in 1 : vector<8x128xf32>, vector<8x128xf32> -> vector<8x256xf32>
    %217 = arith.truncf %216 : vector<8x256xf32> to vector<8x256xbf16>
    %cst_41 = arith.constant dense<0.000000e+00> : vector<8x512xf32>
    %218 = tpu.matmul %217, %1, %cst_41 {dimension_numbers = #tpu.dot_dimension_numbers<[1], [0], [0], [1], [0, 0, 1, 1], [], []>} : vector<8x256xbf16>, vector<256x512xbf16>, vector<8x512xf32> -> vector<8x512xf32>
    %219 = arith.addf %218, %4 : vector<8x512xf32>
    %220 = vector.extract_strided_slice %219 {offsets = [0, 0], sizes = [8, 384], strides = [1, 1]} : vector<8x512xf32> to vector<8x384xf32>
    %221 = arith.negf %220 : vector<8x384xf32>
    %222 = math.exp %221 : vector<8x384xf32>
    %cst_42 = arith.constant 1.000000e+00 : f32
    %223 = vector.broadcast %cst_42 : f32 to vector<8x384xf32>
    %224 = arith.addf %223, %222 : vector<8x384xf32>
    %225 = arith.divf %223, %224 : vector<8x384xf32>
    %226 = vector.extract_strided_slice %225 {offsets = [0, 0], sizes = [8, 128], strides = [1, 1]} : vector<8x384xf32> to vector<8x128xf32>
    %227 = vector.extract_strided_slice %225 {offsets = [0, 128], sizes = [8, 128], strides = [1, 1]} : vector<8x384xf32> to vector<8x128xf32>
    %228 = vector.extract_strided_slice %225 {offsets = [0, 256], sizes = [8, 128], strides = [1, 1]} : vector<8x384xf32> to vector<8x128xf32>
    %229 = vector.extract_strided_slice %219 {offsets = [0, 384], sizes = [8, 128], strides = [1, 1]} : vector<8x512xf32> to vector<8x128xf32>
    %230 = math.tanh %229 : vector<8x128xf32>
    %231 = arith.mulf %227, %186 : vector<8x128xf32>
    %232 = arith.mulf %226, %230 : vector<8x128xf32>
    %233 = arith.addf %231, %232 : vector<8x128xf32>
    %234 = math.tanh %233 : vector<8x128xf32>
    %235 = arith.mulf %228, %234 : vector<8x128xf32>
    %236 = arith.truncf %235 : vector<8x128xf32> to vector<8x128xbf16>
    %237 = arith.index_cast %c4_i32 : i32 to index
    %c0_43 = arith.constant 0 : index
    %c0_44 = arith.constant 0 : index
    %238 = vector.load %arg5[%237, %c0_43, %c0_44] : memref<8x8x128xbf16, #tpu.memory_space<vmem>>, vector<1x8x128xbf16>
    %239 = vector.shape_cast %238 : vector<1x8x128xbf16> to vector<8x128xbf16>
    %240 = vector.shape_cast %236 : vector<8x128xbf16> to vector<1x8x128xbf16>
    tpu.vector_store %arg5[%237, %c0_43, %c0_44], %240 {strides = array<i32>} : memref<8x8x128xbf16, #tpu.memory_space<vmem>>, vector<1x8x128xbf16>,
    %c5_i32 = arith.constant 5 : i32
    %241 = arith.index_cast %c5_i32 : i32 to index
    %c0_45 = arith.constant 0 : index
    %c0_46 = arith.constant 0 : index
    %242 = vector.load %arg1[%241, %c0_45, %c0_46] : memref<8x8x512xf32, #tpu.memory_space<vmem>>, vector<1x8x512xf32>
    %243 = vector.shape_cast %242 : vector<1x8x512xf32> to vector<8x512xf32>
    %244 = arith.truncf %215 : vector<8x128xf32> to vector<8x128xbf16>
    %cst_47 = arith.constant dense<0.000000e+00> : vector<8x512xf32>
    %245 = tpu.matmul %244, %0, %cst_47 {dimension_numbers = #tpu.dot_dimension_numbers<[1], [0], [0], [1], [0, 0, 1, 1], [], []>} : vector<8x128xbf16>, vector<128x512xbf16>, vector<8x512xf32> -> vector<8x512xf32>
    %246 = arith.addf %243, %245 : vector<8x512xf32>
    %247 = vector.extract_strided_slice %246 {offsets = [0, 0], sizes = [8, 384], strides = [1, 1]} : vector<8x512xf32> to vector<8x384xf32>
    %248 = arith.negf %247 : vector<8x384xf32>
    %249 = math.exp %248 : vector<8x384xf32>
    %cst_48 = arith.constant 1.000000e+00 : f32
    %250 = vector.broadcast %cst_48 : f32 to vector<8x384xf32>
    %251 = arith.addf %250, %249 : vector<8x384xf32>
    %252 = arith.divf %250, %251 : vector<8x384xf32>
    %253 = vector.extract_strided_slice %252 {offsets = [0, 0], sizes = [8, 128], strides = [1, 1]} : vector<8x384xf32> to vector<8x128xf32>
    %254 = vector.extract_strided_slice %252 {offsets = [0, 128], sizes = [8, 128], strides = [1, 1]} : vector<8x384xf32> to vector<8x128xf32>
    %255 = vector.extract_strided_slice %252 {offsets = [0, 256], sizes = [8, 128], strides = [1, 1]} : vector<8x384xf32> to vector<8x128xf32>
    %256 = vector.extract_strided_slice %246 {offsets = [0, 384], sizes = [8, 128], strides = [1, 1]} : vector<8x512xf32> to vector<8x128xf32>
    %257 = math.tanh %256 : vector<8x128xf32>
    %258 = arith.mulf %254, %213 : vector<8x128xf32>
    %259 = arith.mulf %253, %257 : vector<8x128xf32>
    %260 = arith.addf %258, %259 : vector<8x128xf32>
    %261 = math.tanh %260 : vector<8x128xf32>
    %262 = arith.mulf %255, %261 : vector<8x128xf32>
    %263 = tpu.concatenate %262, %235 in 1 : vector<8x128xf32>, vector<8x128xf32> -> vector<8x256xf32>
    %264 = arith.truncf %263 : vector<8x256xf32> to vector<8x256xbf16>
    %cst_49 = arith.constant dense<0.000000e+00> : vector<8x512xf32>
    %265 = tpu.matmul %264, %1, %cst_49 {dimension_numbers = #tpu.dot_dimension_numbers<[1], [0], [0], [1], [0, 0, 1, 1], [], []>} : vector<8x256xbf16>, vector<256x512xbf16>, vector<8x512xf32> -> vector<8x512xf32>
    %266 = arith.addf %265, %4 : vector<8x512xf32>
    %267 = vector.extract_strided_slice %266 {offsets = [0, 0], sizes = [8, 384], strides = [1, 1]} : vector<8x512xf32> to vector<8x384xf32>
    %268 = arith.negf %267 : vector<8x384xf32>
    %269 = math.exp %268 : vector<8x384xf32>
    %cst_50 = arith.constant 1.000000e+00 : f32
    %270 = vector.broadcast %cst_50 : f32 to vector<8x384xf32>
    %271 = arith.addf %270, %269 : vector<8x384xf32>
    %272 = arith.divf %270, %271 : vector<8x384xf32>
    %273 = vector.extract_strided_slice %272 {offsets = [0, 0], sizes = [8, 128], strides = [1, 1]} : vector<8x384xf32> to vector<8x128xf32>
    %274 = vector.extract_strided_slice %272 {offsets = [0, 128], sizes = [8, 128], strides = [1, 1]} : vector<8x384xf32> to vector<8x128xf32>
    %275 = vector.extract_strided_slice %272 {offsets = [0, 256], sizes = [8, 128], strides = [1, 1]} : vector<8x384xf32> to vector<8x128xf32>
    %276 = vector.extract_strided_slice %266 {offsets = [0, 384], sizes = [8, 128], strides = [1, 1]} : vector<8x512xf32> to vector<8x128xf32>
    %277 = math.tanh %276 : vector<8x128xf32>
    %278 = arith.mulf %274, %233 : vector<8x128xf32>
    %279 = arith.mulf %273, %277 : vector<8x128xf32>
    %280 = arith.addf %278, %279 : vector<8x128xf32>
    %281 = math.tanh %280 : vector<8x128xf32>
    %282 = arith.mulf %275, %281 : vector<8x128xf32>
    %283 = arith.truncf %282 : vector<8x128xf32> to vector<8x128xbf16>
    %284 = arith.index_cast %c5_i32 : i32 to index
    %c0_51 = arith.constant 0 : index
    %c0_52 = arith.constant 0 : index
    %285 = vector.load %arg5[%284, %c0_51, %c0_52] : memref<8x8x128xbf16, #tpu.memory_space<vmem>>, vector<1x8x128xbf16>
    %286 = vector.shape_cast %285 : vector<1x8x128xbf16> to vector<8x128xbf16>
    %287 = vector.shape_cast %283 : vector<8x128xbf16> to vector<1x8x128xbf16>
    tpu.vector_store %arg5[%284, %c0_51, %c0_52], %287 {strides = array<i32>} : memref<8x8x128xbf16, #tpu.memory_space<vmem>>, vector<1x8x128xbf16>,
    %c6_i32 = arith.constant 6 : i32
    %288 = arith.index_cast %c6_i32 : i32 to index
    %c0_53 = arith.constant 0 : index
    %c0_54 = arith.constant 0 : index
    %289 = vector.load %arg1[%288, %c0_53, %c0_54] : memref<8x8x512xf32, #tpu.memory_space<vmem>>, vector<1x8x512xf32>
    %290 = vector.shape_cast %289 : vector<1x8x512xf32> to vector<8x512xf32>
    %291 = arith.truncf %262 : vector<8x128xf32> to vector<8x128xbf16>
    %cst_55 = arith.constant dense<0.000000e+00> : vector<8x512xf32>
    %292 = tpu.matmul %291, %0, %cst_55 {dimension_numbers = #tpu.dot_dimension_numbers<[1], [0], [0], [1], [0, 0, 1, 1], [], []>} : vector<8x128xbf16>, vector<128x512xbf16>, vector<8x512xf32> -> vector<8x512xf32>
    %293 = arith.addf %290, %292 : vector<8x512xf32>
    %294 = vector.extract_strided_slice %293 {offsets = [0, 0], sizes = [8, 384], strides = [1, 1]} : vector<8x512xf32> to vector<8x384xf32>
    %295 = arith.negf %294 : vector<8x384xf32>
    %296 = math.exp %295 : vector<8x384xf32>
    %cst_56 = arith.constant 1.000000e+00 : f32
    %297 = vector.broadcast %cst_56 : f32 to vector<8x384xf32>
    %298 = arith.addf %297, %296 : vector<8x384xf32>
    %299 = arith.divf %297, %298 : vector<8x384xf32>
    %300 = vector.extract_strided_slice %299 {offsets = [0, 0], sizes = [8, 128], strides = [1, 1]} : vector<8x384xf32> to vector<8x128xf32>
    %301 = vector.extract_strided_slice %299 {offsets = [0, 128], sizes = [8, 128], strides = [1, 1]} : vector<8x384xf32> to vector<8x128xf32>
    %302 = vector.extract_strided_slice %299 {offsets = [0, 256], sizes = [8, 128], strides = [1, 1]} : vector<8x384xf32> to vector<8x128xf32>
    %303 = vector.extract_strided_slice %293 {offsets = [0, 384], sizes = [8, 128], strides = [1, 1]} : vector<8x512xf32> to vector<8x128xf32>
    %304 = math.tanh %303 : vector<8x128xf32>
    %305 = arith.mulf %301, %260 : vector<8x128xf32>
    %306 = arith.mulf %300, %304 : vector<8x128xf32>
    %307 = arith.addf %305, %306 : vector<8x128xf32>
    %308 = math.tanh %307 : vector<8x128xf32>
    %309 = arith.mulf %302, %308 : vector<8x128xf32>
    %310 = tpu.concatenate %309, %282 in 1 : vector<8x128xf32>, vector<8x128xf32> -> vector<8x256xf32>
    %311 = arith.truncf %310 : vector<8x256xf32> to vector<8x256xbf16>
    %cst_57 = arith.constant dense<0.000000e+00> : vector<8x512xf32>
    %312 = tpu.matmul %311, %1, %cst_57 {dimension_numbers = #tpu.dot_dimension_numbers<[1], [0], [0], [1], [0, 0, 1, 1], [], []>} : vector<8x256xbf16>, vector<256x512xbf16>, vector<8x512xf32> -> vector<8x512xf32>
    %313 = arith.addf %312, %4 : vector<8x512xf32>
    %314 = vector.extract_strided_slice %313 {offsets = [0, 0], sizes = [8, 384], strides = [1, 1]} : vector<8x512xf32> to vector<8x384xf32>
    %315 = arith.negf %314 : vector<8x384xf32>
    %316 = math.exp %315 : vector<8x384xf32>
    %cst_58 = arith.constant 1.000000e+00 : f32
    %317 = vector.broadcast %cst_58 : f32 to vector<8x384xf32>
    %318 = arith.addf %317, %316 : vector<8x384xf32>
    %319 = arith.divf %317, %318 : vector<8x384xf32>
    %320 = vector.extract_strided_slice %319 {offsets = [0, 0], sizes = [8, 128], strides = [1, 1]} : vector<8x384xf32> to vector<8x128xf32>
    %321 = vector.extract_strided_slice %319 {offsets = [0, 128], sizes = [8, 128], strides = [1, 1]} : vector<8x384xf32> to vector<8x128xf32>
    %322 = vector.extract_strided_slice %319 {offsets = [0, 256], sizes = [8, 128], strides = [1, 1]} : vector<8x384xf32> to vector<8x128xf32>
    %323 = vector.extract_strided_slice %313 {offsets = [0, 384], sizes = [8, 128], strides = [1, 1]} : vector<8x512xf32> to vector<8x128xf32>
    %324 = math.tanh %323 : vector<8x128xf32>
    %325 = arith.mulf %321, %280 : vector<8x128xf32>
    %326 = arith.mulf %320, %324 : vector<8x128xf32>
    %327 = arith.addf %325, %326 : vector<8x128xf32>
    %328 = math.tanh %327 : vector<8x128xf32>
    %329 = arith.mulf %322, %328 : vector<8x128xf32>
    %330 = arith.truncf %329 : vector<8x128xf32> to vector<8x128xbf16>
    %331 = arith.index_cast %c6_i32 : i32 to index
    %c0_59 = arith.constant 0 : index
    %c0_60 = arith.constant 0 : index
    %332 = vector.load %arg5[%331, %c0_59, %c0_60] : memref<8x8x128xbf16, #tpu.memory_space<vmem>>, vector<1x8x128xbf16>
    %333 = vector.shape_cast %332 : vector<1x8x128xbf16> to vector<8x128xbf16>
    %334 = vector.shape_cast %330 : vector<8x128xbf16> to vector<1x8x128xbf16>
    tpu.vector_store %arg5[%331, %c0_59, %c0_60], %334 {strides = array<i32>} : memref<8x8x128xbf16, #tpu.memory_space<vmem>>, vector<1x8x128xbf16>,
    %c7_i32 = arith.constant 7 : i32
    %335 = arith.index_cast %c7_i32 : i32 to index
    %c0_61 = arith.constant 0 : index
    %c0_62 = arith.constant 0 : index
    %336 = vector.load %arg1[%335, %c0_61, %c0_62] : memref<8x8x512xf32, #tpu.memory_space<vmem>>, vector<1x8x512xf32>
    %337 = vector.shape_cast %336 : vector<1x8x512xf32> to vector<8x512xf32>
    %338 = arith.truncf %309 : vector<8x128xf32> to vector<8x128xbf16>
    %cst_63 = arith.constant dense<0.000000e+00> : vector<8x512xf32>
    %339 = tpu.matmul %338, %0, %cst_63 {dimension_numbers = #tpu.dot_dimension_numbers<[1], [0], [0], [1], [0, 0, 1, 1], [], []>} : vector<8x128xbf16>, vector<128x512xbf16>, vector<8x512xf32> -> vector<8x512xf32>
    %340 = arith.addf %337, %339 : vector<8x512xf32>
    %341 = vector.extract_strided_slice %340 {offsets = [0, 0], sizes = [8, 384], strides = [1, 1]} : vector<8x512xf32> to vector<8x384xf32>
    %342 = arith.negf %341 : vector<8x384xf32>
    %343 = math.exp %342 : vector<8x384xf32>
    %cst_64 = arith.constant 1.000000e+00 : f32
    %344 = vector.broadcast %cst_64 : f32 to vector<8x384xf32>
    %345 = arith.addf %344, %343 : vector<8x384xf32>
    %346 = arith.divf %344, %345 : vector<8x384xf32>
    %347 = vector.extract_strided_slice %346 {offsets = [0, 0], sizes = [8, 128], strides = [1, 1]} : vector<8x384xf32> to vector<8x128xf32>
    %348 = vector.extract_strided_slice %346 {offsets = [0, 128], sizes = [8, 128], strides = [1, 1]} : vector<8x384xf32> to vector<8x128xf32>
    %349 = vector.extract_strided_slice %346 {offsets = [0, 256], sizes = [8, 128], strides = [1, 1]} : vector<8x384xf32> to vector<8x128xf32>
    %350 = vector.extract_strided_slice %340 {offsets = [0, 384], sizes = [8, 128], strides = [1, 1]} : vector<8x512xf32> to vector<8x128xf32>
    %351 = math.tanh %350 : vector<8x128xf32>
    %352 = arith.mulf %348, %307 : vector<8x128xf32>
    %353 = arith.mulf %347, %351 : vector<8x128xf32>
    %354 = arith.addf %352, %353 : vector<8x128xf32>
    %355 = math.tanh %354 : vector<8x128xf32>
    %356 = arith.mulf %349, %355 : vector<8x128xf32>
    %357 = tpu.concatenate %356, %329 in 1 : vector<8x128xf32>, vector<8x128xf32> -> vector<8x256xf32>
    %358 = arith.truncf %357 : vector<8x256xf32> to vector<8x256xbf16>
    %cst_65 = arith.constant dense<0.000000e+00> : vector<8x512xf32>
    %359 = tpu.matmul %358, %1, %cst_65 {dimension_numbers = #tpu.dot_dimension_numbers<[1], [0], [0], [1], [0, 0, 1, 1], [], []>} : vector<8x256xbf16>, vector<256x512xbf16>, vector<8x512xf32> -> vector<8x512xf32>
    %360 = arith.addf %359, %4 : vector<8x512xf32>
    %361 = vector.extract_strided_slice %360 {offsets = [0, 0], sizes = [8, 384], strides = [1, 1]} : vector<8x512xf32> to vector<8x384xf32>
    %362 = arith.negf %361 : vector<8x384xf32>
    %363 = math.exp %362 : vector<8x384xf32>
    %cst_66 = arith.constant 1.000000e+00 : f32
    %364 = vector.broadcast %cst_66 : f32 to vector<8x384xf32>
    %365 = arith.addf %364, %363 : vector<8x384xf32>
    %366 = arith.divf %364, %365 : vector<8x384xf32>
    %367 = vector.extract_strided_slice %366 {offsets = [0, 0], sizes = [8, 128], strides = [1, 1]} : vector<8x384xf32> to vector<8x128xf32>
    %368 = vector.extract_strided_slice %366 {offsets = [0, 128], sizes = [8, 128], strides = [1, 1]} : vector<8x384xf32> to vector<8x128xf32>
    %369 = vector.extract_strided_slice %366 {offsets = [0, 256], sizes = [8, 128], strides = [1, 1]} : vector<8x384xf32> to vector<8x128xf32>
    %370 = vector.extract_strided_slice %360 {offsets = [0, 384], sizes = [8, 128], strides = [1, 1]} : vector<8x512xf32> to vector<8x128xf32>
    %371 = math.tanh %370 : vector<8x128xf32>
    %372 = arith.mulf %368, %327 : vector<8x128xf32>
    %373 = arith.mulf %367, %371 : vector<8x128xf32>
    %374 = arith.addf %372, %373 : vector<8x128xf32>
    %375 = math.tanh %374 : vector<8x128xf32>
    %376 = arith.mulf %369, %375 : vector<8x128xf32>
    %377 = arith.truncf %376 : vector<8x128xf32> to vector<8x128xbf16>
    %378 = arith.index_cast %c7_i32 : i32 to index
    %c0_67 = arith.constant 0 : index
    %c0_68 = arith.constant 0 : index
    %379 = vector.load %arg5[%378, %c0_67, %c0_68] : memref<8x8x128xbf16, #tpu.memory_space<vmem>>, vector<1x8x128xbf16>
    %380 = vector.shape_cast %379 : vector<1x8x128xbf16> to vector<8x128xbf16>
    %381 = vector.shape_cast %377 : vector<8x128xbf16> to vector<1x8x128xbf16>
    tpu.vector_store %arg5[%378, %c0_67, %c0_68], %381 {strides = array<i32>} : memref<8x8x128xbf16, #tpu.memory_space<vmem>>, vector<1x8x128xbf16>,
    %c8_i32 = arith.constant 8 : i32
    return
  }
  func.func @transform_0(%arg0: i32) -> (i32, i32, i32) {
    %c0_i32 = arith.constant 0 : i32
    %c0_i32_0 = arith.constant 0 : i32
    %c0_i32_1 = arith.constant 0 : i32
    return %c0_i32, %arg0, %c0_i32_0 : i32, i32, i32
  }
  func.func @transform_1(%arg0: i32) -> (i32, i32) {
    %c0_i32 = arith.constant 0 : i32
    %c0_i32_0 = arith.constant 0 : i32
    %c0_i32_1 = arith.constant 0 : i32
    return %c0_i32, %c0_i32_0 : i32, i32
  }
  func.func @transform_2(%arg0: i32) -> (i32, i32) {
    %c0_i32 = arith.constant 0 : i32
    %c0_i32_0 = arith.constant 0 : i32
    %c0_i32_1 = arith.constant 0 : i32
    return %c0_i32, %c0_i32_0 : i32, i32
  }
  func.func @transform_3(%arg0: i32) -> (i32, i32) {
    %c0_i32 = arith.constant 0 : i32
    %c0_i32_0 = arith.constant 0 : i32
    %c0_i32_1 = arith.constant 0 : i32
    return %c0_i32, %c0_i32_0 : i32, i32
  }
  func.func @transform_4(%arg0: i32) -> (i32, i32, i32) {
    %c0_i32 = arith.constant 0 : i32
    %c0_i32_0 = arith.constant 0 : i32
    %c0_i32_1 = arith.constant 0 : i32
    return %c0_i32, %arg0, %c0_i32_0 : i32, i32, i32
  }
}

module attributes {stable_mosaic.version = 11 : i64} {
  func.func @ar_head_kernel(%arg0: i32, %arg1: memref<5x64x25xbf16, #tpu.memory_space<vmem>>, %arg2: memref<64x128xbf16, #tpu.memory_space<vmem>>, %arg3: memref<25x512xbf16, #tpu.memory_space<vmem>>, %arg4: memref<128x512xbf16, #tpu.memory_space<vmem>>, %arg5: memref<128x512xbf16, #tpu.memory_space<vmem>>, %arg6: memref<1x512xf32, #tpu.memory_space<vmem>>, %arg7: memref<128x128xbf16, #tpu.memory_space<vmem>>, %arg8: memref<1x128xf32, #tpu.memory_space<vmem>>, %arg9: memref<5x64x128xf32, #tpu.memory_space<vmem>>, %arg10: memref<320x128xf32, #tpu.memory_space<vmem>>) attributes {dimension_semantics = [#tpu.dimension_semantics<parallel>], iteration_bounds = array<i64: 1>, scalar_prefetch = 0 : i64, scratch_operands = 1 : i64, tpu.core_type = #tpu.core_type<tc>, window_params = [{transform_indices = @transform_0, window_bounds = array<i64: 5, 64, 25>}, {transform_indices = @transform_1, window_bounds = array<i64: 64, 128>}, {pipeline_mode = #tpu.pipeline_mode<synchronous>, transform_indices = @transform_2, window_bounds = array<i64: 25, 512>}, {pipeline_mode = #tpu.pipeline_mode<synchronous>, transform_indices = @transform_3, window_bounds = array<i64: 128, 512>}, {pipeline_mode = #tpu.pipeline_mode<synchronous>, transform_indices = @transform_4, window_bounds = array<i64: 128, 512>}, {pipeline_mode = #tpu.pipeline_mode<synchronous>, transform_indices = @transform_5, window_bounds = array<i64: 1, 512>}, {pipeline_mode = #tpu.pipeline_mode<synchronous>, transform_indices = @transform_6, window_bounds = array<i64: 128, 128>}, {pipeline_mode = #tpu.pipeline_mode<synchronous>, transform_indices = @transform_7, window_bounds = array<i64: 1, 128>}, {transform_indices = @transform_8, window_bounds = array<i64: 5, 64, 128>}]} {
    %c0 = arith.constant 0 : index
    %c0_0 = arith.constant 0 : index
    %0 = vector.load %arg2[%c0, %c0_0] : memref<64x128xbf16, #tpu.memory_space<vmem>>, vector<64x128xbf16>
    %c0_1 = arith.constant 0 : index
    %c0_2 = arith.constant 0 : index
    %1 = vector.load %arg4[%c0_1, %c0_2] : memref<128x512xbf16, #tpu.memory_space<vmem>>, vector<128x512xbf16>
    %cst = arith.constant dense<0.000000e+00> : vector<64x512xf32>
    %2 = tpu.matmul %0, %1, %cst {dimension_numbers = #tpu.dot_dimension_numbers<[1], [0], [0], [1], [0, 0, 1, 1], [], []>} : vector<64x128xbf16>, vector<128x512xbf16>, vector<64x512xf32> -> vector<64x512xf32>
    %c0_3 = arith.constant 0 : index
    %c0_4 = arith.constant 0 : index
    %3 = vector.load %arg6[%c0_3, %c0_4] : memref<1x512xf32, #tpu.memory_space<vmem>>, vector<1x512xf32>
    %4 = vector.broadcast %3 : vector<1x512xf32> to vector<64x512xf32>
    %5 = arith.addf %2, %4 : vector<64x512xf32>
    %c0_5 = arith.constant 0 : index
    %c0_6 = arith.constant 0 : index
    %c0_7 = arith.constant 0 : index
    %6 = vector.load %arg1[%c0_5, %c0_6, %c0_7] : memref<5x64x25xbf16, #tpu.memory_space<vmem>>, vector<5x64x25xbf16>
    %7 = vector.shape_cast %6 : vector<5x64x25xbf16> to vector<320x25xbf16>
    %c0_8 = arith.constant 0 : index
    %c0_9 = arith.constant 0 : index
    %8 = vector.load %arg3[%c0_8, %c0_9] : memref<25x512xbf16, #tpu.memory_space<vmem>>, vector<25x512xbf16>
    %cst_10 = arith.constant dense<0.000000e+00> : vector<320x512xf32>
    %9 = tpu.matmul %7, %8, %cst_10 {dimension_numbers = #tpu.dot_dimension_numbers<[1], [0], [0], [1], [0, 0, 1, 1], [], []>} : vector<320x25xbf16>, vector<25x512xbf16>, vector<320x512xf32> -> vector<320x512xf32>
    %c0_11 = arith.constant 0 : index
    %c0_12 = arith.constant 0 : index
    %10 = vector.load %arg5[%c0_11, %c0_12] : memref<128x512xbf16, #tpu.memory_space<vmem>>, vector<128x512xbf16>
    %cst_13 = arith.constant 0.000000e+00 : f32
    %11 = vector.broadcast %cst_13 : f32 to vector<64x128xf32>
    %cst_14 = arith.constant 0.000000e+00 : f32
    %12 = vector.broadcast %cst_14 : f32 to vector<64x128xf32>
    %13 = vector.extract_strided_slice %9 {offsets = [0, 0], sizes = [64, 512], strides = [1, 1]} : vector<320x512xf32> to vector<64x512xf32>
    %14 = arith.addf %5, %13 : vector<64x512xf32>
    %15 = arith.truncf %11 : vector<64x128xf32> to vector<64x128xbf16>
    %cst_15 = arith.constant dense<0.000000e+00> : vector<64x512xf32>
    %16 = tpu.matmul %15, %10, %cst_15 {dimension_numbers = #tpu.dot_dimension_numbers<[1], [0], [0], [1], [0, 0, 1, 1], [], []>} : vector<64x128xbf16>, vector<128x512xbf16>, vector<64x512xf32> -> vector<64x512xf32>
    %17 = arith.addf %14, %16 : vector<64x512xf32>
    %18 = vector.extract_strided_slice %17 {offsets = [0, 0], sizes = [64, 384], strides = [1, 1]} : vector<64x512xf32> to vector<64x384xf32>
    %19 = arith.negf %18 : vector<64x384xf32>
    %20 = math.exp %19 : vector<64x384xf32>
    %cst_16 = arith.constant 1.000000e+00 : f32
    %21 = vector.broadcast %cst_16 : f32 to vector<64x384xf32>
    %22 = arith.addf %21, %20 : vector<64x384xf32>
    %23 = arith.divf %21, %22 : vector<64x384xf32>
    %24 = vector.extract_strided_slice %23 {offsets = [0, 0], sizes = [64, 128], strides = [1, 1]} : vector<64x384xf32> to vector<64x128xf32>
    %25 = vector.extract_strided_slice %23 {offsets = [0, 128], sizes = [64, 128], strides = [1, 1]} : vector<64x384xf32> to vector<64x128xf32>
    %26 = vector.extract_strided_slice %23 {offsets = [0, 256], sizes = [64, 128], strides = [1, 1]} : vector<64x384xf32> to vector<64x128xf32>
    %27 = vector.extract_strided_slice %17 {offsets = [0, 384], sizes = [64, 128], strides = [1, 1]} : vector<64x512xf32> to vector<64x128xf32>
    %28 = math.tanh %27 : vector<64x128xf32>
    %29 = arith.mulf %25, %12 : vector<64x128xf32>
    %30 = arith.mulf %24, %28 : vector<64x128xf32>
    %31 = arith.addf %29, %30 : vector<64x128xf32>
    %32 = math.tanh %31 : vector<64x128xf32>
    %33 = arith.mulf %26, %32 : vector<64x128xf32>
    %c0_17 = arith.constant 0 : index
    %c0_18 = arith.constant 0 : index
    %34 = vector.load %arg10[%c0_17, %c0_18] : memref<320x128xf32, #tpu.memory_space<vmem>>, vector<64x128xf32>
    tpu.vector_store %arg10[%c0_17, %c0_18], %33 {strides = array<i32>} : memref<320x128xf32, #tpu.memory_space<vmem>>, vector<64x128xf32>,
    %35 = vector.extract_strided_slice %9 {offsets = [64, 0], sizes = [64, 512], strides = [1, 1]} : vector<320x512xf32> to vector<64x512xf32>
    %36 = arith.addf %5, %35 : vector<64x512xf32>
    %37 = arith.truncf %33 : vector<64x128xf32> to vector<64x128xbf16>
    %cst_19 = arith.constant dense<0.000000e+00> : vector<64x512xf32>
    %38 = tpu.matmul %37, %10, %cst_19 {dimension_numbers = #tpu.dot_dimension_numbers<[1], [0], [0], [1], [0, 0, 1, 1], [], []>} : vector<64x128xbf16>, vector<128x512xbf16>, vector<64x512xf32> -> vector<64x512xf32>
    %39 = arith.addf %36, %38 : vector<64x512xf32>
    %40 = vector.extract_strided_slice %39 {offsets = [0, 0], sizes = [64, 384], strides = [1, 1]} : vector<64x512xf32> to vector<64x384xf32>
    %41 = arith.negf %40 : vector<64x384xf32>
    %42 = math.exp %41 : vector<64x384xf32>
    %cst_20 = arith.constant 1.000000e+00 : f32
    %43 = vector.broadcast %cst_20 : f32 to vector<64x384xf32>
    %44 = arith.addf %43, %42 : vector<64x384xf32>
    %45 = arith.divf %43, %44 : vector<64x384xf32>
    %46 = vector.extract_strided_slice %45 {offsets = [0, 0], sizes = [64, 128], strides = [1, 1]} : vector<64x384xf32> to vector<64x128xf32>
    %47 = vector.extract_strided_slice %45 {offsets = [0, 128], sizes = [64, 128], strides = [1, 1]} : vector<64x384xf32> to vector<64x128xf32>
    %48 = vector.extract_strided_slice %45 {offsets = [0, 256], sizes = [64, 128], strides = [1, 1]} : vector<64x384xf32> to vector<64x128xf32>
    %49 = vector.extract_strided_slice %39 {offsets = [0, 384], sizes = [64, 128], strides = [1, 1]} : vector<64x512xf32> to vector<64x128xf32>
    %50 = math.tanh %49 : vector<64x128xf32>
    %51 = arith.mulf %47, %31 : vector<64x128xf32>
    %52 = arith.mulf %46, %50 : vector<64x128xf32>
    %53 = arith.addf %51, %52 : vector<64x128xf32>
    %54 = math.tanh %53 : vector<64x128xf32>
    %55 = arith.mulf %48, %54 : vector<64x128xf32>
    %c64 = arith.constant 64 : index
    %c0_21 = arith.constant 0 : index
    %56 = vector.load %arg10[%c64, %c0_21] : memref<320x128xf32, #tpu.memory_space<vmem>>, vector<64x128xf32>
    tpu.vector_store %arg10[%c64, %c0_21], %55 {strides = array<i32>} : memref<320x128xf32, #tpu.memory_space<vmem>>, vector<64x128xf32>,
    %57 = vector.extract_strided_slice %9 {offsets = [128, 0], sizes = [64, 512], strides = [1, 1]} : vector<320x512xf32> to vector<64x512xf32>
    %58 = arith.addf %5, %57 : vector<64x512xf32>
    %59 = arith.truncf %55 : vector<64x128xf32> to vector<64x128xbf16>
    %cst_22 = arith.constant dense<0.000000e+00> : vector<64x512xf32>
    %60 = tpu.matmul %59, %10, %cst_22 {dimension_numbers = #tpu.dot_dimension_numbers<[1], [0], [0], [1], [0, 0, 1, 1], [], []>} : vector<64x128xbf16>, vector<128x512xbf16>, vector<64x512xf32> -> vector<64x512xf32>
    %61 = arith.addf %58, %60 : vector<64x512xf32>
    %62 = vector.extract_strided_slice %61 {offsets = [0, 0], sizes = [64, 384], strides = [1, 1]} : vector<64x512xf32> to vector<64x384xf32>
    %63 = arith.negf %62 : vector<64x384xf32>
    %64 = math.exp %63 : vector<64x384xf32>
    %cst_23 = arith.constant 1.000000e+00 : f32
    %65 = vector.broadcast %cst_23 : f32 to vector<64x384xf32>
    %66 = arith.addf %65, %64 : vector<64x384xf32>
    %67 = arith.divf %65, %66 : vector<64x384xf32>
    %68 = vector.extract_strided_slice %67 {offsets = [0, 0], sizes = [64, 128], strides = [1, 1]} : vector<64x384xf32> to vector<64x128xf32>
    %69 = vector.extract_strided_slice %67 {offsets = [0, 128], sizes = [64, 128], strides = [1, 1]} : vector<64x384xf32> to vector<64x128xf32>
    %70 = vector.extract_strided_slice %67 {offsets = [0, 256], sizes = [64, 128], strides = [1, 1]} : vector<64x384xf32> to vector<64x128xf32>
    %71 = vector.extract_strided_slice %61 {offsets = [0, 384], sizes = [64, 128], strides = [1, 1]} : vector<64x512xf32> to vector<64x128xf32>
    %72 = math.tanh %71 : vector<64x128xf32>
    %73 = arith.mulf %69, %53 : vector<64x128xf32>
    %74 = arith.mulf %68, %72 : vector<64x128xf32>
    %75 = arith.addf %73, %74 : vector<64x128xf32>
    %76 = math.tanh %75 : vector<64x128xf32>
    %77 = arith.mulf %70, %76 : vector<64x128xf32>
    %c128 = arith.constant 128 : index
    %c0_24 = arith.constant 0 : index
    %78 = vector.load %arg10[%c128, %c0_24] : memref<320x128xf32, #tpu.memory_space<vmem>>, vector<64x128xf32>
    tpu.vector_store %arg10[%c128, %c0_24], %77 {strides = array<i32>} : memref<320x128xf32, #tpu.memory_space<vmem>>, vector<64x128xf32>,
    %79 = vector.extract_strided_slice %9 {offsets = [192, 0], sizes = [64, 512], strides = [1, 1]} : vector<320x512xf32> to vector<64x512xf32>
    %80 = arith.addf %5, %79 : vector<64x512xf32>
    %81 = arith.truncf %77 : vector<64x128xf32> to vector<64x128xbf16>
    %cst_25 = arith.constant dense<0.000000e+00> : vector<64x512xf32>
    %82 = tpu.matmul %81, %10, %cst_25 {dimension_numbers = #tpu.dot_dimension_numbers<[1], [0], [0], [1], [0, 0, 1, 1], [], []>} : vector<64x128xbf16>, vector<128x512xbf16>, vector<64x512xf32> -> vector<64x512xf32>
    %83 = arith.addf %80, %82 : vector<64x512xf32>
    %84 = vector.extract_strided_slice %83 {offsets = [0, 0], sizes = [64, 384], strides = [1, 1]} : vector<64x512xf32> to vector<64x384xf32>
    %85 = arith.negf %84 : vector<64x384xf32>
    %86 = math.exp %85 : vector<64x384xf32>
    %cst_26 = arith.constant 1.000000e+00 : f32
    %87 = vector.broadcast %cst_26 : f32 to vector<64x384xf32>
    %88 = arith.addf %87, %86 : vector<64x384xf32>
    %89 = arith.divf %87, %88 : vector<64x384xf32>
    %90 = vector.extract_strided_slice %89 {offsets = [0, 0], sizes = [64, 128], strides = [1, 1]} : vector<64x384xf32> to vector<64x128xf32>
    %91 = vector.extract_strided_slice %89 {offsets = [0, 128], sizes = [64, 128], strides = [1, 1]} : vector<64x384xf32> to vector<64x128xf32>
    %92 = vector.extract_strided_slice %89 {offsets = [0, 256], sizes = [64, 128], strides = [1, 1]} : vector<64x384xf32> to vector<64x128xf32>
    %93 = vector.extract_strided_slice %83 {offsets = [0, 384], sizes = [64, 128], strides = [1, 1]} : vector<64x512xf32> to vector<64x128xf32>
    %94 = math.tanh %93 : vector<64x128xf32>
    %95 = arith.mulf %91, %75 : vector<64x128xf32>
    %96 = arith.mulf %90, %94 : vector<64x128xf32>
    %97 = arith.addf %95, %96 : vector<64x128xf32>
    %98 = math.tanh %97 : vector<64x128xf32>
    %99 = arith.mulf %92, %98 : vector<64x128xf32>
    %c192 = arith.constant 192 : index
    %c0_27 = arith.constant 0 : index
    %100 = vector.load %arg10[%c192, %c0_27] : memref<320x128xf32, #tpu.memory_space<vmem>>, vector<64x128xf32>
    tpu.vector_store %arg10[%c192, %c0_27], %99 {strides = array<i32>} : memref<320x128xf32, #tpu.memory_space<vmem>>, vector<64x128xf32>,
    %101 = vector.extract_strided_slice %9 {offsets = [256, 0], sizes = [64, 512], strides = [1, 1]} : vector<320x512xf32> to vector<64x512xf32>
    %102 = arith.addf %5, %101 : vector<64x512xf32>
    %103 = arith.truncf %99 : vector<64x128xf32> to vector<64x128xbf16>
    %cst_28 = arith.constant dense<0.000000e+00> : vector<64x512xf32>
    %104 = tpu.matmul %103, %10, %cst_28 {dimension_numbers = #tpu.dot_dimension_numbers<[1], [0], [0], [1], [0, 0, 1, 1], [], []>} : vector<64x128xbf16>, vector<128x512xbf16>, vector<64x512xf32> -> vector<64x512xf32>
    %105 = arith.addf %102, %104 : vector<64x512xf32>
    %106 = vector.extract_strided_slice %105 {offsets = [0, 0], sizes = [64, 384], strides = [1, 1]} : vector<64x512xf32> to vector<64x384xf32>
    %107 = arith.negf %106 : vector<64x384xf32>
    %108 = math.exp %107 : vector<64x384xf32>
    %cst_29 = arith.constant 1.000000e+00 : f32
    %109 = vector.broadcast %cst_29 : f32 to vector<64x384xf32>
    %110 = arith.addf %109, %108 : vector<64x384xf32>
    %111 = arith.divf %109, %110 : vector<64x384xf32>
    %112 = vector.extract_strided_slice %111 {offsets = [0, 0], sizes = [64, 128], strides = [1, 1]} : vector<64x384xf32> to vector<64x128xf32>
    %113 = vector.extract_strided_slice %111 {offsets = [0, 128], sizes = [64, 128], strides = [1, 1]} : vector<64x384xf32> to vector<64x128xf32>
    %114 = vector.extract_strided_slice %111 {offsets = [0, 256], sizes = [64, 128], strides = [1, 1]} : vector<64x384xf32> to vector<64x128xf32>
    %115 = vector.extract_strided_slice %105 {offsets = [0, 384], sizes = [64, 128], strides = [1, 1]} : vector<64x512xf32> to vector<64x128xf32>
    %116 = math.tanh %115 : vector<64x128xf32>
    %117 = arith.mulf %113, %97 : vector<64x128xf32>
    %118 = arith.mulf %112, %116 : vector<64x128xf32>
    %119 = arith.addf %117, %118 : vector<64x128xf32>
    %120 = math.tanh %119 : vector<64x128xf32>
    %121 = arith.mulf %114, %120 : vector<64x128xf32>
    %c256 = arith.constant 256 : index
    %c0_30 = arith.constant 0 : index
    %122 = vector.load %arg10[%c256, %c0_30] : memref<320x128xf32, #tpu.memory_space<vmem>>, vector<64x128xf32>
    tpu.vector_store %arg10[%c256, %c0_30], %121 {strides = array<i32>} : memref<320x128xf32, #tpu.memory_space<vmem>>, vector<64x128xf32>,
    %c0_31 = arith.constant 0 : index
    %c0_32 = arith.constant 0 : index
    %123 = vector.load %arg10[%c0_31, %c0_32] : memref<320x128xf32, #tpu.memory_space<vmem>>, vector<320x128xf32>
    %c0_33 = arith.constant 0 : index
    %c0_34 = arith.constant 0 : index
    %124 = vector.load %arg7[%c0_33, %c0_34] : memref<128x128xbf16, #tpu.memory_space<vmem>>, vector<128x128xbf16>
    %125 = arith.truncf %123 : vector<320x128xf32> to vector<320x128xbf16>
    %cst_35 = arith.constant dense<0.000000e+00> : vector<320x128xf32>
    %126 = tpu.matmul %125, %124, %cst_35 {dimension_numbers = #tpu.dot_dimension_numbers<[1], [0], [0], [1], [0, 0, 1, 1], [], []>} : vector<320x128xbf16>, vector<128x128xbf16>, vector<320x128xf32> -> vector<320x128xf32>
    %c0_36 = arith.constant 0 : index
    %c0_37 = arith.constant 0 : index
    %127 = vector.load %arg8[%c0_36, %c0_37] : memref<1x128xf32, #tpu.memory_space<vmem>>, vector<1x128xf32>
    %128 = vector.broadcast %127 : vector<1x128xf32> to vector<320x128xf32>
    %129 = arith.addf %126, %128 : vector<320x128xf32>
    %130 = vector.shape_cast %129 : vector<320x128xf32> to vector<5x64x128xf32>
    %c0_38 = arith.constant 0 : index
    %c0_39 = arith.constant 0 : index
    %c0_40 = arith.constant 0 : index
    %131 = vector.load %arg9[%c0_38, %c0_39, %c0_40] : memref<5x64x128xf32, #tpu.memory_space<vmem>>, vector<5x64x128xf32>
    tpu.vector_store %arg9[%c0_38, %c0_39, %c0_40], %130 {strides = array<i32>} : memref<5x64x128xf32, #tpu.memory_space<vmem>>, vector<5x64x128xf32>,
    return
  }
  func.func @transform_0(%arg0: i32) -> (i32, i32, i32) {
    %c0_i32 = arith.constant 0 : i32
    %c0_i32_0 = arith.constant 0 : i32
    %c0_i32_1 = arith.constant 0 : i32
    return %c0_i32, %arg0, %c0_i32_0 : i32, i32, i32
  }
  func.func @transform_1(%arg0: i32) -> (i32, i32) {
    %c0_i32 = arith.constant 0 : i32
    %c0_i32_0 = arith.constant 0 : i32
    return %arg0, %c0_i32 : i32, i32
  }
  func.func @transform_2(%arg0: i32) -> (i32, i32) {
    %c0_i32 = arith.constant 0 : i32
    %c0_i32_0 = arith.constant 0 : i32
    %c0_i32_1 = arith.constant 0 : i32
    return %c0_i32, %c0_i32_0 : i32, i32
  }
  func.func @transform_3(%arg0: i32) -> (i32, i32) {
    %c0_i32 = arith.constant 0 : i32
    %c0_i32_0 = arith.constant 0 : i32
    %c0_i32_1 = arith.constant 0 : i32
    return %c0_i32, %c0_i32_0 : i32, i32
  }
  func.func @transform_4(%arg0: i32) -> (i32, i32) {
    %c0_i32 = arith.constant 0 : i32
    %c0_i32_0 = arith.constant 0 : i32
    %c0_i32_1 = arith.constant 0 : i32
    return %c0_i32, %c0_i32_0 : i32, i32
  }
  func.func @transform_5(%arg0: i32) -> (i32, i32) {
    %c0_i32 = arith.constant 0 : i32
    %c0_i32_0 = arith.constant 0 : i32
    %c0_i32_1 = arith.constant 0 : i32
    return %c0_i32, %c0_i32_0 : i32, i32
  }
  func.func @transform_6(%arg0: i32) -> (i32, i32) {
    %c0_i32 = arith.constant 0 : i32
    %c0_i32_0 = arith.constant 0 : i32
    %c0_i32_1 = arith.constant 0 : i32
    return %c0_i32, %c0_i32_0 : i32, i32
  }
  func.func @transform_7(%arg0: i32) -> (i32, i32) {
    %c0_i32 = arith.constant 0 : i32
    %c0_i32_0 = arith.constant 0 : i32
    %c0_i32_1 = arith.constant 0 : i32
    return %c0_i32, %c0_i32_0 : i32, i32
  }
  func.func @transform_8(%arg0: i32) -> (i32, i32, i32) {
    %c0_i32 = arith.constant 0 : i32
    %c0_i32_0 = arith.constant 0 : i32
    %c0_i32_1 = arith.constant 0 : i32
    return %c0_i32, %arg0, %c0_i32_0 : i32, i32, i32
  }
}

</mosaic_0001>

<llo_original>
// kernel: ar_belief_forward.3
$region0: #{ar_belief_forward.3}
  #allocation0 [shape = 'u32[]', space=smem, size = 0x4, offset = 0x4, fixed_abs, tag = 'smem constant byte address 0x4 - core index']
  #allocation1 [shape = 'u32[144,128]{1,0:T(1,128)}', space=vmem, size = 0x12000, scoped, tag = 'internal scratch']
  %s0 = inlined_call_operand.vmem [shape: bf16[64,128], index: 0, kind: input, shape index: {}]
  %s1 = inlined_call_operand.vmem [shape: bf16[128,128], index: 1, kind: input, shape index: {}]
  %s2 = inlined_call_operand.vmem [shape: f32[1,128], index: 2, kind: input, shape index: {}]
  %s3 = inlined_call_operand.vmem [shape: bf16[128,128], index: 3, kind: input, shape index: {}]
  %s4 = inlined_call_operand.vmem [shape: f32[1,128], index: 4, kind: input, shape index: {}]
  %s5 = inlined_call_operand.vmem [shape: bf16[128,512], index: 5, kind: input, shape index: {}]
  %s6 = inlined_call_operand.vmem [shape: f32[1,512], index: 6, kind: input, shape index: {}]
  %s7 = inlined_call_operand.vmem [shape: f32[64,512], index: 7, kind: output, shape index: {}]
  %s8 = sld [smem:[#allocation0]]
  $region38: #{ar_belief_forward.3} parent=0
    _
  %s10 = ssub.s32 1, %s8
  %s11 = scalar_select 0, %s10, %s8
  // Predicated region
  $region2: #{ar_belief_forward.3} parent=0 // pred_check
    _
  $region3: #{ar_belief_forward.3} parent=0 // pred_check_branch
    %13 = sbr.rel (0) target = $region5
  $region4: #{ar_belief_forward.3} parent=0 // pred_region
    _
  $region5: #{ar_belief_forward.3} parent=0 // pred_fallthru
    _
  // Predicated region
  $region6: #{ar_belief_forward.3} parent=0 // pred_check
    _
  $region7: #{ar_belief_forward.3} parent=0 // pred_check_branch
    %15 = sbr.rel (0) target = $region9
  $region8: #{ar_belief_forward.3} parent=0 // pred_region
    _
  $region9: #{ar_belief_forward.3} parent=0 // pred_fallthru
    _
  // Predicated region
  $region10: #{ar_belief_forward.3} parent=0 // pred_check
    _
  $region11: #{ar_belief_forward.3} parent=0 // pred_check_branch
    %17 = sbr.rel (0) target = $region13
  $region12: #{ar_belief_forward.3} parent=0 // pred_region
    _
  $region13: #{ar_belief_forward.3} parent=0 // pred_fallthru
    _
  // Predicated region
  $region14: #{ar_belief_forward.3} parent=0 // pred_check
    _
  $region15: #{ar_belief_forward.3} parent=0 // pred_check_branch
    %19 = sbr.rel (0) target = $region17
  $region16: #{ar_belief_forward.3} parent=0 // pred_region
    _
  $region17: #{ar_belief_forward.3} parent=0 // pred_fallthru
    _
  // Predicated region
  $region18: #{ar_belief_forward.3} parent=0 // pred_check
    _
  $region19: #{ar_belief_forward.3} parent=0 // pred_check_branch
    %21 = sbr.rel (0) target = $region21
  $region20: #{ar_belief_forward.3} parent=0 // pred_region
    _
  $region21: #{ar_belief_forward.3} parent=0 // pred_fallthru
    _
  // Predicated region
  $region22: #{ar_belief_forward.3} parent=0 // pred_check
    _
  $region23: #{ar_belief_forward.3} parent=0 // pred_check_branch
    %23 = sbr.rel (0) target = $region25
  $region24: #{ar_belief_forward.3} parent=0 // pred_region
    _
  $region25: #{ar_belief_forward.3} parent=0 // pred_fallthru
    _
  // Predicated region
  $region26: #{ar_belief_forward.3} parent=0 // pred_check
    _
  $region27: #{ar_belief_forward.3} parent=0 // pred_check_branch
    %25 = sbr.rel (0) target = $region29
  $region28: #{ar_belief_forward.3} parent=0 // pred_region
    _
  $region29: #{ar_belief_forward.3} parent=0 // pred_fallthru
    _
  %v27 = vld [vmem:[%s0] sm:$0xf]
  %v28 = vld [vmem:[%s0 + $0x4] sm:$0xf]
  %v29 = vld [vmem:[%s0 + $0x8] sm:$0xf]
  %v30 = vld [vmem:[%s0 + $0xc] sm:$0xf]
  %v31 = vld [vmem:[%s0 + $0x10] sm:$0xf]
  %v32 = vld [vmem:[%s0 + $0x14] sm:$0xf]
  %v33 = vld [vmem:[%s0 + $0x18] sm:$0xf]
  %v34 = vld [vmem:[%s0 + $0x1c] sm:$0xf]
  %v35 = vld [vmem:[%s1] sm:$0xf]
  %v36 = vld [vmem:[%s1 + $0x4] sm:$0xf]
  %v37 = vld [vmem:[%s1 + $0x8] sm:$0xf]
  %v38 = vld [vmem:[%s1 + $0xc] sm:$0xf]
  %v39 = vld [vmem:[%s1 + $0x10] sm:$0xf]
  %v40 = vld [vmem:[%s1 + $0x14] sm:$0xf]
  %v41 = vld [vmem:[%s1 + $0x18] sm:$0xf]
  %v42 = vld [vmem:[%s1 + $0x1c] sm:$0xf]
  %v43 = vld [vmem:[%s1 + $0x20] sm:$0xf]
  %v44 = vld [vmem:[%s1 + $0x24] sm:$0xf]
  %v45 = vld [vmem:[%s1 + $0x28] sm:$0xf]
  %v46 = vld [vmem:[%s1 + $0x2c] sm:$0xf]
  %v47 = vld [vmem:[%s1 + $0x30] sm:$0xf]
  %v48 = vld [vmem:[%s1 + $0x34] sm:$0xf]
  %v49 = vld [vmem:[%s1 + $0x38] sm:$0xf]
  %v50 = vld [vmem:[%s1 + $0x3c] sm:$0xf]
  %v51 = vld [vmem:[%s2] sm:$0x1]
  %v53 = vlaneseq
  %v54 = vshrl.u32 %v53, 7
  %v55 = vsub.s32 0, %v54
  %v56 = vrot.slane %v51, %v55
  %v66 = vunpack.c.l.b16 %v27
  %v67 = vunpack.c.l.b16 %v28
  %v68 = vunpack.c.l.b16 %v29
  %v69 = vunpack.c.l.b16 %v30
  %v70 = vunpack.c.l.b16 %v31
  %v71 = vunpack.c.l.b16 %v32
  %v72 = vunpack.c.l.b16 %v33
  %v73 = vunpack.c.l.b16 %v34
  %v74 = vpack.c.b16 %v67, %v66
  %v75 = vpack.c.b16 %v69, %v68
  %v76 = vpack.c.b16 %v71, %v70
  %v77 = vpack.c.b16 %v73, %v72
  %v98 = vunpack.c.l.b16 %v35
  %v99 = vunpack.c.l.b16 %v36
  %v100 = vunpack.c.l.b16 %v37
  %v101 = vunpack.c.l.b16 %v38
  %v102 = vunpack.c.l.b16 %v39
  %v103 = vunpack.c.l.b16 %v40
  %v104 = vunpack.c.l.b16 %v41
  %v105 = vunpack.c.l.b16 %v42
  %v106 = vunpack.c.l.b16 %v43
  %v107 = vunpack.c.l.b16 %v44
  %v108 = vunpack.c.l.b16 %v45
  %v109 = vunpack.c.l.b16 %v46
  %v110 = vunpack.c.l.b16 %v47
  %v111 = vunpack.c.l.b16 %v48
  %v112 = vunpack.c.l.b16 %v49
  %v113 = vunpack.c.l.b16 %v50
  %v114 = vpack.c.b16 %v99, %v98
  %v115 = vpack.c.b16 %v101, %v100
  %v116 = vpack.c.b16 %v103, %v102
  %v117 = vpack.c.b16 %v105, %v104
  %v118 = vpack.c.b16 %v107, %v106
  %v119 = vpack.c.b16 %v109, %v108
  %v120 = vpack.c.b16 %v111, %v110
  %v121 = vpack.c.b16 %v113, %v112
  %130 = vmatprep.subr.bf16.mxu0 0
  %131 = vmatpush1.bf16.msra.mxu0 %v114
  %132 = vmatprep.subr.bf16.mxu0 0
  %133 = vmatpush1.bf16.msra.mxu0 %v115
  %134 = vmatprep.subr.bf16.mxu0 0
  %135 = vmatpush1.bf16.msra.mxu0 %v116
  %136 = vmatprep.subr.bf16.mxu0 0
  %137 = vmatpush1.bf16.msra.mxu0 %v117
  %138 = vmatprep.subr.bf16.mxu0 0
  %139 = vmatpush1.bf16.msra.mxu0 %v118
  %140 = vmatprep.subr.bf16.mxu0 0
  %141 = vmatpush1.bf16.msra.mxu0 %v119
  %142 = vmatprep.subr.bf16.mxu0 0
  %143 = vmatpush1.bf16.msra.mxu0 %v120
  %144 = vmatprep.subr.bf16.mxu0 0
  %145 = vmatpush1.bf16.msra.mxu0 %v121
  %146 = vmatprep.subr.bf16.mxu0 0
  %147 = vmatpush1.bf16.msra.mxu0 0
  %148 = vmatprep.subr.bf16.mxu0 0
  %149 = vmatpush1.bf16.msra.mxu0 0
  %150 = vmatprep.subr.bf16.mxu0 0
  %151 = vmatpush1.bf16.msra.mxu0 0
  %152 = vmatprep.subr.bf16.mxu0 0
  %153 = vmatpush1.bf16.msra.mxu0 0
  %154 = vmatprep.subr.bf16.mxu0 0
  %155 = vmatpush1.bf16.msra.mxu0 0
  %156 = vmatprep.subr.bf16.mxu0 0
  %157 = vmatpush1.bf16.msra.mxu0 0
  %158 = vmatprep.subr.bf16.mxu0 0
  %159 = vmatpush1.bf16.msra.mxu0 0
  %160 = vmatprep.subr.bf16.mxu0 0
  %161 = vmatpush1.bf16.msra.mxu0 0
  %162 = vmatprep.mubr.bf16.mxu0 0
  %163 = vmatmul.mubr.bf16.gmra.mrb[0].mxu0 %v74
  %v164 = vpop.f32.mrb[0].mxu0
  %v165 = vadd.f32 %v56, %v164
  %v166 = vpop.f32.mrb[0].mxu0
  %v167 = vpop.f32.mrb[0].mxu0
  %v168 = vadd.f32 %v56, %v167
  %v169 = vpop.f32.mrb[0].mxu0
  %170 = vmatprep.mubr.bf16.mxu0 0
  %171 = vmatmul.mubr.bf16.gmra.mrb[0].mxu0 %v75
  %v172 = vpop.f32.mrb[0].mxu0
  %v173 = vadd.f32 %v56, %v172
  %v174 = vpop.f32.mrb[0].mxu0
  %v175 = vpop.f32.mrb[0].mxu0
  %v176 = vadd.f32 %v56, %v175
  %v177 = vpop.f32.mrb[0].mxu0
  %178 = vmatprep.mubr.bf16.mxu0 0
  %179 = vmatmul.mubr.bf16.gmra.mrb[0].mxu0 %v76
  %v180 = vpop.f32.mrb[0].mxu0
  %v181 = vadd.f32 %v56, %v180
  %v182 = vpop.f32.mrb[0].mxu0
  %v183 = vpop.f32.mrb[0].mxu0
  %v184 = vadd.f32 %v56, %v183
  %v185 = vpop.f32.mrb[0].mxu0
  %186 = vmatprep.mubr.bf16.mxu0 0
  %187 = vmatmul.mubr.bf16.gmra.mrb[0].mxu0 %v77
  %v188 = vpop.f32.mrb[0].mxu0
  %v189 = vadd.f32 %v56, %v188
  %v190 = vpop.f32.mrb[0].mxu0
  %v191 = vpop.f32.mrb[0].mxu0
  %v192 = vadd.f32 %v56, %v191
  %v193 = vpop.f32.mrb[0].mxu0
  %194 = vdwg.mxu0
  %v195 = vmax.f32 %v165, 0.0
  %v196 = vmax.f32 %v168, 0.0
  %v197 = vmax.f32 %v173, 0.0
  %v198 = vmax.f32 %v176, 0.0
  %v199 = vmax.f32 %v181, 0.0
  %v200 = vmax.f32 %v184, 0.0
  %v201 = vmax.f32 %v189, 0.0
  %v202 = vmax.f32 %v192, 0.0
  %v203 = vld [vmem:[%s3] sm:$0xf]
  %v204 = vld [vmem:[%s3 + $0x4] sm:$0xf]
  %v205 = vld [vmem:[%s3 + $0x8] sm:$0xf]
  %v206 = vld [vmem:[%s3 + $0xc] sm:$0xf]
  %v207 = vld [vmem:[%s3 + $0x10] sm:$0xf]
  %v208 = vld [vmem:[%s3 + $0x14] sm:$0xf]
  %v209 = vld [vmem:[%s3 + $0x18] sm:$0xf]
  %v210 = vld [vmem:[%s3 + $0x1c] sm:$0xf]
  %v211 = vld [vmem:[%s3 + $0x20] sm:$0xf]
  %v212 = vld [vmem:[%s3 + $0x24] sm:$0xf]
  %v213 = vld [vmem:[%s3 + $0x28] sm:$0xf]
  %v214 = vld [vmem:[%s3 + $0x2c] sm:$0xf]
  %v215 = vld [vmem:[%s3 + $0x30] sm:$0xf]
  %v216 = vld [vmem:[%s3 + $0x34] sm:$0xf]
  %v217 = vld [vmem:[%s3 + $0x38] sm:$0xf]
  %v218 = vld [vmem:[%s3 + $0x3c] sm:$0xf]
  %v219 = vpack.c.bf16 %v196, %v195
  %v220 = vpack.c.bf16 %v198, %v197
  %v221 = vpack.c.bf16 %v200, %v199
  %v222 = vpack.c.bf16 %v202, %v201
  %v223 = vld [vmem:[%s4] sm:$0x1]
  %v225 = vlaneseq
  %v226 = vshrl.u32 %v225, 7
  %v227 = vsub.s32 0, %v226
  %v228 = vrot.slane %v223, %v227
  %v246 = vunpack.c.l.b16 %v203
  %v247 = vunpack.c.l.b16 %v204
  %v248 = vunpack.c.l.b16 %v205
  %v249 = vunpack.c.l.b16 %v206
  %v250 = vunpack.c.l.b16 %v207
  %v251 = vunpack.c.l.b16 %v208
  %v252 = vunpack.c.l.b16 %v209
  %v253 = vunpack.c.l.b16 %v210
  %v254 = vunpack.c.l.b16 %v211
  %v255 = vunpack.c.l.b16 %v212
  %v256 = vunpack.c.l.b16 %v213
  %v257 = vunpack.c.l.b16 %v214
  %v258 = vunpack.c.l.b16 %v215
  %v259 = vunpack.c.l.b16 %v216
  %v260 = vunpack.c.l.b16 %v217
  %v261 = vunpack.c.l.b16 %v218
  %v262 = vpack.c.b16 %v247, %v246
  %v263 = vpack.c.b16 %v249, %v248
  %v264 = vpack.c.b16 %v251, %v250
  %v265 = vpack.c.b16 %v253, %v252
  %v266 = vpack.c.b16 %v255, %v254
  %v267 = vpack.c.b16 %v257, %v256
  %v268 = vpack.c.b16 %v259, %v258
  %v269 = vpack.c.b16 %v261, %v260
  %278 = vmatprep.subr.bf16.mxu0 0
  %279 = vmatpush1.bf16.msra.mxu0 %v262
  %280 = vmatprep.subr.bf16.mxu0 0
  %281 = vmatpush1.bf16.msra.mxu0 %v263
  %282 = vmatprep.subr.bf16.mxu0 0
  %283 = vmatpush1.bf16.msra.mxu0 %v264
  %284 = vmatprep.subr.bf16.mxu0 0
  %285 = vmatpush1.bf16.msra.mxu0 %v265
  %286 = vmatprep.subr.bf16.mxu0 0
  %287 = vmatpush1.bf16.msra.mxu0 %v266
  %288 = vmatprep.subr.bf16.mxu0 0
  %289 = vmatpush1.bf16.msra.mxu0 %v267
  %290 = vmatprep.subr.bf16.mxu0 0
  %291 = vmatpush1.bf16.msra.mxu0 %v268
  %292 = vmatprep.subr.bf16.mxu0 0
  %293 = vmatpush1.bf16.msra.mxu0 %v269
  %294 = vmatprep.subr.bf16.mxu0 0
  %295 = vmatpush1.bf16.msra.mxu0 0
  %296 = vmatprep.subr.bf16.mxu0 0
  %297 = vmatpush1.bf16.msra.mxu0 0
  %298 = vmatprep.subr.bf16.mxu0 0
  %299 = vmatpush1.bf16.msra.mxu0 0
  %300 = vmatprep.subr.bf16.mxu0 0
  %301 = vmatpush1.bf16.msra.mxu0 0
  %302 = vmatprep.subr.bf16.mxu0 0
  %303 = vmatpush1.bf16.msra.mxu0 0
  %304 = vmatprep.subr.bf16.mxu0 0
  %305 = vmatpush1.bf16.msra.mxu0 0
  %306 = vmatprep.subr.bf16.mxu0 0
  %307 = vmatpush1.bf16.msra.mxu0 0
  %308 = vmatprep.subr.bf16.mxu0 0
  %309 = vmatpush1.bf16.msra.mxu0 0
  %310 = vmatprep.mubr.bf16.mxu0 0
  %311 = vmatmul.mubr.bf16.gmra.mrb[0].mxu0 %v219
  %v312 = vpop.f32.mrb[0].mxu0
  %v313 = vadd.f32 %v228, %v312
  %v314 = vpop.f32.mrb[0].mxu0
  %v315 = vpop.f32.mrb[0].mxu0
  %v316 = vadd.f32 %v228, %v315
  %v317 = vpop.f32.mrb[0].mxu0
  %318 = vmatprep.mubr.bf16.mxu0 0
  %319 = vmatmul.mubr.bf16.gmra.mrb[0].mxu0 %v220
  %v320 = vpop.f32.mrb[0].mxu0
  %v321 = vadd.f32 %v228, %v320
  %v322 = vpop.f32.mrb[0].mxu0
  %v323 = vpop.f32.mrb[0].mxu0
  %v324 = vadd.f32 %v228, %v323
  %v325 = vpop.f32.mrb[0].mxu0
  %326 = vmatprep.mubr.bf16.mxu0 0
  %327 = vmatmul.mubr.bf16.gmra.mrb[0].mxu0 %v221
  %v328 = vpop.f32.mrb[0].mxu0
  %v329 = vadd.f32 %v228, %v328
  %v330 = vpop.f32.mrb[0].mxu0
  %v331 = vpop.f32.mrb[0].mxu0
  %v332 = vadd.f32 %v228, %v331
  %v333 = vpop.f32.mrb[0].mxu0
  %334 = vmatprep.mubr.bf16.mxu0 0
  %335 = vmatmul.mubr.bf16.gmra.mrb[0].mxu0 %v222
  %v336 = vpop.f32.mrb[0].mxu0
  %v337 = vadd.f32 %v228, %v336
  %v338 = vpop.f32.mrb[0].mxu0
  %v339 = vpop.f32.mrb[0].mxu0
  %v340 = vadd.f32 %v228, %v339
  %v341 = vpop.f32.mrb[0].mxu0
  %342 = vdwg.mxu0
  %v343 = vmax.f32 %v313, 0.0
  %v344 = vmax.f32 %v316, 0.0
  %v345 = vmax.f32 %v321, 0.0
  %v346 = vmax.f32 %v324, 0.0
  %v347 = vmax.f32 %v329, 0.0
  %v348 = vmax.f32 %v332, 0.0
  %v349 = vmax.f32 %v337, 0.0
  %v350 = vmax.f32 %v340, 0.0
  %v351 = vld [vmem:[%s5] sm:$0xff]
  %v352 = vld [vmem:[%s5 + $0x8] sm:$0xff]
  %v353 = vld [vmem:[%s5 + $0x10] sm:$0xff]
  %v354 = vld [vmem:[%s5 + $0x18] sm:$0xff]
  %v355 = vld [vmem:[%s5 + $0x20] sm:$0xff]
  %v356 = vld [vmem:[%s5 + $0x28] sm:$0xff]
  %v357 = vld [vmem:[%s5 + $0x30] sm:$0xff]
  %v358 = vld [vmem:[%s5 + $0x38] sm:$0xff]
  %v359 = vld [vmem:[%s5 + $0x40] sm:$0xff]
  %v360 = vld [vmem:[%s5 + $0x48] sm:$0xff]
  %v361 = vld [vmem:[%s5 + $0x50] sm:$0xff]
  %v362 = vld [vmem:[%s5 + $0x58] sm:$0xff]
  %v363 = vld [vmem:[%s5 + $0x60] sm:$0xff]
  %v364 = vld [vmem:[%s5 + $0x68] sm:$0xff]
  %v365 = vld [vmem:[%s5 + $0x70] sm:$0xff]
  %v366 = vld [vmem:[%s5 + $0x78] sm:$0xff]
  %v367 = vld [vmem:[%s5 + $0x80] sm:$0xff]
  %v368 = vld [vmem:[%s5 + $0x88] sm:$0xff]
  %v369 = vld [vmem:[%s5 + $0x90] sm:$0xff]
  %v370 = vld [vmem:[%s5 + $0x98] sm:$0xff]
  %v371 = vld [vmem:[%s5 + $0xa0] sm:$0xff]
  %v372 = vld [vmem:[%s5 + $0xa8] sm:$0xff]
  %v373 = vld [vmem:[%s5 + $0xb0] sm:$0xff]
  %v374 = vld [vmem:[%s5 + $0xb8] sm:$0xff]
  %v375 = vld [vmem:[%s5 + $0xc0] sm:$0xff]
  %v376 = vld [vmem:[%s5 + $0xc8] sm:$0xff]
  %v377 = vld [vmem:[%s5 + $0xd0] sm:$0xff]
  %v378 = vld [vmem:[%s5 + $0xd8] sm:$0xff]
  %v379 = vld [vmem:[%s5 + $0xe0] sm:$0xff]
  %v380 = vld [vmem:[%s5 + $0xe8] sm:$0xff]
  %v381 = vld [vmem:[%s5 + $0xf0] sm:$0xff]
  %v382 = vld [vmem:[%s5 + $0xf8] sm:$0xff]
  %v383 = vpack.c.bf16 %v344, %v343
  %v384 = vpack.c.bf16 %v346, %v345
  %v385 = vpack.c.bf16 %v348, %v347
  %v386 = vpack.c.bf16 %v350, %v349
  %v387 = vld [vmem:[%s6] sm:$0xf]
  %v389 = vlaneseq
  %v390 = vshrl.u32 %v389, 7
  %v391 = vsub.s32 0, %v390
  %v392 = vrot.slane %v387, %v391
  %v393 = vlaneseq
  %v394 = vshrl.u32 %v393, 7
  %v395 = vsub.s32 1, %v394
  %v396 = vrot.slane %v387, %v395
  %v397 = vlaneseq
  %v398 = vshrl.u32 %v397, 7
  %v399 = vsub.s32 2, %v398
  %v400 = vrot.slane %v387, %v399
  %v401 = vlaneseq
  %v402 = vshrl.u32 %v401, 7
  %v403 = vsub.s32 3, %v402
  %v404 = vrot.slane %v387, %v403
  %v441 = vunpack.c.l.b16 %v351
  %v442 = vunpack.c.h.b16 %v351
  %v443 = vunpack.c.l.b16 %v352
  %v444 = vunpack.c.h.b16 %v352
  %v445 = vunpack.c.l.b16 %v353
  %v446 = vunpack.c.h.b16 %v353
  %v447 = vunpack.c.l.b16 %v354
  %v448 = vunpack.c.h.b16 %v354
  %v449 = vunpack.c.l.b16 %v355
  %v450 = vunpack.c.h.b16 %v355
  %v451 = vunpack.c.l.b16 %v356
  %v452 = vunpack.c.h.b16 %v356
  %v453 = vunpack.c.l.b16 %v357
  %v454 = vunpack.c.h.b16 %v357
  %v455 = vunpack.c.l.b16 %v358
  %v456 = vunpack.c.h.b16 %v358
  %v457 = vunpack.c.l.b16 %v359
  %v458 = vunpack.c.h.b16 %v359
  %v459 = vunpack.c.l.b16 %v360
  %v460 = vunpack.c.h.b16 %v360
  %v461 = vunpack.c.l.b16 %v361
  %v462 = vunpack.c.h.b16 %v361
  %v463 = vunpack.c.l.b16 %v362
  %v464 = vunpack.c.h.b16 %v362
  %v465 = vunpack.c.l.b16 %v363
  %v466 = vunpack.c.h.b16 %v363
  %v467 = vunpack.c.l.b16 %v364
  %v468 = vunpack.c.h.b16 %v364
  %v469 = vunpack.c.l.b16 %v365
  %v470 = vunpack.c.h.b16 %v365
  %v471 = vunpack.c.l.b16 %v366
  %v472 = vunpack.c.h.b16 %v366
  %v473 = vunpack.c.l.b16 %v367
  %v474 = vunpack.c.h.b16 %v367
  %v475 = vunpack.c.l.b16 %v368
  %v476 = vunpack.c.h.b16 %v368
  %v477 = vunpack.c.l.b16 %v369
  %v478 = vunpack.c.h.b16 %v369
  %v479 = vunpack.c.l.b16 %v370
  %v480 = vunpack.c.h.b16 %v370
  %v481 = vunpack.c.l.b16 %v371
  %v482 = vunpack.c.h.b16 %v371
  %v483 = vunpack.c.l.b16 %v372
  %v484 = vunpack.c.h.b16 %v372
  %v485 = vunpack.c.l.b16 %v373
  %v486 = vunpack.c.h.b16 %v373
  %v487 = vunpack.c.l.b16 %v374
  %v488 = vunpack.c.h.b16 %v374
  %v489 = vunpack.c.l.b16 %v375
  %v490 = vunpack.c.h.b16 %v375
  %v491 = vunpack.c.l.b16 %v376
  %v492 = vunpack.c.h.b16 %v376
  %v493 = vunpack.c.l.b16 %v377
  %v494 = vunpack.c.h.b16 %v377
  %v495 = vunpack.c.l.b16 %v378
  %v496 = vunpack.c.h.b16 %v378
  %v497 = vunpack.c.l.b16 %v379
  %v498 = vunpack.c.h.b16 %v379
  %v499 = vunpack.c.l.b16 %v380
  %v500 = vunpack.c.h.b16 %v380
  %v501 = vunpack.c.l.b16 %v381
  %v502 = vunpack.c.h.b16 %v381
  %v503 = vunpack.c.l.b16 %v382
  %v504 = vunpack.c.h.b16 %v382
  %v505 = vpack.c.b16 %v445, %v441
  %v506 = vpack.c.b16 %v446, %v442
  %v507 = vpack.c.b16 %v447, %v443
  %v508 = vpack.c.b16 %v448, %v444
  %v509 = vpack.c.b16 %v453, %v449
  %v510 = vpack.c.b16 %v454, %v450
  %v511 = vpack.c.b16 %v455, %v451
  %v512 = vpack.c.b16 %v456, %v452
  %v513 = vpack.c.b16 %v461, %v457
  %v514 = vpack.c.b16 %v462, %v458
  %v515 = vpack.c.b16 %v463, %v459
  %v516 = vpack.c.b16 %v464, %v460
  %v517 = vpack.c.b16 %v469, %v465
  %v518 = vpack.c.b16 %v470, %v466
  %v519 = vpack.c.b16 %v471, %v467
  %v520 = vpack.c.b16 %v472, %v468
  %v521 = vpack.c.b16 %v477, %v473
  %v522 = vpack.c.b16 %v478, %v474
  %v523 = vpack.c.b16 %v479, %v475
  %v524 = vpack.c.b16 %v480, %v476
  %v525 = vpack.c.b16 %v485, %v481
  %v526 = vpack.c.b16 %v486, %v482
  %v527 = vpack.c.b16 %v487, %v483
  %v528 = vpack.c.b16 %v488, %v484
  %v529 = vpack.c.b16 %v493, %v489
  %v530 = vpack.c.b16 %v494, %v490
  %v531 = vpack.c.b16 %v495, %v491
  %v532 = vpack.c.b16 %v496, %v492
  %v533 = vpack.c.b16 %v501, %v497
  %v534 = vpack.c.b16 %v502, %v498
  %v535 = vpack.c.b16 %v503, %v499
  %v536 = vpack.c.b16 %v504, %v500
  %569 = vmatprep.subr.bf16.mxu0 %v506
  %570 = vmatpush1.bf16.msra.mxu0 %v505
  %571 = vmatprep.subr.bf16.mxu0 %v510
  %572 = vmatpush1.bf16.msra.mxu0 %v509
  %573 = vmatprep.subr.bf16.mxu0 %v514
  %574 = vmatpush1.bf16.msra.mxu0 %v513
  %575 = vmatprep.subr.bf16.mxu0 %v518
  %576 = vmatpush1.bf16.msra.mxu0 %v517
  %577 = vmatprep.subr.bf16.mxu0 %v522
  %578 = vmatpush1.bf16.msra.mxu0 %v521
  %579 = vmatprep.subr.bf16.mxu0 %v526
  %580 = vmatpush1.bf16.msra.mxu0 %v525
  %581 = vmatprep.subr.bf16.mxu0 %v530
  %582 = vmatpush1.bf16.msra.mxu0 %v529
  %583 = vmatprep.subr.bf16.mxu0 %v534
  %584 = vmatpush1.bf16.msra.mxu0 %v533
  %585 = vmatprep.subr.bf16.mxu0 0
  %586 = vmatpush1.bf16.msra.mxu0 0
  %587 = vmatprep.subr.bf16.mxu0 0
  %588 = vmatpush1.bf16.msra.mxu0 0
  %589 = vmatprep.subr.bf16.mxu0 0
  %590 = vmatpush1.bf16.msra.mxu0 0
  %591 = vmatprep.subr.bf16.mxu0 0
  %592 = vmatpush1.bf16.msra.mxu0 0
  %593 = vmatprep.subr.bf16.mxu0 0
  %594 = vmatpush1.bf16.msra.mxu0 0
  %595 = vmatprep.subr.bf16.mxu0 0
  %596 = vmatpush1.bf16.msra.mxu0 0
  %597 = vmatprep.subr.bf16.mxu0 0
  %598 = vmatpush1.bf16.msra.mxu0 0
  %599 = vmatprep.subr.bf16.mxu0 0
  %600 = vmatpush1.bf16.msra.mxu0 0
  %601 = vmatprep.mubr.bf16.mxu0 0
  %602 = vmatmul.mubr.bf16.gmra.mrb[0].mxu0 %v383
  %v603 = vpop.f32.mrb[0].mxu0
  %v604 = vadd.f32 %v392, %v603
  %v605 = vpop.f32.mrb[0].mxu0
  %v606 = vadd.f32 %v396, %v605
  %v607 = vpop.f32.mrb[0].mxu0
  %v608 = vadd.f32 %v392, %v607
  %v609 = vpop.f32.mrb[0].mxu0
  %v610 = vadd.f32 %v396, %v609
  %611 = vmatprep.mubr.bf16.mxu0 0
  %612 = vmatmul.mubr.bf16.gmra.mrb[0].mxu0 %v384
  %v613 = vpop.f32.mrb[0].mxu0
  %v614 = vadd.f32 %v392, %v613
  %v615 = vpop.f32.mrb[0].mxu0
  %v616 = vadd.f32 %v396, %v615
  %v617 = vpop.f32.mrb[0].mxu0
  %v618 = vadd.f32 %v392, %v617
  %v619 = vpop.f32.mrb[0].mxu0
  %v620 = vadd.f32 %v396, %v619
  %621 = vmatprep.mubr.bf16.mxu0 0
  %622 = vmatmul.mubr.bf16.gmra.mrb[0].mxu0 %v385
  %v623 = vpop.f32.mrb[0].mxu0
  %v624 = vadd.f32 %v392, %v623
  %v625 = vpop.f32.mrb[0].mxu0
  %v626 = vadd.f32 %v396, %v625
  %v627 = vpop.f32.mrb[0].mxu0
  %v628 = vadd.f32 %v392, %v627
  %v629 = vpop.f32.mrb[0].mxu0
  %v630 = vadd.f32 %v396, %v629
  %631 = vmatprep.mubr.bf16.mxu0 0
  %632 = vmatmul.mubr.bf16.gmra.mrb[0].mxu0 %v386
  %v633 = vpop.f32.mrb[0].mxu0
  %v634 = vadd.f32 %v392, %v633
  %v635 = vpop.f32.mrb[0].mxu0
  %v636 = vadd.f32 %v396, %v635
  %v637 = vpop.f32.mrb[0].mxu0
  %v638 = vadd.f32 %v392, %v637
  %v639 = vpop.f32.mrb[0].mxu0
  %v640 = vadd.f32 %v396, %v639
  %641 = vdwg.mxu0
  %642 = vmatprep.subr.bf16.mxu0 %v508
  %643 = vmatpush1.bf16.msra.mxu0 %v507
  %644 = vmatprep.subr.bf16.mxu0 %v512
  %645 = vmatpush1.bf16.msra.mxu0 %v511
  %646 = vmatprep.subr.bf16.mxu0 %v516
  %647 = vmatpush1.bf16.msra.mxu0 %v515
  %648 = vmatprep.subr.bf16.mxu0 %v520
  %649 = vmatpush1.bf16.msra.mxu0 %v519
  %650 = vmatprep.subr.bf16.mxu0 %v524
  %651 = vmatpush1.bf16.msra.mxu0 %v523
  %652 = vmatprep.subr.bf16.mxu0 %v528
  %653 = vmatpush1.bf16.msra.mxu0 %v527
  %654 = vmatprep.subr.bf16.mxu0 %v532
  %655 = vmatpush1.bf16.msra.mxu0 %v531
  %656 = vmatprep.subr.bf16.mxu0 %v536
  %657 = vmatpush1.bf16.msra.mxu0 %v535
  %658 = vmatprep.subr.bf16.mxu0 0
  %659 = vmatpush1.bf16.msra.mxu0 0
  %660 = vmatprep.subr.bf16.mxu0 0
  %661 = vmatpush1.bf16.msra.mxu0 0
  %662 = vmatprep.subr.bf16.mxu0 0
  %663 = vmatpush1.bf16.msra.mxu0 0
  %664 = vmatprep.subr.bf16.mxu0 0
  %665 = vmatpush1.bf16.msra.mxu0 0
  %666 = vmatprep.subr.bf16.mxu0 0
  %667 = vmatpush1.bf16.msra.mxu0 0
  %668 = vmatprep.subr.bf16.mxu0 0
  %669 = vmatpush1.bf16.msra.mxu0 0
  %670 = vmatprep.subr.bf16.mxu0 0
  %671 = vmatpush1.bf16.msra.mxu0 0
  %672 = vmatprep.subr.bf16.mxu0 0
  %673 = vmatpush1.bf16.msra.mxu0 0
  %674 = vmatprep.mubr.bf16.mxu0 0
  %675 = vmatmul.mubr.bf16.gmra.mrb[0].mxu0 %v383
  %v676 = vpop.f32.mrb[0].mxu0
  %v677 = vadd.f32 %v400, %v676
  %v678 = vpop.f32.mrb[0].mxu0
  %v679 = vadd.f32 %v404, %v678
  %v680 = vpop.f32.mrb[0].mxu0
  %v681 = vadd.f32 %v400, %v680
  %v682 = vpop.f32.mrb[0].mxu0
  %v683 = vadd.f32 %v404, %v682
  %684 = vmatprep.mubr.bf16.mxu0 0
  %685 = vmatmul.mubr.bf16.gmra.mrb[0].mxu0 %v384
  %v686 = vpop.f32.mrb[0].mxu0
  %v687 = vadd.f32 %v400, %v686
  %v688 = vpop.f32.mrb[0].mxu0
  %v689 = vadd.f32 %v404, %v688
  %v690 = vpop.f32.mrb[0].mxu0
  %v691 = vadd.f32 %v400, %v690
  %v692 = vpop.f32.mrb[0].mxu0
  %v693 = vadd.f32 %v404, %v692
  %694 = vmatprep.mubr.bf16.mxu0 0
  %695 = vmatmul.mubr.bf16.gmra.mrb[0].mxu0 %v385
  %v696 = vpop.f32.mrb[0].mxu0
  %v697 = vadd.f32 %v400, %v696
  %v698 = vpop.f32.mrb[0].mxu0
  %v699 = vadd.f32 %v404, %v698
  %v700 = vpop.f32.mrb[0].mxu0
  %v701 = vadd.f32 %v400, %v700
  %v702 = vpop.f32.mrb[0].mxu0
  %v703 = vadd.f32 %v404, %v702
  %704 = vmatprep.mubr.bf16.mxu0 0
  %705 = vmatmul.mubr.bf16.gmra.mrb[0].mxu0 %v386
  %v706 = vpop.f32.mrb[0].mxu0
  %v707 = vadd.f32 %v400, %v706
  %v708 = vpop.f32.mrb[0].mxu0
  %v709 = vadd.f32 %v404, %v708
  %v710 = vpop.f32.mrb[0].mxu0
  %v711 = vadd.f32 %v400, %v710
  %v712 = vpop.f32.mrb[0].mxu0
  %v713 = vadd.f32 %v404, %v712
  %714 = vdwg.mxu0
  %715 = vst [vmem:[%s7] sm:$0xff] %v604
  %716 = vst [vmem:[%s7 + $0x8] sm:$0xff] %v606
  %717 = vst [vmem:[%s7 + $0x10] sm:$0xff] %v677
  %718 = vst [vmem:[%s7 + $0x18] sm:$0xff] %v679
  %719 = vst [vmem:[%s7 + $0x20] sm:$0xff] %v608
  %720 = vst [vmem:[%s7 + $0x28] sm:$0xff] %v610
  %721 = vst [vmem:[%s7 + $0x30] sm:$0xff] %v681
  %722 = vst [vmem:[%s7 + $0x38] sm:$0xff] %v683
  %723 = vst [vmem:[%s7 + $0x40] sm:$0xff] %v614
  %724 = vst [vmem:[%s7 + $0x48] sm:$0xff] %v616
  %725 = vst [vmem:[%s7 + $0x50] sm:$0xff] %v687
  %726 = vst [vmem:[%s7 + $0x58] sm:$0xff] %v689
  %727 = vst [vmem:[%s7 + $0x60] sm:$0xff] %v618
  %728 = vst [vmem:[%s7 + $0x68] sm:$0xff] %v620
  %729 = vst [vmem:[%s7 + $0x70] sm:$0xff] %v691
  %730 = vst [vmem:[%s7 + $0x78] sm:$0xff] %v693
  %731 = vst [vmem:[%s7 + $0x80] sm:$0xff] %v624
  %732 = vst [vmem:[%s7 + $0x88] sm:$0xff] %v626
  %733 = vst [vmem:[%s7 + $0x90] sm:$0xff] %v697
  %734 = vst [vmem:[%s7 + $0x98] sm:$0xff] %v699
  %735 = vst [vmem:[%s7 + $0xa0] sm:$0xff] %v628
  %736 = vst [vmem:[%s7 + $0xa8] sm:$0xff] %v630
  %737 = vst [vmem:[%s7 + $0xb0] sm:$0xff] %v701
  %738 = vst [vmem:[%s7 + $0xb8] sm:$0xff] %v703
  %739 = vst [vmem:[%s7 + $0xc0] sm:$0xff] %v634
  %740 = vst [vmem:[%s7 + $0xc8] sm:$0xff] %v636
  %741 = vst [vmem:[%s7 + $0xd0] sm:$0xff] %v707
  %742 = vst [vmem:[%s7 + $0xd8] sm:$0xff] %v709
  %743 = vst [vmem:[%s7 + $0xe0] sm:$0xff] %v638
  %744 = vst [vmem:[%s7 + $0xe8] sm:$0xff] %v640
  %745 = vst [vmem:[%s7 + $0xf0] sm:$0xff] %v711
  %746 = vst [vmem:[%s7 + $0xf8] sm:$0xff] %v713
  // Predicated region
  $region30: #{ar_belief_forward.3} parent=0 // pred_check
    _
  $region31: #{ar_belief_forward.3} parent=0 // pred_check_branch
    %748 = sbr.rel (0) target = $region33
  $region32: #{ar_belief_forward.3} parent=0 // pred_region
    _
  $region33: #{ar_belief_forward.3} parent=0 // pred_fallthru
    _
  // Predicated region
  $region34: #{ar_belief_forward.3} parent=0 // pred_check
    _
  $region35: #{ar_belief_forward.3} parent=0 // pred_check_branch
    %750 = sbr.rel (0) target = $region37
  $region36: #{ar_belief_forward.3} parent=0 // pred_region
    _
  $region37: #{ar_belief_forward.3} parent=0 // pred_fallthru
    _

// kernel: ar_belief_forward.4
$region0: #{ar_belief_forward.4}
  #allocation0 [shape = 'u32[]', space=smem, size = 0x4, offset = 0x4, fixed_abs, tag = 'smem constant byte address 0x4 - core index']
  #allocation1 [shape = 'u32[144,128]{1,0:T(1,128)}', space=vmem, size = 0x12000, scoped, tag = 'internal scratch']
  %s0 = inlined_call_operand.vmem [shape: f32[8,8,512], index: 0, kind: input, shape index: {}]
  %s1 = inlined_call_operand.vmem [shape: bf16[128,512], index: 1, kind: input, shape index: {}]
  %s2 = inlined_call_operand.vmem [shape: bf16[256,512], index: 2, kind: input, shape index: {}]
  %s3 = inlined_call_operand.vmem [shape: f32[1,512], index: 3, kind: input, shape index: {}]
  %s4 = inlined_call_operand.vmem [shape: bf16[8,8,128], index: 4, kind: output, shape index: {}]
  %s5 = sld [smem:[#allocation0]]
  $region26: #{ar_belief_forward.4} parent=0
    _
  %s7 = ssub.s32 1, %s5
  %s8 = scalar_select 0, %s7, %s5
  // Predicated region
  $region2: #{ar_belief_forward.4} parent=0 // pred_check
    _
  $region3: #{ar_belief_forward.4} parent=0 // pred_check_branch
    %10 = sbr.rel (0) target = $region5
  $region4: #{ar_belief_forward.4} parent=0 // pred_region
    _
  $region5: #{ar_belief_forward.4} parent=0 // pred_fallthru
    _
  // Predicated region
  $region6: #{ar_belief_forward.4} parent=0 // pred_check
    _
  $region7: #{ar_belief_forward.4} parent=0 // pred_check_branch
    %12 = sbr.rel (0) target = $region9
  $region8: #{ar_belief_forward.4} parent=0 // pred_region
    _
  $region9: #{ar_belief_forward.4} parent=0 // pred_fallthru
    _
  // Predicated region
  $region10: #{ar_belief_forward.4} parent=0 // pred_check
    _
  $region11: #{ar_belief_forward.4} parent=0 // pred_check_branch
    %14 = sbr.rel (0) target = $region13
  $region12: #{ar_belief_forward.4} parent=0 // pred_region
    _
  $region13: #{ar_belief_forward.4} parent=0 // pred_fallthru
    _
  // Predicated region
  $region14: #{ar_belief_forward.4} parent=0 // pred_check
    _
  $region15: #{ar_belief_forward.4} parent=0 // pred_check_branch
    %16 = sbr.rel (0) target = $region17
  $region16: #{ar_belief_forward.4} parent=0 // pred_region
    _
  $region17: #{ar_belief_forward.4} parent=0 // pred_fallthru
    _
  %v18 = vld [vmem:[%s1] sm:$0xff]
  %v19 = vld [vmem:[%s1 + $0x8] sm:$0xff]
  %v20 = vld [vmem:[%s1 + $0x10] sm:$0xff]
  %v21 = vld [vmem:[%s1 + $0x18] sm:$0xff]
  %v22 = vld [vmem:[%s1 + $0x20] sm:$0xff]
  %v23 = vld [vmem:[%s1 + $0x28] sm:$0xff]
  %v24 = vld [vmem:[%s1 + $0x30] sm:$0xff]
  %v25 = vld [vmem:[%s1 + $0x38] sm:$0xff]
  %v26 = vld [vmem:[%s1 + $0x40] sm:$0xff]
  %v27 = vld [vmem:[%s1 + $0x48] sm:$0xff]
  %v28 = vld [vmem:[%s1 + $0x50] sm:$0xff]
  %v29 = vld [vmem:[%s1 + $0x58] sm:$0xff]
  %v30 = vld [vmem:[%s1 + $0x60] sm:$0xff]
  %v31 = vld [vmem:[%s1 + $0x68] sm:$0xff]
  %v32 = vld [vmem:[%s1 + $0x70] sm:$0xff]
  %v33 = vld [vmem:[%s1 + $0x78] sm:$0xff]
  %v34 = vld [vmem:[%s1 + $0x80] sm:$0xff]
  %v35 = vld [vmem:[%s1 + $0x88] sm:$0xff]
  %v36 = vld [vmem:[%s1 + $0x90] sm:$0xff]
  %v37 = vld [vmem:[%s1 + $0x98] sm:$0xff]
  %v38 = vld [vmem:[%s1 + $0xa0] sm:$0xff]
  %v39 = vld [vmem:[%s1 + $0xa8] sm:$0xff]
  %v40 = vld [vmem:[%s1 + $0xb0] sm:$0xff]
  %v41 = vld [vmem:[%s1 + $0xb8] sm:$0xff]
  %v42 = vld [vmem:[%s1 + $0xc0] sm:$0xff]
  %v43 = vld [vmem:[%s1 + $0xc8] sm:$0xff]
  %v44 = vld [vmem:[%s1 + $0xd0] sm:$0xff]
  %v45 = vld [vmem:[%s1 + $0xd8] sm:$0xff]
  %v46 = vld [vmem:[%s1 + $0xe0] sm:$0xff]
  %v47 = vld [vmem:[%s1 + $0xe8] sm:$0xff]
  %v48 = vld [vmem:[%s1 + $0xf0] sm:$0xff]
  %v49 = vld [vmem:[%s1 + $0xf8] sm:$0xff]
  %v50 = vld [vmem:[%s2] sm:$0xff]
  %v51 = vld [vmem:[%s2 + $0x8] sm:$0xff]
  %v52 = vld [vmem:[%s2 + $0x10] sm:$0xff]
  %v53 = vld [vmem:[%s2 + $0x18] sm:$0xff]
  %v54 = vld [vmem:[%s2 + $0x20] sm:$0xff]
  %v55 = vld [vmem:[%s2 + $0x28] sm:$0xff]
  %v56 = vld [vmem:[%s2 + $0x30] sm:$0xff]
  %v57 = vld [vmem:[%s2 + $0x38] sm:$0xff]
  %v58 = vld [vmem:[%s2 + $0x40] sm:$0xff]
  %v59 = vld [vmem:[%s2 + $0x48] sm:$0xff]
  %v60 = vld [vmem:[%s2 + $0x50] sm:$0xff]
  %v61 = vld [vmem:[%s2 + $0x58] sm:$0xff]
  %v62 = vld [vmem:[%s2 + $0x60] sm:$0xff]
  %v63 = vld [vmem:[%s2 + $0x68] sm:$0xff]
  %v64 = vld [vmem:[%s2 + $0x70] sm:$0xff]
  %v65 = vld [vmem:[%s2 + $0x78] sm:$0xff]
  %v66 = vld [vmem:[%s2 + $0x80] sm:$0xff]
  %v67 = vld [vmem:[%s2 + $0x88] sm:$0xff]
  %v68 = vld [vmem:[%s2 + $0x90] sm:$0xff]
  %v69 = vld [vmem:[%s2 + $0x98] sm:$0xff]
  %v70 = vld [vmem:[%s2 + $0xa0] sm:$0xff]
  %v71 = vld [vmem:[%s2 + $0xa8] sm:$0xff]
  %v72 = vld [vmem:[%s2 + $0xb0] sm:$0xff]
  %v73 = vld [vmem:[%s2 + $0xb8] sm:$0xff]
  %v74 = vld [vmem:[%s2 + $0xc0] sm:$0xff]
  %v75 = vld [vmem:[%s2 + $0xc8] sm:$0xff]
  %v76 = vld [vmem:[%s2 + $0xd0] sm:$0xff]
  %v77 = vld [vmem:[%s2 + $0xd8] sm:$0xff]
  %v78 = vld [vmem:[%s2 + $0xe0] sm:$0xff]
  %v79 = vld [vmem:[%s2 + $0xe8] sm:$0xff]
  %v80 = vld [vmem:[%s2 + $0xf0] sm:$0xff]
  %v81 = vld [vmem:[%s2 + $0xf8] sm:$0xff]
  %v82 = vld [vmem:[%s2 + $0x100] sm:$0xff]
  %v83 = vld [vmem:[%s2 + $0x108] sm:$0xff]
  %v84 = vld [vmem:[%s2 + $0x110] sm:$0xff]
  %v85 = vld [vmem:[%s2 + $0x118] sm:$0xff]
  %v86 = vld [vmem:[%s2 + $0x120] sm:$0xff]
  %v87 = vld [vmem:[%s2 + $0x128] sm:$0xff]
  %v88 = vld [vmem:[%s2 + $0x130] sm:$0xff]
  %v89 = vld [vmem:[%s2 + $0x138] sm:$0xff]
  %v90 = vld [vmem:[%s2 + $0x140] sm:$0xff]
  %v91 = vld [vmem:[%s2 + $0x148] sm:$0xff]
  %v92 = vld [vmem:[%s2 + $0x150] sm:$0xff]
  %v93 = vld [vmem:[%s2 + $0x158] sm:$0xff]
  %v94 = vld [vmem:[%s2 + $0x160] sm:$0xff]
  %v95 = vld [vmem:[%s2 + $0x168] sm:$0xff]
  %v96 = vld [vmem:[%s2 + $0x170] sm:$0xff]
  %v97 = vld [vmem:[%s2 + $0x178] sm:$0xff]
  %v98 = vld [vmem:[%s2 + $0x180] sm:$0xff]
  %v99 = vld [vmem:[%s2 + $0x188] sm:$0xff]
  %v100 = vld [vmem:[%s2 + $0x190] sm:$0xff]
  %v101 = vld [vmem:[%s2 + $0x198] sm:$0xff]
  %v102 = vld [vmem:[%s2 + $0x1a0] sm:$0xff]
  %v103 = vld [vmem:[%s2 + $0x1a8] sm:$0xff]
  %v104 = vld [vmem:[%s2 + $0x1b0] sm:$0xff]
  %v105 = vld [vmem:[%s2 + $0x1b8] sm:$0xff]
  %v106 = vld [vmem:[%s2 + $0x1c0] sm:$0xff]
  %v107 = vld [vmem:[%s2 + $0x1c8] sm:$0xff]
  %v108 = vld [vmem:[%s2 + $0x1d0] sm:$0xff]
  %v109 = vld [vmem:[%s2 + $0x1d8] sm:$0xff]
  %v110 = vld [vmem:[%s2 + $0x1e0] sm:$0xff]
  %v111 = vld [vmem:[%s2 + $0x1e8] sm:$0xff]
  %v112 = vld [vmem:[%s2 + $0x1f0] sm:$0xff]
  %v113 = vld [vmem:[%s2 + $0x1f8] sm:$0xff]
  %v114 = vld [vmem:[%s3] sm:$0xf]
  %v116 = vlaneseq
  %v117 = vshrl.u32 %v116, 7
  %v118 = vsub.s32 0, %v117
  %v119 = vrot.slane %v114, %v118
  %v120 = vlaneseq
  %v121 = vshrl.u32 %v120, 7
  %v122 = vsub.s32 1, %v121
  %v123 = vrot.slane %v114, %v122
  %v124 = vlaneseq
  %v125 = vshrl.u32 %v124, 7
  %v126 = vsub.s32 2, %v125
  %v127 = vrot.slane %v114, %v126
  %v128 = vlaneseq
  %v129 = vshrl.u32 %v128, 7
  %v130 = vsub.s32 3, %v129
  %v131 = vrot.slane %v114, %v130
  %v136 = vld [vmem:[%s0] sm:$0xff]
  %v137 = vld [vmem:[%s0 + $0x8] sm:$0xff]
  %v138 = vld [vmem:[%s0 + $0x10] sm:$0xff]
  %v139 = vld [vmem:[%s0 + $0x18] sm:$0xff]
  %v172 = vunpack.c.l.b16 %v18
  %v173 = vunpack.c.h.b16 %v18
  %v174 = vunpack.c.l.b16 %v19
  %v175 = vunpack.c.h.b16 %v19
  %v176 = vunpack.c.l.b16 %v20
  %v177 = vunpack.c.h.b16 %v20
  %v178 = vunpack.c.l.b16 %v21
  %v179 = vunpack.c.h.b16 %v21
  %v180 = vunpack.c.l.b16 %v22
  %v181 = vunpack.c.h.b16 %v22
  %v182 = vunpack.c.l.b16 %v23
  %v183 = vunpack.c.h.b16 %v23
  %v184 = vunpack.c.l.b16 %v24
  %v185 = vunpack.c.h.b16 %v24
  %v186 = vunpack.c.l.b16 %v25
  %v187 = vunpack.c.h.b16 %v25
  %v188 = vunpack.c.l.b16 %v26
  %v189 = vunpack.c.h.b16 %v26
  %v190 = vunpack.c.l.b16 %v27
  %v191 = vunpack.c.h.b16 %v27
  %v192 = vunpack.c.l.b16 %v28
  %v193 = vunpack.c.h.b16 %v28
  %v194 = vunpack.c.l.b16 %v29
  %v195 = vunpack.c.h.b16 %v29
  %v196 = vunpack.c.l.b16 %v30
  %v197 = vunpack.c.h.b16 %v30
  %v198 = vunpack.c.l.b16 %v31
  %v199 = vunpack.c.h.b16 %v31
  %v200 = vunpack.c.l.b16 %v32
  %v201 = vunpack.c.h.b16 %v32
  %v202 = vunpack.c.l.b16 %v33
  %v203 = vunpack.c.h.b16 %v33
  %v204 = vunpack.c.l.b16 %v34
  %v205 = vunpack.c.h.b16 %v34
  %v206 = vunpack.c.l.b16 %v35
  %v207 = vunpack.c.h.b16 %v35
  %v208 = vunpack.c.l.b16 %v36
  %v209 = vunpack.c.h.b16 %v36
  %v210 = vunpack.c.l.b16 %v37
  %v211 = vunpack.c.h.b16 %v37
  %v212 = vunpack.c.l.b16 %v38
  %v213 = vunpack.c.h.b16 %v38
  %v214 = vunpack.c.l.b16 %v39
  %v215 = vunpack.c.h.b16 %v39
  %v216 = vunpack.c.l.b16 %v40
  %v217 = vunpack.c.h.b16 %v40
  %v218 = vunpack.c.l.b16 %v41
  %v219 = vunpack.c.h.b16 %v41
  %v220 = vunpack.c.l.b16 %v42
  %v221 = vunpack.c.h.b16 %v42
  %v222 = vunpack.c.l.b16 %v43
  %v223 = vunpack.c.h.b16 %v43
  %v224 = vunpack.c.l.b16 %v44
  %v225 = vunpack.c.h.b16 %v44
  %v226 = vunpack.c.l.b16 %v45
  %v227 = vunpack.c.h.b16 %v45
  %v228 = vunpack.c.l.b16 %v46
  %v229 = vunpack.c.h.b16 %v46
  %v230 = vunpack.c.l.b16 %v47
  %v231 = vunpack.c.h.b16 %v47
  %v232 = vunpack.c.l.b16 %v48
  %v233 = vunpack.c.h.b16 %v48
  %v234 = vunpack.c.l.b16 %v49
  %v235 = vunpack.c.h.b16 %v49
  %v236 = vpack.c.b16 %v176, %v172
  %v237 = vpack.c.b16 %v177, %v173
  %v238 = vpack.c.b16 %v178, %v174
  %v239 = vpack.c.b16 %v179, %v175
  %v240 = vpack.c.b16 %v184, %v180
  %v241 = vpack.c.b16 %v185, %v181
  %v242 = vpack.c.b16 %v186, %v182
  %v243 = vpack.c.b16 %v187, %v183
  %v244 = vpack.c.b16 %v192, %v188
  %v245 = vpack.c.b16 %v193, %v189
  %v246 = vpack.c.b16 %v194, %v190
  %v247 = vpack.c.b16 %v195, %v191
  %v248 = vpack.c.b16 %v200, %v196
  %v249 = vpack.c.b16 %v201, %v197
  %v250 = vpack.c.b16 %v202, %v198
  %v251 = vpack.c.b16 %v203, %v199
  %v252 = vpack.c.b16 %v208, %v204
  %v253 = vpack.c.b16 %v209, %v205
  %v254 = vpack.c.b16 %v210, %v206
  %v255 = vpack.c.b16 %v211, %v207
  %v256 = vpack.c.b16 %v216, %v212
  %v257 = vpack.c.b16 %v217, %v213
  %v258 = vpack.c.b16 %v218, %v214
  %v259 = vpack.c.b16 %v219, %v215
  %v260 = vpack.c.b16 %v224, %v220
  %v261 = vpack.c.b16 %v225, %v221
  %v262 = vpack.c.b16 %v226, %v222
  %v263 = vpack.c.b16 %v227, %v223
  %v264 = vpack.c.b16 %v232, %v228
  %v265 = vpack.c.b16 %v233, %v229
  %v266 = vpack.c.b16 %v234, %v230
  %v267 = vpack.c.b16 %v235, %v231
  %300 = vmatprep.subr.bf16.mxu0 %v237
  %301 = vmatpush1.bf16.msra.mxu0 %v236
  %302 = vmatprep.subr.bf16.mxu0 %v241
  %303 = vmatpush1.bf16.msra.mxu0 %v240
  %304 = vmatprep.subr.bf16.mxu0 %v245
  %305 = vmatpush1.bf16.msra.mxu0 %v244
  %306 = vmatprep.subr.bf16.mxu0 %v249
  %307 = vmatpush1.bf16.msra.mxu0 %v248
  %308 = vmatprep.subr.bf16.mxu0 %v253
  %309 = vmatpush1.bf16.msra.mxu0 %v252
  %310 = vmatprep.subr.bf16.mxu0 %v257
  %311 = vmatpush1.bf16.msra.mxu0 %v256
  %312 = vmatprep.subr.bf16.mxu0 %v261
  %313 = vmatpush1.bf16.msra.mxu0 %v260
  %314 = vmatprep.subr.bf16.mxu0 %v265
  %315 = vmatpush1.bf16.msra.mxu0 %v264
  %316 = vmatprep.subr.bf16.mxu0 0
  %317 = vmatpush1.bf16.msra.mxu0 0
  %318 = vmatprep.subr.bf16.mxu0 0
  %319 = vmatpush1.bf16.msra.mxu0 0
  %320 = vmatprep.subr.bf16.mxu0 0
  %321 = vmatpush1.bf16.msra.mxu0 0
  %322 = vmatprep.subr.bf16.mxu0 0
  %323 = vmatpush1.bf16.msra.mxu0 0
  %324 = vmatprep.subr.bf16.mxu0 0
  %325 = vmatpush1.bf16.msra.mxu0 0
  %326 = vmatprep.subr.bf16.mxu0 0
  %327 = vmatpush1.bf16.msra.mxu0 0
  %328 = vmatprep.subr.bf16.mxu0 0
  %329 = vmatpush1.bf16.msra.mxu0 0
  %330 = vmatprep.subr.bf16.mxu0 0
  %331 = vmatpush1.bf16.msra.mxu0 0
  %332 = vmatprep.mubr.bf16.mxu0 0
  %333 = vmatmul.mubr.bf16.gmra.mrb[0].mxu0 0
  %v334 = vpop.f32.mrb[0].mxu0
  %v335 = vadd.f32 0.0, %v334
  %v336 = vpop.f32.mrb[0].mxu0
  %v337 = vadd.f32 0.0, %v336
  %v338 = vpop.f32.mrb[0].mxu0
  %v339 = vpop.f32.mrb[0].mxu0
  %340 = vdwg.mxu0
  %341 = vmatprep.subr.bf16.mxu0 %v239
  %342 = vmatpush1.bf16.msra.mxu0 %v238
  %343 = vmatprep.subr.bf16.mxu0 %v243
  %344 = vmatpush1.bf16.msra.mxu0 %v242
  %345 = vmatprep.subr.bf16.mxu0 %v247
  %346 = vmatpush1.bf16.msra.mxu0 %v246
  %347 = vmatprep.subr.bf16.mxu0 %v251
  %348 = vmatpush1.bf16.msra.mxu0 %v250
  %349 = vmatprep.subr.bf16.mxu0 %v255
  %350 = vmatpush1.bf16.msra.mxu0 %v254
  %351 = vmatprep.subr.bf16.mxu0 %v259
  %352 = vmatpush1.bf16.msra.mxu0 %v258
  %353 = vmatprep.subr.bf16.mxu0 %v263
  %354 = vmatpush1.bf16.msra.mxu0 %v262
  %355 = vmatprep.subr.bf16.mxu0 %v267
  %356 = vmatpush1.bf16.msra.mxu0 %v266
  %357 = vmatprep.subr.bf16.mxu0 0
  %358 = vmatpush1.bf16.msra.mxu0 0
  %359 = vmatprep.subr.bf16.mxu0 0
  %360 = vmatpush1.bf16.msra.mxu0 0
  %361 = vmatprep.subr.bf16.mxu0 0
  %362 = vmatpush1.bf16.msra.mxu0 0
  %363 = vmatprep.subr.bf16.mxu0 0
  %364 = vmatpush1.bf16.msra.mxu0 0
  %365 = vmatprep.subr.bf16.mxu0 0
  %366 = vmatpush1.bf16.msra.mxu0 0
  %367 = vmatprep.subr.bf16.mxu0 0
  %368 = vmatpush1.bf16.msra.mxu0 0
  %369 = vmatprep.subr.bf16.mxu0 0
  %370 = vmatpush1.bf16.msra.mxu0 0
  %371 = vmatprep.subr.bf16.mxu0 0
  %372 = vmatpush1.bf16.msra.mxu0 0
  %373 = vmatprep.mubr.bf16.mxu0 0
  %374 = vmatmul.mubr.bf16.gmra.mrb[0].mxu0 0
  %v375 = vpop.f32.mrb[0].mxu0
  %v376 = vadd.f32 0.0, %v375
  %v377 = vpop.f32.mrb[0].mxu0
  %v378 = vadd.f32 0.0, %v377
  %v379 = vpop.f32.mrb[0].mxu0
  %v380 = vpop.f32.mrb[0].mxu0
  %381 = vdwg.mxu0
  %v382 = vadd.f32 %v136, %v335
  %v383 = vadd.f32 %v137, %v337
  %v384 = vadd.f32 %v138, %v376
  %v385 = vadd.f32 %v139, %v378
  %v386 = vxor.u32 %v382, 2147483648
  %v387 = vxor.u32 %v383, 2147483648
  %v388 = vxor.u32 %v384, 2147483648
  %v389 = vmul.f32 %v386, 1.442695
  %v390 = vpow.pop %v389
  %v391 = vmul.f32 %v387, 1.442695
  %v392 = vpow.pop %v391
  %v393 = vmul.f32 %v388, 1.442695
  %v394 = vpow.pop %v393
  %v395 = vadd.f32 %v390, 1.0
  %v396 = vadd.f32 %v392, 1.0
  %v397 = vadd.f32 %v394, 1.0
  %v398 = vrcp.pop %v395
  %v399 = vmul.f32 1.0, %v398
  %v400 = vrcp.pop %v396
  %v401 = vmul.f32 1.0, %v400
  %v402 = vrcp.pop %v397
  %v403 = vmul.f32 1.0, %v402
  %v404 = vtanh.pop %v385
  %v405 = vmul.f32 %v401, 0.0
  %v406 = vmul.f32 %v399, %v404
  %v407 = vadd.f32 %v405, %v406
  %v408 = vtanh.pop %v407
  %v409 = vmul.f32 %v403, %v408
  %v410 = vpack.c.bf16 %v409, %v409
  %v411 = vpack.c.bf16 0.0, 0.0
  %v476 = vunpack.c.l.b16 %v50
  %v477 = vunpack.c.h.b16 %v50
  %v478 = vunpack.c.l.b16 %v51
  %v479 = vunpack.c.h.b16 %v51
  %v480 = vunpack.c.l.b16 %v52
  %v481 = vunpack.c.h.b16 %v52
  %v482 = vunpack.c.l.b16 %v53
  %v483 = vunpack.c.h.b16 %v53
  %v484 = vunpack.c.l.b16 %v54
  %v485 = vunpack.c.h.b16 %v54
  %v486 = vunpack.c.l.b16 %v55
  %v487 = vunpack.c.h.b16 %v55
  %v488 = vunpack.c.l.b16 %v56
  %v489 = vunpack.c.h.b16 %v56
  %v490 = vunpack.c.l.b16 %v57
  %v491 = vunpack.c.h.b16 %v57
  %v492 = vunpack.c.l.b16 %v58
  %v493 = vunpack.c.h.b16 %v58
  %v494 = vunpack.c.l.b16 %v59
  %v495 = vunpack.c.h.b16 %v59
  %v496 = vunpack.c.l.b16 %v60
  %v497 = vunpack.c.h.b16 %v60
  %v498 = vunpack.c.l.b16 %v61
  %v499 = vunpack.c.h.b16 %v61
  %v500 = vunpack.c.l.b16 %v62
  %v501 = vunpack.c.h.b16 %v62
  %v502 = vunpack.c.l.b16 %v63
  %v503 = vunpack.c.h.b16 %v63
  %v504 = vunpack.c.l.b16 %v64
  %v505 = vunpack.c.h.b16 %v64
  %v506 = vunpack.c.l.b16 %v65
  %v507 = vunpack.c.h.b16 %v65
  %v508 = vunpack.c.l.b16 %v66
  %v509 = vunpack.c.h.b16 %v66
  %v510 = vunpack.c.l.b16 %v67
  %v511 = vunpack.c.h.b16 %v67
  %v512 = vunpack.c.l.b16 %v68
  %v513 = vunpack.c.h.b16 %v68
  %v514 = vunpack.c.l.b16 %v69
  %v515 = vunpack.c.h.b16 %v69
  %v516 = vunpack.c.l.b16 %v70
  %v517 = vunpack.c.h.b16 %v70
  %v518 = vunpack.c.l.b16 %v71
  %v519 = vunpack.c.h.b16 %v71
  %v520 = vunpack.c.l.b16 %v72
  %v521 = vunpack.c.h.b16 %v72
  %v522 = vunpack.c.l.b16 %v73
  %v523 = vunpack.c.h.b16 %v73
  %v524 = vunpack.c.l.b16 %v74
  %v525 = vunpack.c.h.b16 %v74
  %v526 = vunpack.c.l.b16 %v75
  %v527 = vunpack.c.h.b16 %v75
  %v528 = vunpack.c.l.b16 %v76
  %v529 = vunpack.c.h.b16 %v76
  %v530 = vunpack.c.l.b16 %v77
  %v531 = vunpack.c.h.b16 %v77
  %v532 = vunpack.c.l.b16 %v78
  %v533 = vunpack.c.h.b16 %v78
  %v534 = vunpack.c.l.b16 %v79
  %v535 = vunpack.c.h.b16 %v79
  %v536 = vunpack.c.l.b16 %v80
  %v537 = vunpack.c.h.b16 %v80
  %v538 = vunpack.c.l.b16 %v81
  %v539 = vunpack.c.h.b16 %v81
  %v540 = vunpack.c.l.b16 %v82
  %v541 = vunpack.c.h.b16 %v82
  %v542 = vunpack.c.l.b16 %v83
  %v543 = vunpack.c.h.b16 %v83
  %v544 = vunpack.c.l.b16 %v84
  %v545 = vunpack.c.h.b16 %v84
  %v546 = vunpack.c.l.b16 %v85
  %v547 = vunpack.c.h.b16 %v85
  %v548 = vunpack.c.l.b16 %v86
  %v549 = vunpack.c.h.b16 %v86
  %v550 = vunpack.c.l.b16 %v87
  %v551 = vunpack.c.h.b16 %v87
  %v552 = vunpack.c.l.b16 %v88
  %v553 = vunpack.c.h.b16 %v88
  %v554 = vunpack.c.l.b16 %v89
  %v555 = vunpack.c.h.b16 %v89
  %v556 = vunpack.c.l.b16 %v90
  %v557 = vunpack.c.h.b16 %v90
  %v558 = vunpack.c.l.b16 %v91
  %v559 = vunpack.c.h.b16 %v91
  %v560 = vunpack.c.l.b16 %v92
  %v561 = vunpack.c.h.b16 %v92
  %v562 = vunpack.c.l.b16 %v93
  %v563 = vunpack.c.h.b16 %v93
  %v564 = vunpack.c.l.b16 %v94
  %v565 = vunpack.c.h.b16 %v94
  %v566 = vunpack.c.l.b16 %v95
  %v567 = vunpack.c.h.b16 %v95
  %v568 = vunpack.c.l.b16 %v96
  %v569 = vunpack.c.h.b16 %v96
  %v570 = vunpack.c.l.b16 %v97
  %v571 = vunpack.c.h.b16 %v97
  %v572 = vunpack.c.l.b16 %v98
  %v573 = vunpack.c.h.b16 %v98
  %v574 = vunpack.c.l.b16 %v99
  %v575 = vunpack.c.h.b16 %v99
  %v576 = vunpack.c.l.b16 %v100
  %v577 = vunpack.c.h.b16 %v100
  %v578 = vunpack.c.l.b16 %v101
  %v579 = vunpack.c.h.b16 %v101
  %v580 = vunpack.c.l.b16 %v102
  %v581 = vunpack.c.h.b16 %v102
  %v582 = vunpack.c.l.b16 %v103
  %v583 = vunpack.c.h.b16 %v103
  %v584 = vunpack.c.l.b16 %v104
  %v585 = vunpack.c.h.b16 %v104
  %v586 = vunpack.c.l.b16 %v105
  %v587 = vunpack.c.h.b16 %v105
  %v588 = vunpack.c.l.b16 %v106
  %v589 = vunpack.c.h.b16 %v106
  %v590 = vunpack.c.l.b16 %v107
  %v591 = vunpack.c.h.b16 %v107
  %v592 = vunpack.c.l.b16 %v108
  %v593 = vunpack.c.h.b16 %v108
  %v594 = vunpack.c.l.b16 %v109
  %v595 = vunpack.c.h.b16 %v109
  %v596 = vunpack.c.l.b16 %v110
  %v597 = vunpack.c.h.b16 %v110
  %v598 = vunpack.c.l.b16 %v111
  %v599 = vunpack.c.h.b16 %v111
  %v600 = vunpack.c.l.b16 %v112
  %v601 = vunpack.c.h.b16 %v112
  %v602 = vunpack.c.l.b16 %v113
  %v603 = vunpack.c.h.b16 %v113
  %v604 = vpack.c.b16 %v480, %v476
  %v605 = vpack.c.b16 %v481, %v477
  %v606 = vpack.c.b16 %v482, %v478
  %v607 = vpack.c.b16 %v483, %v479
  %v608 = vpack.c.b16 %v488, %v484
  %v609 = vpack.c.b16 %v489, %v485
  %v610 = vpack.c.b16 %v490, %v486
  %v611 = vpack.c.b16 %v491, %v487
  %v612 = vpack.c.b16 %v496, %v492
  %v613 = vpack.c.b16 %v497, %v493
  %v614 = vpack.c.b16 %v498, %v494
  %v615 = vpack.c.b16 %v499, %v495
  %v616 = vpack.c.b16 %v504, %v500
  %v617 = vpack.c.b16 %v505, %v501
  %v618 = vpack.c.b16 %v506, %v502
  %v619 = vpack.c.b16 %v507, %v503
  %v620 = vpack.c.b16 %v512, %v508
  %v621 = vpack.c.b16 %v513, %v509
  %v622 = vpack.c.b16 %v514, %v510
  %v623 = vpack.c.b16 %v515, %v511
  %v624 = vpack.c.b16 %v520, %v516
  %v625 = vpack.c.b16 %v521, %v517
  %v626 = vpack.c.b16 %v522, %v518
  %v627 = vpack.c.b16 %v523, %v519
  %v628 = vpack.c.b16 %v528, %v524
  %v629 = vpack.c.b16 %v529, %v525
  %v630 = vpack.c.b16 %v530, %v526
  %v631 = vpack.c.b16 %v531, %v527
  %v632 = vpack.c.b16 %v536, %v532
  %v633 = vpack.c.b16 %v537, %v533
  %v634 = vpack.c.b16 %v538, %v534
  %v635 = vpack.c.b16 %v539, %v535
  %v636 = vpack.c.b16 %v544, %v540
  %v637 = vpack.c.b16 %v545, %v541
  %v638 = vpack.c.b16 %v546, %v542
  %v639 = vpack.c.b16 %v547, %v543
  %v640 = vpack.c.b16 %v552, %v548
  %v641 = vpack.c.b16 %v553, %v549
  %v642 = vpack.c.b16 %v554, %v550
  %v643 = vpack.c.b16 %v555, %v551
  %v644 = vpack.c.b16 %v560, %v556
  %v645 = vpack.c.b16 %v561, %v557
  %v646 = vpack.c.b16 %v562, %v558
  %v647 = vpack.c.b16 %v563, %v559
  %v648 = vpack.c.b16 %v568, %v564
  %v649 = vpack.c.b16 %v569, %v565
  %v650 = vpack.c.b16 %v570, %v566
  %v651 = vpack.c.b16 %v571, %v567
  %v652 = vpack.c.b16 %v576, %v572
  %v653 = vpack.c.b16 %v577, %v573
  %v654 = vpack.c.b16 %v578, %v574
  %v655 = vpack.c.b16 %v579, %v575
  %v656 = vpack.c.b16 %v584, %v580
  %v657 = vpack.c.b16 %v585, %v581
  %v658 = vpack.c.b16 %v586, %v582
  %v659 = vpack.c.b16 %v587, %v583
  %v660 = vpack.c.b16 %v592, %v588
  %v661 = vpack.c.b16 %v593, %v589
  %v662 = vpack.c.b16 %v594, %v590
  %v663 = vpack.c.b16 %v595, %v591
  %v664 = vpack.c.b16 %v600, %v596
  %v665 = vpack.c.b16 %v601, %v597
  %v666 = vpack.c.b16 %v602, %v598
  %v667 = vpack.c.b16 %v603, %v599
  %732 = vmatprep.subr.bf16.mxu0 %v605
  %733 = vmatpush1.bf16.msra.mxu0 %v604
  %734 = vmatprep.subr.bf16.mxu0 %v609
  %735 = vmatpush1.bf16.msra.mxu0 %v608
  %736 = vmatprep.subr.bf16.mxu0 %v613
  %737 = vmatpush1.bf16.msra.mxu0 %v612
  %738 = vmatprep.subr.bf16.mxu0 %v617
  %739 = vmatpush1.bf16.msra.mxu0 %v616
  %740 = vmatprep.subr.bf16.mxu0 %v621
  %741 = vmatpush1.bf16.msra.mxu0 %v620
  %742 = vmatprep.subr.bf16.mxu0 %v625
  %743 = vmatpush1.bf16.msra.mxu0 %v624
  %744 = vmatprep.subr.bf16.mxu0 %v629
  %745 = vmatpush1.bf16.msra.mxu0 %v628
  %746 = vmatprep.subr.bf16.mxu0 %v633
  %747 = vmatpush1.bf16.msra.mxu0 %v632
  %748 = vmatprep.subr.bf16.mxu0 %v637
  %749 = vmatpush1.bf16.msra.mxu0 %v636
  %750 = vmatprep.subr.bf16.mxu0 %v641
  %751 = vmatpush1.bf16.msra.mxu0 %v640
  %752 = vmatprep.subr.bf16.mxu0 %v645
  %753 = vmatpush1.bf16.msra.mxu0 %v644
  %754 = vmatprep.subr.bf16.mxu0 %v649
  %755 = vmatpush1.bf16.msra.mxu0 %v648
  %756 = vmatprep.subr.bf16.mxu0 %v653
  %757 = vmatpush1.bf16.msra.mxu0 %v652
  %758 = vmatprep.subr.bf16.mxu0 %v657
  %759 = vmatpush1.bf16.msra.mxu0 %v656
  %760 = vmatprep.subr.bf16.mxu0 %v661
  %761 = vmatpush1.bf16.msra.mxu0 %v660
  %762 = vmatprep.subr.bf16.mxu0 %v665
  %763 = vmatpush1.bf16.msra.mxu0 %v664
  %764 = vmatprep.mubr.bf16.mxu0 %v411
  %765 = vmatmul.mubr.bf16.gmra.mrb[0].mxu0 %v410
  %v766 = vpop.f32.mrb[0].mxu0
  %v767 = vadd.f32 %v119, %v766
  %v768 = vpop.f32.mrb[0].mxu0
  %v769 = vadd.f32 %v123, %v768
  %v770 = vpop.f32.mrb[0].mxu0
  %v771 = vpop.f32.mrb[0].mxu0
  %772 = vdwg.mxu0
  %773 = vmatprep.subr.bf16.mxu0 %v607
  %774 = vmatpush1.bf16.msra.mxu0 %v606
  %775 = vmatprep.subr.bf16.mxu0 %v611
  %776 = vmatpush1.bf16.msra.mxu0 %v610
  %777 = vmatprep.subr.bf16.mxu0 %v615
  %778 = vmatpush1.bf16.msra.mxu0 %v614
  %779 = vmatprep.subr.bf16.mxu0 %v619
  %780 = vmatpush1.bf16.msra.mxu0 %v618
  %781 = vmatprep.subr.bf16.mxu0 %v623
  %782 = vmatpush1.bf16.msra.mxu0 %v622
  %783 = vmatprep.subr.bf16.mxu0 %v627
  %784 = vmatpush1.bf16.msra.mxu0 %v626
  %785 = vmatprep.subr.bf16.mxu0 %v631
  %786 = vmatpush1.bf16.msra.mxu0 %v630
  %787 = vmatprep.subr.bf16.mxu0 %v635
  %788 = vmatpush1.bf16.msra.mxu0 %v634
  %789 = vmatprep.subr.bf16.mxu0 %v639
  %790 = vmatpush1.bf16.msra.mxu0 %v638
  %791 = vmatprep.subr.bf16.mxu0 %v643
  %792 = vmatpush1.bf16.msra.mxu0 %v642
  %793 = vmatprep.subr.bf16.mxu0 %v647
  %794 = vmatpush1.bf16.msra.mxu0 %v646
  %795 = vmatprep.subr.bf16.mxu0 %v651
  %796 = vmatpush1.bf16.msra.mxu0 %v650
  %797 = vmatprep.subr.bf16.mxu0 %v655
  %798 = vmatpush1.bf16.msra.mxu0 %v654
  %799 = vmatprep.subr.bf16.mxu0 %v659
  %800 = vmatpush1.bf16.msra.mxu0 %v658
  %801 = vmatprep.subr.bf16.mxu0 %v663
  %802 = vmatpush1.bf16.msra.mxu0 %v662
  %803 = vmatprep.subr.bf16.mxu0 %v667
  %804 = vmatpush1.bf16.msra.mxu0 %v666
  %805 = vmatprep.mubr.bf16.mxu0 %v411
  %806 = vmatmul.mubr.bf16.gmra.mrb[0].mxu0 %v410
  %v807 = vpop.f32.mrb[0].mxu0
  %v808 = vadd.f32 %v127, %v807
  %v809 = vpop.f32.mrb[0].mxu0
  %v810 = vadd.f32 %v131, %v809
  %v811 = vpop.f32.mrb[0].mxu0
  %v812 = vpop.f32.mrb[0].mxu0
  %813 = vdwg.mxu0
  %v814 = vxor.u32 %v767, 2147483648
  %v815 = vxor.u32 %v769, 2147483648
  %v816 = vxor.u32 %v808, 2147483648
  %v817 = vmul.f32 %v814, 1.442695
  %v818 = vpow.pop %v817
  %v819 = vmul.f32 %v815, 1.442695
  %v820 = vpow.pop %v819
  %v821 = vmul.f32 %v816, 1.442695
  %v822 = vpow.pop %v821
  %v823 = vadd.f32 %v818, 1.0
  %v824 = vadd.f32 %v820, 1.0
  %v825 = vadd.f32 %v822, 1.0
  %v826 = vrcp.pop %v823
  %v827 = vmul.f32 1.0, %v826
  %v828 = vrcp.pop %v824
  %v829 = vmul.f32 1.0, %v828
  %v830 = vrcp.pop %v825
  %v831 = vmul.f32 1.0, %v830
  %v832 = vtanh.pop %v810
  %v833 = vmul.f32 %v829, 0.0
  %v834 = vmul.f32 %v827, %v832
  %v835 = vadd.f32 %v833, %v834
  %v836 = vtanh.pop %v835
  %v837 = vmul.f32 %v831, %v836
  %v838 = vpack.c.bf16 %v837, %v837
  %839 = vst [vmem:[%s4] sm:$0xf] %v838
  %s840 = scalar_lea.vmem %s0, 32
  %v841 = vld [vmem:[%s840] sm:$0xff]
  %v842 = vld [vmem:[%s840 + $0x8] sm:$0xff]
  %v843 = vld [vmem:[%s840 + $0x10] sm:$0xff]
  %v844 = vld [vmem:[%s840 + $0x18] sm:$0xff]
  %845 = vmatprep.subr.bf16.mxu0 %v237
  %846 = vmatpush1.bf16.msra.mxu0 %v236
  %847 = vmatprep.subr.bf16.mxu0 %v241
  %848 = vmatpush1.bf16.msra.mxu0 %v240
  %849 = vmatprep.subr.bf16.mxu0 %v245
  %850 = vmatpush1.bf16.msra.mxu0 %v244
  %851 = vmatprep.subr.bf16.mxu0 %v249
  %852 = vmatpush1.bf16.msra.mxu0 %v248
  %853 = vmatprep.subr.bf16.mxu0 %v253
  %854 = vmatpush1.bf16.msra.mxu0 %v252
  %855 = vmatprep.subr.bf16.mxu0 %v257
  %856 = vmatpush1.bf16.msra.mxu0 %v256
  %857 = vmatprep.subr.bf16.mxu0 %v261
  %858 = vmatpush1.bf16.msra.mxu0 %v260
  %859 = vmatprep.subr.bf16.mxu0 %v265
  %860 = vmatpush1.bf16.msra.mxu0 %v264
  %861 = vmatprep.subr.bf16.mxu0 0
  %862 = vmatpush1.bf16.msra.mxu0 0
  %863 = vmatprep.subr.bf16.mxu0 0
  %864 = vmatpush1.bf16.msra.mxu0 0
  %865 = vmatprep.subr.bf16.mxu0 0
  %866 = vmatpush1.bf16.msra.mxu0 0
  %867 = vmatprep.subr.bf16.mxu0 0
  %868 = vmatpush1.bf16.msra.mxu0 0
  %869 = vmatprep.subr.bf16.mxu0 0
  %870 = vmatpush1.bf16.msra.mxu0 0
  %871 = vmatprep.subr.bf16.mxu0 0
  %872 = vmatpush1.bf16.msra.mxu0 0
  %873 = vmatprep.subr.bf16.mxu0 0
  %874 = vmatpush1.bf16.msra.mxu0 0
  %875 = vmatprep.subr.bf16.mxu0 0
  %876 = vmatpush1.bf16.msra.mxu0 0
  %877 = vmatprep.mubr.bf16.mxu0 0
  %878 = vmatmul.mubr.bf16.gmra.mrb[0].mxu0 %v410
  %v879 = vpop.f32.mrb[0].mxu0
  %v880 = vadd.f32 0.0, %v879
  %v881 = vpop.f32.mrb[0].mxu0
  %v882 = vadd.f32 0.0, %v881
  %v883 = vpop.f32.mrb[0].mxu0
  %v884 = vpop.f32.mrb[0].mxu0
  %885 = vdwg.mxu0
  %886 = vmatprep.subr.bf16.mxu0 %v239
  %887 = vmatpush1.bf16.msra.mxu0 %v238
  %888 = vmatprep.subr.bf16.mxu0 %v243
  %889 = vmatpush1.bf16.msra.mxu0 %v242
  %890 = vmatprep.subr.bf16.mxu0 %v247
  %891 = vmatpush1.bf16.msra.mxu0 %v246
  %892 = vmatprep.subr.bf16.mxu0 %v251
  %893 = vmatpush1.bf16.msra.mxu0 %v250
  %894 = vmatprep.subr.bf16.mxu0 %v255
  %895 = vmatpush1.bf16.msra.mxu0 %v254
  %896 = vmatprep.subr.bf16.mxu0 %v259
  %897 = vmatpush1.bf16.msra.mxu0 %v258
  %898 = vmatprep.subr.bf16.mxu0 %v263
  %899 = vmatpush1.bf16.msra.mxu0 %v262
  %900 = vmatprep.subr.bf16.mxu0 %v267
  %901 = vmatpush1.bf16.msra.mxu0 %v266
  %902 = vmatprep.subr.bf16.mxu0 0
  %903 = vmatpush1.bf16.msra.mxu0 0
  %904 = vmatprep.subr.bf16.mxu0 0
  %905 = vmatpush1.bf16.msra.mxu0 0
  %906 = vmatprep.subr.bf16.mxu0 0
  %907 = vmatpush1.bf16.msra.mxu0 0
  %908 = vmatprep.subr.bf16.mxu0 0
  %909 = vmatpush1.bf16.msra.mxu0 0
  %910 = vmatprep.subr.bf16.mxu0 0
  %911 = vmatpush1.bf16.msra.mxu0 0
  %912 = vmatprep.subr.bf16.mxu0 0
  %913 = vmatpush1.bf16.msra.mxu0 0
  %914 = vmatprep.subr.bf16.mxu0 0
  %915 = vmatpush1.bf16.msra.mxu0 0
  %916 = vmatprep.subr.bf16.mxu0 0
  %917 = vmatpush1.bf16.msra.mxu0 0
  %918 = vmatprep.mubr.bf16.mxu0 0
  %919 = vmatmul.mubr.bf16.gmra.mrb[0].mxu0 %v410
  %v920 = vpop.f32.mrb[0].mxu0
  %v921 = vadd.f32 0.0, %v920
  %v922 = vpop.f32.mrb[0].mxu0
  %v923 = vadd.f32 0.0, %v922
  %v924 = vpop.f32.mrb[0].mxu0
  %v925 = vpop.f32.mrb[0].mxu0
  %926 = vdwg.mxu0
  %v927 = vadd.f32 %v841, %v880
  %v928 = vadd.f32 %v842, %v882
  %v929 = vadd.f32 %v843, %v921
  %v930 = vadd.f32 %v844, %v923
  %v931 = vxor.u32 %v927, 2147483648
  %v932 = vxor.u32 %v928, 2147483648
  %v933 = vxor.u32 %v929, 2147483648
  %v934 = vmul.f32 %v931, 1.442695
  %v935 = vpow.pop %v934
  %v936 = vmul.f32 %v932, 1.442695
  %v937 = vpow.pop %v936
  %v938 = vmul.f32 %v933, 1.442695
  %v939 = vpow.pop %v938
  %v940 = vadd.f32 %v935, 1.0
  %v941 = vadd.f32 %v937, 1.0
  %v942 = vadd.f32 %v939, 1.0
  %v943 = vrcp.pop %v940
  %v944 = vmul.f32 1.0, %v943
  %v945 = vrcp.pop %v941
  %v946 = vmul.f32 1.0, %v945
  %v947 = vrcp.pop %v942
  %v948 = vmul.f32 1.0, %v947
  %v949 = vtanh.pop %v930
  %v950 = vmul.f32 %v946, %v407
  %v951 = vmul.f32 %v944, %v949
  %v952 = vadd.f32 %v950, %v951
  %v953 = vtanh.pop %v952
  %v954 = vmul.f32 %v948, %v953
  %v955 = vpack.c.bf16 %v954, %v954
  %956 = vmatprep.subr.bf16.mxu0 %v605
  %957 = vmatpush1.bf16.msra.mxu0 %v604
  %958 = vmatprep.subr.bf16.mxu0 %v609
  %959 = vmatpush1.bf16.msra.mxu0 %v608
  %960 = vmatprep.subr.bf16.mxu0 %v613
  %961 = vmatpush1.bf16.msra.mxu0 %v612
  %962 = vmatprep.subr.bf16.mxu0 %v617
  %963 = vmatpush1.bf16.msra.mxu0 %v616
  %964 = vmatprep.subr.bf16.mxu0 %v621
  %965 = vmatpush1.bf16.msra.mxu0 %v620
  %966 = vmatprep.subr.bf16.mxu0 %v625
  %967 = vmatpush1.bf16.msra.mxu0 %v624
  %968 = vmatprep.subr.bf16.mxu0 %v629
  %969 = vmatpush1.bf16.msra.mxu0 %v628
  %970 = vmatprep.subr.bf16.mxu0 %v633
  %971 = vmatpush1.bf16.msra.mxu0 %v632
  %972 = vmatprep.subr.bf16.mxu0 %v637
  %973 = vmatpush1.bf16.msra.mxu0 %v636
  %974 = vmatprep.subr.bf16.mxu0 %v641
  %975 = vmatpush1.bf16.msra.mxu0 %v640
  %976 = vmatprep.subr.bf16.mxu0 %v645
  %977 = vmatpush1.bf16.msra.mxu0 %v644
  %978 = vmatprep.subr.bf16.mxu0 %v649
  %979 = vmatpush1.bf16.msra.mxu0 %v648
  %980 = vmatprep.subr.bf16.mxu0 %v653
  %981 = vmatpush1.bf16.msra.mxu0 %v652
  %982 = vmatprep.subr.bf16.mxu0 %v657
  %983 = vmatpush1.bf16.msra.mxu0 %v656
  %984 = vmatprep.subr.bf16.mxu0 %v661
  %985 = vmatpush1.bf16.msra.mxu0 %v660
  %986 = vmatprep.subr.bf16.mxu0 %v665
  %987 = vmatpush1.bf16.msra.mxu0 %v664
  %988 = vmatprep.mubr.bf16.mxu0 %v838
  %989 = vmatmul.mubr.bf16.gmra.mrb[0].mxu0 %v955
  %v990 = vpop.f32.mrb[0].mxu0
  %v991 = vadd.f32 %v119, %v990
  %v992 = vpop.f32.mrb[0].mxu0
  %v993 = vadd.f32 %v123, %v992
  %v994 = vpop.f32.mrb[0].mxu0
  %v995 = vpop.f32.mrb[0].mxu0
  %996 = vdwg.mxu0
  %997 = vmatprep.subr.bf16.mxu0 %v607
  %998 = vmatpush1.bf16.msra.mxu0 %v606
  %999 = vmatprep.subr.bf16.mxu0 %v611
  %1000 = vmatpush1.bf16.msra.mxu0 %v610
  %1001 = vmatprep.subr.bf16.mxu0 %v615
  %1002 = vmatpush1.bf16.msra.mxu0 %v614
  %1003 = vmatprep.subr.bf16.mxu0 %v619
  %1004 = vmatpush1.bf16.msra.mxu0 %v618
  %1005 = vmatprep.subr.bf16.mxu0 %v623
  %1006 = vmatpush1.bf16.msra.mxu0 %v622
  %1007 = vmatprep.subr.bf16.mxu0 %v627
  %1008 = vmatpush1.bf16.msra.mxu0 %v626
  %1009 = vmatprep.subr.bf16.mxu0 %v631
  %1010 = vmatpush1.bf16.msra.mxu0 %v630
  %1011 = vmatprep.subr.bf16.mxu0 %v635
  %1012 = vmatpush1.bf16.msra.mxu0 %v634
  %1013 = vmatprep.subr.bf16.mxu0 %v639
  %1014 = vmatpush1.bf16.msra.mxu0 %v638
  %1015 = vmatprep.subr.bf16.mxu0 %v643
  %1016 = vmatpush1.bf16.msra.mxu0 %v642
  %1017 = vmatprep.subr.bf16.mxu0 %v647
  %1018 = vmatpush1.bf16.msra.mxu0 %v646
  %1019 = vmatprep.subr.bf16.mxu0 %v651
  %1020 = vmatpush1.bf16.msra.mxu0 %v650
  %1021 = vmatprep.subr.bf16.mxu0 %v655
  %1022 = vmatpush1.bf16.msra.mxu0 %v654
  %1023 = vmatprep.subr.bf16.mxu0 %v659
  %1024 = vmatpush1.bf16.msra.mxu0 %v658
  %1025 = vmatprep.subr.bf16.mxu0 %v663
  %1026 = vmatpush1.bf16.msra.mxu0 %v662
  %1027 = vmatprep.subr.bf16.mxu0 %v667
  %1028 = vmatpush1.bf16.msra.mxu0 %v666
  %1029 = vmatprep.mubr.bf16.mxu0 %v838
  %1030 = vmatmul.mubr.bf16.gmra.mrb[0].mxu0 %v955
  %v1031 = vpop.f32.mrb[0].mxu0
  %v1032 = vadd.f32 %v127, %v1031
  %v1033 = vpop.f32.mrb[0].mxu0
  %v1034 = vadd.f32 %v131, %v1033
  %v1035 = vpop.f32.mrb[0].mxu0
  %v1036 = vpop.f32.mrb[0].mxu0
  %1037 = vdwg.mxu0
  %v1038 = vxor.u32 %v991, 2147483648
  %v1039 = vxor.u32 %v993, 2147483648
  %v1040 = vxor.u32 %v1032, 2147483648
  %v1041 = vmul.f32 %v1038, 1.442695
  %v1042 = vpow.pop %v1041
  %v1043 = vmul.f32 %v1039, 1.442695
  %v1044 = vpow.pop %v1043
  %v1045 = vmul.f32 %v1040, 1.442695
  %v1046 = vpow.pop %v1045
  %v1047 = vadd.f32 %v1042, 1.0
  %v1048 = vadd.f32 %v1044, 1.0
  %v1049 = vadd.f32 %v1046, 1.0
  %v1050 = vrcp.pop %v1047
  %v1051 = vmul.f32 1.0, %v1050
  %v1052 = vrcp.pop %v1048
  %v1053 = vmul.f32 1.0, %v1052
  %v1054 = vrcp.pop %v1049
  %v1055 = vmul.f32 1.0, %v1054
  %v1056 = vtanh.pop %v1034
  %v1057 = vmul.f32 %v1053, %v835
  %v1058 = vmul.f32 %v1051, %v1056
  %v1059 = vadd.f32 %v1057, %v1058
  %v1060 = vtanh.pop %v1059
  %v1061 = vmul.f32 %v1055, %v1060
  %v1062 = vpack.c.bf16 %v1061, %v1061
  %s1063 = scalar_lea.vmem %s4, 4
  %1064 = vst [vmem:[%s1063] sm:$0xf] %v1062
  %s1065 = scalar_lea.vmem %s0, 64
  %v1066 = vld [vmem:[%s1065] sm:$0xff]
  %v1067 = vld [vmem:[%s1065 + $0x8] sm:$0xff]
  %v1068 = vld [vmem:[%s1065 + $0x10] sm:$0xff]
  %v1069 = vld [vmem:[%s1065 + $0x18] sm:$0xff]
  %1070 = vmatprep.subr.bf16.mxu0 %v237
  %1071 = vmatpush1.bf16.msra.mxu0 %v236
  %1072 = vmatprep.subr.bf16.mxu0 %v241
  %1073 = vmatpush1.bf16.msra.mxu0 %v240
  %1074 = vmatprep.subr.bf16.mxu0 %v245
  %1075 = vmatpush1.bf16.msra.mxu0 %v244
  %1076 = vmatprep.subr.bf16.mxu0 %v249
  %1077 = vmatpush1.bf16.msra.mxu0 %v248
  %1078 = vmatprep.subr.bf16.mxu0 %v253
  %1079 = vmatpush1.bf16.msra.mxu0 %v252
  %1080 = vmatprep.subr.bf16.mxu0 %v257
  %1081 = vmatpush1.bf16.msra.mxu0 %v256
  %1082 = vmatprep.subr.bf16.mxu0 %v261
  %1083 = vmatpush1.bf16.msra.mxu0 %v260
  %1084 = vmatprep.subr.bf16.mxu0 %v265
  %1085 = vmatpush1.bf16.msra.mxu0 %v264
  %1086 = vmatprep.subr.bf16.mxu0 0
  %1087 = vmatpush1.bf16.msra.mxu0 0
  %1088 = vmatprep.subr.bf16.mxu0 0
  %1089 = vmatpush1.bf16.msra.mxu0 0
  %1090 = vmatprep.subr.bf16.mxu0 0
  %1091 = vmatpush1.bf16.msra.mxu0 0
  %1092 = vmatprep.subr.bf16.mxu0 0
  %1093 = vmatpush1.bf16.msra.mxu0 0
  %1094 = vmatprep.subr.bf16.mxu0 0
  %1095 = vmatpush1.bf16.msra.mxu0 0
  %1096 = vmatprep.subr.bf16.mxu0 0
  %1097 = vmatpush1.bf16.msra.mxu0 0
  %1098 = vmatprep.subr.bf16.mxu0 0
  %1099 = vmatpush1.bf16.msra.mxu0 0
  %1100 = vmatprep.subr.bf16.mxu0 0
  %1101 = vmatpush1.bf16.msra.mxu0 0
  %1102 = vmatprep.mubr.bf16.mxu0 0
  %1103 = vmatmul.mubr.bf16.gmra.mrb[0].mxu0 %v955
  %v1104 = vpop.f32.mrb[0].mxu0
  %v1105 = vadd.f32 0.0, %v1104
  %v1106 = vpop.f32.mrb[0].mxu0
  %v1107 = vadd.f32 0.0, %v1106
  %v1108 = vpop.f32.mrb[0].mxu0
  %v1109 = vpop.f32.mrb[0].mxu0
  %1110 = vdwg.mxu0
  %1111 = vmatprep.subr.bf16.mxu0 %v239
  %1112 = vmatpush1.bf16.msra.mxu0 %v238
  %1113 = vmatprep.subr.bf16.mxu0 %v243
  %1114 = vmatpush1.bf16.msra.mxu0 %v242
  %1115 = vmatprep.subr.bf16.mxu0 %v247
  %1116 = vmatpush1.bf16.msra.mxu0 %v246
  %1117 = vmatprep.subr.bf16.mxu0 %v251
  %1118 = vmatpush1.bf16.msra.mxu0 %v250
  %1119 = vmatprep.subr.bf16.mxu0 %v255
  %1120 = vmatpush1.bf16.msra.mxu0 %v254
  %1121 = vmatprep.subr.bf16.mxu0 %v259
  %1122 = vmatpush1.bf16.msra.mxu0 %v258
  %1123 = vmatprep.subr.bf16.mxu0 %v263
  %1124 = vmatpush1.bf16.msra.mxu0 %v262
  %1125 = vmatprep.subr.bf16.mxu0 %v267
  %1126 = vmatpush1.bf16.msra.mxu0 %v266
  %1127 = vmatprep.subr.bf16.mxu0 0
  %1128 = vmatpush1.bf16.msra.mxu0 0
  %1129 = vmatprep.subr.bf16.mxu0 0
  %1130 = vmatpush1.bf16.msra.mxu0 0
  %1131 = vmatprep.subr.bf16.mxu0 0
  %1132 = vmatpush1.bf16.msra.mxu0 0
  %1133 = vmatprep.subr.bf16.mxu0 0
  %1134 = vmatpush1.bf16.msra.mxu0 0
  %1135 = vmatprep.subr.bf16.mxu0 0
  %1136 = vmatpush1.bf16.msra.mxu0 0
  %1137 = vmatprep.subr.bf16.mxu0 0
  %1138 = vmatpush1.bf16.msra.mxu0 0
  %1139 = vmatprep.subr.bf16.mxu0 0
  %1140 = vmatpush1.bf16.msra.mxu0 0
  %1141 = vmatprep.subr.bf16.mxu0 0
  %1142 = vmatpush1.bf16.msra.mxu0 0
  %1143 = vmatprep.mubr.bf16.mxu0 0
  %1144 = vmatmul.mubr.bf16.gmra.mrb[0].mxu0 %v955
  %v1145 = vpop.f32.mrb[0].mxu0
  %v1146 = vadd.f32 0.0, %v1145
  %v1147 = vpop.f32.mrb[0].mxu0
  %v1148 = vadd.f32 0.0, %v1147
  %v1149 = vpop.f32.mrb[0].mxu0
  %v1150 = vpop.f32.mrb[0].mxu0
  %1151 = vdwg.mxu0
  %v1152 = vadd.f32 %v1066, %v1105
  %v1153 = vadd.f32 %v1067, %v1107
  %v1154 = vadd.f32 %v1068, %v1146
  %v1155 = vadd.f32 %v1069, %v1148
  %v1156 = vxor.u32 %v1152, 2147483648
  %v1157 = vxor.u32 %v1153, 2147483648
  %v1158 = vxor.u32 %v1154, 2147483648
  %v1159 = vmul.f32 %v1156, 1.442695
  %v1160 = vpow.pop %v1159
  %v1161 = vmul.f32 %v1157, 1.442695
  %v1162 = vpow.pop %v1161
  %v1163 = vmul.f32 %v1158, 1.442695
  %v1164 = vpow.pop %v1163
  %v1165 = vadd.f32 %v1160, 1.0
  %v1166 = vadd.f32 %v1162, 1.0
  %v1167 = vadd.f32 %v1164, 1.0
  %v1168 = vrcp.pop %v1165
  %v1169 = vmul.f32 1.0, %v1168
  %v1170 = vrcp.pop %v1166
  %v1171 = vmul.f32 1.0, %v1170
  %v1172 = vrcp.pop %v1167
  %v1173 = vmul.f32 1.0, %v1172
  %v1174 = vtanh.pop %v1155
  %v1175 = vmul.f32 %v1171, %v952
  %v1176 = vmul.f32 %v1169, %v1174
  %v1177 = vadd.f32 %v1175, %v1176
  %v1178 = vtanh.pop %v1177
  %v1179 = vmul.f32 %v1173, %v1178
  %v1180 = vpack.c.bf16 %v1179, %v1179
  %1181 = vmatprep.subr.bf16.mxu0 %v605
  %1182 = vmatpush1.bf16.msra.mxu0 %v604
  %1183 = vmatprep.subr.bf16.mxu0 %v609
  %1184 = vmatpush1.bf16.msra.mxu0 %v608
  %1185 = vmatprep.subr.bf16.mxu0 %v613
  %1186 = vmatpush1.bf16.msra.mxu0 %v612
  %1187 = vmatprep.subr.bf16.mxu0 %v617
  %1188 = vmatpush1.bf16.msra.mxu0 %v616
  %1189 = vmatprep.subr.bf16.mxu0 %v621
  %1190 = vmatpush1.bf16.msra.mxu0 %v620
  %1191 = vmatprep.subr.bf16.mxu0 %v625
  %1192 = vmatpush1.bf16.msra.mxu0 %v624
  %1193 = vmatprep.subr.bf16.mxu0 %v629
  %1194 = vmatpush1.bf16.msra.mxu0 %v628
  %1195 = vmatprep.subr.bf16.mxu0 %v633
  %1196 = vmatpush1.bf16.msra.mxu0 %v632
  %1197 = vmatprep.subr.bf16.mxu0 %v637
  %1198 = vmatpush1.bf16.msra.mxu0 %v636
  %1199 = vmatprep.subr.bf16.mxu0 %v641
  %1200 = vmatpush1.bf16.msra.mxu0 %v640
  %1201 = vmatprep.subr.bf16.mxu0 %v645
  %1202 = vmatpush1.bf16.msra.mxu0 %v644
  %1203 = vmatprep.subr.bf16.mxu0 %v649
  %1204 = vmatpush1.bf16.msra.mxu0 %v648
  %1205 = vmatprep.subr.bf16.mxu0 %v653
  %1206 = vmatpush1.bf16.msra.mxu0 %v652
  %1207 = vmatprep.subr.bf16.mxu0 %v657
  %1208 = vmatpush1.bf16.msra.mxu0 %v656
  %1209 = vmatprep.subr.bf16.mxu0 %v661
  %1210 = vmatpush1.bf16.msra.mxu0 %v660
  %1211 = vmatprep.subr.bf16.mxu0 %v665
  %1212 = vmatpush1.bf16.msra.mxu0 %v664
  %1213 = vmatprep.mubr.bf16.mxu0 %v1062
  %1214 = vmatmul.mubr.bf16.gmra.mrb[0].mxu0 %v1180
  %v1215 = vpop.f32.mrb[0].mxu0
  %v1216 = vadd.f32 %v119, %v1215
  %v1217 = vpop.f32.mrb[0].mxu0
  %v1218 = vadd.f32 %v123, %v1217
  %v1219 = vpop.f32.mrb[0].mxu0
  %v1220 = vpop.f32.mrb[0].mxu0
  %1221 = vdwg.mxu0
  %1222 = vmatprep.subr.bf16.mxu0 %v607
  %1223 = vmatpush1.bf16.msra.mxu0 %v606
  %1224 = vmatprep.subr.bf16.mxu0 %v611
  %1225 = vmatpush1.bf16.msra.mxu0 %v610
  %1226 = vmatprep.subr.bf16.mxu0 %v615
  %1227 = vmatpush1.bf16.msra.mxu0 %v614
  %1228 = vmatprep.subr.bf16.mxu0 %v619
  %1229 = vmatpush1.bf16.msra.mxu0 %v618
  %1230 = vmatprep.subr.bf16.mxu0 %v623
  %1231 = vmatpush1.bf16.msra.mxu0 %v622
  %1232 = vmatprep.subr.bf16.mxu0 %v627
  %1233 = vmatpush1.bf16.msra.mxu0 %v626
  %1234 = vmatprep.subr.bf16.mxu0 %v631
  %1235 = vmatpush1.bf16.msra.mxu0 %v630
  %1236 = vmatprep.subr.bf16.mxu0 %v635
  %1237 = vmatpush1.bf16.msra.mxu0 %v634
  %1238 = vmatprep.subr.bf16.mxu0 %v639
  %1239 = vmatpush1.bf16.msra.mxu0 %v638
  %1240 = vmatprep.subr.bf16.mxu0 %v643
  %1241 = vmatpush1.bf16.msra.mxu0 %v642
  %1242 = vmatprep.subr.bf16.mxu0 %v647
  %1243 = vmatpush1.bf16.msra.mxu0 %v646
  %1244 = vmatprep.subr.bf16.mxu0 %v651
  %1245 = vmatpush1.bf16.msra.mxu0 %v650
  %1246 = vmatprep.subr.bf16.mxu0 %v655
  %1247 = vmatpush1.bf16.msra.mxu0 %v654
  %1248 = vmatprep.subr.bf16.mxu0 %v659
  %1249 = vmatpush1.bf16.msra.mxu0 %v658
  %1250 = vmatprep.subr.bf16.mxu0 %v663
  %1251 = vmatpush1.bf16.msra.mxu0 %v662
  %1252 = vmatprep.subr.bf16.mxu0 %v667
  %1253 = vmatpush1.bf16.msra.mxu0 %v666
  %1254 = vmatprep.mubr.bf16.mxu0 %v1062
  %1255 = vmatmul.mubr.bf16.gmra.mrb[0].mxu0 %v1180
  %v1256 = vpop.f32.mrb[0].mxu0
  %v1257 = vadd.f32 %v127, %v1256
  %v1258 = vpop.f32.mrb[0].mxu0
  %v1259 = vadd.f32 %v131, %v1258
  %v1260 = vpop.f32.mrb[0].mxu0
  %v1261 = vpop.f32.mrb[0].mxu0
  %1262 = vdwg.mxu0
  %v1263 = vxor.u32 %v1216, 2147483648
  %v1264 = vxor.u32 %v1218, 2147483648
  %v1265 = vxor.u32 %v1257, 2147483648
  %v1266 = vmul.f32 %v1263, 1.442695
  %v1267 = vpow.pop %v1266
  %v1268 = vmul.f32 %v1264, 1.442695
  %v1269 = vpow.pop %v1268
  %v1270 = vmul.f32 %v1265, 1.442695
  %v1271 = vpow.pop %v1270
  %v1272 = vadd.f32 %v1267, 1.0
  %v1273 = vadd.f32 %v1269, 1.0
  %v1274 = vadd.f32 %v1271, 1.0
  %v1275 = vrcp.pop %v1272
  %v1276 = vmul.f32 1.0, %v1275
  %v1277 = vrcp.pop %v1273
  %v1278 = vmul.f32 1.0, %v1277
  %v1279 = vrcp.pop %v1274
  %v1280 = vmul.f32 1.0, %v1279
  %v1281 = vtanh.pop %v1259
  %v1282 = vmul.f32 %v1278, %v1059
  %v1283 = vmul.f32 %v1276, %v1281
  %v1284 = vadd.f32 %v1282, %v1283
  %v1285 = vtanh.pop %v1284
  %v1286 = vmul.f32 %v1280, %v1285
  %v1287 = vpack.c.bf16 %v1286, %v1286
  %s1288 = scalar_lea.vmem %s4, 8
  %1289 = vst [vmem:[%s1288] sm:$0xf] %v1287
  %s1290 = scalar_lea.vmem %s0, 96
  %v1291 = vld [vmem:[%s1290] sm:$0xff]
  %v1292 = vld [vmem:[%s1290 + $0x8] sm:$0xff]
  %v1293 = vld [vmem:[%s1290 + $0x10] sm:$0xff]
  %v1294 = vld [vmem:[%s1290 + $0x18] sm:$0xff]
  %1295 = vmatprep.subr.bf16.mxu0 %v237
  %1296 = vmatpush1.bf16.msra.mxu0 %v236
  %1297 = vmatprep.subr.bf16.mxu0 %v241
  %1298 = vmatpush1.bf16.msra.mxu0 %v240
  %1299 = vmatprep.subr.bf16.mxu0 %v245
  %1300 = vmatpush1.bf16.msra.mxu0 %v244
  %1301 = vmatprep.subr.bf16.mxu0 %v249
  %1302 = vmatpush1.bf16.msra.mxu0 %v248
  %1303 = vmatprep.subr.bf16.mxu0 %v253
  %1304 = vmatpush1.bf16.msra.mxu0 %v252
  %1305 = vmatprep.subr.bf16.mxu0 %v257
  %1306 = vmatpush1.bf16.msra.mxu0 %v256
  %1307 = vmatprep.subr.bf16.mxu0 %v261
  %1308 = vmatpush1.bf16.msra.mxu0 %v260
  %1309 = vmatprep.subr.bf16.mxu0 %v265
  %1310 = vmatpush1.bf16.msra.mxu0 %v264
  %1311 = vmatprep.subr.bf16.mxu0 0
  %1312 = vmatpush1.bf16.msra.mxu0 0
  %1313 = vmatprep.subr.bf16.mxu0 0
  %1314 = vmatpush1.bf16.msra.mxu0 0
  %1315 = vmatprep.subr.bf16.mxu0 0
  %1316 = vmatpush1.bf16.msra.mxu0 0
  %1317 = vmatprep.subr.bf16.mxu0 0
  %1318 = vmatpush1.bf16.msra.mxu0 0
  %1319 = vmatprep.subr.bf16.mxu0 0
  %1320 = vmatpush1.bf16.msra.mxu0 0
  %1321 = vmatprep.subr.bf16.mxu0 0
  %1322 = vmatpush1.bf16.msra.mxu0 0
  %1323 = vmatprep.subr.bf16.mxu0 0
  %1324 = vmatpush1.bf16.msra.mxu0 0
  %1325 = vmatprep.subr.bf16.mxu0 0
  %1326 = vmatpush1.bf16.msra.mxu0 0
  %1327 = vmatprep.mubr.bf16.mxu0 0
  %1328 = vmatmul.mubr.bf16.gmra.mrb[0].mxu0 %v1180
  %v1329 = vpop.f32.mrb[0].mxu0
  %v1330 = vadd.f32 0.0, %v1329
  %v1331 = vpop.f32.mrb[0].mxu0
  %v1332 = vadd.f32 0.0, %v1331
  %v1333 = vpop.f32.mrb[0].mxu0
  %v1334 = vpop.f32.mrb[0].mxu0
  %1335 = vdwg.mxu0
  %1336 = vmatprep.subr.bf16.mxu0 %v239
  %1337 = vmatpush1.bf16.msra.mxu0 %v238
  %1338 = vmatprep.subr.bf16.mxu0 %v243
  %1339 = vmatpush1.bf16.msra.mxu0 %v242
  %1340 = vmatprep.subr.bf16.mxu0 %v247
  %1341 = vmatpush1.bf16.msra.mxu0 %v246
  %1342 = vmatprep.subr.bf16.mxu0 %v251
  %1343 = vmatpush1.bf16.msra.mxu0 %v250
  %1344 = vmatprep.subr.bf16.mxu0 %v255
  %1345 = vmatpush1.bf16.msra.mxu0 %v254
  %1346 = vmatprep.subr.bf16.mxu0 %v259
  %1347 = vmatpush1.bf16.msra.mxu0 %v258
  %1348 = vmatprep.subr.bf16.mxu0 %v263
  %1349 = vmatpush1.bf16.msra.mxu0 %v262
  %1350 = vmatprep.subr.bf16.mxu0 %v267
  %1351 = vmatpush1.bf16.msra.mxu0 %v266
  %1352 = vmatprep.subr.bf16.mxu0 0
  %1353 = vmatpush1.bf16.msra.mxu0 0
  %1354 = vmatprep.subr.bf16.mxu0 0
  %1355 = vmatpush1.bf16.msra.mxu0 0
  %1356 = vmatprep.subr.bf16.mxu0 0
  %1357 = vmatpush1.bf16.msra.mxu0 0
  %1358 = vmatprep.subr.bf16.mxu0 0
  %1359 = vmatpush1.bf16.msra.mxu0 0
  %1360 = vmatprep.subr.bf16.mxu0 0
  %1361 = vmatpush1.bf16.msra.mxu0 0
  %1362 = vmatprep.subr.bf16.mxu0 0
  %1363 = vmatpush1.bf16.msra.mxu0 0
  %1364 = vmatprep.subr.bf16.mxu0 0
  %1365 = vmatpush1.bf16.msra.mxu0 0
  %1366 = vmatprep.subr.bf16.mxu0 0
  %1367 = vmatpush1.bf16.msra.mxu0 0
  %1368 = vmatprep.mubr.bf16.mxu0 0
  %1369 = vmatmul.mubr.bf16.gmra.mrb[0].mxu0 %v1180
  %v1370 = vpop.f32.mrb[0].mxu0
  %v1371 = vadd.f32 0.0, %v1370
  %v1372 = vpop.f32.mrb[0].mxu0
  %v1373 = vadd.f32 0.0, %v1372
  %v1374 = vpop.f32.mrb[0].mxu0
  %v1375 = vpop.f32.mrb[0].mxu0
  %1376 = vdwg.mxu0
  %v1377 = vadd.f32 %v1291, %v1330
  %v1378 = vadd.f32 %v1292, %v1332
  %v1379 = vadd.f32 %v1293, %v1371
  %v1380 = vadd.f32 %v1294, %v1373
  %v1381 = vxor.u32 %v1377, 2147483648
  %v1382 = vxor.u32 %v1378, 2147483648
  %v1383 = vxor.u32 %v1379, 2147483648
  %v1384 = vmul.f32 %v1381, 1.442695
  %v1385 = vpow.pop %v1384
  %v1386 = vmul.f32 %v1382, 1.442695
  %v1387 = vpow.pop %v1386
  %v1388 = vmul.f32 %v1383, 1.442695
  %v1389 = vpow.pop %v1388
  %v1390 = vadd.f32 %v1385, 1.0
  %v1391 = vadd.f32 %v1387, 1.0
  %v1392 = vadd.f32 %v1389, 1.0
  %v1393 = vrcp.pop %v1390
  %v1394 = vmul.f32 1.0, %v1393
  %v1395 = vrcp.pop %v1391
  %v1396 = vmul.f32 1.0, %v1395
  %v1397 = vrcp.pop %v1392
  %v1398 = vmul.f32 1.0, %v1397
  %v1399 = vtanh.pop %v1380
  %v1400 = vmul.f32 %v1396, %v1177
  %v1401 = vmul.f32 %v1394, %v1399
  %v1402 = vadd.f32 %v1400, %v1401
  %v1403 = vtanh.pop %v1402
  %v1404 = vmul.f32 %v1398, %v1403
  %v1405 = vpack.c.bf16 %v1404, %v1404
  %1406 = vmatprep.subr.bf16.mxu0 %v605
  %1407 = vmatpush1.bf16.msra.mxu0 %v604
  %1408 = vmatprep.subr.bf16.mxu0 %v609
  %1409 = vmatpush1.bf16.msra.mxu0 %v608
  %1410 = vmatprep.subr.bf16.mxu0 %v613
  %1411 = vmatpush1.bf16.msra.mxu0 %v612
  %1412 = vmatprep.subr.bf16.mxu0 %v617
  %1413 = vmatpush1.bf16.msra.mxu0 %v616
  %1414 = vmatprep.subr.bf16.mxu0 %v621
  %1415 = vmatpush1.bf16.msra.mxu0 %v620
  %1416 = vmatprep.subr.bf16.mxu0 %v625
  %1417 = vmatpush1.bf16.msra.mxu0 %v624
  %1418 = vmatprep.subr.bf16.mxu0 %v629
  %1419 = vmatpush1.bf16.msra.mxu0 %v628
  %1420 = vmatprep.subr.bf16.mxu0 %v633
  %1421 = vmatpush1.bf16.msra.mxu0 %v632
  %1422 = vmatprep.subr.bf16.mxu0 %v637
  %1423 = vmatpush1.bf16.msra.mxu0 %v636
  %1424 = vmatprep.subr.bf16.mxu0 %v641
  %1425 = vmatpush1.bf16.msra.mxu0 %v640
  %1426 = vmatprep.subr.bf16.mxu0 %v645
  %1427 = vmatpush1.bf16.msra.mxu0 %v644
  %1428 = vmatprep.subr.bf16.mxu0 %v649
  %1429 = vmatpush1.bf16.msra.mxu0 %v648
  %1430 = vmatprep.subr.bf16.mxu0 %v653
  %1431 = vmatpush1.bf16.msra.mxu0 %v652
  %1432 = vmatprep.subr.bf16.mxu0 %v657
  %1433 = vmatpush1.bf16.msra.mxu0 %v656
  %1434 = vmatprep.subr.bf16.mxu0 %v661
  %1435 = vmatpush1.bf16.msra.mxu0 %v660
  %1436 = vmatprep.subr.bf16.mxu0 %v665
  %1437 = vmatpush1.bf16.msra.mxu0 %v664
  %1438 = vmatprep.mubr.bf16.mxu0 %v1287
  %1439 = vmatmul.mubr.bf16.gmra.mrb[0].mxu0 %v1405
  %v1440 = vpop.f32.mrb[0].mxu0
  %v1441 = vadd.f32 %v119, %v1440
  %v1442 = vpop.f32.mrb[0].mxu0
  %v1443 = vadd.f32 %v123, %v1442
  %v1444 = vpop.f32.mrb[0].mxu0
  %v1445 = vpop.f32.mrb[0].mxu0
  %1446 = vdwg.mxu0
  %1447 = vmatprep.subr.bf16.mxu0 %v607
  %1448 = vmatpush1.bf16.msra.mxu0 %v606
  %1449 = vmatprep.subr.bf16.mxu0 %v611
  %1450 = vmatpush1.bf16.msra.mxu0 %v610
  %1451 = vmatprep.subr.bf16.mxu0 %v615
  %1452 = vmatpush1.bf16.msra.mxu0 %v614
  %1453 = vmatprep.subr.bf16.mxu0 %v619
  %1454 = vmatpush1.bf16.msra.mxu0 %v618
  %1455 = vmatprep.subr.bf16.mxu0 %v623
  %1456 = vmatpush1.bf16.msra.mxu0 %v622
  %1457 = vmatprep.subr.bf16.mxu0 %v627
  %1458 = vmatpush1.bf16.msra.mxu0 %v626
  %1459 = vmatprep.subr.bf16.mxu0 %v631
  %1460 = vmatpush1.bf16.msra.mxu0 %v630
  %1461 = vmatprep.subr.bf16.mxu0 %v635
  %1462 = vmatpush1.bf16.msra.mxu0 %v634
  %1463 = vmatprep.subr.bf16.mxu0 %v639
  %1464 = vmatpush1.bf16.msra.mxu0 %v638
  %1465 = vmatprep.subr.bf16.mxu0 %v643
  %1466 = vmatpush1.bf16.msra.mxu0 %v642
  %1467 = vmatprep.subr.bf16.mxu0 %v647
  %1468 = vmatpush1.bf16.msra.mxu0 %v646
  %1469 = vmatprep.subr.bf16.mxu0 %v651
  %1470 = vmatpush1.bf16.msra.mxu0 %v650
  %1471 = vmatprep.subr.bf16.mxu0 %v655
  %1472 = vmatpush1.bf16.msra.mxu0 %v654
  %1473 = vmatprep.subr.bf16.mxu0 %v659
  %1474 = vmatpush1.bf16.msra.mxu0 %v658
  %1475 = vmatprep.subr.bf16.mxu0 %v663
  %1476 = vmatpush1.bf16.msra.mxu0 %v662
  %1477 = vmatprep.subr.bf16.mxu0 %v667
  %1478 = vmatpush1.bf16.msra.mxu0 %v666
  %1479 = vmatprep.mubr.bf16.mxu0 %v1287
  %1480 = vmatmul.mubr.bf16.gmra.mrb[0].mxu0 %v1405
  %v1481 = vpop.f32.mrb[0].mxu0
  %v1482 = vadd.f32 %v127, %v1481
  %v1483 = vpop.f32.mrb[0].mxu0
  %v1484 = vadd.f32 %v131, %v1483
  %v1485 = vpop.f32.mrb[0].mxu0
  %v1486 = vpop.f32.mrb[0].mxu0
  %1487 = vdwg.mxu0
  %v1488 = vxor.u32 %v1441, 2147483648
  %v1489 = vxor.u32 %v1443, 2147483648
  %v1490 = vxor.u32 %v1482, 2147483648
  %v1491 = vmul.f32 %v1488, 1.442695
  %v1492 = vpow.pop %v1491
  %v1493 = vmul.f32 %v1489, 1.442695
  %v1494 = vpow.pop %v1493
  %v1495 = vmul.f32 %v1490, 1.442695
  %v1496 = vpow.pop %v1495
  %v1497 = vadd.f32 %v1492, 1.0
  %v1498 = vadd.f32 %v1494, 1.0
  %v1499 = vadd.f32 %v1496, 1.0
  %v1500 = vrcp.pop %v1497
  %v1501 = vmul.f32 1.0, %v1500
  %v1502 = vrcp.pop %v1498
  %v1503 = vmul.f32 1.0, %v1502
  %v1504 = vrcp.pop %v1499
  %v1505 = vmul.f32 1.0, %v1504
  %v1506 = vtanh.pop %v1484
  %v1507 = vmul.f32 %v1503, %v1284
  %v1508 = vmul.f32 %v1501, %v1506
  %v1509 = vadd.f32 %v1507, %v1508
  %v1510 = vtanh.pop %v1509
  %v1511 = vmul.f32 %v1505, %v1510
  %v1512 = vpack.c.bf16 %v1511, %v1511
  %s1513 = scalar_lea.vmem %s4, 12
  %1514 = vst [vmem:[%s1513] sm:$0xf] %v1512
  %s1515 = scalar_lea.vmem %s0, 128
  %v1516 = vld [vmem:[%s1515] sm:$0xff]
  %v1517 = vld [vmem:[%s1515 + $0x8] sm:$0xff]
  %v1518 = vld [vmem:[%s1515 + $0x10] sm:$0xff]
  %v1519 = vld [vmem:[%s1515 + $0x18] sm:$0xff]
  %1520 = vmatprep.subr.bf16.mxu0 %v237
  %1521 = vmatpush1.bf16.msra.mxu0 %v236
  %1522 = vmatprep.subr.bf16.mxu0 %v241
  %1523 = vmatpush1.bf16.msra.mxu0 %v240
  %1524 = vmatprep.subr.bf16.mxu0 %v245
  %1525 = vmatpush1.bf16.msra.mxu0 %v244
  %1526 = vmatprep.subr.bf16.mxu0 %v249
  %1527 = vmatpush1.bf16.msra.mxu0 %v248
  %1528 = vmatprep.subr.bf16.mxu0 %v253
  %1529 = vmatpush1.bf16.msra.mxu0 %v252
  %1530 = vmatprep.subr.bf16.mxu0 %v257
  %1531 = vmatpush1.bf16.msra.mxu0 %v256
  %1532 = vmatprep.subr.bf16.mxu0 %v261
  %1533 = vmatpush1.bf16.msra.mxu0 %v260
  %1534 = vmatprep.subr.bf16.mxu0 %v265
  %1535 = vmatpush1.bf16.msra.mxu0 %v264
  %1536 = vmatprep.subr.bf16.mxu0 0
  %1537 = vmatpush1.bf16.msra.mxu0 0
  %1538 = vmatprep.subr.bf16.mxu0 0
  %1539 = vmatpush1.bf16.msra.mxu0 0
  %1540 = vmatprep.subr.bf16.mxu0 0
  %1541 = vmatpush1.bf16.msra.mxu0 0
  %1542 = vmatprep.subr.bf16.mxu0 0
  %1543 = vmatpush1.bf16.msra.mxu0 0
  %1544 = vmatprep.subr.bf16.mxu0 0
  %1545 = vmatpush1.bf16.msra.mxu0 0
  %1546 = vmatprep.subr.bf16.mxu0 0
  %1547 = vmatpush1.bf16.msra.mxu0 0
  %1548 = vmatprep.subr.bf16.mxu0 0
  %1549 = vmatpush1.bf16.msra.mxu0 0
  %1550 = vmatprep.subr.bf16.mxu0 0
  %1551 = vmatpush1.bf16.msra.mxu0 0
  %1552 = vmatprep.mubr.bf16.mxu0 0
  %1553 = vmatmul.mubr.bf16.gmra.mrb[0].mxu0 %v1405
  %v1554 = vpop.f32.mrb[0].mxu0
  %v1555 = vadd.f32 0.0, %v1554
  %v1556 = vpop.f32.mrb[0].mxu0
  %v1557 = vadd.f32 0.0, %v1556
  %v1558 = vpop.f32.mrb[0].mxu0
  %v1559 = vpop.f32.mrb[0].mxu0
  %1560 = vdwg.mxu0
  %1561 = vmatprep.subr.bf16.mxu0 %v239
  %1562 = vmatpush1.bf16.msra.mxu0 %v238
  %1563 = vmatprep.subr.bf16.mxu0 %v243
  %1564 = vmatpush1.bf16.msra.mxu0 %v242
  %1565 = vmatprep.subr.bf16.mxu0 %v247
  %1566 = vmatpush1.bf16.msra.mxu0 %v246
  %1567 = vmatprep.subr.bf16.mxu0 %v251
  %1568 = vmatpush1.bf16.msra.mxu0 %v250
  %1569 = vmatprep.subr.bf16.mxu0 %v255
  %1570 = vmatpush1.bf16.msra.mxu0 %v254
  %1571 = vmatprep.subr.bf16.mxu0 %v259
  %1572 = vmatpush1.bf16.msra.mxu0 %v258
  %1573 = vmatprep.subr.bf16.mxu0 %v263
  %1574 = vmatpush1.bf16.msra.mxu0 %v262
  %1575 = vmatprep.subr.bf16.mxu0 %v267
  %1576 = vmatpush1.bf16.msra.mxu0 %v266
  %1577 = vmatprep.subr.bf16.mxu0 0
  %1578 = vmatpush1.bf16.msra.mxu0 0
  %1579 = vmatprep.subr.bf16.mxu0 0
  %1580 = vmatpush1.bf16.msra.mxu0 0
  %1581 = vmatprep.subr.bf16.mxu0 0
  %1582 = vmatpush1.bf16.msra.mxu0 0
  %1583 = vmatprep.subr.bf16.mxu0 0
  %1584 = vmatpush1.bf16.msra.mxu0 0
  %1585 = vmatprep.subr.bf16.mxu0 0
  %1586 = vmatpush1.bf16.msra.mxu0 0
  %1587 = vmatprep.subr.bf16.mxu0 0
  %1588 = vmatpush1.bf16.msra.mxu0 0
  %1589 = vmatprep.subr.bf16.mxu0 0
  %1590 = vmatpush1.bf16.msra.mxu0 0
  %1591 = vmatprep.subr.bf16.mxu0 0
  %1592 = vmatpush1.bf16.msra.mxu0 0
  %1593 = vmatprep.mubr.bf16.mxu0 0
  %1594 = vmatmul.mubr.bf16.gmra.mrb[0].mxu0 %v1405
  %v1595 = vpop.f32.mrb[0].mxu0
  %v1596 = vadd.f32 0.0, %v1595
  %v1597 = vpop.f32.mrb[0].mxu0
  %v1598 = vadd.f32 0.0, %v1597
  %v1599 = vpop.f32.mrb[0].mxu0
  %v1600 = vpop.f32.mrb[0].mxu0
  %1601 = vdwg.mxu0
  %v1602 = vadd.f32 %v1516, %v1555
  %v1603 = vadd.f32 %v1517, %v1557
  %v1604 = vadd.f32 %v1518, %v1596
  %v1605 = vadd.f32 %v1519, %v1598
  %v1606 = vxor.u32 %v1602, 2147483648
  %v1607 = vxor.u32 %v1603, 2147483648
  %v1608 = vxor.u32 %v1604, 2147483648
  %v1609 = vmul.f32 %v1606, 1.442695
  %v1610 = vpow.pop %v1609
  %v1611 = vmul.f32 %v1607, 1.442695
  %v1612 = vpow.pop %v1611
  %v1613 = vmul.f32 %v1608, 1.442695
  %v1614 = vpow.pop %v1613
  %v1615 = vadd.f32 %v1610, 1.0
  %v1616 = vadd.f32 %v1612, 1.0
  %v1617 = vadd.f32 %v1614, 1.0
  %v1618 = vrcp.pop %v1615
  %v1619 = vmul.f32 1.0, %v1618
  %v1620 = vrcp.pop %v1616
  %v1621 = vmul.f32 1.0, %v1620
  %v1622 = vrcp.pop %v1617
  %v1623 = vmul.f32 1.0, %v1622
  %v1624 = vtanh.pop %v1605
  %v1625 = vmul.f32 %v1621, %v1402
  %v1626 = vmul.f32 %v1619, %v1624
  %v1627 = vadd.f32 %v1625, %v1626
  %v1628 = vtanh.pop %v1627
  %v1629 = vmul.f32 %v1623, %v1628
  %v1630 = vpack.c.bf16 %v1629, %v1629
  %1631 = vmatprep.subr.bf16.mxu0 %v605
  %1632 = vmatpush1.bf16.msra.mxu0 %v604
  %1633 = vmatprep.subr.bf16.mxu0 %v609
  %1634 = vmatpush1.bf16.msra.mxu0 %v608
  %1635 = vmatprep.subr.bf16.mxu0 %v613
  %1636 = vmatpush1.bf16.msra.mxu0 %v612
  %1637 = vmatprep.subr.bf16.mxu0 %v617
  %1638 = vmatpush1.bf16.msra.mxu0 %v616
  %1639 = vmatprep.subr.bf16.mxu0 %v621
  %1640 = vmatpush1.bf16.msra.mxu0 %v620
  %1641 = vmatprep.subr.bf16.mxu0 %v625
  %1642 = vmatpush1.bf16.msra.mxu0 %v624
  %1643 = vmatprep.subr.bf16.mxu0 %v629
  %1644 = vmatpush1.bf16.msra.mxu0 %v628
  %1645 = vmatprep.subr.bf16.mxu0 %v633
  %1646 = vmatpush1.bf16.msra.mxu0 %v632
  %1647 = vmatprep.subr.bf16.mxu0 %v637
  %1648 = vmatpush1.bf16.msra.mxu0 %v636
  %1649 = vmatprep.subr.bf16.mxu0 %v641
  %1650 = vmatpush1.bf16.msra.mxu0 %v640
  %1651 = vmatprep.subr.bf16.mxu0 %v645
  %1652 = vmatpush1.bf16.msra.mxu0 %v644
  %1653 = vmatprep.subr.bf16.mxu0 %v649
  %1654 = vmatpush1.bf16.msra.mxu0 %v648
  %1655 = vmatprep.subr.bf16.mxu0 %v653
  %1656 = vmatpush1.bf16.msra.mxu0 %v652
  %1657 = vmatprep.subr.bf16.mxu0 %v657
  %1658 = vmatpush1.bf16.msra.mxu0 %v656
  %1659 = vmatprep.subr.bf16.mxu0 %v661
  %1660 = vmatpush1.bf16.msra.mxu0 %v660
  %1661 = vmatprep.subr.bf16.mxu0 %v665
  %1662 = vmatpush1.bf16.msra.mxu0 %v664
  %1663 = vmatprep.mubr.bf16.mxu0 %v1512
  %1664 = vmatmul.mubr.bf16.gmra.mrb[0].mxu0 %v1630
  %v1665 = vpop.f32.mrb[0].mxu0
  %v1666 = vadd.f32 %v119, %v1665
  %v1667 = vpop.f32.mrb[0].mxu0
  %v1668 = vadd.f32 %v123, %v1667
  %v1669 = vpop.f32.mrb[0].mxu0
  %v1670 = vpop.f32.mrb[0].mxu0
  %1671 = vdwg.mxu0
  %1672 = vmatprep.subr.bf16.mxu0 %v607
  %1673 = vmatpush1.bf16.msra.mxu0 %v606
  %1674 = vmatprep.subr.bf16.mxu0 %v611
  %1675 = vmatpush1.bf16.msra.mxu0 %v610
  %1676 = vmatprep.subr.bf16.mxu0 %v615
  %1677 = vmatpush1.bf16.msra.mxu0 %v614
  %1678 = vmatprep.subr.bf16.mxu0 %v619
  %1679 = vmatpush1.bf16.msra.mxu0 %v618
  %1680 = vmatprep.subr.bf16.mxu0 %v623
  %1681 = vmatpush1.bf16.msra.mxu0 %v622
  %1682 = vmatprep.subr.bf16.mxu0 %v627
  %1683 = vmatpush1.bf16.msra.mxu0 %v626
  %1684 = vmatprep.subr.bf16.mxu0 %v631
  %1685 = vmatpush1.bf16.msra.mxu0 %v630
  %1686 = vmatprep.subr.bf16.mxu0 %v635
  %1687 = vmatpush1.bf16.msra.mxu0 %v634
  %1688 = vmatprep.subr.bf16.mxu0 %v639
  %1689 = vmatpush1.bf16.msra.mxu0 %v638
  %1690 = vmatprep.subr.bf16.mxu0 %v643
  %1691 = vmatpush1.bf16.msra.mxu0 %v642
  %1692 = vmatprep.subr.bf16.mxu0 %v647
  %1693 = vmatpush1.bf16.msra.mxu0 %v646
  %1694 = vmatprep.subr.bf16.mxu0 %v651
  %1695 = vmatpush1.bf16.msra.mxu0 %v650
  %1696 = vmatprep.subr.bf16.mxu0 %v655
  %1697 = vmatpush1.bf16.msra.mxu0 %v654
  %1698 = vmatprep.subr.bf16.mxu0 %v659
  %1699 = vmatpush1.bf16.msra.mxu0 %v658
  %1700 = vmatprep.subr.bf16.mxu0 %v663
  %1701 = vmatpush1.bf16.msra.mxu0 %v662
  %1702 = vmatprep.subr.bf16.mxu0 %v667
  %1703 = vmatpush1.bf16.msra.mxu0 %v666
  %1704 = vmatprep.mubr.bf16.mxu0 %v1512
  %1705 = vmatmul.mubr.bf16.gmra.mrb[0].mxu0 %v1630
  %v1706 = vpop.f32.mrb[0].mxu0
  %v1707 = vadd.f32 %v127, %v1706
  %v1708 = vpop.f32.mrb[0].mxu0
  %v1709 = vadd.f32 %v131, %v1708
  %v1710 = vpop.f32.mrb[0].mxu0
  %v1711 = vpop.f32.mrb[0].mxu0
  %1712 = vdwg.mxu0
  %v1713 = vxor.u32 %v1666, 2147483648
  %v1714 = vxor.u32 %v1668, 2147483648
  %v1715 = vxor.u32 %v1707, 2147483648
  %v1716 = vmul.f32 %v1713, 1.442695
  %v1717 = vpow.pop %v1716
  %v1718 = vmul.f32 %v1714, 1.442695
  %v1719 = vpow.pop %v1718
  %v1720 = vmul.f32 %v1715, 1.442695
  %v1721 = vpow.pop %v1720
  %v1722 = vadd.f32 %v1717, 1.0
  %v1723 = vadd.f32 %v1719, 1.0
  %v1724 = vadd.f32 %v1721, 1.0
  %v1725 = vrcp.pop %v1722
  %v1726 = vmul.f32 1.0, %v1725
  %v1727 = vrcp.pop %v1723
  %v1728 = vmul.f32 1.0, %v1727
  %v1729 = vrcp.pop %v1724
  %v1730 = vmul.f32 1.0, %v1729
  %v1731 = vtanh.pop %v1709
  %v1732 = vmul.f32 %v1728, %v1509
  %v1733 = vmul.f32 %v1726, %v1731
  %v1734 = vadd.f32 %v1732, %v1733
  %v1735 = vtanh.pop %v1734
  %v1736 = vmul.f32 %v1730, %v1735
  %v1737 = vpack.c.bf16 %v1736, %v1736
  %s1738 = scalar_lea.vmem %s4, 16
  %1739 = vst [vmem:[%s1738] sm:$0xf] %v1737
  %s1740 = scalar_lea.vmem %s0, 160
  %v1741 = vld [vmem:[%s1740] sm:$0xff]
  %v1742 = vld [vmem:[%s1740 + $0x8] sm:$0xff]
  %v1743 = vld [vmem:[%s1740 + $0x10] sm:$0xff]
  %v1744 = vld [vmem:[%s1740 + $0x18] sm:$0xff]
  %1745 = vmatprep.subr.bf16.mxu0 %v237
  %1746 = vmatpush1.bf16.msra.mxu0 %v236
  %1747 = vmatprep.subr.bf16.mxu0 %v241
  %1748 = vmatpush1.bf16.msra.mxu0 %v240
  %1749 = vmatprep.subr.bf16.mxu0 %v245
  %1750 = vmatpush1.bf16.msra.mxu0 %v244
  %1751 = vmatprep.subr.bf16.mxu0 %v249
  %1752 = vmatpush1.bf16.msra.mxu0 %v248
  %1753 = vmatprep.subr.bf16.mxu0 %v253
  %1754 = vmatpush1.bf16.msra.mxu0 %v252
  %1755 = vmatprep.subr.bf16.mxu0 %v257
  %1756 = vmatpush1.bf16.msra.mxu0 %v256
  %1757 = vmatprep.subr.bf16.mxu0 %v261
  %1758 = vmatpush1.bf16.msra.mxu0 %v260
  %1759 = vmatprep.subr.bf16.mxu0 %v265
  %1760 = vmatpush1.bf16.msra.mxu0 %v264
  %1761 = vmatprep.subr.bf16.mxu0 0
  %1762 = vmatpush1.bf16.msra.mxu0 0
  %1763 = vmatprep.subr.bf16.mxu0 0
  %1764 = vmatpush1.bf16.msra.mxu0 0
  %1765 = vmatprep.subr.bf16.mxu0 0
  %1766 = vmatpush1.bf16.msra.mxu0 0
  %1767 = vmatprep.subr.bf16.mxu0 0
  %1768 = vmatpush1.bf16.msra.mxu0 0
  %1769 = vmatprep.subr.bf16.mxu0 0
  %1770 = vmatpush1.bf16.msra.mxu0 0
  %1771 = vmatprep.subr.bf16.mxu0 0
  %1772 = vmatpush1.bf16.msra.mxu0 0
  %1773 = vmatprep.subr.bf16.mxu0 0
  %1774 = vmatpush1.bf16.msra.mxu0 0
  %1775 = vmatprep.subr.bf16.mxu0 0
  %1776 = vmatpush1.bf16.msra.mxu0 0
  %1777 = vmatprep.mubr.bf16.mxu0 0
  %1778 = vmatmul.mubr.bf16.gmra.mrb[0].mxu0 %v1630
  %v1779 = vpop.f32.mrb[0].mxu0
  %v1780 = vadd.f32 0.0, %v1779
  %v1781 = vpop.f32.mrb[0].mxu0
  %v1782 = vadd.f32 0.0, %v1781
  %v1783 = vpop.f32.mrb[0].mxu0
  %v1784 = vpop.f32.mrb[0].mxu0
  %1785 = vdwg.mxu0
  %1786 = vmatprep.subr.bf16.mxu0 %v239
  %1787 = vmatpush1.bf16.msra.mxu0 %v238
  %1788 = vmatprep.subr.bf16.mxu0 %v243
  %1789 = vmatpush1.bf16.msra.mxu0 %v242
  %1790 = vmatprep.subr.bf16.mxu0 %v247
  %1791 = vmatpush1.bf16.msra.mxu0 %v246
  %1792 = vmatprep.subr.bf16.mxu0 %v251
  %1793 = vmatpush1.bf16.msra.mxu0 %v250
  %1794 = vmatprep.subr.bf16.mxu0 %v255
  %1795 = vmatpush1.bf16.msra.mxu0 %v254
  %1796 = vmatprep.subr.bf16.mxu0 %v259
  %1797 = vmatpush1.bf16.msra.mxu0 %v258
  %1798 = vmatprep.subr.bf16.mxu0 %v263
  %1799 = vmatpush1.bf16.msra.mxu0 %v262
  %1800 = vmatprep.subr.bf16.mxu0 %v267
  %1801 = vmatpush1.bf16.msra.mxu0 %v266
  %1802 = vmatprep.subr.bf16.mxu0 0
  %1803 = vmatpush1.bf16.msra.mxu0 0
  %1804 = vmatprep.subr.bf16.mxu0 0
  %1805 = vmatpush1.bf16.msra.mxu0 0
  %1806 = vmatprep.subr.bf16.mxu0 0
  %1807 = vmatpush1.bf16.msra.mxu0 0
  %1808 = vmatprep.subr.bf16.mxu0 0
  %1809 = vmatpush1.bf16.msra.mxu0 0
  %1810 = vmatprep.subr.bf16.mxu0 0
  %1811 = vmatpush1.bf16.msra.mxu0 0
  %1812 = vmatprep.subr.bf16.mxu0 0
  %1813 = vmatpush1.bf16.msra.mxu0 0
  %1814 = vmatprep.subr.bf16.mxu0 0
  %1815 = vmatpush1.bf16.msra.mxu0 0
  %1816 = vmatprep.subr.bf16.mxu0 0
  %1817 = vmatpush1.bf16.msra.mxu0 0
  %1818 = vmatprep.mubr.bf16.mxu0 0
  %1819 = vmatmul.mubr.bf16.gmra.mrb[0].mxu0 %v1630
  %v1820 = vpop.f32.mrb[0].mxu0
  %v1821 = vadd.f32 0.0, %v1820
  %v1822 = vpop.f32.mrb[0].mxu0
  %v1823 = vadd.f32 0.0, %v1822
  %v1824 = vpop.f32.mrb[0].mxu0
  %v1825 = vpop.f32.mrb[0].mxu0
  %1826 = vdwg.mxu0
  %v1827 = vadd.f32 %v1741, %v1780
  %v1828 = vadd.f32 %v1742, %v1782
  %v1829 = vadd.f32 %v1743, %v1821
  %v1830 = vadd.f32 %v1744, %v1823
  %v1831 = vxor.u32 %v1827, 2147483648
  %v1832 = vxor.u32 %v1828, 2147483648
  %v1833 = vxor.u32 %v1829, 2147483648
  %v1834 = vmul.f32 %v1831, 1.442695
  %v1835 = vpow.pop %v1834
  %v1836 = vmul.f32 %v1832, 1.442695
  %v1837 = vpow.pop %v1836
  %v1838 = vmul.f32 %v1833, 1.442695
  %v1839 = vpow.pop %v1838
  %v1840 = vadd.f32 %v1835, 1.0
  %v1841 = vadd.f32 %v1837, 1.0
  %v1842 = vadd.f32 %v1839, 1.0
  %v1843 = vrcp.pop %v1840
  %v1844 = vmul.f32 1.0, %v1843
  %v1845 = vrcp.pop %v1841
  %v1846 = vmul.f32 1.0, %v1845
  %v1847 = vrcp.pop %v1842
  %v1848 = vmul.f32 1.0, %v1847
  %v1849 = vtanh.pop %v1830
  %v1850 = vmul.f32 %v1846, %v1627
  %v1851 = vmul.f32 %v1844, %v1849
  %v1852 = vadd.f32 %v1850, %v1851
  %v1853 = vtanh.pop %v1852
  %v1854 = vmul.f32 %v1848, %v1853
  %v1855 = vpack.c.bf16 %v1854, %v1854
  %1856 = vmatprep.subr.bf16.mxu0 %v605
  %1857 = vmatpush1.bf16.msra.mxu0 %v604
  %1858 = vmatprep.subr.bf16.mxu0 %v609
  %1859 = vmatpush1.bf16.msra.mxu0 %v608
  %1860 = vmatprep.subr.bf16.mxu0 %v613
  %1861 = vmatpush1.bf16.msra.mxu0 %v612
  %1862 = vmatprep.subr.bf16.mxu0 %v617
  %1863 = vmatpush1.bf16.msra.mxu0 %v616
  %1864 = vmatprep.subr.bf16.mxu0 %v621
  %1865 = vmatpush1.bf16.msra.mxu0 %v620
  %1866 = vmatprep.subr.bf16.mxu0 %v625
  %1867 = vmatpush1.bf16.msra.mxu0 %v624
  %1868 = vmatprep.subr.bf16.mxu0 %v629
  %1869 = vmatpush1.bf16.msra.mxu0 %v628
  %1870 = vmatprep.subr.bf16.mxu0 %v633
  %1871 = vmatpush1.bf16.msra.mxu0 %v632
  %1872 = vmatprep.subr.bf16.mxu0 %v637
  %1873 = vmatpush1.bf16.msra.mxu0 %v636
  %1874 = vmatprep.subr.bf16.mxu0 %v641
  %1875 = vmatpush1.bf16.msra.mxu0 %v640
  %1876 = vmatprep.subr.bf16.mxu0 %v645
  %1877 = vmatpush1.bf16.msra.mxu0 %v644
  %1878 = vmatprep.subr.bf16.mxu0 %v649
  %1879 = vmatpush1.bf16.msra.mxu0 %v648
  %1880 = vmatprep.subr.bf16.mxu0 %v653
  %1881 = vmatpush1.bf16.msra.mxu0 %v652
  %1882 = vmatprep.subr.bf16.mxu0 %v657
  %1883 = vmatpush1.bf16.msra.mxu0 %v656
  %1884 = vmatprep.subr.bf16.mxu0 %v661
  %1885 = vmatpush1.bf16.msra.mxu0 %v660
  %1886 = vmatprep.subr.bf16.mxu0 %v665
  %1887 = vmatpush1.bf16.msra.mxu0 %v664
  %1888 = vmatprep.mubr.bf16.mxu0 %v1737
  %1889 = vmatmul.mubr.bf16.gmra.mrb[0].mxu0 %v1855
  %v1890 = vpop.f32.mrb[0].mxu0
  %v1891 = vadd.f32 %v119, %v1890
  %v1892 = vpop.f32.mrb[0].mxu0
  %v1893 = vadd.f32 %v123, %v1892
  %v1894 = vpop.f32.mrb[0].mxu0
  %v1895 = vpop.f32.mrb[0].mxu0
  %1896 = vdwg.mxu0
  %1897 = vmatprep.subr.bf16.mxu0 %v607
  %1898 = vmatpush1.bf16.msra.mxu0 %v606
  %1899 = vmatprep.subr.bf16.mxu0 %v611
  %1900 = vmatpush1.bf16.msra.mxu0 %v610
  %1901 = vmatprep.subr.bf16.mxu0 %v615
  %1902 = vmatpush1.bf16.msra.mxu0 %v614
  %1903 = vmatprep.subr.bf16.mxu0 %v619
  %1904 = vmatpush1.bf16.msra.mxu0 %v618
  %1905 = vmatprep.subr.bf16.mxu0 %v623
  %1906 = vmatpush1.bf16.msra.mxu0 %v622
  %1907 = vmatprep.subr.bf16.mxu0 %v627
  %1908 = vmatpush1.bf16.msra.mxu0 %v626
  %1909 = vmatprep.subr.bf16.mxu0 %v631
  %1910 = vmatpush1.bf16.msra.mxu0 %v630
  %1911 = vmatprep.subr.bf16.mxu0 %v635
  %1912 = vmatpush1.bf16.msra.mxu0 %v634
  %1913 = vmatprep.subr.bf16.mxu0 %v639
  %1914 = vmatpush1.bf16.msra.mxu0 %v638
  %1915 = vmatprep.subr.bf16.mxu0 %v643
  %1916 = vmatpush1.bf16.msra.mxu0 %v642
  %1917 = vmatprep.subr.bf16.mxu0 %v647
  %1918 = vmatpush1.bf16.msra.mxu0 %v646
  %1919 = vmatprep.subr.bf16.mxu0 %v651
  %1920 = vmatpush1.bf16.msra.mxu0 %v650
  %1921 = vmatprep.subr.bf16.mxu0 %v655
  %1922 = vmatpush1.bf16.msra.mxu0 %v654
  %1923 = vmatprep.subr.bf16.mxu0 %v659
  %1924 = vmatpush1.bf16.msra.mxu0 %v658
  %1925 = vmatprep.subr.bf16.mxu0 %v663
  %1926 = vmatpush1.bf16.msra.mxu0 %v662
  %1927 = vmatprep.subr.bf16.mxu0 %v667
  %1928 = vmatpush1.bf16.msra.mxu0 %v666
  %1929 = vmatprep.mubr.bf16.mxu0 %v1737
  %1930 = vmatmul.mubr.bf16.gmra.mrb[0].mxu0 %v1855
  %v1931 = vpop.f32.mrb[0].mxu0
  %v1932 = vadd.f32 %v127, %v1931
  %v1933 = vpop.f32.mrb[0].mxu0
  %v1934 = vadd.f32 %v131, %v1933
  %v1935 = vpop.f32.mrb[0].mxu0
  %v1936 = vpop.f32.mrb[0].mxu0
  %1937 = vdwg.mxu0
  %v1938 = vxor.u32 %v1891, 2147483648
  %v1939 = vxor.u32 %v1893, 2147483648
  %v1940 = vxor.u32 %v1932, 2147483648
  %v1941 = vmul.f32 %v1938, 1.442695
  %v1942 = vpow.pop %v1941
  %v1943 = vmul.f32 %v1939, 1.442695
  %v1944 = vpow.pop %v1943
  %v1945 = vmul.f32 %v1940, 1.442695
  %v1946 = vpow.pop %v1945
  %v1947 = vadd.f32 %v1942, 1.0
  %v1948 = vadd.f32 %v1944, 1.0
  %v1949 = vadd.f32 %v1946, 1.0
  %v1950 = vrcp.pop %v1947
  %v1951 = vmul.f32 1.0, %v1950
  %v1952 = vrcp.pop %v1948
  %v1953 = vmul.f32 1.0, %v1952
  %v1954 = vrcp.pop %v1949
  %v1955 = vmul.f32 1.0, %v1954
  %v1956 = vtanh.pop %v1934
  %v1957 = vmul.f32 %v1953, %v1734
  %v1958 = vmul.f32 %v1951, %v1956
  %v1959 = vadd.f32 %v1957, %v1958
  %v1960 = vtanh.pop %v1959
  %v1961 = vmul.f32 %v1955, %v1960
  %v1962 = vpack.c.bf16 %v1961, %v1961
  %s1963 = scalar_lea.vmem %s4, 20
  %1964 = vst [vmem:[%s1963] sm:$0xf] %v1962
  %s1965 = scalar_lea.vmem %s0, 192
  %v1966 = vld [vmem:[%s1965] sm:$0xff]
  %v1967 = vld [vmem:[%s1965 + $0x8] sm:$0xff]
  %v1968 = vld [vmem:[%s1965 + $0x10] sm:$0xff]
  %v1969 = vld [vmem:[%s1965 + $0x18] sm:$0xff]
  %1970 = vmatprep.subr.bf16.mxu0 %v237
  %1971 = vmatpush1.bf16.msra.mxu0 %v236
  %1972 = vmatprep.subr.bf16.mxu0 %v241
  %1973 = vmatpush1.bf16.msra.mxu0 %v240
  %1974 = vmatprep.subr.bf16.mxu0 %v245
  %1975 = vmatpush1.bf16.msra.mxu0 %v244
  %1976 = vmatprep.subr.bf16.mxu0 %v249
  %1977 = vmatpush1.bf16.msra.mxu0 %v248
  %1978 = vmatprep.subr.bf16.mxu0 %v253
  %1979 = vmatpush1.bf16.msra.mxu0 %v252
  %1980 = vmatprep.subr.bf16.mxu0 %v257
  %1981 = vmatpush1.bf16.msra.mxu0 %v256
  %1982 = vmatprep.subr.bf16.mxu0 %v261
  %1983 = vmatpush1.bf16.msra.mxu0 %v260
  %1984 = vmatprep.subr.bf16.mxu0 %v265
  %1985 = vmatpush1.bf16.msra.mxu0 %v264
  %1986 = vmatprep.subr.bf16.mxu0 0
  %1987 = vmatpush1.bf16.msra.mxu0 0
  %1988 = vmatprep.subr.bf16.mxu0 0
  %1989 = vmatpush1.bf16.msra.mxu0 0
  %1990 = vmatprep.subr.bf16.mxu0 0
  %1991 = vmatpush1.bf16.msra.mxu0 0
  %1992 = vmatprep.subr.bf16.mxu0 0
  %1993 = vmatpush1.bf16.msra.mxu0 0
  %1994 = vmatprep.subr.bf16.mxu0 0
  %1995 = vmatpush1.bf16.msra.mxu0 0
  %1996 = vmatprep.subr.bf16.mxu0 0
  %1997 = vmatpush1.bf16.msra.mxu0 0
  %1998 = vmatprep.subr.bf16.mxu0 0
  %1999 = vmatpush1.bf16.msra.mxu0 0
  %2000 = vmatprep.subr.bf16.mxu0 0
  %2001 = vmatpush1.bf16.msra.mxu0 0
  %2002 = vmatprep.mubr.bf16.mxu0 0
  %2003 = vmatmul.mubr.bf16.gmra.mrb[0].mxu0 %v1855
  %v2004 = vpop.f32.mrb[0].mxu0
  %v2005 = vadd.f32 0.0, %v2004
  %v2006 = vpop.f32.mrb[0].mxu0
  %v2007 = vadd.f32 0.0, %v2006
  %v2008 = vpop.f32.mrb[0].mxu0
  %v2009 = vpop.f32.mrb[0].mxu0
  %2010 = vdwg.mxu0
  %2011 = vmatprep.subr.bf16.mxu0 %v239
  %2012 = vmatpush1.bf16.msra.mxu0 %v238
  %2013 = vmatprep.subr.bf16.mxu0 %v243
  %2014 = vmatpush1.bf16.msra.mxu0 %v242
  %2015 = vmatprep.subr.bf16.mxu0 %v247
  %2016 = vmatpush1.bf16.msra.mxu0 %v246
  %2017 = vmatprep.subr.bf16.mxu0 %v251
  %2018 = vmatpush1.bf16.msra.mxu0 %v250
  %2019 = vmatprep.subr.bf16.mxu0 %v255
  %2020 = vmatpush1.bf16.msra.mxu0 %v254
  %2021 = vmatprep.subr.bf16.mxu0 %v259
  %2022 = vmatpush1.bf16.msra.mxu0 %v258
  %2023 = vmatprep.subr.bf16.mxu0 %v263
  %2024 = vmatpush1.bf16.msra.mxu0 %v262
  %2025 = vmatprep.subr.bf16.mxu0 %v267
  %2026 = vmatpush1.bf16.msra.mxu0 %v266
  %2027 = vmatprep.subr.bf16.mxu0 0
  %2028 = vmatpush1.bf16.msra.mxu0 0
  %2029 = vmatprep.subr.bf16.mxu0 0
  %2030 = vmatpush1.bf16.msra.mxu0 0
  %2031 = vmatprep.subr.bf16.mxu0 0
  %2032 = vmatpush1.bf16.msra.mxu0 0
  %2033 = vmatprep.subr.bf16.mxu0 0
  %2034 = vmatpush1.bf16.msra.mxu0 0
  %2035 = vmatprep.subr.bf16.mxu0 0
  %2036 = vmatpush1.bf16.msra.mxu0 0
  %2037 = vmatprep.subr.bf16.mxu0 0
  %2038 = vmatpush1.bf16.msra.mxu0 0
  %2039 = vmatprep.subr.bf16.mxu0 0
  %2040 = vmatpush1.bf16.msra.mxu0 0
  %2041 = vmatprep.subr.bf16.mxu0 0
  %2042 = vmatpush1.bf16.msra.mxu0 0
  %2043 = vmatprep.mubr.bf16.mxu0 0
  %2044 = vmatmul.mubr.bf16.gmra.mrb[0].mxu0 %v1855
  %v2045 = vpop.f32.mrb[0].mxu0
  %v2046 = vadd.f32 0.0, %v2045
  %v2047 = vpop.f32.mrb[0].mxu0
  %v2048 = vadd.f32 0.0, %v2047
  %v2049 = vpop.f32.mrb[0].mxu0
  %v2050 = vpop.f32.mrb[0].mxu0
  %2051 = vdwg.mxu0
  %v2052 = vadd.f32 %v1966, %v2005
  %v2053 = vadd.f32 %v1967, %v2007
  %v2054 = vadd.f32 %v1968, %v2046
  %v2055 = vadd.f32 %v1969, %v2048
  %v2056 = vxor.u32 %v2052, 2147483648
  %v2057 = vxor.u32 %v2053, 2147483648
  %v2058 = vxor.u32 %v2054, 2147483648
  %v2059 = vmul.f32 %v2056, 1.442695
  %v2060 = vpow.pop %v2059
  %v2061 = vmul.f32 %v2057, 1.442695
  %v2062 = vpow.pop %v2061
  %v2063 = vmul.f32 %v2058, 1.442695
  %v2064 = vpow.pop %v2063
  %v2065 = vadd.f32 %v2060, 1.0
  %v2066 = vadd.f32 %v2062, 1.0
  %v2067 = vadd.f32 %v2064, 1.0
  %v2068 = vrcp.pop %v2065
  %v2069 = vmul.f32 1.0, %v2068
  %v2070 = vrcp.pop %v2066
  %v2071 = vmul.f32 1.0, %v2070
  %v2072 = vrcp.pop %v2067
  %v2073 = vmul.f32 1.0, %v2072
  %v2074 = vtanh.pop %v2055
  %v2075 = vmul.f32 %v2071, %v1852
  %v2076 = vmul.f32 %v2069, %v2074
  %v2077 = vadd.f32 %v2075, %v2076
  %v2078 = vtanh.pop %v2077
  %v2079 = vmul.f32 %v2073, %v2078
  %v2080 = vpack.c.bf16 %v2079, %v2079
  %2081 = vmatprep.subr.bf16.mxu0 %v605
  %2082 = vmatpush1.bf16.msra.mxu0 %v604
  %2083 = vmatprep.subr.bf16.mxu0 %v609
  %2084 = vmatpush1.bf16.msra.mxu0 %v608
  %2085 = vmatprep.subr.bf16.mxu0 %v613
  %2086 = vmatpush1.bf16.msra.mxu0 %v612
  %2087 = vmatprep.subr.bf16.mxu0 %v617
  %2088 = vmatpush1.bf16.msra.mxu0 %v616
  %2089 = vmatprep.subr.bf16.mxu0 %v621
  %2090 = vmatpush1.bf16.msra.mxu0 %v620
  %2091 = vmatprep.subr.bf16.mxu0 %v625
  %2092 = vmatpush1.bf16.msra.mxu0 %v624
  %2093 = vmatprep.subr.bf16.mxu0 %v629
  %2094 = vmatpush1.bf16.msra.mxu0 %v628
  %2095 = vmatprep.subr.bf16.mxu0 %v633
  %2096 = vmatpush1.bf16.msra.mxu0 %v632
  %2097 = vmatprep.subr.bf16.mxu0 %v637
  %2098 = vmatpush1.bf16.msra.mxu0 %v636
  %2099 = vmatprep.subr.bf16.mxu0 %v641
  %2100 = vmatpush1.bf16.msra.mxu0 %v640
  %2101 = vmatprep.subr.bf16.mxu0 %v645
  %2102 = vmatpush1.bf16.msra.mxu0 %v644
  %2103 = vmatprep.subr.bf16.mxu0 %v649
  %2104 = vmatpush1.bf16.msra.mxu0 %v648
  %2105 = vmatprep.subr.bf16.mxu0 %v653
  %2106 = vmatpush1.bf16.msra.mxu0 %v652
  %2107 = vmatprep.subr.bf16.mxu0 %v657
  %2108 = vmatpush1.bf16.msra.mxu0 %v656
  %2109 = vmatprep.subr.bf16.mxu0 %v661
  %2110 = vmatpush1.bf16.msra.mxu0 %v660
  %2111 = vmatprep.subr.bf16.mxu0 %v665
  %2112 = vmatpush1.bf16.msra.mxu0 %v664
  %2113 = vmatprep.mubr.bf16.mxu0 %v1962
  %2114 = vmatmul.mubr.bf16.gmra.mrb[0].mxu0 %v2080
  %v2115 = vpop.f32.mrb[0].mxu0
  %v2116 = vadd.f32 %v119, %v2115
  %v2117 = vpop.f32.mrb[0].mxu0
  %v2118 = vadd.f32 %v123, %v2117
  %v2119 = vpop.f32.mrb[0].mxu0
  %v2120 = vpop.f32.mrb[0].mxu0
  %2121 = vdwg.mxu0
  %2122 = vmatprep.subr.bf16.mxu0 %v607
  %2123 = vmatpush1.bf16.msra.mxu0 %v606
  %2124 = vmatprep.subr.bf16.mxu0 %v611
  %2125 = vmatpush1.bf16.msra.mxu0 %v610
  %2126 = vmatprep.subr.bf16.mxu0 %v615
  %2127 = vmatpush1.bf16.msra.mxu0 %v614
  %2128 = vmatprep.subr.bf16.mxu0 %v619
  %2129 = vmatpush1.bf16.msra.mxu0 %v618
  %2130 = vmatprep.subr.bf16.mxu0 %v623
  %2131 = vmatpush1.bf16.msra.mxu0 %v622
  %2132 = vmatprep.subr.bf16.mxu0 %v627
  %2133 = vmatpush1.bf16.msra.mxu0 %v626
  %2134 = vmatprep.subr.bf16.mxu0 %v631
  %2135 = vmatpush1.bf16.msra.mxu0 %v630
  %2136 = vmatprep.subr.bf16.mxu0 %v635
  %2137 = vmatpush1.bf16.msra.mxu0 %v634
  %2138 = vmatprep.subr.bf16.mxu0 %v639
  %2139 = vmatpush1.bf16.msra.mxu0 %v638
  %2140 = vmatprep.subr.bf16.mxu0 %v643
  %2141 = vmatpush1.bf16.msra.mxu0 %v642
  %2142 = vmatprep.subr.bf16.mxu0 %v647
  %2143 = vmatpush1.bf16.msra.mxu0 %v646
  %2144 = vmatprep.subr.bf16.mxu0 %v651
  %2145 = vmatpush1.bf16.msra.mxu0 %v650
  %2146 = vmatprep.subr.bf16.mxu0 %v655
  %2147 = vmatpush1.bf16.msra.mxu0 %v654
  %2148 = vmatprep.subr.bf16.mxu0 %v659
  %2149 = vmatpush1.bf16.msra.mxu0 %v658
  %2150 = vmatprep.subr.bf16.mxu0 %v663
  %2151 = vmatpush1.bf16.msra.mxu0 %v662
  %2152 = vmatprep.subr.bf16.mxu0 %v667
  %2153 = vmatpush1.bf16.msra.mxu0 %v666
  %2154 = vmatprep.mubr.bf16.mxu0 %v1962
  %2155 = vmatmul.mubr.bf16.gmra.mrb[0].mxu0 %v2080
  %v2156 = vpop.f32.mrb[0].mxu0
  %v2157 = vadd.f32 %v127, %v2156
  %v2158 = vpop.f32.mrb[0].mxu0
  %v2159 = vadd.f32 %v131, %v2158
  %v2160 = vpop.f32.mrb[0].mxu0
  %v2161 = vpop.f32.mrb[0].mxu0
  %2162 = vdwg.mxu0
  %v2163 = vxor.u32 %v2116, 2147483648
  %v2164 = vxor.u32 %v2118, 2147483648
  %v2165 = vxor.u32 %v2157, 2147483648
  %v2166 = vmul.f32 %v2163, 1.442695
  %v2167 = vpow.pop %v2166
  %v2168 = vmul.f32 %v2164, 1.442695
  %v2169 = vpow.pop %v2168
  %v2170 = vmul.f32 %v2165, 1.442695
  %v2171 = vpow.pop %v2170
  %v2172 = vadd.f32 %v2167, 1.0
  %v2173 = vadd.f32 %v2169, 1.0
  %v2174 = vadd.f32 %v2171, 1.0
  %v2175 = vrcp.pop %v2172
  %v2176 = vmul.f32 1.0, %v2175
  %v2177 = vrcp.pop %v2173
  %v2178 = vmul.f32 1.0, %v2177
  %v2179 = vrcp.pop %v2174
  %v2180 = vmul.f32 1.0, %v2179
  %v2181 = vtanh.pop %v2159
  %v2182 = vmul.f32 %v2178, %v1959
  %v2183 = vmul.f32 %v2176, %v2181
  %v2184 = vadd.f32 %v2182, %v2183
  %v2185 = vtanh.pop %v2184
  %v2186 = vmul.f32 %v2180, %v2185
  %v2187 = vpack.c.bf16 %v2186, %v2186
  %s2188 = scalar_lea.vmem %s4, 24
  %2189 = vst [vmem:[%s2188] sm:$0xf] %v2187
  %s2190 = scalar_lea.vmem %s0, 224
  %v2191 = vld [vmem:[%s2190] sm:$0xff]
  %v2192 = vld [vmem:[%s2190 + $0x8] sm:$0xff]
  %v2193 = vld [vmem:[%s2190 + $0x10] sm:$0xff]
  %v2194 = vld [vmem:[%s2190 + $0x18] sm:$0xff]
  %2195 = vmatprep.subr.bf16.mxu0 %v237
  %2196 = vmatpush1.bf16.msra.mxu0 %v236
  %2197 = vmatprep.subr.bf16.mxu0 %v241
  %2198 = vmatpush1.bf16.msra.mxu0 %v240
  %2199 = vmatprep.subr.bf16.mxu0 %v245
  %2200 = vmatpush1.bf16.msra.mxu0 %v244
  %2201 = vmatprep.subr.bf16.mxu0 %v249
  %2202 = vmatpush1.bf16.msra.mxu0 %v248
  %2203 = vmatprep.subr.bf16.mxu0 %v253
  %2204 = vmatpush1.bf16.msra.mxu0 %v252
  %2205 = vmatprep.subr.bf16.mxu0 %v257
  %2206 = vmatpush1.bf16.msra.mxu0 %v256
  %2207 = vmatprep.subr.bf16.mxu0 %v261
  %2208 = vmatpush1.bf16.msra.mxu0 %v260
  %2209 = vmatprep.subr.bf16.mxu0 %v265
  %2210 = vmatpush1.bf16.msra.mxu0 %v264
  %2211 = vmatprep.subr.bf16.mxu0 0
  %2212 = vmatpush1.bf16.msra.mxu0 0
  %2213 = vmatprep.subr.bf16.mxu0 0
  %2214 = vmatpush1.bf16.msra.mxu0 0
  %2215 = vmatprep.subr.bf16.mxu0 0
  %2216 = vmatpush1.bf16.msra.mxu0 0
  %2217 = vmatprep.subr.bf16.mxu0 0
  %2218 = vmatpush1.bf16.msra.mxu0 0
  %2219 = vmatprep.subr.bf16.mxu0 0
  %2220 = vmatpush1.bf16.msra.mxu0 0
  %2221 = vmatprep.subr.bf16.mxu0 0
  %2222 = vmatpush1.bf16.msra.mxu0 0
  %2223 = vmatprep.subr.bf16.mxu0 0
  %2224 = vmatpush1.bf16.msra.mxu0 0
  %2225 = vmatprep.subr.bf16.mxu0 0
  %2226 = vmatpush1.bf16.msra.mxu0 0
  %2227 = vmatprep.mubr.bf16.mxu0 0
  %2228 = vmatmul.mubr.bf16.gmra.mrb[0].mxu0 %v2080
  %v2229 = vpop.f32.mrb[0].mxu0
  %v2230 = vadd.f32 0.0, %v2229
  %v2231 = vpop.f32.mrb[0].mxu0
  %v2232 = vadd.f32 0.0, %v2231
  %v2233 = vpop.f32.mrb[0].mxu0
  %v2234 = vpop.f32.mrb[0].mxu0
  %2235 = vdwg.mxu0
  %2236 = vmatprep.subr.bf16.mxu0 %v239
  %2237 = vmatpush1.bf16.msra.mxu0 %v238
  %2238 = vmatprep.subr.bf16.mxu0 %v243
  %2239 = vmatpush1.bf16.msra.mxu0 %v242
  %2240 = vmatprep.subr.bf16.mxu0 %v247
  %2241 = vmatpush1.bf16.msra.mxu0 %v246
  %2242 = vmatprep.subr.bf16.mxu0 %v251
  %2243 = vmatpush1.bf16.msra.mxu0 %v250
  %2244 = vmatprep.subr.bf16.mxu0 %v255
  %2245 = vmatpush1.bf16.msra.mxu0 %v254
  %2246 = vmatprep.subr.bf16.mxu0 %v259
  %2247 = vmatpush1.bf16.msra.mxu0 %v258
  %2248 = vmatprep.subr.bf16.mxu0 %v263
  %2249 = vmatpush1.bf16.msra.mxu0 %v262
  %2250 = vmatprep.subr.bf16.mxu0 %v267
  %2251 = vmatpush1.bf16.msra.mxu0 %v266
  %2252 = vmatprep.subr.bf16.mxu0 0
  %2253 = vmatpush1.bf16.msra.mxu0 0
  %2254 = vmatprep.subr.bf16.mxu0 0
  %2255 = vmatpush1.bf16.msra.mxu0 0
  %2256 = vmatprep.subr.bf16.mxu0 0
  %2257 = vmatpush1.bf16.msra.mxu0 0
  %2258 = vmatprep.subr.bf16.mxu0 0
  %2259 = vmatpush1.bf16.msra.mxu0 0
  %2260 = vmatprep.subr.bf16.mxu0 0
  %2261 = vmatpush1.bf16.msra.mxu0 0
  %2262 = vmatprep.subr.bf16.mxu0 0
  %2263 = vmatpush1.bf16.msra.mxu0 0
  %2264 = vmatprep.subr.bf16.mxu0 0
  %2265 = vmatpush1.bf16.msra.mxu0 0
  %2266 = vmatprep.subr.bf16.mxu0 0
  %2267 = vmatpush1.bf16.msra.mxu0 0
  %2268 = vmatprep.mubr.bf16.mxu0 0
  %2269 = vmatmul.mubr.bf16.gmra.mrb[0].mxu0 %v2080
  %v2270 = vpop.f32.mrb[0].mxu0
  %v2271 = vadd.f32 0.0, %v2270
  %v2272 = vpop.f32.mrb[0].mxu0
  %v2273 = vadd.f32 0.0, %v2272
  %v2274 = vpop.f32.mrb[0].mxu0
  %v2275 = vpop.f32.mrb[0].mxu0
  %2276 = vdwg.mxu0
  %v2277 = vadd.f32 %v2191, %v2230
  %v2278 = vadd.f32 %v2192, %v2232
  %v2279 = vadd.f32 %v2193, %v2271
  %v2280 = vadd.f32 %v2194, %v2273
  %v2281 = vxor.u32 %v2277, 2147483648
  %v2282 = vxor.u32 %v2278, 2147483648
  %v2283 = vxor.u32 %v2279, 2147483648
  %v2284 = vmul.f32 %v2281, 1.442695
  %v2285 = vpow.pop %v2284
  %v2286 = vmul.f32 %v2282, 1.442695
  %v2287 = vpow.pop %v2286
  %v2288 = vmul.f32 %v2283, 1.442695
  %v2289 = vpow.pop %v2288
  %v2290 = vadd.f32 %v2285, 1.0
  %v2291 = vadd.f32 %v2287, 1.0
  %v2292 = vadd.f32 %v2289, 1.0
  %v2293 = vrcp.pop %v2290
  %v2294 = vmul.f32 1.0, %v2293
  %v2295 = vrcp.pop %v2291
  %v2296 = vmul.f32 1.0, %v2295
  %v2297 = vrcp.pop %v2292
  %v2298 = vmul.f32 1.0, %v2297
  %v2299 = vtanh.pop %v2280
  %v2300 = vmul.f32 %v2296, %v2077
  %v2301 = vmul.f32 %v2294, %v2299
  %v2302 = vadd.f32 %v2300, %v2301
  %v2303 = vtanh.pop %v2302
  %v2304 = vmul.f32 %v2298, %v2303
  %v2305 = vpack.c.bf16 %v2304, %v2304
  %2306 = vmatprep.subr.bf16.mxu0 %v605
  %2307 = vmatpush1.bf16.msra.mxu0 %v604
  %2308 = vmatprep.subr.bf16.mxu0 %v609
  %2309 = vmatpush1.bf16.msra.mxu0 %v608
  %2310 = vmatprep.subr.bf16.mxu0 %v613
  %2311 = vmatpush1.bf16.msra.mxu0 %v612
  %2312 = vmatprep.subr.bf16.mxu0 %v617
  %2313 = vmatpush1.bf16.msra.mxu0 %v616
  %2314 = vmatprep.subr.bf16.mxu0 %v621
  %2315 = vmatpush1.bf16.msra.mxu0 %v620
  %2316 = vmatprep.subr.bf16.mxu0 %v625
  %2317 = vmatpush1.bf16.msra.mxu0 %v624
  %2318 = vmatprep.subr.bf16.mxu0 %v629
  %2319 = vmatpush1.bf16.msra.mxu0 %v628
  %2320 = vmatprep.subr.bf16.mxu0 %v633
  %2321 = vmatpush1.bf16.msra.mxu0 %v632
  %2322 = vmatprep.subr.bf16.mxu0 %v637
  %2323 = vmatpush1.bf16.msra.mxu0 %v636
  %2324 = vmatprep.subr.bf16.mxu0 %v641
  %2325 = vmatpush1.bf16.msra.mxu0 %v640
  %2326 = vmatprep.subr.bf16.mxu0 %v645
  %2327 = vmatpush1.bf16.msra.mxu0 %v644
  %2328 = vmatprep.subr.bf16.mxu0 %v649
  %2329 = vmatpush1.bf16.msra.mxu0 %v648
  %2330 = vmatprep.subr.bf16.mxu0 %v653
  %2331 = vmatpush1.bf16.msra.mxu0 %v652
  %2332 = vmatprep.subr.bf16.mxu0 %v657
  %2333 = vmatpush1.bf16.msra.mxu0 %v656
  %2334 = vmatprep.subr.bf16.mxu0 %v661
  %2335 = vmatpush1.bf16.msra.mxu0 %v660
  %2336 = vmatprep.subr.bf16.mxu0 %v665
  %2337 = vmatpush1.bf16.msra.mxu0 %v664
  %2338 = vmatprep.mubr.bf16.mxu0 %v2187
  %2339 = vmatmul.mubr.bf16.gmra.mrb[0].mxu0 %v2305
  %v2340 = vpop.f32.mrb[0].mxu0
  %v2341 = vadd.f32 %v119, %v2340
  %v2342 = vpop.f32.mrb[0].mxu0
  %v2343 = vadd.f32 %v123, %v2342
  %v2344 = vpop.f32.mrb[0].mxu0
  %v2345 = vpop.f32.mrb[0].mxu0
  %2346 = vdwg.mxu0
  %2347 = vmatprep.subr.bf16.mxu0 %v607
  %2348 = vmatpush1.bf16.msra.mxu0 %v606
  %2349 = vmatprep.subr.bf16.mxu0 %v611
  %2350 = vmatpush1.bf16.msra.mxu0 %v610
  %2351 = vmatprep.subr.bf16.mxu0 %v615
  %2352 = vmatpush1.bf16.msra.mxu0 %v614
  %2353 = vmatprep.subr.bf16.mxu0 %v619
  %2354 = vmatpush1.bf16.msra.mxu0 %v618
  %2355 = vmatprep.subr.bf16.mxu0 %v623
  %2356 = vmatpush1.bf16.msra.mxu0 %v622
  %2357 = vmatprep.subr.bf16.mxu0 %v627
  %2358 = vmatpush1.bf16.msra.mxu0 %v626
  %2359 = vmatprep.subr.bf16.mxu0 %v631
  %2360 = vmatpush1.bf16.msra.mxu0 %v630
  %2361 = vmatprep.subr.bf16.mxu0 %v635
  %2362 = vmatpush1.bf16.msra.mxu0 %v634
  %2363 = vmatprep.subr.bf16.mxu0 %v639
  %2364 = vmatpush1.bf16.msra.mxu0 %v638
  %2365 = vmatprep.subr.bf16.mxu0 %v643
  %2366 = vmatpush1.bf16.msra.mxu0 %v642
  %2367 = vmatprep.subr.bf16.mxu0 %v647
  %2368 = vmatpush1.bf16.msra.mxu0 %v646
  %2369 = vmatprep.subr.bf16.mxu0 %v651
  %2370 = vmatpush1.bf16.msra.mxu0 %v650
  %2371 = vmatprep.subr.bf16.mxu0 %v655
  %2372 = vmatpush1.bf16.msra.mxu0 %v654
  %2373 = vmatprep.subr.bf16.mxu0 %v659
  %2374 = vmatpush1.bf16.msra.mxu0 %v658
  %2375 = vmatprep.subr.bf16.mxu0 %v663
  %2376 = vmatpush1.bf16.msra.mxu0 %v662
  %2377 = vmatprep.subr.bf16.mxu0 %v667
  %2378 = vmatpush1.bf16.msra.mxu0 %v666
  %2379 = vmatprep.mubr.bf16.mxu0 %v2187
  %2380 = vmatmul.mubr.bf16.gmra.mrb[0].mxu0 %v2305
  %v2381 = vpop.f32.mrb[0].mxu0
  %v2382 = vadd.f32 %v127, %v2381
  %v2383 = vpop.f32.mrb[0].mxu0
  %v2384 = vadd.f32 %v131, %v2383
  %v2385 = vpop.f32.mrb[0].mxu0
  %v2386 = vpop.f32.mrb[0].mxu0
  %2387 = vdwg.mxu0
  %v2388 = vxor.u32 %v2341, 2147483648
  %v2389 = vxor.u32 %v2343, 2147483648
  %v2390 = vxor.u32 %v2382, 2147483648
  %v2391 = vmul.f32 %v2388, 1.442695
  %v2392 = vpow.pop %v2391
  %v2393 = vmul.f32 %v2389, 1.442695
  %v2394 = vpow.pop %v2393
  %v2395 = vmul.f32 %v2390, 1.442695
  %v2396 = vpow.pop %v2395
  %v2397 = vadd.f32 %v2392, 1.0
  %v2398 = vadd.f32 %v2394, 1.0
  %v2399 = vadd.f32 %v2396, 1.0
  %v2400 = vrcp.pop %v2397
  %v2401 = vmul.f32 1.0, %v2400
  %v2402 = vrcp.pop %v2398
  %v2403 = vmul.f32 1.0, %v2402
  %v2404 = vrcp.pop %v2399
  %v2405 = vmul.f32 1.0, %v2404
  %v2406 = vtanh.pop %v2384
  %v2407 = vmul.f32 %v2403, %v2184
  %v2408 = vmul.f32 %v2401, %v2406
  %v2409 = vadd.f32 %v2407, %v2408
  %v2410 = vtanh.pop %v2409
  %v2411 = vmul.f32 %v2405, %v2410
  %v2412 = vpack.c.bf16 %v2411, %v2411
  %s2413 = scalar_lea.vmem %s4, 28
  %2414 = vst [vmem:[%s2413] sm:$0xf] %v2412
  // Predicated region
  $region18: #{ar_belief_forward.4} parent=0 // pred_check
    _
  $region19: #{ar_belief_forward.4} parent=0 // pred_check_branch
    %2416 = sbr.rel (0) target = $region21
  $region20: #{ar_belief_forward.4} parent=0 // pred_region
    _
  $region21: #{ar_belief_forward.4} parent=0 // pred_fallthru
    _
  // Predicated region
  $region22: #{ar_belief_forward.4} parent=0 // pred_check
    _
  $region23: #{ar_belief_forward.4} parent=0 // pred_check_branch
    %2418 = sbr.rel (0) target = $region25
  $region24: #{ar_belief_forward.4} parent=0 // pred_region
    _
  $region25: #{ar_belief_forward.4} parent=0 // pred_fallthru
    _

// kernel: ar_belief_forward.5
$region0: #{ar_belief_forward.5}
  #allocation0 [shape = 'u32[]', space=smem, size = 0x4, offset = 0x4, fixed_abs, tag = 'smem constant byte address 0x4 - core index']
  #allocation1 [shape = 'u32[144,128]{1,0:T(1,128)}', space=vmem, size = 0x12000, scoped, tag = 'internal scratch']
  #allocation2 [shape = 'f32[320,128]{1,0:T(8,128)}', space=vmem, size = 0x28000, scoped, tag = 'scratch operand']
  %s0 = inlined_call_operand.vmem [shape: bf16[5,64,25], index: 0, kind: input, shape index: {}]
  %s1 = inlined_call_operand.vmem [shape: bf16[64,128], index: 1, kind: input, shape index: {}]
  %s2 = inlined_call_operand.vmem [shape: bf16[25,512], index: 2, kind: input, shape index: {}]
  %s3 = inlined_call_operand.vmem [shape: bf16[128,512], index: 3, kind: input, shape index: {}]
  %s4 = inlined_call_operand.vmem [shape: bf16[128,512], index: 4, kind: input, shape index: {}]
  %s5 = inlined_call_operand.vmem [shape: f32[1,512], index: 5, kind: input, shape index: {}]
  %s6 = inlined_call_operand.vmem [shape: bf16[128,128], index: 6, kind: input, shape index: {}]
  %s7 = inlined_call_operand.vmem [shape: f32[1,128], index: 7, kind: input, shape index: {}]
  %s8 = inlined_call_operand.vmem [shape: f32[5,64,128], index: 8, kind: output, shape index: {}]
  %s9 = sld [smem:[#allocation0]]
  $region42: #{ar_belief_forward.5} parent=0
    _
  %s11 = ssub.s32 1, %s9
  %s12 = scalar_select 0, %s11, %s9
  // Predicated region
  $region2: #{ar_belief_forward.5} parent=0 // pred_check
    _
  $region3: #{ar_belief_forward.5} parent=0 // pred_check_branch
    %14 = sbr.rel (0) target = $region5
  $region4: #{ar_belief_forward.5} parent=0 // pred_region
    _
  $region5: #{ar_belief_forward.5} parent=0 // pred_fallthru
    _
  // Predicated region
  $region6: #{ar_belief_forward.5} parent=0 // pred_check
    _
  $region7: #{ar_belief_forward.5} parent=0 // pred_check_branch
    %16 = sbr.rel (0) target = $region9
  $region8: #{ar_belief_forward.5} parent=0 // pred_region
    _
  $region9: #{ar_belief_forward.5} parent=0 // pred_fallthru
    _
  // Predicated region
  $region10: #{ar_belief_forward.5} parent=0 // pred_check
    _
  $region11: #{ar_belief_forward.5} parent=0 // pred_check_branch
    %18 = sbr.rel (0) target = $region13
  $region12: #{ar_belief_forward.5} parent=0 // pred_region
    _
  $region13: #{ar_belief_forward.5} parent=0 // pred_fallthru
    _
  // Predicated region
  $region14: #{ar_belief_forward.5} parent=0 // pred_check
    _
  $region15: #{ar_belief_forward.5} parent=0 // pred_check_branch
    %20 = sbr.rel (0) target = $region17
  $region16: #{ar_belief_forward.5} parent=0 // pred_region
    _
  $region17: #{ar_belief_forward.5} parent=0 // pred_fallthru
    _
  // Predicated region
  $region18: #{ar_belief_forward.5} parent=0 // pred_check
    _
  $region19: #{ar_belief_forward.5} parent=0 // pred_check_branch
    %22 = sbr.rel (0) target = $region21
  $region20: #{ar_belief_forward.5} parent=0 // pred_region
    _
  $region21: #{ar_belief_forward.5} parent=0 // pred_fallthru
    _
  // Predicated region
  $region22: #{ar_belief_forward.5} parent=0 // pred_check
    _
  $region23: #{ar_belief_forward.5} parent=0 // pred_check_branch
    %24 = sbr.rel (0) target = $region25
  $region24: #{ar_belief_forward.5} parent=0 // pred_region
    _
  $region25: #{ar_belief_forward.5} parent=0 // pred_fallthru
    _
  // Predicated region
  $region26: #{ar_belief_forward.5} parent=0 // pred_check
    _
  $region27: #{ar_belief_forward.5} parent=0 // pred_check_branch
    %26 = sbr.rel (0) target = $region29
  $region28: #{ar_belief_forward.5} parent=0 // pred_region
    _
  $region29: #{ar_belief_forward.5} parent=0 // pred_fallthru
    _
  // Predicated region
  $region30: #{ar_belief_forward.5} parent=0 // pred_check
    _
  $region31: #{ar_belief_forward.5} parent=0 // pred_check_branch
    %28 = sbr.rel (0) target = $region33
  $region32: #{ar_belief_forward.5} parent=0 // pred_region
    _
  $region33: #{ar_belief_forward.5} parent=0 // pred_fallthru
    _
  %v30 = vld [vmem:[%s1] sm:$0xf]
  %v31 = vld [vmem:[%s1 + $0x4] sm:$0xf]
  %v32 = vld [vmem:[%s1 + $0x8] sm:$0xf]
  %v33 = vld [vmem:[%s1 + $0xc] sm:$0xf]
  %v34 = vld [vmem:[%s1 + $0x10] sm:$0xf]
  %v35 = vld [vmem:[%s1 + $0x14] sm:$0xf]
  %v36 = vld [vmem:[%s1 + $0x18] sm:$0xf]
  %v37 = vld [vmem:[%s1 + $0x1c] sm:$0xf]
  %v38 = vld [vmem:[%s3] sm:$0xff]
  %v39 = vld [vmem:[%s3 + $0x8] sm:$0xff]
  %v40 = vld [vmem:[%s3 + $0x10] sm:$0xff]
  %v41 = vld [vmem:[%s3 + $0x18] sm:$0xff]
  %v42 = vld [vmem:[%s3 + $0x20] sm:$0xff]
  %v43 = vld [vmem:[%s3 + $0x28] sm:$0xff]
  %v44 = vld [vmem:[%s3 + $0x30] sm:$0xff]
  %v45 = vld [vmem:[%s3 + $0x38] sm:$0xff]
  %v46 = vld [vmem:[%s3 + $0x40] sm:$0xff]
  %v47 = vld [vmem:[%s3 + $0x48] sm:$0xff]
  %v48 = vld [vmem:[%s3 + $0x50] sm:$0xff]
  %v49 = vld [vmem:[%s3 + $0x58] sm:$0xff]
  %v50 = vld [vmem:[%s3 + $0x60] sm:$0xff]
  %v51 = vld [vmem:[%s3 + $0x68] sm:$0xff]
  %v52 = vld [vmem:[%s3 + $0x70] sm:$0xff]
  %v53 = vld [vmem:[%s3 + $0x78] sm:$0xff]
  %v54 = vld [vmem:[%s3 + $0x80] sm:$0xff]
  %v55 = vld [vmem:[%s3 + $0x88] sm:$0xff]
  %v56 = vld [vmem:[%s3 + $0x90] sm:$0xff]
  %v57 = vld [vmem:[%s3 + $0x98] sm:$0xff]
  %v58 = vld [vmem:[%s3 + $0xa0] sm:$0xff]
  %v59 = vld [vmem:[%s3 + $0xa8] sm:$0xff]
  %v60 = vld [vmem:[%s3 + $0xb0] sm:$0xff]
  %v61 = vld [vmem:[%s3 + $0xb8] sm:$0xff]
  %v62 = vld [vmem:[%s3 + $0xc0] sm:$0xff]
  %v63 = vld [vmem:[%s3 + $0xc8] sm:$0xff]
  %v64 = vld [vmem:[%s3 + $0xd0] sm:$0xff]
  %v65 = vld [vmem:[%s3 + $0xd8] sm:$0xff]
  %v66 = vld [vmem:[%s3 + $0xe0] sm:$0xff]
  %v67 = vld [vmem:[%s3 + $0xe8] sm:$0xff]
  %v68 = vld [vmem:[%s3 + $0xf0] sm:$0xff]
  %v69 = vld [vmem:[%s3 + $0xf8] sm:$0xff]
  %v70 = vld [vmem:[%s5] sm:$0xf]
  %v72 = vlaneseq
  %v73 = vshrl.u32 %v72, 7
  %v74 = vsub.s32 0, %v73
  %v75 = vrot.slane %v70, %v74
  %v76 = vlaneseq
  %v77 = vshrl.u32 %v76, 7
  %v78 = vsub.s32 1, %v77
  %v79 = vrot.slane %v70, %v78
  %v80 = vlaneseq
  %v81 = vshrl.u32 %v80, 7
  %v82 = vsub.s32 2, %v81
  %v83 = vrot.slane %v70, %v82
  %v84 = vlaneseq
  %v85 = vshrl.u32 %v84, 7
  %v86 = vsub.s32 3, %v85
  %v87 = vrot.slane %v70, %v86
  %v100 = vunpack.c.l.b16 %v30
  %v101 = vunpack.c.l.b16 %v31
  %v102 = vunpack.c.l.b16 %v32
  %v103 = vunpack.c.l.b16 %v33
  %v104 = vunpack.c.l.b16 %v34
  %v105 = vunpack.c.l.b16 %v35
  %v106 = vunpack.c.l.b16 %v36
  %v107 = vunpack.c.l.b16 %v37
  %v108 = vpack.c.b16 %v101, %v100
  %v109 = vpack.c.b16 %v103, %v102
  %v110 = vpack.c.b16 %v105, %v104
  %v111 = vpack.c.b16 %v107, %v106
  %v148 = vunpack.c.l.b16 %v38
  %v149 = vunpack.c.h.b16 %v38
  %v150 = vunpack.c.l.b16 %v39
  %v151 = vunpack.c.h.b16 %v39
  %v152 = vunpack.c.l.b16 %v40
  %v153 = vunpack.c.h.b16 %v40
  %v154 = vunpack.c.l.b16 %v41
  %v155 = vunpack.c.h.b16 %v41
  %v156 = vunpack.c.l.b16 %v42
  %v157 = vunpack.c.h.b16 %v42
  %v158 = vunpack.c.l.b16 %v43
  %v159 = vunpack.c.h.b16 %v43
  %v160 = vunpack.c.l.b16 %v44
  %v161 = vunpack.c.h.b16 %v44
  %v162 = vunpack.c.l.b16 %v45
  %v163 = vunpack.c.h.b16 %v45
  %v164 = vunpack.c.l.b16 %v46
  %v165 = vunpack.c.h.b16 %v46
  %v166 = vunpack.c.l.b16 %v47
  %v167 = vunpack.c.h.b16 %v47
  %v168 = vunpack.c.l.b16 %v48
  %v169 = vunpack.c.h.b16 %v48
  %v170 = vunpack.c.l.b16 %v49
  %v171 = vunpack.c.h.b16 %v49
  %v172 = vunpack.c.l.b16 %v50
  %v173 = vunpack.c.h.b16 %v50
  %v174 = vunpack.c.l.b16 %v51
  %v175 = vunpack.c.h.b16 %v51
  %v176 = vunpack.c.l.b16 %v52
  %v177 = vunpack.c.h.b16 %v52
  %v178 = vunpack.c.l.b16 %v53
  %v179 = vunpack.c.h.b16 %v53
  %v180 = vunpack.c.l.b16 %v54
  %v181 = vunpack.c.h.b16 %v54
  %v182 = vunpack.c.l.b16 %v55
  %v183 = vunpack.c.h.b16 %v55
  %v184 = vunpack.c.l.b16 %v56
  %v185 = vunpack.c.h.b16 %v56
  %v186 = vunpack.c.l.b16 %v57
  %v187 = vunpack.c.h.b16 %v57
  %v188 = vunpack.c.l.b16 %v58
  %v189 = vunpack.c.h.b16 %v58
  %v190 = vunpack.c.l.b16 %v59
  %v191 = vunpack.c.h.b16 %v59
  %v192 = vunpack.c.l.b16 %v60
  %v193 = vunpack.c.h.b16 %v60
  %v194 = vunpack.c.l.b16 %v61
  %v195 = vunpack.c.h.b16 %v61
  %v196 = vunpack.c.l.b16 %v62
  %v197 = vunpack.c.h.b16 %v62
  %v198 = vunpack.c.l.b16 %v63
  %v199 = vunpack.c.h.b16 %v63
  %v200 = vunpack.c.l.b16 %v64
  %v201 = vunpack.c.h.b16 %v64
  %v202 = vunpack.c.l.b16 %v65
  %v203 = vunpack.c.h.b16 %v65
  %v204 = vunpack.c.l.b16 %v66
  %v205 = vunpack.c.h.b16 %v66
  %v206 = vunpack.c.l.b16 %v67
  %v207 = vunpack.c.h.b16 %v67
  %v208 = vunpack.c.l.b16 %v68
  %v209 = vunpack.c.h.b16 %v68
  %v210 = vunpack.c.l.b16 %v69
  %v211 = vunpack.c.h.b16 %v69
  %v212 = vpack.c.b16 %v152, %v148
  %v213 = vpack.c.b16 %v153, %v149
  %v214 = vpack.c.b16 %v154, %v150
  %v215 = vpack.c.b16 %v155, %v151
  %v216 = vpack.c.b16 %v160, %v156
  %v217 = vpack.c.b16 %v161, %v157
  %v218 = vpack.c.b16 %v162, %v158
  %v219 = vpack.c.b16 %v163, %v159
  %v220 = vpack.c.b16 %v168, %v164
  %v221 = vpack.c.b16 %v169, %v165
  %v222 = vpack.c.b16 %v170, %v166
  %v223 = vpack.c.b16 %v171, %v167
  %v224 = vpack.c.b16 %v176, %v172
  %v225 = vpack.c.b16 %v177, %v173
  %v226 = vpack.c.b16 %v178, %v174
  %v227 = vpack.c.b16 %v179, %v175
  %v228 = vpack.c.b16 %v184, %v180
  %v229 = vpack.c.b16 %v185, %v181
  %v230 = vpack.c.b16 %v186, %v182
  %v231 = vpack.c.b16 %v187, %v183
  %v232 = vpack.c.b16 %v192, %v188
  %v233 = vpack.c.b16 %v193, %v189
  %v234 = vpack.c.b16 %v194, %v190
  %v235 = vpack.c.b16 %v195, %v191
  %v236 = vpack.c.b16 %v200, %v196
  %v237 = vpack.c.b16 %v201, %v197
  %v238 = vpack.c.b16 %v202, %v198
  %v239 = vpack.c.b16 %v203, %v199
  %v240 = vpack.c.b16 %v208, %v204
  %v241 = vpack.c.b16 %v209, %v205
  %v242 = vpack.c.b16 %v210, %v206
  %v243 = vpack.c.b16 %v211, %v207
  %276 = vmatprep.subr.bf16.mxu0 %v213
  %277 = vmatpush1.bf16.msra.mxu0 %v212
  %278 = vmatprep.subr.bf16.mxu0 %v217
  %279 = vmatpush1.bf16.msra.mxu0 %v216
  %280 = vmatprep.subr.bf16.mxu0 %v221
  %281 = vmatpush1.bf16.msra.mxu0 %v220
  %282 = vmatprep.subr.bf16.mxu0 %v225
  %283 = vmatpush1.bf16.msra.mxu0 %v224
  %284 = vmatprep.subr.bf16.mxu0 %v229
  %285 = vmatpush1.bf16.msra.mxu0 %v228
  %286 = vmatprep.subr.bf16.mxu0 %v233
  %287 = vmatpush1.bf16.msra.mxu0 %v232
  %288 = vmatprep.subr.bf16.mxu0 %v237
  %289 = vmatpush1.bf16.msra.mxu0 %v236
  %290 = vmatprep.subr.bf16.mxu0 %v241
  %291 = vmatpush1.bf16.msra.mxu0 %v240
  %292 = vmatprep.subr.bf16.mxu0 0
  %293 = vmatpush1.bf16.msra.mxu0 0
  %294 = vmatprep.subr.bf16.mxu0 0
  %295 = vmatpush1.bf16.msra.mxu0 0
  %296 = vmatprep.subr.bf16.mxu0 0
  %297 = vmatpush1.bf16.msra.mxu0 0
  %298 = vmatprep.subr.bf16.mxu0 0
  %299 = vmatpush1.bf16.msra.mxu0 0
  %300 = vmatprep.subr.bf16.mxu0 0
  %301 = vmatpush1.bf16.msra.mxu0 0
  %302 = vmatprep.subr.bf16.mxu0 0
  %303 = vmatpush1.bf16.msra.mxu0 0
  %304 = vmatprep.subr.bf16.mxu0 0
  %305 = vmatpush1.bf16.msra.mxu0 0
  %306 = vmatprep.subr.bf16.mxu0 0
  %307 = vmatpush1.bf16.msra.mxu0 0
  %308 = vmatprep.mubr.bf16.mxu0 0
  %309 = vmatmul.mubr.bf16.gmra.mrb[0].mxu0 %v108
  %v310 = vpop.f32.mrb[0].mxu0
  %v311 = vadd.f32 %v75, %v310
  %v312 = vpop.f32.mrb[0].mxu0
  %v313 = vadd.f32 %v79, %v312
  %v314 = vpop.f32.mrb[0].mxu0
  %v315 = vadd.f32 %v75, %v314
  %v316 = vpop.f32.mrb[0].mxu0
  %v317 = vadd.f32 %v79, %v316
  %318 = vmatprep.mubr.bf16.mxu0 0
  %319 = vmatmul.mubr.bf16.gmra.mrb[0].mxu0 %v109
  %v320 = vpop.f32.mrb[0].mxu0
  %v321 = vadd.f32 %v75, %v320
  %v322 = vpop.f32.mrb[0].mxu0
  %v323 = vadd.f32 %v79, %v322
  %v324 = vpop.f32.mrb[0].mxu0
  %v325 = vadd.f32 %v75, %v324
  %v326 = vpop.f32.mrb[0].mxu0
  %v327 = vadd.f32 %v79, %v326
  %328 = vmatprep.mubr.bf16.mxu0 0
  %329 = vmatmul.mubr.bf16.gmra.mrb[0].mxu0 %v110
  %v330 = vpop.f32.mrb[0].mxu0
  %v331 = vadd.f32 %v75, %v330
  %v332 = vpop.f32.mrb[0].mxu0
  %v333 = vadd.f32 %v79, %v332
  %v334 = vpop.f32.mrb[0].mxu0
  %v335 = vadd.f32 %v75, %v334
  %v336 = vpop.f32.mrb[0].mxu0
  %v337 = vadd.f32 %v79, %v336
  %338 = vmatprep.mubr.bf16.mxu0 0
  %339 = vmatmul.mubr.bf16.gmra.mrb[0].mxu0 %v111
  %v340 = vpop.f32.mrb[0].mxu0
  %v341 = vadd.f32 %v75, %v340
  %v342 = vpop.f32.mrb[0].mxu0
  %v343 = vadd.f32 %v79, %v342
  %v344 = vpop.f32.mrb[0].mxu0
  %v345 = vadd.f32 %v75, %v344
  %v346 = vpop.f32.mrb[0].mxu0
  %v347 = vadd.f32 %v79, %v346
  %348 = vdwg.mxu0
  %349 = vmatprep.subr.bf16.mxu0 %v215
  %350 = vmatpush1.bf16.msra.mxu0 %v214
  %351 = vmatprep.subr.bf16.mxu0 %v219
  %352 = vmatpush1.bf16.msra.mxu0 %v218
  %353 = vmatprep.subr.bf16.mxu0 %v223
  %354 = vmatpush1.bf16.msra.mxu0 %v222
  %355 = vmatprep.subr.bf16.mxu0 %v227
  %356 = vmatpush1.bf16.msra.mxu0 %v226
  %357 = vmatprep.subr.bf16.mxu0 %v231
  %358 = vmatpush1.bf16.msra.mxu0 %v230
  %359 = vmatprep.subr.bf16.mxu0 %v235
  %360 = vmatpush1.bf16.msra.mxu0 %v234
  %361 = vmatprep.subr.bf16.mxu0 %v239
  %362 = vmatpush1.bf16.msra.mxu0 %v238
  %363 = vmatprep.subr.bf16.mxu0 %v243
  %364 = vmatpush1.bf16.msra.mxu0 %v242
  %365 = vmatprep.subr.bf16.mxu0 0
  %366 = vmatpush1.bf16.msra.mxu0 0
  %367 = vmatprep.subr.bf16.mxu0 0
  %368 = vmatpush1.bf16.msra.mxu0 0
  %369 = vmatprep.subr.bf16.mxu0 0
  %370 = vmatpush1.bf16.msra.mxu0 0
  %371 = vmatprep.subr.bf16.mxu0 0
  %372 = vmatpush1.bf16.msra.mxu0 0
  %373 = vmatprep.subr.bf16.mxu0 0
  %374 = vmatpush1.bf16.msra.mxu0 0
  %375 = vmatprep.subr.bf16.mxu0 0
  %376 = vmatpush1.bf16.msra.mxu0 0
  %377 = vmatprep.subr.bf16.mxu0 0
  %378 = vmatpush1.bf16.msra.mxu0 0
  %379 = vmatprep.subr.bf16.mxu0 0
  %380 = vmatpush1.bf16.msra.mxu0 0
  %381 = vmatprep.mubr.bf16.mxu0 0
  %382 = vmatmul.mubr.bf16.gmra.mrb[0].mxu0 %v108
  %v383 = vpop.f32.mrb[0].mxu0
  %v384 = vadd.f32 %v83, %v383
  %v385 = vpop.f32.mrb[0].mxu0
  %v386 = vadd.f32 %v87, %v385
  %v387 = vpop.f32.mrb[0].mxu0
  %v388 = vadd.f32 %v83, %v387
  %v389 = vpop.f32.mrb[0].mxu0
  %v390 = vadd.f32 %v87, %v389
  %391 = vmatprep.mubr.bf16.mxu0 0
  %392 = vmatmul.mubr.bf16.gmra.mrb[0].mxu0 %v109
  %v393 = vpop.f32.mrb[0].mxu0
  %v394 = vadd.f32 %v83, %v393
  %v395 = vpop.f32.mrb[0].mxu0
  %v396 = vadd.f32 %v87, %v395
  %v397 = vpop.f32.mrb[0].mxu0
  %v398 = vadd.f32 %v83, %v397
  %v399 = vpop.f32.mrb[0].mxu0
  %v400 = vadd.f32 %v87, %v399
  %401 = vmatprep.mubr.bf16.mxu0 0
  %402 = vmatmul.mubr.bf16.gmra.mrb[0].mxu0 %v110
  %v403 = vpop.f32.mrb[0].mxu0
  %v404 = vadd.f32 %v83, %v403
  %v405 = vpop.f32.mrb[0].mxu0
  %v406 = vadd.f32 %v87, %v405
  %v407 = vpop.f32.mrb[0].mxu0
  %v408 = vadd.f32 %v83, %v407
  %v409 = vpop.f32.mrb[0].mxu0
  %v410 = vadd.f32 %v87, %v409
  %411 = vmatprep.mubr.bf16.mxu0 0
  %412 = vmatmul.mubr.bf16.gmra.mrb[0].mxu0 %v111
  %v413 = vpop.f32.mrb[0].mxu0
  %v414 = vadd.f32 %v83, %v413
  %v415 = vpop.f32.mrb[0].mxu0
  %v416 = vadd.f32 %v87, %v415
  %v417 = vpop.f32.mrb[0].mxu0
  %v418 = vadd.f32 %v83, %v417
  %v419 = vpop.f32.mrb[0].mxu0
  %v420 = vadd.f32 %v87, %v419
  %421 = vdwg.mxu0
  %v422 = vld [vmem:[%s0] sm:$0xf]
  %v423 = vld [vmem:[%s0 + $0x4] sm:$0xf]
  %v424 = vld [vmem:[%s0 + $0x8] sm:$0xf]
  %v425 = vld [vmem:[%s0 + $0xc] sm:$0xf]
  %v426 = vld [vmem:[%s0 + $0x10] sm:$0xf]
  %v427 = vld [vmem:[%s0 + $0x14] sm:$0xf]
  %v428 = vld [vmem:[%s0 + $0x18] sm:$0xf]
  %v429 = vld [vmem:[%s0 + $0x1c] sm:$0xf]
  %v430 = vld [vmem:[%s0 + $0x20] sm:$0xf]
  %v431 = vld [vmem:[%s0 + $0x24] sm:$0xf]
  %v432 = vld [vmem:[%s0 + $0x28] sm:$0xf]
  %v433 = vld [vmem:[%s0 + $0x2c] sm:$0xf]
  %v434 = vld [vmem:[%s0 + $0x30] sm:$0xf]
  %v435 = vld [vmem:[%s0 + $0x34] sm:$0xf]
  %v436 = vld [vmem:[%s0 + $0x38] sm:$0xf]
  %v437 = vld [vmem:[%s0 + $0x3c] sm:$0xf]
  %v438 = vld [vmem:[%s0 + $0x40] sm:$0xf]
  %v439 = vld [vmem:[%s0 + $0x44] sm:$0xf]
  %v440 = vld [vmem:[%s0 + $0x48] sm:$0xf]
  %v441 = vld [vmem:[%s0 + $0x4c] sm:$0xf]
  %v442 = vld [vmem:[%s0 + $0x50] sm:$0xf]
  %v443 = vld [vmem:[%s0 + $0x54] sm:$0xf]
  %v444 = vld [vmem:[%s0 + $0x58] sm:$0xf]
  %v445 = vld [vmem:[%s0 + $0x5c] sm:$0xf]
  %v446 = vld [vmem:[%s0 + $0x60] sm:$0xf]
  %v447 = vld [vmem:[%s0 + $0x64] sm:$0xf]
  %v448 = vld [vmem:[%s0 + $0x68] sm:$0xf]
  %v449 = vld [vmem:[%s0 + $0x6c] sm:$0xf]
  %v450 = vld [vmem:[%s0 + $0x70] sm:$0xf]
  %v451 = vld [vmem:[%s0 + $0x74] sm:$0xf]
  %v452 = vld [vmem:[%s0 + $0x78] sm:$0xf]
  %v453 = vld [vmem:[%s0 + $0x7c] sm:$0xf]
  %v454 = vld [vmem:[%s0 + $0x80] sm:$0xf]
  %v455 = vld [vmem:[%s0 + $0x84] sm:$0xf]
  %v456 = vld [vmem:[%s0 + $0x88] sm:$0xf]
  %v457 = vld [vmem:[%s0 + $0x8c] sm:$0xf]
  %v458 = vld [vmem:[%s0 + $0x90] sm:$0xf]
  %v459 = vld [vmem:[%s0 + $0x94] sm:$0xf]
  %v460 = vld [vmem:[%s0 + $0x98] sm:$0xf]
  %v461 = vld [vmem:[%s0 + $0x9c] sm:$0xf]
  %v462 = vld [vmem:[%s2] sm:$0xff]
  %v463 = vld [vmem:[%s2 + $0x8] sm:$0xff]
  %v464 = vld [vmem:[%s2 + $0x10] sm:$0xff]
  %v465 = vld [vmem:[%s2 + $0x18] sm:$0xff]
  %v466 = vld [vmem:[%s2 + $0x20] sm:$0xff]
  %v467 = vld [vmem:[%s2 + $0x28] sm:$0xff]
  %v468 = vld [vmem:[%s2 + $0x30] sm:$0x11]
  %v469 = vld [vmem:[%s2 + $0x38] sm:$0x11]
  %v510 = vunpack.c.l.b16 %v422
  %v511 = vunpack.c.l.b16 %v423
  %v512 = vunpack.c.l.b16 %v424
  %v513 = vunpack.c.l.b16 %v425
  %v514 = vunpack.c.l.b16 %v426
  %v515 = vunpack.c.l.b16 %v427
  %v516 = vunpack.c.l.b16 %v428
  %v517 = vunpack.c.l.b16 %v429
  %v518 = vunpack.c.l.b16 %v430
  %v519 = vunpack.c.l.b16 %v431
  %v520 = vunpack.c.l.b16 %v432
  %v521 = vunpack.c.l.b16 %v433
  %v522 = vunpack.c.l.b16 %v434
  %v523 = vunpack.c.l.b16 %v435
  %v524 = vunpack.c.l.b16 %v436
  %v525 = vunpack.c.l.b16 %v437
  %v526 = vunpack.c.l.b16 %v438
  %v527 = vunpack.c.l.b16 %v439
  %v528 = vunpack.c.l.b16 %v440
  %v529 = vunpack.c.l.b16 %v441
  %v530 = vunpack.c.l.b16 %v442
  %v531 = vunpack.c.l.b16 %v443
  %v532 = vunpack.c.l.b16 %v444
  %v533 = vunpack.c.l.b16 %v445
  %v534 = vunpack.c.l.b16 %v446
  %v535 = vunpack.c.l.b16 %v447
  %v536 = vunpack.c.l.b16 %v448
  %v537 = vunpack.c.l.b16 %v449
  %v538 = vunpack.c.l.b16 %v450
  %v539 = vunpack.c.l.b16 %v451
  %v540 = vunpack.c.l.b16 %v452
  %v541 = vunpack.c.l.b16 %v453
  %v542 = vunpack.c.l.b16 %v454
  %v543 = vunpack.c.l.b16 %v455
  %v544 = vunpack.c.l.b16 %v456
  %v545 = vunpack.c.l.b16 %v457
  %v546 = vunpack.c.l.b16 %v458
  %v547 = vunpack.c.l.b16 %v459
  %v548 = vunpack.c.l.b16 %v460
  %v549 = vunpack.c.l.b16 %v461
  %v550 = vpack.c.b16 %v511, %v510
  %v551 = vpack.c.b16 %v513, %v512
  %v552 = vpack.c.b16 %v515, %v514
  %v553 = vpack.c.b16 %v517, %v516
  %v554 = vpack.c.b16 %v519, %v518
  %v555 = vpack.c.b16 %v521, %v520
  %v556 = vpack.c.b16 %v523, %v522
  %v557 = vpack.c.b16 %v525, %v524
  %v558 = vpack.c.b16 %v527, %v526
  %v559 = vpack.c.b16 %v529, %v528
  %v560 = vpack.c.b16 %v531, %v530
  %v561 = vpack.c.b16 %v533, %v532
  %v562 = vpack.c.b16 %v535, %v534
  %v563 = vpack.c.b16 %v537, %v536
  %v564 = vpack.c.b16 %v539, %v538
  %v565 = vpack.c.b16 %v541, %v540
  %v566 = vpack.c.b16 %v543, %v542
  %v567 = vpack.c.b16 %v545, %v544
  %v568 = vpack.c.b16 %v547, %v546
  %v569 = vpack.c.b16 %v549, %v548
  %v578 = vunpack.c.l.b16 %v462
  %v579 = vunpack.c.h.b16 %v462
  %v580 = vunpack.c.l.b16 %v463
  %v581 = vunpack.c.h.b16 %v463
  %v582 = vunpack.c.l.b16 %v464
  %v583 = vunpack.c.h.b16 %v464
  %v584 = vunpack.c.l.b16 %v465
  %v585 = vunpack.c.h.b16 %v465
  %v586 = vunpack.c.l.b16 %v466
  %v587 = vunpack.c.h.b16 %v466
  %v588 = vunpack.c.l.b16 %v467
  %v589 = vunpack.c.h.b16 %v467
  %v590 = vunpack.c.l.b16 %v468
  %v591 = vunpack.c.h.b16 %v468
  %v592 = vunpack.c.l.b16 %v469
  %v593 = vunpack.c.h.b16 %v469
  %v594 = vpack.c.b16 %v582, %v578
  %v595 = vpack.c.b16 %v583, %v579
  %v596 = vpack.c.b16 %v584, %v580
  %v597 = vpack.c.b16 %v585, %v581
  %v598 = vpack.c.b16 %v590, %v586
  %v599 = vpack.c.b16 %v591, %v587
  %v600 = vpack.c.b16 %v592, %v588
  %v601 = vpack.c.b16 %v593, %v589
  %vm606 = vcmask 203776
  %v608 = vsel %vm606, %v550, 0
  %v611 = vsel %vm606, %v551, 0
  %v614 = vsel %vm606, %v552, 0
  %v617 = vsel %vm606, %v553, 0
  %v620 = vsel %vm606, %v554, 0
  %v623 = vsel %vm606, %v555, 0
  %v626 = vsel %vm606, %v556, 0
  %v629 = vsel %vm606, %v557, 0
  %v632 = vsel %vm606, %v558, 0
  %v635 = vsel %vm606, %v559, 0
  %v638 = vsel %vm606, %v560, 0
  %v641 = vsel %vm606, %v561, 0
  %v644 = vsel %vm606, %v562, 0
  %v647 = vsel %vm606, %v563, 0
  %v650 = vsel %vm606, %v564, 0
  %v653 = vsel %vm606, %v565, 0
  %v656 = vsel %vm606, %v566, 0
  %v659 = vsel %vm606, %v567, 0
  %v662 = vsel %vm606, %v568, 0
  %v665 = vsel %vm606, %v569, 0
  %vm667 = vcmask 1043456
  %vm668 = vcmask 1044480
  %v669 = vsel %vm667, 4294967295, 65535
  %v670 = vsel %vm668, %v669, 0
  %v672 = vand.u32 %v598, %v670
  %v675 = vand.u32 %v599, %v670
  %v678 = vand.u32 %v600, %v670
  %v681 = vand.u32 %v601, %v670
  %683 = vmatprep.subr.bf16.mxu0 %v595
  %684 = vmatpush1.bf16.msra.mxu0 %v594
  %685 = vmatprep.subr.bf16.mxu0 %v675
  %686 = vmatpush1.bf16.msra.mxu0 %v672
  %687 = vmatprep.subr.bf16.mxu0 0
  %688 = vmatpush1.bf16.msra.mxu0 0
  %689 = vmatprep.subr.bf16.mxu0 0
  %690 = vmatpush1.bf16.msra.mxu0 0
  %691 = vmatprep.subr.bf16.mxu0 0
  %692 = vmatpush1.bf16.msra.mxu0 0
  %693 = vmatprep.subr.bf16.mxu0 0
  %694 = vmatpush1.bf16.msra.mxu0 0
  %695 = vmatprep.subr.bf16.mxu0 0
  %696 = vmatpush1.bf16.msra.mxu0 0
  %697 = vmatprep.subr.bf16.mxu0 0
  %698 = vmatpush1.bf16.msra.mxu0 0
  %699 = vmatprep.subr.bf16.mxu0 0
  %700 = vmatpush1.bf16.msra.mxu0 0
  %701 = vmatprep.subr.bf16.mxu0 0
  %702 = vmatpush1.bf16.msra.mxu0 0
  %703 = vmatprep.subr.bf16.mxu0 0
  %704 = vmatpush1.bf16.msra.mxu0 0
  %705 = vmatprep.subr.bf16.mxu0 0
  %706 = vmatpush1.bf16.msra.mxu0 0
  %707 = vmatprep.subr.bf16.mxu0 0
  %708 = vmatpush1.bf16.msra.mxu0 0
  %709 = vmatprep.subr.bf16.mxu0 0
  %710 = vmatpush1.bf16.msra.mxu0 0
  %711 = vmatprep.subr.bf16.mxu0 0
  %712 = vmatpush1.bf16.msra.mxu0 0
  %713 = vmatprep.subr.bf16.mxu0 0
  %714 = vmatpush1.bf16.msra.mxu0 0
  %715 = vmatprep.mubr.bf16.mxu0 0
  %716 = vmatmul.mubr.bf16.gmra.mrb[0].mxu0 %v608
  %v717 = vpop.f32.mrb[0].mxu0
  %v718 = vadd.f32 0.0, %v717
  %v719 = vpop.f32.mrb[0].mxu0
  %v720 = vadd.f32 0.0, %v719
  %v721 = vpop.f32.mrb[0].mxu0
  %v722 = vadd.f32 0.0, %v721
  %v723 = vpop.f32.mrb[0].mxu0
  %v724 = vadd.f32 0.0, %v723
  %725 = vmatprep.mubr.bf16.mxu0 0
  %726 = vmatmul.mubr.bf16.gmra.mrb[0].mxu0 %v611
  %v727 = vpop.f32.mrb[0].mxu0
  %v728 = vadd.f32 0.0, %v727
  %v729 = vpop.f32.mrb[0].mxu0
  %v730 = vadd.f32 0.0, %v729
  %v731 = vpop.f32.mrb[0].mxu0
  %v732 = vadd.f32 0.0, %v731
  %v733 = vpop.f32.mrb[0].mxu0
  %v734 = vadd.f32 0.0, %v733
  %735 = vmatprep.mubr.bf16.mxu0 0
  %736 = vmatmul.mubr.bf16.gmra.mrb[0].mxu0 %v614
  %v737 = vpop.f32.mrb[0].mxu0
  %v738 = vadd.f32 0.0, %v737
  %v739 = vpop.f32.mrb[0].mxu0
  %v740 = vadd.f32 0.0, %v739
  %v741 = vpop.f32.mrb[0].mxu0
  %v742 = vadd.f32 0.0, %v741
  %v743 = vpop.f32.mrb[0].mxu0
  %v744 = vadd.f32 0.0, %v743
  %745 = vmatprep.mubr.bf16.mxu0 0
  %746 = vmatmul.mubr.bf16.gmra.mrb[0].mxu0 %v617
  %v747 = vpop.f32.mrb[0].mxu0
  %v748 = vadd.f32 0.0, %v747
  %v749 = vpop.f32.mrb[0].mxu0
  %v750 = vadd.f32 0.0, %v749
  %v751 = vpop.f32.mrb[0].mxu0
  %v752 = vadd.f32 0.0, %v751
  %v753 = vpop.f32.mrb[0].mxu0
  %v754 = vadd.f32 0.0, %v753
  %755 = vmatprep.mubr.bf16.mxu0 0
  %756 = vmatmul.mubr.bf16.gmra.mrb[0].mxu0 %v620
  %v757 = vpop.f32.mrb[0].mxu0
  %v758 = vadd.f32 0.0, %v757
  %v759 = vpop.f32.mrb[0].mxu0
  %v760 = vadd.f32 0.0, %v759
  %v761 = vpop.f32.mrb[0].mxu0
  %v762 = vadd.f32 0.0, %v761
  %v763 = vpop.f32.mrb[0].mxu0
  %v764 = vadd.f32 0.0, %v763
  %765 = vmatprep.mubr.bf16.mxu0 0
  %766 = vmatmul.mubr.bf16.gmra.mrb[0].mxu0 %v623
  %v767 = vpop.f32.mrb[0].mxu0
  %v768 = vadd.f32 0.0, %v767
  %v769 = vpop.f32.mrb[0].mxu0
  %v770 = vadd.f32 0.0, %v769
  %v771 = vpop.f32.mrb[0].mxu0
  %v772 = vadd.f32 0.0, %v771
  %v773 = vpop.f32.mrb[0].mxu0
  %v774 = vadd.f32 0.0, %v773
  %775 = vmatprep.mubr.bf16.mxu0 0
  %776 = vmatmul.mubr.bf16.gmra.mrb[0].mxu0 %v626
  %v777 = vpop.f32.mrb[0].mxu0
  %v778 = vadd.f32 0.0, %v777
  %v779 = vpop.f32.mrb[0].mxu0
  %v780 = vadd.f32 0.0, %v779
  %v781 = vpop.f32.mrb[0].mxu0
  %v782 = vadd.f32 0.0, %v781
  %v783 = vpop.f32.mrb[0].mxu0
  %v784 = vadd.f32 0.0, %v783
  %785 = vmatprep.mubr.bf16.mxu0 0
  %786 = vmatmul.mubr.bf16.gmra.mrb[0].mxu0 %v629
  %v787 = vpop.f32.mrb[0].mxu0
  %v788 = vadd.f32 0.0, %v787
  %v789 = vpop.f32.mrb[0].mxu0
  %v790 = vadd.f32 0.0, %v789
  %v791 = vpop.f32.mrb[0].mxu0
  %v792 = vadd.f32 0.0, %v791
  %v793 = vpop.f32.mrb[0].mxu0
  %v794 = vadd.f32 0.0, %v793
  %795 = vmatprep.mubr.bf16.mxu0 0
  %796 = vmatmul.mubr.bf16.gmra.mrb[0].mxu0 %v632
  %v797 = vpop.f32.mrb[0].mxu0
  %v798 = vadd.f32 0.0, %v797
  %v799 = vpop.f32.mrb[0].mxu0
  %v800 = vadd.f32 0.0, %v799
  %v801 = vpop.f32.mrb[0].mxu0
  %v802 = vadd.f32 0.0, %v801
  %v803 = vpop.f32.mrb[0].mxu0
  %v804 = vadd.f32 0.0, %v803
  %805 = vmatprep.mubr.bf16.mxu0 0
  %806 = vmatmul.mubr.bf16.gmra.mrb[0].mxu0 %v635
  %v807 = vpop.f32.mrb[0].mxu0
  %v808 = vadd.f32 0.0, %v807
  %v809 = vpop.f32.mrb[0].mxu0
  %v810 = vadd.f32 0.0, %v809
  %v811 = vpop.f32.mrb[0].mxu0
  %v812 = vadd.f32 0.0, %v811
  %v813 = vpop.f32.mrb[0].mxu0
  %v814 = vadd.f32 0.0, %v813
  %815 = vmatprep.mubr.bf16.mxu0 0
  %816 = vmatmul.mubr.bf16.gmra.mrb[0].mxu0 %v638
  %v817 = vpop.f32.mrb[0].mxu0
  %v818 = vadd.f32 0.0, %v817
  %v819 = vpop.f32.mrb[0].mxu0
  %v820 = vadd.f32 0.0, %v819
  %v821 = vpop.f32.mrb[0].mxu0
  %v822 = vadd.f32 0.0, %v821
  %v823 = vpop.f32.mrb[0].mxu0
  %v824 = vadd.f32 0.0, %v823
  %825 = vmatprep.mubr.bf16.mxu0 0
  %826 = vmatmul.mubr.bf16.gmra.mrb[0].mxu0 %v641
  %v827 = vpop.f32.mrb[0].mxu0
  %v828 = vadd.f32 0.0, %v827
  %v829 = vpop.f32.mrb[0].mxu0
  %v830 = vadd.f32 0.0, %v829
  %v831 = vpop.f32.mrb[0].mxu0
  %v832 = vadd.f32 0.0, %v831
  %v833 = vpop.f32.mrb[0].mxu0
  %v834 = vadd.f32 0.0, %v833
  %835 = vmatprep.mubr.bf16.mxu0 0
  %836 = vmatmul.mubr.bf16.gmra.mrb[0].mxu0 %v644
  %v837 = vpop.f32.mrb[0].mxu0
  %v838 = vadd.f32 0.0, %v837
  %v839 = vpop.f32.mrb[0].mxu0
  %v840 = vadd.f32 0.0, %v839
  %v841 = vpop.f32.mrb[0].mxu0
  %v842 = vadd.f32 0.0, %v841
  %v843 = vpop.f32.mrb[0].mxu0
  %v844 = vadd.f32 0.0, %v843
  %845 = vmatprep.mubr.bf16.mxu0 0
  %846 = vmatmul.mubr.bf16.gmra.mrb[0].mxu0 %v647
  %v847 = vpop.f32.mrb[0].mxu0
  %v848 = vadd.f32 0.0, %v847
  %v849 = vpop.f32.mrb[0].mxu0
  %v850 = vadd.f32 0.0, %v849
  %v851 = vpop.f32.mrb[0].mxu0
  %v852 = vadd.f32 0.0, %v851
  %v853 = vpop.f32.mrb[0].mxu0
  %v854 = vadd.f32 0.0, %v853
  %855 = vmatprep.mubr.bf16.mxu0 0
  %856 = vmatmul.mubr.bf16.gmra.mrb[0].mxu0 %v650
  %v857 = vpop.f32.mrb[0].mxu0
  %v858 = vadd.f32 0.0, %v857
  %v859 = vpop.f32.mrb[0].mxu0
  %v860 = vadd.f32 0.0, %v859
  %v861 = vpop.f32.mrb[0].mxu0
  %v862 = vadd.f32 0.0, %v861
  %v863 = vpop.f32.mrb[0].mxu0
  %v864 = vadd.f32 0.0, %v863
  %865 = vmatprep.mubr.bf16.mxu0 0
  %866 = vmatmul.mubr.bf16.gmra.mrb[0].mxu0 %v653
  %v867 = vpop.f32.mrb[0].mxu0
  %v868 = vadd.f32 0.0, %v867
  %v869 = vpop.f32.mrb[0].mxu0
  %v870 = vadd.f32 0.0, %v869
  %v871 = vpop.f32.mrb[0].mxu0
  %v872 = vadd.f32 0.0, %v871
  %v873 = vpop.f32.mrb[0].mxu0
  %v874 = vadd.f32 0.0, %v873
  %875 = vmatprep.mubr.bf16.mxu0 0
  %876 = vmatmul.mubr.bf16.gmra.mrb[0].mxu0 %v656
  %v877 = vpop.f32.mrb[0].mxu0
  %v878 = vadd.f32 0.0, %v877
  %v879 = vpop.f32.mrb[0].mxu0
  %v880 = vadd.f32 0.0, %v879
  %v881 = vpop.f32.mrb[0].mxu0
  %v882 = vadd.f32 0.0, %v881
  %v883 = vpop.f32.mrb[0].mxu0
  %v884 = vadd.f32 0.0, %v883
  %885 = vmatprep.mubr.bf16.mxu0 0
  %886 = vmatmul.mubr.bf16.gmra.mrb[0].mxu0 %v659
  %v887 = vpop.f32.mrb[0].mxu0
  %v888 = vadd.f32 0.0, %v887
  %v889 = vpop.f32.mrb[0].mxu0
  %v890 = vadd.f32 0.0, %v889
  %v891 = vpop.f32.mrb[0].mxu0
  %v892 = vadd.f32 0.0, %v891
  %v893 = vpop.f32.mrb[0].mxu0
  %v894 = vadd.f32 0.0, %v893
  %895 = vmatprep.mubr.bf16.mxu0 0
  %896 = vmatmul.mubr.bf16.gmra.mrb[0].mxu0 %v662
  %v897 = vpop.f32.mrb[0].mxu0
  %v898 = vadd.f32 0.0, %v897
  %v899 = vpop.f32.mrb[0].mxu0
  %v900 = vadd.f32 0.0, %v899
  %v901 = vpop.f32.mrb[0].mxu0
  %v902 = vadd.f32 0.0, %v901
  %v903 = vpop.f32.mrb[0].mxu0
  %v904 = vadd.f32 0.0, %v903
  %905 = vmatprep.mubr.bf16.mxu0 0
  %906 = vmatmul.mubr.bf16.gmra.mrb[0].mxu0 %v665
  %v907 = vpop.f32.mrb[0].mxu0
  %v908 = vadd.f32 0.0, %v907
  %v909 = vpop.f32.mrb[0].mxu0
  %v910 = vadd.f32 0.0, %v909
  %v911 = vpop.f32.mrb[0].mxu0
  %v912 = vadd.f32 0.0, %v911
  %v913 = vpop.f32.mrb[0].mxu0
  %v914 = vadd.f32 0.0, %v913
  %915 = vdwg.mxu0
  %916 = vmatprep.subr.bf16.mxu0 %v597
  %917 = vmatpush1.bf16.msra.mxu0 %v596
  %918 = vmatprep.subr.bf16.mxu0 %v681
  %919 = vmatpush1.bf16.msra.mxu0 %v678
  %920 = vmatprep.subr.bf16.mxu0 0
  %921 = vmatpush1.bf16.msra.mxu0 0
  %922 = vmatprep.subr.bf16.mxu0 0
  %923 = vmatpush1.bf16.msra.mxu0 0
  %924 = vmatprep.subr.bf16.mxu0 0
  %925 = vmatpush1.bf16.msra.mxu0 0
  %926 = vmatprep.subr.bf16.mxu0 0
  %927 = vmatpush1.bf16.msra.mxu0 0
  %928 = vmatprep.subr.bf16.mxu0 0
  %929 = vmatpush1.bf16.msra.mxu0 0
  %930 = vmatprep.subr.bf16.mxu0 0
  %931 = vmatpush1.bf16.msra.mxu0 0
  %932 = vmatprep.subr.bf16.mxu0 0
  %933 = vmatpush1.bf16.msra.mxu0 0
  %934 = vmatprep.subr.bf16.mxu0 0
  %935 = vmatpush1.bf16.msra.mxu0 0
  %936 = vmatprep.subr.bf16.mxu0 0
  %937 = vmatpush1.bf16.msra.mxu0 0
  %938 = vmatprep.subr.bf16.mxu0 0
  %939 = vmatpush1.bf16.msra.mxu0 0
  %940 = vmatprep.subr.bf16.mxu0 0
  %941 = vmatpush1.bf16.msra.mxu0 0
  %942 = vmatprep.subr.bf16.mxu0 0
  %943 = vmatpush1.bf16.msra.mxu0 0
  %944 = vmatprep.subr.bf16.mxu0 0
  %945 = vmatpush1.bf16.msra.mxu0 0
  %946 = vmatprep.subr.bf16.mxu0 0
  %947 = vmatpush1.bf16.msra.mxu0 0
  %948 = vmatprep.mubr.bf16.mxu0 0
  %949 = vmatmul.mubr.bf16.gmra.mrb[0].mxu0 %v608
  %v950 = vpop.f32.mrb[0].mxu0
  %v951 = vadd.f32 0.0, %v950
  %v952 = vpop.f32.mrb[0].mxu0
  %v953 = vadd.f32 0.0, %v952
  %v954 = vpop.f32.mrb[0].mxu0
  %v955 = vadd.f32 0.0, %v954
  %v956 = vpop.f32.mrb[0].mxu0
  %v957 = vadd.f32 0.0, %v956
  %958 = vmatprep.mubr.bf16.mxu0 0
  %959 = vmatmul.mubr.bf16.gmra.mrb[0].mxu0 %v611
  %v960 = vpop.f32.mrb[0].mxu0
  %v961 = vadd.f32 0.0, %v960
  %v962 = vpop.f32.mrb[0].mxu0
  %v963 = vadd.f32 0.0, %v962
  %v964 = vpop.f32.mrb[0].mxu0
  %v965 = vadd.f32 0.0, %v964
  %v966 = vpop.f32.mrb[0].mxu0
  %v967 = vadd.f32 0.0, %v966
  %968 = vmatprep.mubr.bf16.mxu0 0
  %969 = vmatmul.mubr.bf16.gmra.mrb[0].mxu0 %v614
  %v970 = vpop.f32.mrb[0].mxu0
  %v971 = vadd.f32 0.0, %v970
  %v972 = vpop.f32.mrb[0].mxu0
  %v973 = vadd.f32 0.0, %v972
  %v974 = vpop.f32.mrb[0].mxu0
  %v975 = vadd.f32 0.0, %v974
  %v976 = vpop.f32.mrb[0].mxu0
  %v977 = vadd.f32 0.0, %v976
  %978 = vmatprep.mubr.bf16.mxu0 0
  %979 = vmatmul.mubr.bf16.gmra.mrb[0].mxu0 %v617
  %v980 = vpop.f32.mrb[0].mxu0
  %v981 = vadd.f32 0.0, %v980
  %v982 = vpop.f32.mrb[0].mxu0
  %v983 = vadd.f32 0.0, %v982
  %v984 = vpop.f32.mrb[0].mxu0
  %v985 = vadd.f32 0.0, %v984
  %v986 = vpop.f32.mrb[0].mxu0
  %v987 = vadd.f32 0.0, %v986
  %988 = vmatprep.mubr.bf16.mxu0 0
  %989 = vmatmul.mubr.bf16.gmra.mrb[0].mxu0 %v620
  %v990 = vpop.f32.mrb[0].mxu0
  %v991 = vadd.f32 0.0, %v990
  %v992 = vpop.f32.mrb[0].mxu0
  %v993 = vadd.f32 0.0, %v992
  %v994 = vpop.f32.mrb[0].mxu0
  %v995 = vadd.f32 0.0, %v994
  %v996 = vpop.f32.mrb[0].mxu0
  %v997 = vadd.f32 0.0, %v996
  %998 = vmatprep.mubr.bf16.mxu0 0
  %999 = vmatmul.mubr.bf16.gmra.mrb[0].mxu0 %v623
  %v1000 = vpop.f32.mrb[0].mxu0
  %v1001 = vadd.f32 0.0, %v1000
  %v1002 = vpop.f32.mrb[0].mxu0
  %v1003 = vadd.f32 0.0, %v1002
  %v1004 = vpop.f32.mrb[0].mxu0
  %v1005 = vadd.f32 0.0, %v1004
  %v1006 = vpop.f32.mrb[0].mxu0
  %v1007 = vadd.f32 0.0, %v1006
  %1008 = vmatprep.mubr.bf16.mxu0 0
  %1009 = vmatmul.mubr.bf16.gmra.mrb[0].mxu0 %v626
  %v1010 = vpop.f32.mrb[0].mxu0
  %v1011 = vadd.f32 0.0, %v1010
  %v1012 = vpop.f32.mrb[0].mxu0
  %v1013 = vadd.f32 0.0, %v1012
  %v1014 = vpop.f32.mrb[0].mxu0
  %v1015 = vadd.f32 0.0, %v1014
  %v1016 = vpop.f32.mrb[0].mxu0
  %v1017 = vadd.f32 0.0, %v1016
  %1018 = vmatprep.mubr.bf16.mxu0 0
  %1019 = vmatmul.mubr.bf16.gmra.mrb[0].mxu0 %v629
  %v1020 = vpop.f32.mrb[0].mxu0
  %v1021 = vadd.f32 0.0, %v1020
  %v1022 = vpop.f32.mrb[0].mxu0
  %v1023 = vadd.f32 0.0, %v1022
  %v1024 = vpop.f32.mrb[0].mxu0
  %v1025 = vadd.f32 0.0, %v1024
  %v1026 = vpop.f32.mrb[0].mxu0
  %v1027 = vadd.f32 0.0, %v1026
  %1028 = vmatprep.mubr.bf16.mxu0 0
  %1029 = vmatmul.mubr.bf16.gmra.mrb[0].mxu0 %v632
  %v1030 = vpop.f32.mrb[0].mxu0
  %v1031 = vadd.f32 0.0, %v1030
  %v1032 = vpop.f32.mrb[0].mxu0
  %v1033 = vadd.f32 0.0, %v1032
  %v1034 = vpop.f32.mrb[0].mxu0
  %v1035 = vadd.f32 0.0, %v1034
  %v1036 = vpop.f32.mrb[0].mxu0
  %v1037 = vadd.f32 0.0, %v1036
  %1038 = vmatprep.mubr.bf16.mxu0 0
  %1039 = vmatmul.mubr.bf16.gmra.mrb[0].mxu0 %v635
  %v1040 = vpop.f32.mrb[0].mxu0
  %v1041 = vadd.f32 0.0, %v1040
  %v1042 = vpop.f32.mrb[0].mxu0
  %v1043 = vadd.f32 0.0, %v1042
  %v1044 = vpop.f32.mrb[0].mxu0
  %v1045 = vadd.f32 0.0, %v1044
  %v1046 = vpop.f32.mrb[0].mxu0
  %v1047 = vadd.f32 0.0, %v1046
  %1048 = vmatprep.mubr.bf16.mxu0 0
  %1049 = vmatmul.mubr.bf16.gmra.mrb[0].mxu0 %v638
  %v1050 = vpop.f32.mrb[0].mxu0
  %v1051 = vadd.f32 0.0, %v1050
  %v1052 = vpop.f32.mrb[0].mxu0
  %v1053 = vadd.f32 0.0, %v1052
  %v1054 = vpop.f32.mrb[0].mxu0
  %v1055 = vadd.f32 0.0, %v1054
  %v1056 = vpop.f32.mrb[0].mxu0
  %v1057 = vadd.f32 0.0, %v1056
  %1058 = vmatprep.mubr.bf16.mxu0 0
  %1059 = vmatmul.mubr.bf16.gmra.mrb[0].mxu0 %v641
  %v1060 = vpop.f32.mrb[0].mxu0
  %v1061 = vadd.f32 0.0, %v1060
  %v1062 = vpop.f32.mrb[0].mxu0
  %v1063 = vadd.f32 0.0, %v1062
  %v1064 = vpop.f32.mrb[0].mxu0
  %v1065 = vadd.f32 0.0, %v1064
  %v1066 = vpop.f32.mrb[0].mxu0
  %v1067 = vadd.f32 0.0, %v1066
  %1068 = vmatprep.mubr.bf16.mxu0 0
  %1069 = vmatmul.mubr.bf16.gmra.mrb[0].mxu0 %v644
  %v1070 = vpop.f32.mrb[0].mxu0
  %v1071 = vadd.f32 0.0, %v1070
  %v1072 = vpop.f32.mrb[0].mxu0
  %v1073 = vadd.f32 0.0, %v1072
  %v1074 = vpop.f32.mrb[0].mxu0
  %v1075 = vadd.f32 0.0, %v1074
  %v1076 = vpop.f32.mrb[0].mxu0
  %v1077 = vadd.f32 0.0, %v1076
  %1078 = vmatprep.mubr.bf16.mxu0 0
  %1079 = vmatmul.mubr.bf16.gmra.mrb[0].mxu0 %v647
  %v1080 = vpop.f32.mrb[0].mxu0
  %v1081 = vadd.f32 0.0, %v1080
  %v1082 = vpop.f32.mrb[0].mxu0
  %v1083 = vadd.f32 0.0, %v1082
  %v1084 = vpop.f32.mrb[0].mxu0
  %v1085 = vadd.f32 0.0, %v1084
  %v1086 = vpop.f32.mrb[0].mxu0
  %v1087 = vadd.f32 0.0, %v1086
  %1088 = vmatprep.mubr.bf16.mxu0 0
  %1089 = vmatmul.mubr.bf16.gmra.mrb[0].mxu0 %v650
  %v1090 = vpop.f32.mrb[0].mxu0
  %v1091 = vadd.f32 0.0, %v1090
  %v1092 = vpop.f32.mrb[0].mxu0
  %v1093 = vadd.f32 0.0, %v1092
  %v1094 = vpop.f32.mrb[0].mxu0
  %v1095 = vadd.f32 0.0, %v1094
  %v1096 = vpop.f32.mrb[0].mxu0
  %v1097 = vadd.f32 0.0, %v1096
  %1098 = vmatprep.mubr.bf16.mxu0 0
  %1099 = vmatmul.mubr.bf16.gmra.mrb[0].mxu0 %v653
  %v1100 = vpop.f32.mrb[0].mxu0
  %v1101 = vadd.f32 0.0, %v1100
  %v1102 = vpop.f32.mrb[0].mxu0
  %v1103 = vadd.f32 0.0, %v1102
  %v1104 = vpop.f32.mrb[0].mxu0
  %v1105 = vadd.f32 0.0, %v1104
  %v1106 = vpop.f32.mrb[0].mxu0
  %v1107 = vadd.f32 0.0, %v1106
  %1108 = vmatprep.mubr.bf16.mxu0 0
  %1109 = vmatmul.mubr.bf16.gmra.mrb[0].mxu0 %v656
  %v1110 = vpop.f32.mrb[0].mxu0
  %v1111 = vadd.f32 0.0, %v1110
  %v1112 = vpop.f32.mrb[0].mxu0
  %v1113 = vadd.f32 0.0, %v1112
  %v1114 = vpop.f32.mrb[0].mxu0
  %v1115 = vadd.f32 0.0, %v1114
  %v1116 = vpop.f32.mrb[0].mxu0
  %v1117 = vadd.f32 0.0, %v1116
  %1118 = vmatprep.mubr.bf16.mxu0 0
  %1119 = vmatmul.mubr.bf16.gmra.mrb[0].mxu0 %v659
  %v1120 = vpop.f32.mrb[0].mxu0
  %v1121 = vadd.f32 0.0, %v1120
  %v1122 = vpop.f32.mrb[0].mxu0
  %v1123 = vadd.f32 0.0, %v1122
  %v1124 = vpop.f32.mrb[0].mxu0
  %v1125 = vadd.f32 0.0, %v1124
  %v1126 = vpop.f32.mrb[0].mxu0
  %v1127 = vadd.f32 0.0, %v1126
  %1128 = vmatprep.mubr.bf16.mxu0 0
  %1129 = vmatmul.mubr.bf16.gmra.mrb[0].mxu0 %v662
  %v1130 = vpop.f32.mrb[0].mxu0
  %v1131 = vadd.f32 0.0, %v1130
  %v1132 = vpop.f32.mrb[0].mxu0
  %v1133 = vadd.f32 0.0, %v1132
  %v1134 = vpop.f32.mrb[0].mxu0
  %v1135 = vadd.f32 0.0, %v1134
  %v1136 = vpop.f32.mrb[0].mxu0
  %v1137 = vadd.f32 0.0, %v1136
  %1138 = vmatprep.mubr.bf16.mxu0 0
  %1139 = vmatmul.mubr.bf16.gmra.mrb[0].mxu0 %v665
  %v1140 = vpop.f32.mrb[0].mxu0
  %v1141 = vadd.f32 0.0, %v1140
  %v1142 = vpop.f32.mrb[0].mxu0
  %v1143 = vadd.f32 0.0, %v1142
  %v1144 = vpop.f32.mrb[0].mxu0
  %v1145 = vadd.f32 0.0, %v1144
  %v1146 = vpop.f32.mrb[0].mxu0
  %v1147 = vadd.f32 0.0, %v1146
  %1148 = vdwg.mxu0
  %v1149 = vld [vmem:[%s4] sm:$0xff]
  %v1150 = vld [vmem:[%s4 + $0x8] sm:$0xff]
  %v1151 = vld [vmem:[%s4 + $0x10] sm:$0xff]
  %v1152 = vld [vmem:[%s4 + $0x18] sm:$0xff]
  %v1153 = vld [vmem:[%s4 + $0x20] sm:$0xff]
  %v1154 = vld [vmem:[%s4 + $0x28] sm:$0xff]
  %v1155 = vld [vmem:[%s4 + $0x30] sm:$0xff]
  %v1156 = vld [vmem:[%s4 + $0x38] sm:$0xff]
  %v1157 = vld [vmem:[%s4 + $0x40] sm:$0xff]
  %v1158 = vld [vmem:[%s4 + $0x48] sm:$0xff]
  %v1159 = vld [vmem:[%s4 + $0x50] sm:$0xff]
  %v1160 = vld [vmem:[%s4 + $0x58] sm:$0xff]
  %v1161 = vld [vmem:[%s4 + $0x60] sm:$0xff]
  %v1162 = vld [vmem:[%s4 + $0x68] sm:$0xff]
  %v1163 = vld [vmem:[%s4 + $0x70] sm:$0xff]
  %v1164 = vld [vmem:[%s4 + $0x78] sm:$0xff]
  %v1165 = vld [vmem:[%s4 + $0x80] sm:$0xff]
  %v1166 = vld [vmem:[%s4 + $0x88] sm:$0xff]
  %v1167 = vld [vmem:[%s4 + $0x90] sm:$0xff]
  %v1168 = vld [vmem:[%s4 + $0x98] sm:$0xff]
  %v1169 = vld [vmem:[%s4 + $0xa0] sm:$0xff]
  %v1170 = vld [vmem:[%s4 + $0xa8] sm:$0xff]
  %v1171 = vld [vmem:[%s4 + $0xb0] sm:$0xff]
  %v1172 = vld [vmem:[%s4 + $0xb8] sm:$0xff]
  %v1173 = vld [vmem:[%s4 + $0xc0] sm:$0xff]
  %v1174 = vld [vmem:[%s4 + $0xc8] sm:$0xff]
  %v1175 = vld [vmem:[%s4 + $0xd0] sm:$0xff]
  %v1176 = vld [vmem:[%s4 + $0xd8] sm:$0xff]
  %v1177 = vld [vmem:[%s4 + $0xe0] sm:$0xff]
  %v1178 = vld [vmem:[%s4 + $0xe8] sm:$0xff]
  %v1179 = vld [vmem:[%s4 + $0xf0] sm:$0xff]
  %v1180 = vld [vmem:[%s4 + $0xf8] sm:$0xff]
  %v1181 = vadd.f32 %v311, %v718
  %v1182 = vadd.f32 %v313, %v720
  %v1183 = vadd.f32 %v384, %v951
  %v1184 = vadd.f32 %v386, %v953
  %v1185 = vadd.f32 %v315, %v722
  %v1186 = vadd.f32 %v317, %v724
  %v1187 = vadd.f32 %v388, %v955
  %v1188 = vadd.f32 %v390, %v957
  %v1189 = vadd.f32 %v321, %v728
  %v1190 = vadd.f32 %v323, %v730
  %v1191 = vadd.f32 %v394, %v961
  %v1192 = vadd.f32 %v396, %v963
  %v1193 = vadd.f32 %v325, %v732
  %v1194 = vadd.f32 %v327, %v734
  %v1195 = vadd.f32 %v398, %v965
  %v1196 = vadd.f32 %v400, %v967
  %v1197 = vadd.f32 %v331, %v738
  %v1198 = vadd.f32 %v333, %v740
  %v1199 = vadd.f32 %v404, %v971
  %v1200 = vadd.f32 %v406, %v973
  %v1201 = vadd.f32 %v335, %v742
  %v1202 = vadd.f32 %v337, %v744
  %v1203 = vadd.f32 %v408, %v975
  %v1204 = vadd.f32 %v410, %v977
  %v1205 = vadd.f32 %v341, %v748
  %v1206 = vadd.f32 %v343, %v750
  %v1207 = vadd.f32 %v414, %v981
  %v1208 = vadd.f32 %v416, %v983
  %v1209 = vadd.f32 %v345, %v752
  %v1210 = vadd.f32 %v347, %v754
  %v1211 = vadd.f32 %v418, %v985
  %v1212 = vadd.f32 %v420, %v987
  %v1245 = vunpack.c.l.b16 %v1149
  %v1246 = vunpack.c.h.b16 %v1149
  %v1247 = vunpack.c.l.b16 %v1150
  %v1248 = vunpack.c.h.b16 %v1150
  %v1249 = vunpack.c.l.b16 %v1151
  %v1250 = vunpack.c.h.b16 %v1151
  %v1251 = vunpack.c.l.b16 %v1152
  %v1252 = vunpack.c.h.b16 %v1152
  %v1253 = vunpack.c.l.b16 %v1153
  %v1254 = vunpack.c.h.b16 %v1153
  %v1255 = vunpack.c.l.b16 %v1154
  %v1256 = vunpack.c.h.b16 %v1154
  %v1257 = vunpack.c.l.b16 %v1155
  %v1258 = vunpack.c.h.b16 %v1155
  %v1259 = vunpack.c.l.b16 %v1156
  %v1260 = vunpack.c.h.b16 %v1156
  %v1261 = vunpack.c.l.b16 %v1157
  %v1262 = vunpack.c.h.b16 %v1157
  %v1263 = vunpack.c.l.b16 %v1158
  %v1264 = vunpack.c.h.b16 %v1158
  %v1265 = vunpack.c.l.b16 %v1159
  %v1266 = vunpack.c.h.b16 %v1159
  %v1267 = vunpack.c.l.b16 %v1160
  %v1268 = vunpack.c.h.b16 %v1160
  %v1269 = vunpack.c.l.b16 %v1161
  %v1270 = vunpack.c.h.b16 %v1161
  %v1271 = vunpack.c.l.b16 %v1162
  %v1272 = vunpack.c.h.b16 %v1162
  %v1273 = vunpack.c.l.b16 %v1163
  %v1274 = vunpack.c.h.b16 %v1163
  %v1275 = vunpack.c.l.b16 %v1164
  %v1276 = vunpack.c.h.b16 %v1164
  %v1277 = vunpack.c.l.b16 %v1165
  %v1278 = vunpack.c.h.b16 %v1165
  %v1279 = vunpack.c.l.b16 %v1166
  %v1280 = vunpack.c.h.b16 %v1166
  %v1281 = vunpack.c.l.b16 %v1167
  %v1282 = vunpack.c.h.b16 %v1167
  %v1283 = vunpack.c.l.b16 %v1168
  %v1284 = vunpack.c.h.b16 %v1168
  %v1285 = vunpack.c.l.b16 %v1169
  %v1286 = vunpack.c.h.b16 %v1169
  %v1287 = vunpack.c.l.b16 %v1170
  %v1288 = vunpack.c.h.b16 %v1170
  %v1289 = vunpack.c.l.b16 %v1171
  %v1290 = vunpack.c.h.b16 %v1171
  %v1291 = vunpack.c.l.b16 %v1172
  %v1292 = vunpack.c.h.b16 %v1172
  %v1293 = vunpack.c.l.b16 %v1173
  %v1294 = vunpack.c.h.b16 %v1173
  %v1295 = vunpack.c.l.b16 %v1174
  %v1296 = vunpack.c.h.b16 %v1174
  %v1297 = vunpack.c.l.b16 %v1175
  %v1298 = vunpack.c.h.b16 %v1175
  %v1299 = vunpack.c.l.b16 %v1176
  %v1300 = vunpack.c.h.b16 %v1176
  %v1301 = vunpack.c.l.b16 %v1177
  %v1302 = vunpack.c.h.b16 %v1177
  %v1303 = vunpack.c.l.b16 %v1178
  %v1304 = vunpack.c.h.b16 %v1178
  %v1305 = vunpack.c.l.b16 %v1179
  %v1306 = vunpack.c.h.b16 %v1179
  %v1307 = vunpack.c.l.b16 %v1180
  %v1308 = vunpack.c.h.b16 %v1180
  %v1309 = vpack.c.b16 %v1249, %v1245
  %v1310 = vpack.c.b16 %v1250, %v1246
  %v1311 = vpack.c.b16 %v1251, %v1247
  %v1312 = vpack.c.b16 %v1252, %v1248
  %v1313 = vpack.c.b16 %v1257, %v1253
  %v1314 = vpack.c.b16 %v1258, %v1254
  %v1315 = vpack.c.b16 %v1259, %v1255
  %v1316 = vpack.c.b16 %v1260, %v1256
  %v1317 = vpack.c.b16 %v1265, %v1261
  %v1318 = vpack.c.b16 %v1266, %v1262
  %v1319 = vpack.c.b16 %v1267, %v1263
  %v1320 = vpack.c.b16 %v1268, %v1264
  %v1321 = vpack.c.b16 %v1273, %v1269
  %v1322 = vpack.c.b16 %v1274, %v1270
  %v1323 = vpack.c.b16 %v1275, %v1271
  %v1324 = vpack.c.b16 %v1276, %v1272
  %v1325 = vpack.c.b16 %v1281, %v1277
  %v1326 = vpack.c.b16 %v1282, %v1278
  %v1327 = vpack.c.b16 %v1283, %v1279
  %v1328 = vpack.c.b16 %v1284, %v1280
  %v1329 = vpack.c.b16 %v1289, %v1285
  %v1330 = vpack.c.b16 %v1290, %v1286
  %v1331 = vpack.c.b16 %v1291, %v1287
  %v1332 = vpack.c.b16 %v1292, %v1288
  %v1333 = vpack.c.b16 %v1297, %v1293
  %v1334 = vpack.c.b16 %v1298, %v1294
  %v1335 = vpack.c.b16 %v1299, %v1295
  %v1336 = vpack.c.b16 %v1300, %v1296
  %v1337 = vpack.c.b16 %v1305, %v1301
  %v1338 = vpack.c.b16 %v1306, %v1302
  %v1339 = vpack.c.b16 %v1307, %v1303
  %v1340 = vpack.c.b16 %v1308, %v1304
  %1373 = vmatprep.subr.bf16.mxu0 %v1310
  %1374 = vmatpush1.bf16.msra.mxu0 %v1309
  %1375 = vmatprep.subr.bf16.mxu0 %v1314
  %1376 = vmatpush1.bf16.msra.mxu0 %v1313
  %1377 = vmatprep.subr.bf16.mxu0 %v1318
  %1378 = vmatpush1.bf16.msra.mxu0 %v1317
  %1379 = vmatprep.subr.bf16.mxu0 %v1322
  %1380 = vmatpush1.bf16.msra.mxu0 %v1321
  %1381 = vmatprep.subr.bf16.mxu0 %v1326
  %1382 = vmatpush1.bf16.msra.mxu0 %v1325
  %1383 = vmatprep.subr.bf16.mxu0 %v1330
  %1384 = vmatpush1.bf16.msra.mxu0 %v1329
  %1385 = vmatprep.subr.bf16.mxu0 %v1334
  %1386 = vmatpush1.bf16.msra.mxu0 %v1333
  %1387 = vmatprep.subr.bf16.mxu0 %v1338
  %1388 = vmatpush1.bf16.msra.mxu0 %v1337
  %1389 = vmatprep.subr.bf16.mxu0 0
  %1390 = vmatpush1.bf16.msra.mxu0 0
  %1391 = vmatprep.subr.bf16.mxu0 0
  %1392 = vmatpush1.bf16.msra.mxu0 0
  %1393 = vmatprep.subr.bf16.mxu0 0
  %1394 = vmatpush1.bf16.msra.mxu0 0
  %1395 = vmatprep.subr.bf16.mxu0 0
  %1396 = vmatpush1.bf16.msra.mxu0 0
  %1397 = vmatprep.subr.bf16.mxu0 0
  %1398 = vmatpush1.bf16.msra.mxu0 0
  %1399 = vmatprep.subr.bf16.mxu0 0
  %1400 = vmatpush1.bf16.msra.mxu0 0
  %1401 = vmatprep.subr.bf16.mxu0 0
  %1402 = vmatpush1.bf16.msra.mxu0 0
  %1403 = vmatprep.subr.bf16.mxu0 0
  %1404 = vmatpush1.bf16.msra.mxu0 0
  %1405 = vmatprep.mubr.bf16.mxu0 0
  %1406 = vmatmul.mubr.bf16.gmra.mrb[0].mxu0 0
  %v1407 = vpop.f32.mrb[0].mxu0
  %v1408 = vadd.f32 0.0, %v1407
  %v1409 = vpop.f32.mrb[0].mxu0
  %v1410 = vadd.f32 0.0, %v1409
  %v1411 = vpop.f32.mrb[0].mxu0
  %v1412 = vadd.f32 0.0, %v1411
  %v1413 = vpop.f32.mrb[0].mxu0
  %v1414 = vadd.f32 0.0, %v1413
  %1415 = vmatprep.mubr.bf16.mxu0 0
  %1416 = vmatmul.mubr.bf16.gmra.mrb[0].mxu0 0
  %v1417 = vpop.f32.mrb[0].mxu0
  %v1418 = vadd.f32 0.0, %v1417
  %v1419 = vpop.f32.mrb[0].mxu0
  %v1420 = vadd.f32 0.0, %v1419
  %v1421 = vpop.f32.mrb[0].mxu0
  %v1422 = vadd.f32 0.0, %v1421
  %v1423 = vpop.f32.mrb[0].mxu0
  %v1424 = vadd.f32 0.0, %v1423
  %1425 = vmatprep.mubr.bf16.mxu0 0
  %1426 = vmatmul.mubr.bf16.gmra.mrb[0].mxu0 0
  %v1427 = vpop.f32.mrb[0].mxu0
  %v1428 = vadd.f32 0.0, %v1427
  %v1429 = vpop.f32.mrb[0].mxu0
  %v1430 = vadd.f32 0.0, %v1429
  %v1431 = vpop.f32.mrb[0].mxu0
  %v1432 = vadd.f32 0.0, %v1431
  %v1433 = vpop.f32.mrb[0].mxu0
  %v1434 = vadd.f32 0.0, %v1433
  %1435 = vmatprep.mubr.bf16.mxu0 0
  %1436 = vmatmul.mubr.bf16.gmra.mrb[0].mxu0 0
  %v1437 = vpop.f32.mrb[0].mxu0
  %v1438 = vadd.f32 0.0, %v1437
  %v1439 = vpop.f32.mrb[0].mxu0
  %v1440 = vadd.f32 0.0, %v1439
  %v1441 = vpop.f32.mrb[0].mxu0
  %v1442 = vadd.f32 0.0, %v1441
  %v1443 = vpop.f32.mrb[0].mxu0
  %v1444 = vadd.f32 0.0, %v1443
  %1445 = vdwg.mxu0
  %1446 = vmatprep.subr.bf16.mxu0 %v1312
  %1447 = vmatpush1.bf16.msra.mxu0 %v1311
  %1448 = vmatprep.subr.bf16.mxu0 %v1316
  %1449 = vmatpush1.bf16.msra.mxu0 %v1315
  %1450 = vmatprep.subr.bf16.mxu0 %v1320
  %1451 = vmatpush1.bf16.msra.mxu0 %v1319
  %1452 = vmatprep.subr.bf16.mxu0 %v1324
  %1453 = vmatpush1.bf16.msra.mxu0 %v1323
  %1454 = vmatprep.subr.bf16.mxu0 %v1328
  %1455 = vmatpush1.bf16.msra.mxu0 %v1327
  %1456 = vmatprep.subr.bf16.mxu0 %v1332
  %1457 = vmatpush1.bf16.msra.mxu0 %v1331
  %1458 = vmatprep.subr.bf16.mxu0 %v1336
  %1459 = vmatpush1.bf16.msra.mxu0 %v1335
  %1460 = vmatprep.subr.bf16.mxu0 %v1340
  %1461 = vmatpush1.bf16.msra.mxu0 %v1339
  %1462 = vmatprep.subr.bf16.mxu0 0
  %1463 = vmatpush1.bf16.msra.mxu0 0
  %1464 = vmatprep.subr.bf16.mxu0 0
  %1465 = vmatpush1.bf16.msra.mxu0 0
  %1466 = vmatprep.subr.bf16.mxu0 0
  %1467 = vmatpush1.bf16.msra.mxu0 0
  %1468 = vmatprep.subr.bf16.mxu0 0
  %1469 = vmatpush1.bf16.msra.mxu0 0
  %1470 = vmatprep.subr.bf16.mxu0 0
  %1471 = vmatpush1.bf16.msra.mxu0 0
  %1472 = vmatprep.subr.bf16.mxu0 0
  %1473 = vmatpush1.bf16.msra.mxu0 0
  %1474 = vmatprep.subr.bf16.mxu0 0
  %1475 = vmatpush1.bf16.msra.mxu0 0
  %1476 = vmatprep.subr.bf16.mxu0 0
  %1477 = vmatpush1.bf16.msra.mxu0 0
  %1478 = vmatprep.mubr.bf16.mxu0 0
  %1479 = vmatmul.mubr.bf16.gmra.mrb[0].mxu0 0
  %v1480 = vpop.f32.mrb[0].mxu0
  %v1481 = vadd.f32 0.0, %v1480
  %v1482 = vpop.f32.mrb[0].mxu0
  %v1483 = vadd.f32 0.0, %v1482
  %v1484 = vpop.f32.mrb[0].mxu0
  %v1485 = vadd.f32 0.0, %v1484
  %v1486 = vpop.f32.mrb[0].mxu0
  %v1487 = vadd.f32 0.0, %v1486
  %1488 = vmatprep.mubr.bf16.mxu0 0
  %1489 = vmatmul.mubr.bf16.gmra.mrb[0].mxu0 0
  %v1490 = vpop.f32.mrb[0].mxu0
  %v1491 = vadd.f32 0.0, %v1490
  %v1492 = vpop.f32.mrb[0].mxu0
  %v1493 = vadd.f32 0.0, %v1492
  %v1494 = vpop.f32.mrb[0].mxu0
  %v1495 = vadd.f32 0.0, %v1494
  %v1496 = vpop.f32.mrb[0].mxu0
  %v1497 = vadd.f32 0.0, %v1496
  %1498 = vmatprep.mubr.bf16.mxu0 0
  %1499 = vmatmul.mubr.bf16.gmra.mrb[0].mxu0 0
  %v1500 = vpop.f32.mrb[0].mxu0
  %v1501 = vadd.f32 0.0, %v1500
  %v1502 = vpop.f32.mrb[0].mxu0
  %v1503 = vadd.f32 0.0, %v1502
  %v1504 = vpop.f32.mrb[0].mxu0
  %v1505 = vadd.f32 0.0, %v1504
  %v1506 = vpop.f32.mrb[0].mxu0
  %v1507 = vadd.f32 0.0, %v1506
  %1508 = vmatprep.mubr.bf16.mxu0 0
  %1509 = vmatmul.mubr.bf16.gmra.mrb[0].mxu0 0
  %v1510 = vpop.f32.mrb[0].mxu0
  %v1511 = vadd.f32 0.0, %v1510
  %v1512 = vpop.f32.mrb[0].mxu0
  %v1513 = vadd.f32 0.0, %v1512
  %v1514 = vpop.f32.mrb[0].mxu0
  %v1515 = vadd.f32 0.0, %v1514
  %v1516 = vpop.f32.mrb[0].mxu0
  %v1517 = vadd.f32 0.0, %v1516
  %1518 = vdwg.mxu0
  %v1519 = vadd.f32 %v1181, %v1408
  %v1520 = vadd.f32 %v1182, %v1410
  %v1521 = vadd.f32 %v1183, %v1481
  %v1522 = vadd.f32 %v1184, %v1483
  %v1523 = vadd.f32 %v1185, %v1412
  %v1524 = vadd.f32 %v1186, %v1414
  %v1525 = vadd.f32 %v1187, %v1485
  %v1526 = vadd.f32 %v1188, %v1487
  %v1527 = vadd.f32 %v1189, %v1418
  %v1528 = vadd.f32 %v1190, %v1420
  %v1529 = vadd.f32 %v1191, %v1491
  %v1530 = vadd.f32 %v1192, %v1493
  %v1531 = vadd.f32 %v1193, %v1422
  %v1532 = vadd.f32 %v1194, %v1424
  %v1533 = vadd.f32 %v1195, %v1495
  %v1534 = vadd.f32 %v1196, %v1497
  %v1535 = vadd.f32 %v1197, %v1428
  %v1536 = vadd.f32 %v1198, %v1430
  %v1537 = vadd.f32 %v1199, %v1501
  %v1538 = vadd.f32 %v1200, %v1503
  %v1539 = vadd.f32 %v1201, %v1432
  %v1540 = vadd.f32 %v1202, %v1434
  %v1541 = vadd.f32 %v1203, %v1505
  %v1542 = vadd.f32 %v1204, %v1507
  %v1543 = vadd.f32 %v1205, %v1438
  %v1544 = vadd.f32 %v1206, %v1440
  %v1545 = vadd.f32 %v1207, %v1511
  %v1546 = vadd.f32 %v1208, %v1513
  %v1547 = vadd.f32 %v1209, %v1442
  %v1548 = vadd.f32 %v1210, %v1444
  %v1549 = vadd.f32 %v1211, %v1515
  %v1550 = vadd.f32 %v1212, %v1517
  %v1551 = vxor.u32 %v1519, 2147483648
  %v1552 = vxor.u32 %v1520, 2147483648
  %v1553 = vxor.u32 %v1521, 2147483648
  %v1554 = vxor.u32 %v1523, 2147483648
  %v1555 = vxor.u32 %v1524, 2147483648
  %v1556 = vxor.u32 %v1525, 2147483648
  %v1557 = vxor.u32 %v1527, 2147483648
  %v1558 = vxor.u32 %v1528, 2147483648
  %v1559 = vxor.u32 %v1529, 2147483648
  %v1560 = vxor.u32 %v1531, 2147483648
  %v1561 = vxor.u32 %v1532, 2147483648
  %v1562 = vxor.u32 %v1533, 2147483648
  %v1563 = vxor.u32 %v1535, 2147483648
  %v1564 = vxor.u32 %v1536, 2147483648
  %v1565 = vxor.u32 %v1537, 2147483648
  %v1566 = vxor.u32 %v1539, 2147483648
  %v1567 = vxor.u32 %v1540, 2147483648
  %v1568 = vxor.u32 %v1541, 2147483648
  %v1569 = vxor.u32 %v1543, 2147483648
  %v1570 = vxor.u32 %v1544, 2147483648
  %v1571 = vxor.u32 %v1545, 2147483648
  %v1572 = vxor.u32 %v1547, 2147483648
  %v1573 = vxor.u32 %v1548, 2147483648
  %v1574 = vxor.u32 %v1549, 2147483648
  %v1575 = vmul.f32 %v1551, 1.442695
  %v1576 = vpow.pop %v1575
  %v1577 = vmul.f32 %v1552, 1.442695
  %v1578 = vpow.pop %v1577
  %v1579 = vmul.f32 %v1553, 1.442695
  %v1580 = vpow.pop %v1579
  %v1581 = vmul.f32 %v1554, 1.442695
  %v1582 = vpow.pop %v1581
  %v1583 = vmul.f32 %v1555, 1.442695
  %v1584 = vpow.pop %v1583
  %v1585 = vmul.f32 %v1556, 1.442695
  %v1586 = vpow.pop %v1585
  %v1587 = vmul.f32 %v1557, 1.442695
  %v1588 = vpow.pop %v1587
  %v1589 = vmul.f32 %v1558, 1.442695
  %v1590 = vpow.pop %v1589
  %v1591 = vmul.f32 %v1559, 1.442695
  %v1592 = vpow.pop %v1591
  %v1593 = vmul.f32 %v1560, 1.442695
  %v1594 = vpow.pop %v1593
  %v1595 = vmul.f32 %v1561, 1.442695
  %v1596 = vpow.pop %v1595
  %v1597 = vmul.f32 %v1562, 1.442695
  %v1598 = vpow.pop %v1597
  %v1599 = vmul.f32 %v1563, 1.442695
  %v1600 = vpow.pop %v1599
  %v1601 = vmul.f32 %v1564, 1.442695
  %v1602 = vpow.pop %v1601
  %v1603 = vmul.f32 %v1565, 1.442695
  %v1604 = vpow.pop %v1603
  %v1605 = vmul.f32 %v1566, 1.442695
  %v1606 = vpow.pop %v1605
  %v1607 = vmul.f32 %v1567, 1.442695
  %v1608 = vpow.pop %v1607
  %v1609 = vmul.f32 %v1568, 1.442695
  %v1610 = vpow.pop %v1609
  %v1611 = vmul.f32 %v1569, 1.442695
  %v1612 = vpow.pop %v1611
  %v1613 = vmul.f32 %v1570, 1.442695
  %v1614 = vpow.pop %v1613
  %v1615 = vmul.f32 %v1571, 1.442695
  %v1616 = vpow.pop %v1615
  %v1617 = vmul.f32 %v1572, 1.442695
  %v1618 = vpow.pop %v1617
  %v1619 = vmul.f32 %v1573, 1.442695
  %v1620 = vpow.pop %v1619
  %v1621 = vmul.f32 %v1574, 1.442695
  %v1622 = vpow.pop %v1621
  %v1623 = vadd.f32 %v1576, 1.0
  %v1624 = vadd.f32 %v1578, 1.0
  %v1625 = vadd.f32 %v1580, 1.0
  %v1626 = vadd.f32 %v1582, 1.0
  %v1627 = vadd.f32 %v1584, 1.0
  %v1628 = vadd.f32 %v1586, 1.0
  %v1629 = vadd.f32 %v1588, 1.0
  %v1630 = vadd.f32 %v1590, 1.0
  %v1631 = vadd.f32 %v1592, 1.0
  %v1632 = vadd.f32 %v1594, 1.0
  %v1633 = vadd.f32 %v1596, 1.0
  %v1634 = vadd.f32 %v1598, 1.0
  %v1635 = vadd.f32 %v1600, 1.0
  %v1636 = vadd.f32 %v1602, 1.0
  %v1637 = vadd.f32 %v1604, 1.0
  %v1638 = vadd.f32 %v1606, 1.0
  %v1639 = vadd.f32 %v1608, 1.0
  %v1640 = vadd.f32 %v1610, 1.0
  %v1641 = vadd.f32 %v1612, 1.0
  %v1642 = vadd.f32 %v1614, 1.0
  %v1643 = vadd.f32 %v1616, 1.0
  %v1644 = vadd.f32 %v1618, 1.0
  %v1645 = vadd.f32 %v1620, 1.0
  %v1646 = vadd.f32 %v1622, 1.0
  %v1647 = vrcp.pop %v1623
  %v1648 = vmul.f32 1.0, %v1647
  %v1649 = vrcp.pop %v1624
  %v1650 = vmul.f32 1.0, %v1649
  %v1651 = vrcp.pop %v1625
  %v1652 = vmul.f32 1.0, %v1651
  %v1653 = vrcp.pop %v1626
  %v1654 = vmul.f32 1.0, %v1653
  %v1655 = vrcp.pop %v1627
  %v1656 = vmul.f32 1.0, %v1655
  %v1657 = vrcp.pop %v1628
  %v1658 = vmul.f32 1.0, %v1657
  %v1659 = vrcp.pop %v1629
  %v1660 = vmul.f32 1.0, %v1659
  %v1661 = vrcp.pop %v1630
  %v1662 = vmul.f32 1.0, %v1661
  %v1663 = vrcp.pop %v1631
  %v1664 = vmul.f32 1.0, %v1663
  %v1665 = vrcp.pop %v1632
  %v1666 = vmul.f32 1.0, %v1665
  %v1667 = vrcp.pop %v1633
  %v1668 = vmul.f32 1.0, %v1667
  %v1669 = vrcp.pop %v1634
  %v1670 = vmul.f32 1.0, %v1669
  %v1671 = vrcp.pop %v1635
  %v1672 = vmul.f32 1.0, %v1671
  %v1673 = vrcp.pop %v1636
  %v1674 = vmul.f32 1.0, %v1673
  %v1675 = vrcp.pop %v1637
  %v1676 = vmul.f32 1.0, %v1675
  %v1677 = vrcp.pop %v1638
  %v1678 = vmul.f32 1.0, %v1677
  %v1679 = vrcp.pop %v1639
  %v1680 = vmul.f32 1.0, %v1679
  %v1681 = vrcp.pop %v1640
  %v1682 = vmul.f32 1.0, %v1681
  %v1683 = vrcp.pop %v1641
  %v1684 = vmul.f32 1.0, %v1683
  %v1685 = vrcp.pop %v1642
  %v1686 = vmul.f32 1.0, %v1685
  %v1687 = vrcp.pop %v1643
  %v1688 = vmul.f32 1.0, %v1687
  %v1689 = vrcp.pop %v1644
  %v1690 = vmul.f32 1.0, %v1689
  %v1691 = vrcp.pop %v1645
  %v1692 = vmul.f32 1.0, %v1691
  %v1693 = vrcp.pop %v1646
  %v1694 = vmul.f32 1.0, %v1693
  %v1695 = vtanh.pop %v1522
  %v1696 = vtanh.pop %v1526
  %v1697 = vtanh.pop %v1530
  %v1698 = vtanh.pop %v1534
  %v1699 = vtanh.pop %v1538
  %v1700 = vtanh.pop %v1542
  %v1701 = vtanh.pop %v1546
  %v1702 = vtanh.pop %v1550
  %v1703 = vmul.f32 %v1650, 0.0
  %v1704 = vmul.f32 %v1656, 0.0
  %v1705 = vmul.f32 %v1662, 0.0
  %v1706 = vmul.f32 %v1668, 0.0
  %v1707 = vmul.f32 %v1674, 0.0
  %v1708 = vmul.f32 %v1680, 0.0
  %v1709 = vmul.f32 %v1686, 0.0
  %v1710 = vmul.f32 %v1692, 0.0
  %v1711 = vmul.f32 %v1648, %v1695
  %v1712 = vmul.f32 %v1654, %v1696
  %v1713 = vmul.f32 %v1660, %v1697
  %v1714 = vmul.f32 %v1666, %v1698
  %v1715 = vmul.f32 %v1672, %v1699
  %v1716 = vmul.f32 %v1678, %v1700
  %v1717 = vmul.f32 %v1684, %v1701
  %v1718 = vmul.f32 %v1690, %v1702
  %v1719 = vadd.f32 %v1703, %v1711
  %v1720 = vadd.f32 %v1704, %v1712
  %v1721 = vadd.f32 %v1705, %v1713
  %v1722 = vadd.f32 %v1706, %v1714
  %v1723 = vadd.f32 %v1707, %v1715
  %v1724 = vadd.f32 %v1708, %v1716
  %v1725 = vadd.f32 %v1709, %v1717
  %v1726 = vadd.f32 %v1710, %v1718
  %v1727 = vtanh.pop %v1719
  %v1728 = vtanh.pop %v1720
  %v1729 = vtanh.pop %v1721
  %v1730 = vtanh.pop %v1722
  %v1731 = vtanh.pop %v1723
  %v1732 = vtanh.pop %v1724
  %v1733 = vtanh.pop %v1725
  %v1734 = vtanh.pop %v1726
  %v1735 = vmul.f32 %v1652, %v1727
  %v1736 = vmul.f32 %v1658, %v1728
  %v1737 = vmul.f32 %v1664, %v1729
  %v1738 = vmul.f32 %v1670, %v1730
  %v1739 = vmul.f32 %v1676, %v1731
  %v1740 = vmul.f32 %v1682, %v1732
  %v1741 = vmul.f32 %v1688, %v1733
  %v1742 = vmul.f32 %v1694, %v1734
  %1743 = vst [vmem:[#allocation2] sm:$0xff] %v1735
  %1744 = vst [vmem:[#allocation2 + $0x8] sm:$0xff] %v1736
  %1745 = vst [vmem:[#allocation2 + $0x10] sm:$0xff] %v1737
  %1746 = vst [vmem:[#allocation2 + $0x18] sm:$0xff] %v1738
  %1747 = vst [vmem:[#allocation2 + $0x20] sm:$0xff] %v1739
  %1748 = vst [vmem:[#allocation2 + $0x28] sm:$0xff] %v1740
  %1749 = vst [vmem:[#allocation2 + $0x30] sm:$0xff] %v1741
  %1750 = vst [vmem:[#allocation2 + $0x38] sm:$0xff] %v1742
  %v1751 = vadd.f32 %v311, %v758
  %v1752 = vadd.f32 %v313, %v760
  %v1753 = vadd.f32 %v384, %v991
  %v1754 = vadd.f32 %v386, %v993
  %v1755 = vadd.f32 %v315, %v762
  %v1756 = vadd.f32 %v317, %v764
  %v1757 = vadd.f32 %v388, %v995
  %v1758 = vadd.f32 %v390, %v997
  %v1759 = vadd.f32 %v321, %v768
  %v1760 = vadd.f32 %v323, %v770
  %v1761 = vadd.f32 %v394, %v1001
  %v1762 = vadd.f32 %v396, %v1003
  %v1763 = vadd.f32 %v325, %v772
  %v1764 = vadd.f32 %v327, %v774
  %v1765 = vadd.f32 %v398, %v1005
  %v1766 = vadd.f32 %v400, %v1007
  %v1767 = vadd.f32 %v331, %v778
  %v1768 = vadd.f32 %v333, %v780
  %v1769 = vadd.f32 %v404, %v1011
  %v1770 = vadd.f32 %v406, %v1013
  %v1771 = vadd.f32 %v335, %v782
  %v1772 = vadd.f32 %v337, %v784
  %v1773 = vadd.f32 %v408, %v1015
  %v1774 = vadd.f32 %v410, %v1017
  %v1775 = vadd.f32 %v341, %v788
  %v1776 = vadd.f32 %v343, %v790
  %v1777 = vadd.f32 %v414, %v1021
  %v1778 = vadd.f32 %v416, %v1023
  %v1779 = vadd.f32 %v345, %v792
  %v1780 = vadd.f32 %v347, %v794
  %v1781 = vadd.f32 %v418, %v1025
  %v1782 = vadd.f32 %v420, %v1027
  %v1783 = vpack.c.bf16 %v1736, %v1735
  %v1784 = vpack.c.bf16 %v1738, %v1737
  %v1785 = vpack.c.bf16 %v1740, %v1739
  %v1786 = vpack.c.bf16 %v1742, %v1741
  %1787 = vmatprep.subr.bf16.mxu0 %v1310
  %1788 = vmatpush1.bf16.msra.mxu0 %v1309
  %1789 = vmatprep.subr.bf16.mxu0 %v1314
  %1790 = vmatpush1.bf16.msra.mxu0 %v1313
  %1791 = vmatprep.subr.bf16.mxu0 %v1318
  %1792 = vmatpush1.bf16.msra.mxu0 %v1317
  %1793 = vmatprep.subr.bf16.mxu0 %v1322
  %1794 = vmatpush1.bf16.msra.mxu0 %v1321
  %1795 = vmatprep.subr.bf16.mxu0 %v1326
  %1796 = vmatpush1.bf16.msra.mxu0 %v1325
  %1797 = vmatprep.subr.bf16.mxu0 %v1330
  %1798 = vmatpush1.bf16.msra.mxu0 %v1329
  %1799 = vmatprep.subr.bf16.mxu0 %v1334
  %1800 = vmatpush1.bf16.msra.mxu0 %v1333
  %1801 = vmatprep.subr.bf16.mxu0 %v1338
  %1802 = vmatpush1.bf16.msra.mxu0 %v1337
  %1803 = vmatprep.subr.bf16.mxu0 0
  %1804 = vmatpush1.bf16.msra.mxu0 0
  %1805 = vmatprep.subr.bf16.mxu0 0
  %1806 = vmatpush1.bf16.msra.mxu0 0
  %1807 = vmatprep.subr.bf16.mxu0 0
  %1808 = vmatpush1.bf16.msra.mxu0 0
  %1809 = vmatprep.subr.bf16.mxu0 0
  %1810 = vmatpush1.bf16.msra.mxu0 0
  %1811 = vmatprep.subr.bf16.mxu0 0
  %1812 = vmatpush1.bf16.msra.mxu0 0
  %1813 = vmatprep.subr.bf16.mxu0 0
  %1814 = vmatpush1.bf16.msra.mxu0 0
  %1815 = vmatprep.subr.bf16.mxu0 0
  %1816 = vmatpush1.bf16.msra.mxu0 0
  %1817 = vmatprep.subr.bf16.mxu0 0
  %1818 = vmatpush1.bf16.msra.mxu0 0
  %1819 = vmatprep.mubr.bf16.mxu0 0
  %1820 = vmatmul.mubr.bf16.gmra.mrb[0].mxu0 %v1783
  %v1821 = vpop.f32.mrb[0].mxu0
  %v1822 = vadd.f32 0.0, %v1821
  %v1823 = vpop.f32.mrb[0].mxu0
  %v1824 = vadd.f32 0.0, %v1823
  %v1825 = vpop.f32.mrb[0].mxu0
  %v1826 = vadd.f32 0.0, %v1825
  %v1827 = vpop.f32.mrb[0].mxu0
  %v1828 = vadd.f32 0.0, %v1827
  %1829 = vmatprep.mubr.bf16.mxu0 0
  %1830 = vmatmul.mubr.bf16.gmra.mrb[0].mxu0 %v1784
  %v1831 = vpop.f32.mrb[0].mxu0
  %v1832 = vadd.f32 0.0, %v1831
  %v1833 = vpop.f32.mrb[0].mxu0
  %v1834 = vadd.f32 0.0, %v1833
  %v1835 = vpop.f32.mrb[0].mxu0
  %v1836 = vadd.f32 0.0, %v1835
  %v1837 = vpop.f32.mrb[0].mxu0
  %v1838 = vadd.f32 0.0, %v1837
  %1839 = vmatprep.mubr.bf16.mxu0 0
  %1840 = vmatmul.mubr.bf16.gmra.mrb[0].mxu0 %v1785
  %v1841 = vpop.f32.mrb[0].mxu0
  %v1842 = vadd.f32 0.0, %v1841
  %v1843 = vpop.f32.mrb[0].mxu0
  %v1844 = vadd.f32 0.0, %v1843
  %v1845 = vpop.f32.mrb[0].mxu0
  %v1846 = vadd.f32 0.0, %v1845
  %v1847 = vpop.f32.mrb[0].mxu0
  %v1848 = vadd.f32 0.0, %v1847
  %1849 = vmatprep.mubr.bf16.mxu0 0
  %1850 = vmatmul.mubr.bf16.gmra.mrb[0].mxu0 %v1786
  %v1851 = vpop.f32.mrb[0].mxu0
  %v1852 = vadd.f32 0.0, %v1851
  %v1853 = vpop.f32.mrb[0].mxu0
  %v1854 = vadd.f32 0.0, %v1853
  %v1855 = vpop.f32.mrb[0].mxu0
  %v1856 = vadd.f32 0.0, %v1855
  %v1857 = vpop.f32.mrb[0].mxu0
  %v1858 = vadd.f32 0.0, %v1857
  %1859 = vdwg.mxu0
  %1860 = vmatprep.subr.bf16.mxu0 %v1312
  %1861 = vmatpush1.bf16.msra.mxu0 %v1311
  %1862 = vmatprep.subr.bf16.mxu0 %v1316
  %1863 = vmatpush1.bf16.msra.mxu0 %v1315
  %1864 = vmatprep.subr.bf16.mxu0 %v1320
  %1865 = vmatpush1.bf16.msra.mxu0 %v1319
  %1866 = vmatprep.subr.bf16.mxu0 %v1324
  %1867 = vmatpush1.bf16.msra.mxu0 %v1323
  %1868 = vmatprep.subr.bf16.mxu0 %v1328
  %1869 = vmatpush1.bf16.msra.mxu0 %v1327
  %1870 = vmatprep.subr.bf16.mxu0 %v1332
  %1871 = vmatpush1.bf16.msra.mxu0 %v1331
  %1872 = vmatprep.subr.bf16.mxu0 %v1336
  %1873 = vmatpush1.bf16.msra.mxu0 %v1335
  %1874 = vmatprep.subr.bf16.mxu0 %v1340
  %1875 = vmatpush1.bf16.msra.mxu0 %v1339
  %1876 = vmatprep.subr.bf16.mxu0 0
  %1877 = vmatpush1.bf16.msra.mxu0 0
  %1878 = vmatprep.subr.bf16.mxu0 0
  %1879 = vmatpush1.bf16.msra.mxu0 0
  %1880 = vmatprep.subr.bf16.mxu0 0
  %1881 = vmatpush1.bf16.msra.mxu0 0
  %1882 = vmatprep.subr.bf16.mxu0 0
  %1883 = vmatpush1.bf16.msra.mxu0 0
  %1884 = vmatprep.subr.bf16.mxu0 0
  %1885 = vmatpush1.bf16.msra.mxu0 0
  %1886 = vmatprep.subr.bf16.mxu0 0
  %1887 = vmatpush1.bf16.msra.mxu0 0
  %1888 = vmatprep.subr.bf16.mxu0 0
  %1889 = vmatpush1.bf16.msra.mxu0 0
  %1890 = vmatprep.subr.bf16.mxu0 0
  %1891 = vmatpush1.bf16.msra.mxu0 0
  %1892 = vmatprep.mubr.bf16.mxu0 0
  %1893 = vmatmul.mubr.bf16.gmra.mrb[0].mxu0 %v1783
  %v1894 = vpop.f32.mrb[0].mxu0
  %v1895 = vadd.f32 0.0, %v1894
  %v1896 = vpop.f32.mrb[0].mxu0
  %v1897 = vadd.f32 0.0, %v1896
  %v1898 = vpop.f32.mrb[0].mxu0
  %v1899 = vadd.f32 0.0, %v1898
  %v1900 = vpop.f32.mrb[0].mxu0
  %v1901 = vadd.f32 0.0, %v1900
  %1902 = vmatprep.mubr.bf16.mxu0 0
  %1903 = vmatmul.mubr.bf16.gmra.mrb[0].mxu0 %v1784
  %v1904 = vpop.f32.mrb[0].mxu0
  %v1905 = vadd.f32 0.0, %v1904
  %v1906 = vpop.f32.mrb[0].mxu0
  %v1907 = vadd.f32 0.0, %v1906
  %v1908 = vpop.f32.mrb[0].mxu0
  %v1909 = vadd.f32 0.0, %v1908
  %v1910 = vpop.f32.mrb[0].mxu0
  %v1911 = vadd.f32 0.0, %v1910
  %1912 = vmatprep.mubr.bf16.mxu0 0
  %1913 = vmatmul.mubr.bf16.gmra.mrb[0].mxu0 %v1785
  %v1914 = vpop.f32.mrb[0].mxu0
  %v1915 = vadd.f32 0.0, %v1914
  %v1916 = vpop.f32.mrb[0].mxu0
  %v1917 = vadd.f32 0.0, %v1916
  %v1918 = vpop.f32.mrb[0].mxu0
  %v1919 = vadd.f32 0.0, %v1918
  %v1920 = vpop.f32.mrb[0].mxu0
  %v1921 = vadd.f32 0.0, %v1920
  %1922 = vmatprep.mubr.bf16.mxu0 0
  %1923 = vmatmul.mubr.bf16.gmra.mrb[0].mxu0 %v1786
  %v1924 = vpop.f32.mrb[0].mxu0
  %v1925 = vadd.f32 0.0, %v1924
  %v1926 = vpop.f32.mrb[0].mxu0
  %v1927 = vadd.f32 0.0, %v1926
  %v1928 = vpop.f32.mrb[0].mxu0
  %v1929 = vadd.f32 0.0, %v1928
  %v1930 = vpop.f32.mrb[0].mxu0
  %v1931 = vadd.f32 0.0, %v1930
  %1932 = vdwg.mxu0
  %v1933 = vadd.f32 %v1751, %v1822
  %v1934 = vadd.f32 %v1752, %v1824
  %v1935 = vadd.f32 %v1753, %v1895
  %v1936 = vadd.f32 %v1754, %v1897
  %v1937 = vadd.f32 %v1755, %v1826
  %v1938 = vadd.f32 %v1756, %v1828
  %v1939 = vadd.f32 %v1757, %v1899
  %v1940 = vadd.f32 %v1758, %v1901
  %v1941 = vadd.f32 %v1759, %v1832
  %v1942 = vadd.f32 %v1760, %v1834
  %v1943 = vadd.f32 %v1761, %v1905
  %v1944 = vadd.f32 %v1762, %v1907
  %v1945 = vadd.f32 %v1763, %v1836
  %v1946 = vadd.f32 %v1764, %v1838
  %v1947 = vadd.f32 %v1765, %v1909
  %v1948 = vadd.f32 %v1766, %v1911
  %v1949 = vadd.f32 %v1767, %v1842
  %v1950 = vadd.f32 %v1768, %v1844
  %v1951 = vadd.f32 %v1769, %v1915
  %v1952 = vadd.f32 %v1770, %v1917
  %v1953 = vadd.f32 %v1771, %v1846
  %v1954 = vadd.f32 %v1772, %v1848
  %v1955 = vadd.f32 %v1773, %v1919
  %v1956 = vadd.f32 %v1774, %v1921
  %v1957 = vadd.f32 %v1775, %v1852
  %v1958 = vadd.f32 %v1776, %v1854
  %v1959 = vadd.f32 %v1777, %v1925
  %v1960 = vadd.f32 %v1778, %v1927
  %v1961 = vadd.f32 %v1779, %v1856
  %v1962 = vadd.f32 %v1780, %v1858
  %v1963 = vadd.f32 %v1781, %v1929
  %v1964 = vadd.f32 %v1782, %v1931
  %v1965 = vxor.u32 %v1933, 2147483648
  %v1966 = vxor.u32 %v1934, 2147483648
  %v1967 = vxor.u32 %v1935, 2147483648
  %v1968 = vxor.u32 %v1937, 2147483648
  %v1969 = vxor.u32 %v1938, 2147483648
  %v1970 = vxor.u32 %v1939, 2147483648
  %v1971 = vxor.u32 %v1941, 2147483648
  %v1972 = vxor.u32 %v1942, 2147483648
  %v1973 = vxor.u32 %v1943, 2147483648
  %v1974 = vxor.u32 %v1945, 2147483648
  %v1975 = vxor.u32 %v1946, 2147483648
  %v1976 = vxor.u32 %v1947, 2147483648
  %v1977 = vxor.u32 %v1949, 2147483648
  %v1978 = vxor.u32 %v1950, 2147483648
  %v1979 = vxor.u32 %v1951, 2147483648
  %v1980 = vxor.u32 %v1953, 2147483648
  %v1981 = vxor.u32 %v1954, 2147483648
  %v1982 = vxor.u32 %v1955, 2147483648
  %v1983 = vxor.u32 %v1957, 2147483648
  %v1984 = vxor.u32 %v1958, 2147483648
  %v1985 = vxor.u32 %v1959, 2147483648
  %v1986 = vxor.u32 %v1961, 2147483648
  %v1987 = vxor.u32 %v1962, 2147483648
  %v1988 = vxor.u32 %v1963, 2147483648
  %v1989 = vmul.f32 %v1965, 1.442695
  %v1990 = vpow.pop %v1989
  %v1991 = vmul.f32 %v1966, 1.442695
  %v1992 = vpow.pop %v1991
  %v1993 = vmul.f32 %v1967, 1.442695
  %v1994 = vpow.pop %v1993
  %v1995 = vmul.f32 %v1968, 1.442695
  %v1996 = vpow.pop %v1995
  %v1997 = vmul.f32 %v1969, 1.442695
  %v1998 = vpow.pop %v1997
  %v1999 = vmul.f32 %v1970, 1.442695
  %v2000 = vpow.pop %v1999
  %v2001 = vmul.f32 %v1971, 1.442695
  %v2002 = vpow.pop %v2001
  %v2003 = vmul.f32 %v1972, 1.442695
  %v2004 = vpow.pop %v2003
  %v2005 = vmul.f32 %v1973, 1.442695
  %v2006 = vpow.pop %v2005
  %v2007 = vmul.f32 %v1974, 1.442695
  %v2008 = vpow.pop %v2007
  %v2009 = vmul.f32 %v1975, 1.442695
  %v2010 = vpow.pop %v2009
  %v2011 = vmul.f32 %v1976, 1.442695
  %v2012 = vpow.pop %v2011
  %v2013 = vmul.f32 %v1977, 1.442695
  %v2014 = vpow.pop %v2013
  %v2015 = vmul.f32 %v1978, 1.442695
  %v2016 = vpow.pop %v2015
  %v2017 = vmul.f32 %v1979, 1.442695
  %v2018 = vpow.pop %v2017
  %v2019 = vmul.f32 %v1980, 1.442695
  %v2020 = vpow.pop %v2019
  %v2021 = vmul.f32 %v1981, 1.442695
  %v2022 = vpow.pop %v2021
  %v2023 = vmul.f32 %v1982, 1.442695
  %v2024 = vpow.pop %v2023
  %v2025 = vmul.f32 %v1983, 1.442695
  %v2026 = vpow.pop %v2025
  %v2027 = vmul.f32 %v1984, 1.442695
  %v2028 = vpow.pop %v2027
  %v2029 = vmul.f32 %v1985, 1.442695
  %v2030 = vpow.pop %v2029
  %v2031 = vmul.f32 %v1986, 1.442695
  %v2032 = vpow.pop %v2031
  %v2033 = vmul.f32 %v1987, 1.442695
  %v2034 = vpow.pop %v2033
  %v2035 = vmul.f32 %v1988, 1.442695
  %v2036 = vpow.pop %v2035
  %v2037 = vadd.f32 %v1990, 1.0
  %v2038 = vadd.f32 %v1992, 1.0
  %v2039 = vadd.f32 %v1994, 1.0
  %v2040 = vadd.f32 %v1996, 1.0
  %v2041 = vadd.f32 %v1998, 1.0
  %v2042 = vadd.f32 %v2000, 1.0
  %v2043 = vadd.f32 %v2002, 1.0
  %v2044 = vadd.f32 %v2004, 1.0
  %v2045 = vadd.f32 %v2006, 1.0
  %v2046 = vadd.f32 %v2008, 1.0
  %v2047 = vadd.f32 %v2010, 1.0
  %v2048 = vadd.f32 %v2012, 1.0
  %v2049 = vadd.f32 %v2014, 1.0
  %v2050 = vadd.f32 %v2016, 1.0
  %v2051 = vadd.f32 %v2018, 1.0
  %v2052 = vadd.f32 %v2020, 1.0
  %v2053 = vadd.f32 %v2022, 1.0
  %v2054 = vadd.f32 %v2024, 1.0
  %v2055 = vadd.f32 %v2026, 1.0
  %v2056 = vadd.f32 %v2028, 1.0
  %v2057 = vadd.f32 %v2030, 1.0
  %v2058 = vadd.f32 %v2032, 1.0
  %v2059 = vadd.f32 %v2034, 1.0
  %v2060 = vadd.f32 %v2036, 1.0
  %v2061 = vrcp.pop %v2037
  %v2062 = vmul.f32 1.0, %v2061
  %v2063 = vrcp.pop %v2038
  %v2064 = vmul.f32 1.0, %v2063
  %v2065 = vrcp.pop %v2039
  %v2066 = vmul.f32 1.0, %v2065
  %v2067 = vrcp.pop %v2040
  %v2068 = vmul.f32 1.0, %v2067
  %v2069 = vrcp.pop %v2041
  %v2070 = vmul.f32 1.0, %v2069
  %v2071 = vrcp.pop %v2042
  %v2072 = vmul.f32 1.0, %v2071
  %v2073 = vrcp.pop %v2043
  %v2074 = vmul.f32 1.0, %v2073
  %v2075 = vrcp.pop %v2044
  %v2076 = vmul.f32 1.0, %v2075
  %v2077 = vrcp.pop %v2045
  %v2078 = vmul.f32 1.0, %v2077
  %v2079 = vrcp.pop %v2046
  %v2080 = vmul.f32 1.0, %v2079
  %v2081 = vrcp.pop %v2047
  %v2082 = vmul.f32 1.0, %v2081
  %v2083 = vrcp.pop %v2048
  %v2084 = vmul.f32 1.0, %v2083
  %v2085 = vrcp.pop %v2049
  %v2086 = vmul.f32 1.0, %v2085
  %v2087 = vrcp.pop %v2050
  %v2088 = vmul.f32 1.0, %v2087
  %v2089 = vrcp.pop %v2051
  %v2090 = vmul.f32 1.0, %v2089
  %v2091 = vrcp.pop %v2052
  %v2092 = vmul.f32 1.0, %v2091
  %v2093 = vrcp.pop %v2053
  %v2094 = vmul.f32 1.0, %v2093
  %v2095 = vrcp.pop %v2054
  %v2096 = vmul.f32 1.0, %v2095
  %v2097 = vrcp.pop %v2055
  %v2098 = vmul.f32 1.0, %v2097
  %v2099 = vrcp.pop %v2056
  %v2100 = vmul.f32 1.0, %v2099
  %v2101 = vrcp.pop %v2057
  %v2102 = vmul.f32 1.0, %v2101
  %v2103 = vrcp.pop %v2058
  %v2104 = vmul.f32 1.0, %v2103
  %v2105 = vrcp.pop %v2059
  %v2106 = vmul.f32 1.0, %v2105
  %v2107 = vrcp.pop %v2060
  %v2108 = vmul.f32 1.0, %v2107
  %v2109 = vtanh.pop %v1936
  %v2110 = vtanh.pop %v1940
  %v2111 = vtanh.pop %v1944
  %v2112 = vtanh.pop %v1948
  %v2113 = vtanh.pop %v1952
  %v2114 = vtanh.pop %v1956
  %v2115 = vtanh.pop %v1960
  %v2116 = vtanh.pop %v1964
  %v2117 = vmul.f32 %v2064, %v1719
  %v2118 = vmul.f32 %v2070, %v1720
  %v2119 = vmul.f32 %v2076, %v1721
  %v2120 = vmul.f32 %v2082, %v1722
  %v2121 = vmul.f32 %v2088, %v1723
  %v2122 = vmul.f32 %v2094, %v1724
  %v2123 = vmul.f32 %v2100, %v1725
  %v2124 = vmul.f32 %v2106, %v1726
  %v2125 = vmul.f32 %v2062, %v2109
  %v2126 = vmul.f32 %v2068, %v2110
  %v2127 = vmul.f32 %v2074, %v2111
  %v2128 = vmul.f32 %v2080, %v2112
  %v2129 = vmul.f32 %v2086, %v2113
  %v2130 = vmul.f32 %v2092, %v2114
  %v2131 = vmul.f32 %v2098, %v2115
  %v2132 = vmul.f32 %v2104, %v2116
  %v2133 = vadd.f32 %v2117, %v2125
  %v2134 = vadd.f32 %v2118, %v2126
  %v2135 = vadd.f32 %v2119, %v2127
  %v2136 = vadd.f32 %v2120, %v2128
  %v2137 = vadd.f32 %v2121, %v2129
  %v2138 = vadd.f32 %v2122, %v2130
  %v2139 = vadd.f32 %v2123, %v2131
  %v2140 = vadd.f32 %v2124, %v2132
  %v2141 = vtanh.pop %v2133
  %v2142 = vtanh.pop %v2134
  %v2143 = vtanh.pop %v2135
  %v2144 = vtanh.pop %v2136
  %v2145 = vtanh.pop %v2137
  %v2146 = vtanh.pop %v2138
  %v2147 = vtanh.pop %v2139
  %v2148 = vtanh.pop %v2140
  %v2149 = vmul.f32 %v2066, %v2141
  %v2150 = vmul.f32 %v2072, %v2142
  %v2151 = vmul.f32 %v2078, %v2143
  %v2152 = vmul.f32 %v2084, %v2144
  %v2153 = vmul.f32 %v2090, %v2145
  %v2154 = vmul.f32 %v2096, %v2146
  %v2155 = vmul.f32 %v2102, %v2147
  %v2156 = vmul.f32 %v2108, %v2148
  %2157 = vst [vmem:[#allocation2 + $0x40] sm:$0xff] %v2149
  %2158 = vst [vmem:[#allocation2 + $0x48] sm:$0xff] %v2150
  %2159 = vst [vmem:[#allocation2 + $0x50] sm:$0xff] %v2151
  %2160 = vst [vmem:[#allocation2 + $0x58] sm:$0xff] %v2152
  %2161 = vst [vmem:[#allocation2 + $0x60] sm:$0xff] %v2153
  %2162 = vst [vmem:[#allocation2 + $0x68] sm:$0xff] %v2154
  %2163 = vst [vmem:[#allocation2 + $0x70] sm:$0xff] %v2155
  %2164 = vst [vmem:[#allocation2 + $0x78] sm:$0xff] %v2156
  %v2165 = vadd.f32 %v311, %v798
  %v2166 = vadd.f32 %v313, %v800
  %v2167 = vadd.f32 %v384, %v1031
  %v2168 = vadd.f32 %v386, %v1033
  %v2169 = vadd.f32 %v315, %v802
  %v2170 = vadd.f32 %v317, %v804
  %v2171 = vadd.f32 %v388, %v1035
  %v2172 = vadd.f32 %v390, %v1037
  %v2173 = vadd.f32 %v321, %v808
  %v2174 = vadd.f32 %v323, %v810
  %v2175 = vadd.f32 %v394, %v1041
  %v2176 = vadd.f32 %v396, %v1043
  %v2177 = vadd.f32 %v325, %v812
  %v2178 = vadd.f32 %v327, %v814
  %v2179 = vadd.f32 %v398, %v1045
  %v2180 = vadd.f32 %v400, %v1047
  %v2181 = vadd.f32 %v331, %v818
  %v2182 = vadd.f32 %v333, %v820
  %v2183 = vadd.f32 %v404, %v1051
  %v2184 = vadd.f32 %v406, %v1053
  %v2185 = vadd.f32 %v335, %v822
  %v2186 = vadd.f32 %v337, %v824
  %v2187 = vadd.f32 %v408, %v1055
  %v2188 = vadd.f32 %v410, %v1057
  %v2189 = vadd.f32 %v341, %v828
  %v2190 = vadd.f32 %v343, %v830
  %v2191 = vadd.f32 %v414, %v1061
  %v2192 = vadd.f32 %v416, %v1063
  %v2193 = vadd.f32 %v345, %v832
  %v2194 = vadd.f32 %v347, %v834
  %v2195 = vadd.f32 %v418, %v1065
  %v2196 = vadd.f32 %v420, %v1067
  %v2197 = vpack.c.bf16 %v2150, %v2149
  %v2198 = vpack.c.bf16 %v2152, %v2151
  %v2199 = vpack.c.bf16 %v2154, %v2153
  %v2200 = vpack.c.bf16 %v2156, %v2155
  %2201 = vmatprep.subr.bf16.mxu0 %v1310
  %2202 = vmatpush1.bf16.msra.mxu0 %v1309
  %2203 = vmatprep.subr.bf16.mxu0 %v1314
  %2204 = vmatpush1.bf16.msra.mxu0 %v1313
  %2205 = vmatprep.subr.bf16.mxu0 %v1318
  %2206 = vmatpush1.bf16.msra.mxu0 %v1317
  %2207 = vmatprep.subr.bf16.mxu0 %v1322
  %2208 = vmatpush1.bf16.msra.mxu0 %v1321
  %2209 = vmatprep.subr.bf16.mxu0 %v1326
  %2210 = vmatpush1.bf16.msra.mxu0 %v1325
  %2211 = vmatprep.subr.bf16.mxu0 %v1330
  %2212 = vmatpush1.bf16.msra.mxu0 %v1329
  %2213 = vmatprep.subr.bf16.mxu0 %v1334
  %2214 = vmatpush1.bf16.msra.mxu0 %v1333
  %2215 = vmatprep.subr.bf16.mxu0 %v1338
  %2216 = vmatpush1.bf16.msra.mxu0 %v1337
  %2217 = vmatprep.subr.bf16.mxu0 0
  %2218 = vmatpush1.bf16.msra.mxu0 0
  %2219 = vmatprep.subr.bf16.mxu0 0
  %2220 = vmatpush1.bf16.msra.mxu0 0
  %2221 = vmatprep.subr.bf16.mxu0 0
  %2222 = vmatpush1.bf16.msra.mxu0 0
  %2223 = vmatprep.subr.bf16.mxu0 0
  %2224 = vmatpush1.bf16.msra.mxu0 0
  %2225 = vmatprep.subr.bf16.mxu0 0
  %2226 = vmatpush1.bf16.msra.mxu0 0
  %2227 = vmatprep.subr.bf16.mxu0 0
  %2228 = vmatpush1.bf16.msra.mxu0 0
  %2229 = vmatprep.subr.bf16.mxu0 0
  %2230 = vmatpush1.bf16.msra.mxu0 0
  %2231 = vmatprep.subr.bf16.mxu0 0
  %2232 = vmatpush1.bf16.msra.mxu0 0
  %2233 = vmatprep.mubr.bf16.mxu0 0
  %2234 = vmatmul.mubr.bf16.gmra.mrb[0].mxu0 %v2197
  %v2235 = vpop.f32.mrb[0].mxu0
  %v2236 = vadd.f32 0.0, %v2235
  %v2237 = vpop.f32.mrb[0].mxu0
  %v2238 = vadd.f32 0.0, %v2237
  %v2239 = vpop.f32.mrb[0].mxu0
  %v2240 = vadd.f32 0.0, %v2239
  %v2241 = vpop.f32.mrb[0].mxu0
  %v2242 = vadd.f32 0.0, %v2241
  %2243 = vmatprep.mubr.bf16.mxu0 0
  %2244 = vmatmul.mubr.bf16.gmra.mrb[0].mxu0 %v2198
  %v2245 = vpop.f32.mrb[0].mxu0
  %v2246 = vadd.f32 0.0, %v2245
  %v2247 = vpop.f32.mrb[0].mxu0
  %v2248 = vadd.f32 0.0, %v2247
  %v2249 = vpop.f32.mrb[0].mxu0
  %v2250 = vadd.f32 0.0, %v2249
  %v2251 = vpop.f32.mrb[0].mxu0
  %v2252 = vadd.f32 0.0, %v2251
  %2253 = vmatprep.mubr.bf16.mxu0 0
  %2254 = vmatmul.mubr.bf16.gmra.mrb[0].mxu0 %v2199
  %v2255 = vpop.f32.mrb[0].mxu0
  %v2256 = vadd.f32 0.0, %v2255
  %v2257 = vpop.f32.mrb[0].mxu0
  %v2258 = vadd.f32 0.0, %v2257
  %v2259 = vpop.f32.mrb[0].mxu0
  %v2260 = vadd.f32 0.0, %v2259
  %v2261 = vpop.f32.mrb[0].mxu0
  %v2262 = vadd.f32 0.0, %v2261
  %2263 = vmatprep.mubr.bf16.mxu0 0
  %2264 = vmatmul.mubr.bf16.gmra.mrb[0].mxu0 %v2200
  %v2265 = vpop.f32.mrb[0].mxu0
  %v2266 = vadd.f32 0.0, %v2265
  %v2267 = vpop.f32.mrb[0].mxu0
  %v2268 = vadd.f32 0.0, %v2267
  %v2269 = vpop.f32.mrb[0].mxu0
  %v2270 = vadd.f32 0.0, %v2269
  %v2271 = vpop.f32.mrb[0].mxu0
  %v2272 = vadd.f32 0.0, %v2271
  %2273 = vdwg.mxu0
  %2274 = vmatprep.subr.bf16.mxu0 %v1312
  %2275 = vmatpush1.bf16.msra.mxu0 %v1311
  %2276 = vmatprep.subr.bf16.mxu0 %v1316
  %2277 = vmatpush1.bf16.msra.mxu0 %v1315
  %2278 = vmatprep.subr.bf16.mxu0 %v1320
  %2279 = vmatpush1.bf16.msra.mxu0 %v1319
  %2280 = vmatprep.subr.bf16.mxu0 %v1324
  %2281 = vmatpush1.bf16.msra.mxu0 %v1323
  %2282 = vmatprep.subr.bf16.mxu0 %v1328
  %2283 = vmatpush1.bf16.msra.mxu0 %v1327
  %2284 = vmatprep.subr.bf16.mxu0 %v1332
  %2285 = vmatpush1.bf16.msra.mxu0 %v1331
  %2286 = vmatprep.subr.bf16.mxu0 %v1336
  %2287 = vmatpush1.bf16.msra.mxu0 %v1335
  %2288 = vmatprep.subr.bf16.mxu0 %v1340
  %2289 = vmatpush1.bf16.msra.mxu0 %v1339
  %2290 = vmatprep.subr.bf16.mxu0 0
  %2291 = vmatpush1.bf16.msra.mxu0 0
  %2292 = vmatprep.subr.bf16.mxu0 0
  %2293 = vmatpush1.bf16.msra.mxu0 0
  %2294 = vmatprep.subr.bf16.mxu0 0
  %2295 = vmatpush1.bf16.msra.mxu0 0
  %2296 = vmatprep.subr.bf16.mxu0 0
  %2297 = vmatpush1.bf16.msra.mxu0 0
  %2298 = vmatprep.subr.bf16.mxu0 0
  %2299 = vmatpush1.bf16.msra.mxu0 0
  %2300 = vmatprep.subr.bf16.mxu0 0
  %2301 = vmatpush1.bf16.msra.mxu0 0
  %2302 = vmatprep.subr.bf16.mxu0 0
  %2303 = vmatpush1.bf16.msra.mxu0 0
  %2304 = vmatprep.subr.bf16.mxu0 0
  %2305 = vmatpush1.bf16.msra.mxu0 0
  %2306 = vmatprep.mubr.bf16.mxu0 0
  %2307 = vmatmul.mubr.bf16.gmra.mrb[0].mxu0 %v2197
  %v2308 = vpop.f32.mrb[0].mxu0
  %v2309 = vadd.f32 0.0, %v2308
  %v2310 = vpop.f32.mrb[0].mxu0
  %v2311 = vadd.f32 0.0, %v2310
  %v2312 = vpop.f32.mrb[0].mxu0
  %v2313 = vadd.f32 0.0, %v2312
  %v2314 = vpop.f32.mrb[0].mxu0
  %v2315 = vadd.f32 0.0, %v2314
  %2316 = vmatprep.mubr.bf16.mxu0 0
  %2317 = vmatmul.mubr.bf16.gmra.mrb[0].mxu0 %v2198
  %v2318 = vpop.f32.mrb[0].mxu0
  %v2319 = vadd.f32 0.0, %v2318
  %v2320 = vpop.f32.mrb[0].mxu0
  %v2321 = vadd.f32 0.0, %v2320
  %v2322 = vpop.f32.mrb[0].mxu0
  %v2323 = vadd.f32 0.0, %v2322
  %v2324 = vpop.f32.mrb[0].mxu0
  %v2325 = vadd.f32 0.0, %v2324
  %2326 = vmatprep.mubr.bf16.mxu0 0
  %2327 = vmatmul.mubr.bf16.gmra.mrb[0].mxu0 %v2199
  %v2328 = vpop.f32.mrb[0].mxu0
  %v2329 = vadd.f32 0.0, %v2328
  %v2330 = vpop.f32.mrb[0].mxu0
  %v2331 = vadd.f32 0.0, %v2330
  %v2332 = vpop.f32.mrb[0].mxu0
  %v2333 = vadd.f32 0.0, %v2332
  %v2334 = vpop.f32.mrb[0].mxu0
  %v2335 = vadd.f32 0.0, %v2334
  %2336 = vmatprep.mubr.bf16.mxu0 0
  %2337 = vmatmul.mubr.bf16.gmra.mrb[0].mxu0 %v2200
  %v2338 = vpop.f32.mrb[0].mxu0
  %v2339 = vadd.f32 0.0, %v2338
  %v2340 = vpop.f32.mrb[0].mxu0
  %v2341 = vadd.f32 0.0, %v2340
  %v2342 = vpop.f32.mrb[0].mxu0
  %v2343 = vadd.f32 0.0, %v2342
  %v2344 = vpop.f32.mrb[0].mxu0
  %v2345 = vadd.f32 0.0, %v2344
  %2346 = vdwg.mxu0
  %v2347 = vadd.f32 %v2165, %v2236
  %v2348 = vadd.f32 %v2166, %v2238
  %v2349 = vadd.f32 %v2167, %v2309
  %v2350 = vadd.f32 %v2168, %v2311
  %v2351 = vadd.f32 %v2169, %v2240
  %v2352 = vadd.f32 %v2170, %v2242
  %v2353 = vadd.f32 %v2171, %v2313
  %v2354 = vadd.f32 %v2172, %v2315
  %v2355 = vadd.f32 %v2173, %v2246
  %v2356 = vadd.f32 %v2174, %v2248
  %v2357 = vadd.f32 %v2175, %v2319
  %v2358 = vadd.f32 %v2176, %v2321
  %v2359 = vadd.f32 %v2177, %v2250
  %v2360 = vadd.f32 %v2178, %v2252
  %v2361 = vadd.f32 %v2179, %v2323
  %v2362 = vadd.f32 %v2180, %v2325
  %v2363 = vadd.f32 %v2181, %v2256
  %v2364 = vadd.f32 %v2182, %v2258
  %v2365 = vadd.f32 %v2183, %v2329
  %v2366 = vadd.f32 %v2184, %v2331
  %v2367 = vadd.f32 %v2185, %v2260
  %v2368 = vadd.f32 %v2186, %v2262
  %v2369 = vadd.f32 %v2187, %v2333
  %v2370 = vadd.f32 %v2188, %v2335
  %v2371 = vadd.f32 %v2189, %v2266
  %v2372 = vadd.f32 %v2190, %v2268
  %v2373 = vadd.f32 %v2191, %v2339
  %v2374 = vadd.f32 %v2192, %v2341
  %v2375 = vadd.f32 %v2193, %v2270
  %v2376 = vadd.f32 %v2194, %v2272
  %v2377 = vadd.f32 %v2195, %v2343
  %v2378 = vadd.f32 %v2196, %v2345
  %v2379 = vxor.u32 %v2347, 2147483648
  %v2380 = vxor.u32 %v2348, 2147483648
  %v2381 = vxor.u32 %v2349, 2147483648
  %v2382 = vxor.u32 %v2351, 2147483648
  %v2383 = vxor.u32 %v2352, 2147483648
  %v2384 = vxor.u32 %v2353, 2147483648
  %v2385 = vxor.u32 %v2355, 2147483648
  %v2386 = vxor.u32 %v2356, 2147483648
  %v2387 = vxor.u32 %v2357, 2147483648
  %v2388 = vxor.u32 %v2359, 2147483648
  %v2389 = vxor.u32 %v2360, 2147483648
  %v2390 = vxor.u32 %v2361, 2147483648
  %v2391 = vxor.u32 %v2363, 2147483648
  %v2392 = vxor.u32 %v2364, 2147483648
  %v2393 = vxor.u32 %v2365, 2147483648
  %v2394 = vxor.u32 %v2367, 2147483648
  %v2395 = vxor.u32 %v2368, 2147483648
  %v2396 = vxor.u32 %v2369, 2147483648
  %v2397 = vxor.u32 %v2371, 2147483648
  %v2398 = vxor.u32 %v2372, 2147483648
  %v2399 = vxor.u32 %v2373, 2147483648
  %v2400 = vxor.u32 %v2375, 2147483648
  %v2401 = vxor.u32 %v2376, 2147483648
  %v2402 = vxor.u32 %v2377, 2147483648
  %v2403 = vmul.f32 %v2379, 1.442695
  %v2404 = vpow.pop %v2403
  %v2405 = vmul.f32 %v2380, 1.442695
  %v2406 = vpow.pop %v2405
  %v2407 = vmul.f32 %v2381, 1.442695
  %v2408 = vpow.pop %v2407
  %v2409 = vmul.f32 %v2382, 1.442695
  %v2410 = vpow.pop %v2409
  %v2411 = vmul.f32 %v2383, 1.442695
  %v2412 = vpow.pop %v2411
  %v2413 = vmul.f32 %v2384, 1.442695
  %v2414 = vpow.pop %v2413
  %v2415 = vmul.f32 %v2385, 1.442695
  %v2416 = vpow.pop %v2415
  %v2417 = vmul.f32 %v2386, 1.442695
  %v2418 = vpow.pop %v2417
  %v2419 = vmul.f32 %v2387, 1.442695
  %v2420 = vpow.pop %v2419
  %v2421 = vmul.f32 %v2388, 1.442695
  %v2422 = vpow.pop %v2421
  %v2423 = vmul.f32 %v2389, 1.442695
  %v2424 = vpow.pop %v2423
  %v2425 = vmul.f32 %v2390, 1.442695
  %v2426 = vpow.pop %v2425
  %v2427 = vmul.f32 %v2391, 1.442695
  %v2428 = vpow.pop %v2427
  %v2429 = vmul.f32 %v2392, 1.442695
  %v2430 = vpow.pop %v2429
  %v2431 = vmul.f32 %v2393, 1.442695
  %v2432 = vpow.pop %v2431
  %v2433 = vmul.f32 %v2394, 1.442695
  %v2434 = vpow.pop %v2433
  %v2435 = vmul.f32 %v2395, 1.442695
  %v2436 = vpow.pop %v2435
  %v2437 = vmul.f32 %v2396, 1.442695
  %v2438 = vpow.pop %v2437
  %v2439 = vmul.f32 %v2397, 1.442695
  %v2440 = vpow.pop %v2439
  %v2441 = vmul.f32 %v2398, 1.442695
  %v2442 = vpow.pop %v2441
  %v2443 = vmul.f32 %v2399, 1.442695
  %v2444 = vpow.pop %v2443
  %v2445 = vmul.f32 %v2400, 1.442695
  %v2446 = vpow.pop %v2445
  %v2447 = vmul.f32 %v2401, 1.442695
  %v2448 = vpow.pop %v2447
  %v2449 = vmul.f32 %v2402, 1.442695
  %v2450 = vpow.pop %v2449
  %v2451 = vadd.f32 %v2404, 1.0
  %v2452 = vadd.f32 %v2406, 1.0
  %v2453 = vadd.f32 %v2408, 1.0
  %v2454 = vadd.f32 %v2410, 1.0
  %v2455 = vadd.f32 %v2412, 1.0
  %v2456 = vadd.f32 %v2414, 1.0
  %v2457 = vadd.f32 %v2416, 1.0
  %v2458 = vadd.f32 %v2418, 1.0
  %v2459 = vadd.f32 %v2420, 1.0
  %v2460 = vadd.f32 %v2422, 1.0
  %v2461 = vadd.f32 %v2424, 1.0
  %v2462 = vadd.f32 %v2426, 1.0
  %v2463 = vadd.f32 %v2428, 1.0
  %v2464 = vadd.f32 %v2430, 1.0
  %v2465 = vadd.f32 %v2432, 1.0
  %v2466 = vadd.f32 %v2434, 1.0
  %v2467 = vadd.f32 %v2436, 1.0
  %v2468 = vadd.f32 %v2438, 1.0
  %v2469 = vadd.f32 %v2440, 1.0
  %v2470 = vadd.f32 %v2442, 1.0
  %v2471 = vadd.f32 %v2444, 1.0
  %v2472 = vadd.f32 %v2446, 1.0
  %v2473 = vadd.f32 %v2448, 1.0
  %v2474 = vadd.f32 %v2450, 1.0
  %v2475 = vrcp.pop %v2451
  %v2476 = vmul.f32 1.0, %v2475
  %v2477 = vrcp.pop %v2452
  %v2478 = vmul.f32 1.0, %v2477
  %v2479 = vrcp.pop %v2453
  %v2480 = vmul.f32 1.0, %v2479
  %v2481 = vrcp.pop %v2454
  %v2482 = vmul.f32 1.0, %v2481
  %v2483 = vrcp.pop %v2455
  %v2484 = vmul.f32 1.0, %v2483
  %v2485 = vrcp.pop %v2456
  %v2486 = vmul.f32 1.0, %v2485
  %v2487 = vrcp.pop %v2457
  %v2488 = vmul.f32 1.0, %v2487
  %v2489 = vrcp.pop %v2458
  %v2490 = vmul.f32 1.0, %v2489
  %v2491 = vrcp.pop %v2459
  %v2492 = vmul.f32 1.0, %v2491
  %v2493 = vrcp.pop %v2460
  %v2494 = vmul.f32 1.0, %v2493
  %v2495 = vrcp.pop %v2461
  %v2496 = vmul.f32 1.0, %v2495
  %v2497 = vrcp.pop %v2462
  %v2498 = vmul.f32 1.0, %v2497
  %v2499 = vrcp.pop %v2463
  %v2500 = vmul.f32 1.0, %v2499
  %v2501 = vrcp.pop %v2464
  %v2502 = vmul.f32 1.0, %v2501
  %v2503 = vrcp.pop %v2465
  %v2504 = vmul.f32 1.0, %v2503
  %v2505 = vrcp.pop %v2466
  %v2506 = vmul.f32 1.0, %v2505
  %v2507 = vrcp.pop %v2467
  %v2508 = vmul.f32 1.0, %v2507
  %v2509 = vrcp.pop %v2468
  %v2510 = vmul.f32 1.0, %v2509
  %v2511 = vrcp.pop %v2469
  %v2512 = vmul.f32 1.0, %v2511
  %v2513 = vrcp.pop %v2470
  %v2514 = vmul.f32 1.0, %v2513
  %v2515 = vrcp.pop %v2471
  %v2516 = vmul.f32 1.0, %v2515
  %v2517 = vrcp.pop %v2472
  %v2518 = vmul.f32 1.0, %v2517
  %v2519 = vrcp.pop %v2473
  %v2520 = vmul.f32 1.0, %v2519
  %v2521 = vrcp.pop %v2474
  %v2522 = vmul.f32 1.0, %v2521
  %v2523 = vtanh.pop %v2350
  %v2524 = vtanh.pop %v2354
  %v2525 = vtanh.pop %v2358
  %v2526 = vtanh.pop %v2362
  %v2527 = vtanh.pop %v2366
  %v2528 = vtanh.pop %v2370
  %v2529 = vtanh.pop %v2374
  %v2530 = vtanh.pop %v2378
  %v2531 = vmul.f32 %v2478, %v2133
  %v2532 = vmul.f32 %v2484, %v2134
  %v2533 = vmul.f32 %v2490, %v2135
  %v2534 = vmul.f32 %v2496, %v2136
  %v2535 = vmul.f32 %v2502, %v2137
  %v2536 = vmul.f32 %v2508, %v2138
  %v2537 = vmul.f32 %v2514, %v2139
  %v2538 = vmul.f32 %v2520, %v2140
  %v2539 = vmul.f32 %v2476, %v2523
  %v2540 = vmul.f32 %v2482, %v2524
  %v2541 = vmul.f32 %v2488, %v2525
  %v2542 = vmul.f32 %v2494, %v2526
  %v2543 = vmul.f32 %v2500, %v2527
  %v2544 = vmul.f32 %v2506, %v2528
  %v2545 = vmul.f32 %v2512, %v2529
  %v2546 = vmul.f32 %v2518, %v2530
  %v2547 = vadd.f32 %v2531, %v2539
  %v2548 = vadd.f32 %v2532, %v2540
  %v2549 = vadd.f32 %v2533, %v2541
  %v2550 = vadd.f32 %v2534, %v2542
  %v2551 = vadd.f32 %v2535, %v2543
  %v2552 = vadd.f32 %v2536, %v2544
  %v2553 = vadd.f32 %v2537, %v2545
  %v2554 = vadd.f32 %v2538, %v2546
  %v2555 = vtanh.pop %v2547
  %v2556 = vtanh.pop %v2548
  %v2557 = vtanh.pop %v2549
  %v2558 = vtanh.pop %v2550
  %v2559 = vtanh.pop %v2551
  %v2560 = vtanh.pop %v2552
  %v2561 = vtanh.pop %v2553
  %v2562 = vtanh.pop %v2554
  %v2563 = vmul.f32 %v2480, %v2555
  %v2564 = vmul.f32 %v2486, %v2556
  %v2565 = vmul.f32 %v2492, %v2557
  %v2566 = vmul.f32 %v2498, %v2558
  %v2567 = vmul.f32 %v2504, %v2559
  %v2568 = vmul.f32 %v2510, %v2560
  %v2569 = vmul.f32 %v2516, %v2561
  %v2570 = vmul.f32 %v2522, %v2562
  %2571 = vst [vmem:[#allocation2 + $0x80] sm:$0xff] %v2563
  %2572 = vst [vmem:[#allocation2 + $0x88] sm:$0xff] %v2564
  %2573 = vst [vmem:[#allocation2 + $0x90] sm:$0xff] %v2565
  %2574 = vst [vmem:[#allocation2 + $0x98] sm:$0xff] %v2566
  %2575 = vst [vmem:[#allocation2 + $0xa0] sm:$0xff] %v2567
  %2576 = vst [vmem:[#allocation2 + $0xa8] sm:$0xff] %v2568
  %2577 = vst [vmem:[#allocation2 + $0xb0] sm:$0xff] %v2569
  %2578 = vst [vmem:[#allocation2 + $0xb8] sm:$0xff] %v2570
  %v2579 = vadd.f32 %v311, %v838
  %v2580 = vadd.f32 %v313, %v840
  %v2581 = vadd.f32 %v384, %v1071
  %v2582 = vadd.f32 %v386, %v1073
  %v2583 = vadd.f32 %v315, %v842
  %v2584 = vadd.f32 %v317, %v844
  %v2585 = vadd.f32 %v388, %v1075
  %v2586 = vadd.f32 %v390, %v1077
  %v2587 = vadd.f32 %v321, %v848
  %v2588 = vadd.f32 %v323, %v850
  %v2589 = vadd.f32 %v394, %v1081
  %v2590 = vadd.f32 %v396, %v1083
  %v2591 = vadd.f32 %v325, %v852
  %v2592 = vadd.f32 %v327, %v854
  %v2593 = vadd.f32 %v398, %v1085
  %v2594 = vadd.f32 %v400, %v1087
  %v2595 = vadd.f32 %v331, %v858
  %v2596 = vadd.f32 %v333, %v860
  %v2597 = vadd.f32 %v404, %v1091
  %v2598 = vadd.f32 %v406, %v1093
  %v2599 = vadd.f32 %v335, %v862
  %v2600 = vadd.f32 %v337, %v864
  %v2601 = vadd.f32 %v408, %v1095
  %v2602 = vadd.f32 %v410, %v1097
  %v2603 = vadd.f32 %v341, %v868
  %v2604 = vadd.f32 %v343, %v870
  %v2605 = vadd.f32 %v414, %v1101
  %v2606 = vadd.f32 %v416, %v1103
  %v2607 = vadd.f32 %v345, %v872
  %v2608 = vadd.f32 %v347, %v874
  %v2609 = vadd.f32 %v418, %v1105
  %v2610 = vadd.f32 %v420, %v1107
  %v2611 = vpack.c.bf16 %v2564, %v2563
  %v2612 = vpack.c.bf16 %v2566, %v2565
  %v2613 = vpack.c.bf16 %v2568, %v2567
  %v2614 = vpack.c.bf16 %v2570, %v2569
  %2615 = vmatprep.subr.bf16.mxu0 %v1310
  %2616 = vmatpush1.bf16.msra.mxu0 %v1309
  %2617 = vmatprep.subr.bf16.mxu0 %v1314
  %2618 = vmatpush1.bf16.msra.mxu0 %v1313
  %2619 = vmatprep.subr.bf16.mxu0 %v1318
  %2620 = vmatpush1.bf16.msra.mxu0 %v1317
  %2621 = vmatprep.subr.bf16.mxu0 %v1322
  %2622 = vmatpush1.bf16.msra.mxu0 %v1321
  %2623 = vmatprep.subr.bf16.mxu0 %v1326
  %2624 = vmatpush1.bf16.msra.mxu0 %v1325
  %2625 = vmatprep.subr.bf16.mxu0 %v1330
  %2626 = vmatpush1.bf16.msra.mxu0 %v1329
  %2627 = vmatprep.subr.bf16.mxu0 %v1334
  %2628 = vmatpush1.bf16.msra.mxu0 %v1333
  %2629 = vmatprep.subr.bf16.mxu0 %v1338
  %2630 = vmatpush1.bf16.msra.mxu0 %v1337
  %2631 = vmatprep.subr.bf16.mxu0 0
  %2632 = vmatpush1.bf16.msra.mxu0 0
  %2633 = vmatprep.subr.bf16.mxu0 0
  %2634 = vmatpush1.bf16.msra.mxu0 0
  %2635 = vmatprep.subr.bf16.mxu0 0
  %2636 = vmatpush1.bf16.msra.mxu0 0
  %2637 = vmatprep.subr.bf16.mxu0 0
  %2638 = vmatpush1.bf16.msra.mxu0 0
  %2639 = vmatprep.subr.bf16.mxu0 0
  %2640 = vmatpush1.bf16.msra.mxu0 0
  %2641 = vmatprep.subr.bf16.mxu0 0
  %2642 = vmatpush1.bf16.msra.mxu0 0
  %2643 = vmatprep.subr.bf16.mxu0 0
  %2644 = vmatpush1.bf16.msra.mxu0 0
  %2645 = vmatprep.subr.bf16.mxu0 0
  %2646 = vmatpush1.bf16.msra.mxu0 0
  %2647 = vmatprep.mubr.bf16.mxu0 0
  %2648 = vmatmul.mubr.bf16.gmra.mrb[0].mxu0 %v2611
  %v2649 = vpop.f32.mrb[0].mxu0
  %v2650 = vadd.f32 0.0, %v2649
  %v2651 = vpop.f32.mrb[0].mxu0
  %v2652 = vadd.f32 0.0, %v2651
  %v2653 = vpop.f32.mrb[0].mxu0
  %v2654 = vadd.f32 0.0, %v2653
  %v2655 = vpop.f32.mrb[0].mxu0
  %v2656 = vadd.f32 0.0, %v2655
  %2657 = vmatprep.mubr.bf16.mxu0 0
  %2658 = vmatmul.mubr.bf16.gmra.mrb[0].mxu0 %v2612
  %v2659 = vpop.f32.mrb[0].mxu0
  %v2660 = vadd.f32 0.0, %v2659
  %v2661 = vpop.f32.mrb[0].mxu0
  %v2662 = vadd.f32 0.0, %v2661
  %v2663 = vpop.f32.mrb[0].mxu0
  %v2664 = vadd.f32 0.0, %v2663
  %v2665 = vpop.f32.mrb[0].mxu0
  %v2666 = vadd.f32 0.0, %v2665
  %2667 = vmatprep.mubr.bf16.mxu0 0
  %2668 = vmatmul.mubr.bf16.gmra.mrb[0].mxu0 %v2613
  %v2669 = vpop.f32.mrb[0].mxu0
  %v2670 = vadd.f32 0.0, %v2669
  %v2671 = vpop.f32.mrb[0].mxu0
  %v2672 = vadd.f32 0.0, %v2671
  %v2673 = vpop.f32.mrb[0].mxu0
  %v2674 = vadd.f32 0.0, %v2673
  %v2675 = vpop.f32.mrb[0].mxu0
  %v2676 = vadd.f32 0.0, %v2675
  %2677 = vmatprep.mubr.bf16.mxu0 0
  %2678 = vmatmul.mubr.bf16.gmra.mrb[0].mxu0 %v2614
  %v2679 = vpop.f32.mrb[0].mxu0
  %v2680 = vadd.f32 0.0, %v2679
  %v2681 = vpop.f32.mrb[0].mxu0
  %v2682 = vadd.f32 0.0, %v2681
  %v2683 = vpop.f32.mrb[0].mxu0
  %v2684 = vadd.f32 0.0, %v2683
  %v2685 = vpop.f32.mrb[0].mxu0
  %v2686 = vadd.f32 0.0, %v2685
  %2687 = vdwg.mxu0
  %2688 = vmatprep.subr.bf16.mxu0 %v1312
  %2689 = vmatpush1.bf16.msra.mxu0 %v1311
  %2690 = vmatprep.subr.bf16.mxu0 %v1316
  %2691 = vmatpush1.bf16.msra.mxu0 %v1315
  %2692 = vmatprep.subr.bf16.mxu0 %v1320
  %2693 = vmatpush1.bf16.msra.mxu0 %v1319
  %2694 = vmatprep.subr.bf16.mxu0 %v1324
  %2695 = vmatpush1.bf16.msra.mxu0 %v1323
  %2696 = vmatprep.subr.bf16.mxu0 %v1328
  %2697 = vmatpush1.bf16.msra.mxu0 %v1327
  %2698 = vmatprep.subr.bf16.mxu0 %v1332
  %2699 = vmatpush1.bf16.msra.mxu0 %v1331
  %2700 = vmatprep.subr.bf16.mxu0 %v1336
  %2701 = vmatpush1.bf16.msra.mxu0 %v1335
  %2702 = vmatprep.subr.bf16.mxu0 %v1340
  %2703 = vmatpush1.bf16.msra.mxu0 %v1339
  %2704 = vmatprep.subr.bf16.mxu0 0
  %2705 = vmatpush1.bf16.msra.mxu0 0
  %2706 = vmatprep.subr.bf16.mxu0 0
  %2707 = vmatpush1.bf16.msra.mxu0 0
  %2708 = vmatprep.subr.bf16.mxu0 0
  %2709 = vmatpush1.bf16.msra.mxu0 0
  %2710 = vmatprep.subr.bf16.mxu0 0
  %2711 = vmatpush1.bf16.msra.mxu0 0
  %2712 = vmatprep.subr.bf16.mxu0 0
  %2713 = vmatpush1.bf16.msra.mxu0 0
  %2714 = vmatprep.subr.bf16.mxu0 0
  %2715 = vmatpush1.bf16.msra.mxu0 0
  %2716 = vmatprep.subr.bf16.mxu0 0
  %2717 = vmatpush1.bf16.msra.mxu0 0
  %2718 = vmatprep.subr.bf16.mxu0 0
  %2719 = vmatpush1.bf16.msra.mxu0 0
  %2720 = vmatprep.mubr.bf16.mxu0 0
  %2721 = vmatmul.mubr.bf16.gmra.mrb[0].mxu0 %v2611
  %v2722 = vpop.f32.mrb[0].mxu0
  %v2723 = vadd.f32 0.0, %v2722
  %v2724 = vpop.f32.mrb[0].mxu0
  %v2725 = vadd.f32 0.0, %v2724
  %v2726 = vpop.f32.mrb[0].mxu0
  %v2727 = vadd.f32 0.0, %v2726
  %v2728 = vpop.f32.mrb[0].mxu0
  %v2729 = vadd.f32 0.0, %v2728
  %2730 = vmatprep.mubr.bf16.mxu0 0
  %2731 = vmatmul.mubr.bf16.gmra.mrb[0].mxu0 %v2612
  %v2732 = vpop.f32.mrb[0].mxu0
  %v2733 = vadd.f32 0.0, %v2732
  %v2734 = vpop.f32.mrb[0].mxu0
  %v2735 = vadd.f32 0.0, %v2734
  %v2736 = vpop.f32.mrb[0].mxu0
  %v2737 = vadd.f32 0.0, %v2736
  %v2738 = vpop.f32.mrb[0].mxu0
  %v2739 = vadd.f32 0.0, %v2738
  %2740 = vmatprep.mubr.bf16.mxu0 0
  %2741 = vmatmul.mubr.bf16.gmra.mrb[0].mxu0 %v2613
  %v2742 = vpop.f32.mrb[0].mxu0
  %v2743 = vadd.f32 0.0, %v2742
  %v2744 = vpop.f32.mrb[0].mxu0
  %v2745 = vadd.f32 0.0, %v2744
  %v2746 = vpop.f32.mrb[0].mxu0
  %v2747 = vadd.f32 0.0, %v2746
  %v2748 = vpop.f32.mrb[0].mxu0
  %v2749 = vadd.f32 0.0, %v2748
  %2750 = vmatprep.mubr.bf16.mxu0 0
  %2751 = vmatmul.mubr.bf16.gmra.mrb[0].mxu0 %v2614
  %v2752 = vpop.f32.mrb[0].mxu0
  %v2753 = vadd.f32 0.0, %v2752
  %v2754 = vpop.f32.mrb[0].mxu0
  %v2755 = vadd.f32 0.0, %v2754
  %v2756 = vpop.f32.mrb[0].mxu0
  %v2757 = vadd.f32 0.0, %v2756
  %v2758 = vpop.f32.mrb[0].mxu0
  %v2759 = vadd.f32 0.0, %v2758
  %2760 = vdwg.mxu0
  %v2761 = vadd.f32 %v2579, %v2650
  %v2762 = vadd.f32 %v2580, %v2652
  %v2763 = vadd.f32 %v2581, %v2723
  %v2764 = vadd.f32 %v2582, %v2725
  %v2765 = vadd.f32 %v2583, %v2654
  %v2766 = vadd.f32 %v2584, %v2656
  %v2767 = vadd.f32 %v2585, %v2727
  %v2768 = vadd.f32 %v2586, %v2729
  %v2769 = vadd.f32 %v2587, %v2660
  %v2770 = vadd.f32 %v2588, %v2662
  %v2771 = vadd.f32 %v2589, %v2733
  %v2772 = vadd.f32 %v2590, %v2735
  %v2773 = vadd.f32 %v2591, %v2664
  %v2774 = vadd.f32 %v2592, %v2666
  %v2775 = vadd.f32 %v2593, %v2737
  %v2776 = vadd.f32 %v2594, %v2739
  %v2777 = vadd.f32 %v2595, %v2670
  %v2778 = vadd.f32 %v2596, %v2672
  %v2779 = vadd.f32 %v2597, %v2743
  %v2780 = vadd.f32 %v2598, %v2745
  %v2781 = vadd.f32 %v2599, %v2674
  %v2782 = vadd.f32 %v2600, %v2676
  %v2783 = vadd.f32 %v2601, %v2747
  %v2784 = vadd.f32 %v2602, %v2749
  %v2785 = vadd.f32 %v2603, %v2680
  %v2786 = vadd.f32 %v2604, %v2682
  %v2787 = vadd.f32 %v2605, %v2753
  %v2788 = vadd.f32 %v2606, %v2755
  %v2789 = vadd.f32 %v2607, %v2684
  %v2790 = vadd.f32 %v2608, %v2686
  %v2791 = vadd.f32 %v2609, %v2757
  %v2792 = vadd.f32 %v2610, %v2759
  %v2793 = vxor.u32 %v2761, 2147483648
  %v2794 = vxor.u32 %v2762, 2147483648
  %v2795 = vxor.u32 %v2763, 2147483648
  %v2796 = vxor.u32 %v2765, 2147483648
  %v2797 = vxor.u32 %v2766, 2147483648
  %v2798 = vxor.u32 %v2767, 2147483648
  %v2799 = vxor.u32 %v2769, 2147483648
  %v2800 = vxor.u32 %v2770, 2147483648
  %v2801 = vxor.u32 %v2771, 2147483648
  %v2802 = vxor.u32 %v2773, 2147483648
  %v2803 = vxor.u32 %v2774, 2147483648
  %v2804 = vxor.u32 %v2775, 2147483648
  %v2805 = vxor.u32 %v2777, 2147483648
  %v2806 = vxor.u32 %v2778, 2147483648
  %v2807 = vxor.u32 %v2779, 2147483648
  %v2808 = vxor.u32 %v2781, 2147483648
  %v2809 = vxor.u32 %v2782, 2147483648
  %v2810 = vxor.u32 %v2783, 2147483648
  %v2811 = vxor.u32 %v2785, 2147483648
  %v2812 = vxor.u32 %v2786, 2147483648
  %v2813 = vxor.u32 %v2787, 2147483648
  %v2814 = vxor.u32 %v2789, 2147483648
  %v2815 = vxor.u32 %v2790, 2147483648
  %v2816 = vxor.u32 %v2791, 2147483648
  %v2817 = vmul.f32 %v2793, 1.442695
  %v2818 = vpow.pop %v2817
  %v2819 = vmul.f32 %v2794, 1.442695
  %v2820 = vpow.pop %v2819
  %v2821 = vmul.f32 %v2795, 1.442695
  %v2822 = vpow.pop %v2821
  %v2823 = vmul.f32 %v2796, 1.442695
  %v2824 = vpow.pop %v2823
  %v2825 = vmul.f32 %v2797, 1.442695
  %v2826 = vpow.pop %v2825
  %v2827 = vmul.f32 %v2798, 1.442695
  %v2828 = vpow.pop %v2827
  %v2829 = vmul.f32 %v2799, 1.442695
  %v2830 = vpow.pop %v2829
  %v2831 = vmul.f32 %v2800, 1.442695
  %v2832 = vpow.pop %v2831
  %v2833 = vmul.f32 %v2801, 1.442695
  %v2834 = vpow.pop %v2833
  %v2835 = vmul.f32 %v2802, 1.442695
  %v2836 = vpow.pop %v2835
  %v2837 = vmul.f32 %v2803, 1.442695
  %v2838 = vpow.pop %v2837
  %v2839 = vmul.f32 %v2804, 1.442695
  %v2840 = vpow.pop %v2839
  %v2841 = vmul.f32 %v2805, 1.442695
  %v2842 = vpow.pop %v2841
  %v2843 = vmul.f32 %v2806, 1.442695
  %v2844 = vpow.pop %v2843
  %v2845 = vmul.f32 %v2807, 1.442695
  %v2846 = vpow.pop %v2845
  %v2847 = vmul.f32 %v2808, 1.442695
  %v2848 = vpow.pop %v2847
  %v2849 = vmul.f32 %v2809, 1.442695
  %v2850 = vpow.pop %v2849
  %v2851 = vmul.f32 %v2810, 1.442695
  %v2852 = vpow.pop %v2851
  %v2853 = vmul.f32 %v2811, 1.442695
  %v2854 = vpow.pop %v2853
  %v2855 = vmul.f32 %v2812, 1.442695
  %v2856 = vpow.pop %v2855
  %v2857 = vmul.f32 %v2813, 1.442695
  %v2858 = vpow.pop %v2857
  %v2859 = vmul.f32 %v2814, 1.442695
  %v2860 = vpow.pop %v2859
  %v2861 = vmul.f32 %v2815, 1.442695
  %v2862 = vpow.pop %v2861
  %v2863 = vmul.f32 %v2816, 1.442695
  %v2864 = vpow.pop %v2863
  %v2865 = vadd.f32 %v2818, 1.0
  %v2866 = vadd.f32 %v2820, 1.0
  %v2867 = vadd.f32 %v2822, 1.0
  %v2868 = vadd.f32 %v2824, 1.0
  %v2869 = vadd.f32 %v2826, 1.0
  %v2870 = vadd.f32 %v2828, 1.0
  %v2871 = vadd.f32 %v2830, 1.0
  %v2872 = vadd.f32 %v2832, 1.0
  %v2873 = vadd.f32 %v2834, 1.0
  %v2874 = vadd.f32 %v2836, 1.0
  %v2875 = vadd.f32 %v2838, 1.0
  %v2876 = vadd.f32 %v2840, 1.0
  %v2877 = vadd.f32 %v2842, 1.0
  %v2878 = vadd.f32 %v2844, 1.0
  %v2879 = vadd.f32 %v2846, 1.0
  %v2880 = vadd.f32 %v2848, 1.0
  %v2881 = vadd.f32 %v2850, 1.0
  %v2882 = vadd.f32 %v2852, 1.0
  %v2883 = vadd.f32 %v2854, 1.0
  %v2884 = vadd.f32 %v2856, 1.0
  %v2885 = vadd.f32 %v2858, 1.0
  %v2886 = vadd.f32 %v2860, 1.0
  %v2887 = vadd.f32 %v2862, 1.0
  %v2888 = vadd.f32 %v2864, 1.0
  %v2889 = vrcp.pop %v2865
  %v2890 = vmul.f32 1.0, %v2889
  %v2891 = vrcp.pop %v2866
  %v2892 = vmul.f32 1.0, %v2891
  %v2893 = vrcp.pop %v2867
  %v2894 = vmul.f32 1.0, %v2893
  %v2895 = vrcp.pop %v2868
  %v2896 = vmul.f32 1.0, %v2895
  %v2897 = vrcp.pop %v2869
  %v2898 = vmul.f32 1.0, %v2897
  %v2899 = vrcp.pop %v2870
  %v2900 = vmul.f32 1.0, %v2899
  %v2901 = vrcp.pop %v2871
  %v2902 = vmul.f32 1.0, %v2901
  %v2903 = vrcp.pop %v2872
  %v2904 = vmul.f32 1.0, %v2903
  %v2905 = vrcp.pop %v2873
  %v2906 = vmul.f32 1.0, %v2905
  %v2907 = vrcp.pop %v2874
  %v2908 = vmul.f32 1.0, %v2907
  %v2909 = vrcp.pop %v2875
  %v2910 = vmul.f32 1.0, %v2909
  %v2911 = vrcp.pop %v2876
  %v2912 = vmul.f32 1.0, %v2911
  %v2913 = vrcp.pop %v2877
  %v2914 = vmul.f32 1.0, %v2913
  %v2915 = vrcp.pop %v2878
  %v2916 = vmul.f32 1.0, %v2915
  %v2917 = vrcp.pop %v2879
  %v2918 = vmul.f32 1.0, %v2917
  %v2919 = vrcp.pop %v2880
  %v2920 = vmul.f32 1.0, %v2919
  %v2921 = vrcp.pop %v2881
  %v2922 = vmul.f32 1.0, %v2921
  %v2923 = vrcp.pop %v2882
  %v2924 = vmul.f32 1.0, %v2923
  %v2925 = vrcp.pop %v2883
  %v2926 = vmul.f32 1.0, %v2925
  %v2927 = vrcp.pop %v2884
  %v2928 = vmul.f32 1.0, %v2927
  %v2929 = vrcp.pop %v2885
  %v2930 = vmul.f32 1.0, %v2929
  %v2931 = vrcp.pop %v2886
  %v2932 = vmul.f32 1.0, %v2931
  %v2933 = vrcp.pop %v2887
  %v2934 = vmul.f32 1.0, %v2933
  %v2935 = vrcp.pop %v2888
  %v2936 = vmul.f32 1.0, %v2935
  %v2937 = vtanh.pop %v2764
  %v2938 = vtanh.pop %v2768
  %v2939 = vtanh.pop %v2772
  %v2940 = vtanh.pop %v2776
  %v2941 = vtanh.pop %v2780
  %v2942 = vtanh.pop %v2784
  %v2943 = vtanh.pop %v2788
  %v2944 = vtanh.pop %v2792
  %v2945 = vmul.f32 %v2892, %v2547
  %v2946 = vmul.f32 %v2898, %v2548
  %v2947 = vmul.f32 %v2904, %v2549
  %v2948 = vmul.f32 %v2910, %v2550
  %v2949 = vmul.f32 %v2916, %v2551
  %v2950 = vmul.f32 %v2922, %v2552
  %v2951 = vmul.f32 %v2928, %v2553
  %v2952 = vmul.f32 %v2934, %v2554
  %v2953 = vmul.f32 %v2890, %v2937
  %v2954 = vmul.f32 %v2896, %v2938
  %v2955 = vmul.f32 %v2902, %v2939
  %v2956 = vmul.f32 %v2908, %v2940
  %v2957 = vmul.f32 %v2914, %v2941
  %v2958 = vmul.f32 %v2920, %v2942
  %v2959 = vmul.f32 %v2926, %v2943
  %v2960 = vmul.f32 %v2932, %v2944
  %v2961 = vadd.f32 %v2945, %v2953
  %v2962 = vadd.f32 %v2946, %v2954
  %v2963 = vadd.f32 %v2947, %v2955
  %v2964 = vadd.f32 %v2948, %v2956
  %v2965 = vadd.f32 %v2949, %v2957
  %v2966 = vadd.f32 %v2950, %v2958
  %v2967 = vadd.f32 %v2951, %v2959
  %v2968 = vadd.f32 %v2952, %v2960
  %v2969 = vtanh.pop %v2961
  %v2970 = vtanh.pop %v2962
  %v2971 = vtanh.pop %v2963
  %v2972 = vtanh.pop %v2964
  %v2973 = vtanh.pop %v2965
  %v2974 = vtanh.pop %v2966
  %v2975 = vtanh.pop %v2967
  %v2976 = vtanh.pop %v2968
  %v2977 = vmul.f32 %v2894, %v2969
  %v2978 = vmul.f32 %v2900, %v2970
  %v2979 = vmul.f32 %v2906, %v2971
  %v2980 = vmul.f32 %v2912, %v2972
  %v2981 = vmul.f32 %v2918, %v2973
  %v2982 = vmul.f32 %v2924, %v2974
  %v2983 = vmul.f32 %v2930, %v2975
  %v2984 = vmul.f32 %v2936, %v2976
  %2985 = vst [vmem:[#allocation2 + $0xc0] sm:$0xff] %v2977
  %2986 = vst [vmem:[#allocation2 + $0xc8] sm:$0xff] %v2978
  %2987 = vst [vmem:[#allocation2 + $0xd0] sm:$0xff] %v2979
  %2988 = vst [vmem:[#allocation2 + $0xd8] sm:$0xff] %v2980
  %2989 = vst [vmem:[#allocation2 + $0xe0] sm:$0xff] %v2981
  %2990 = vst [vmem:[#allocation2 + $0xe8] sm:$0xff] %v2982
  %2991 = vst [vmem:[#allocation2 + $0xf0] sm:$0xff] %v2983
  %2992 = vst [vmem:[#allocation2 + $0xf8] sm:$0xff] %v2984
  %v2993 = vadd.f32 %v311, %v878
  %v2994 = vadd.f32 %v313, %v880
  %v2995 = vadd.f32 %v384, %v1111
  %v2996 = vadd.f32 %v386, %v1113
  %v2997 = vadd.f32 %v315, %v882
  %v2998 = vadd.f32 %v317, %v884
  %v2999 = vadd.f32 %v388, %v1115
  %v3000 = vadd.f32 %v390, %v1117
  %v3001 = vadd.f32 %v321, %v888
  %v3002 = vadd.f32 %v323, %v890
  %v3003 = vadd.f32 %v394, %v1121
  %v3004 = vadd.f32 %v396, %v1123
  %v3005 = vadd.f32 %v325, %v892
  %v3006 = vadd.f32 %v327, %v894
  %v3007 = vadd.f32 %v398, %v1125
  %v3008 = vadd.f32 %v400, %v1127
  %v3009 = vadd.f32 %v331, %v898
  %v3010 = vadd.f32 %v333, %v900
  %v3011 = vadd.f32 %v404, %v1131
  %v3012 = vadd.f32 %v406, %v1133
  %v3013 = vadd.f32 %v335, %v902
  %v3014 = vadd.f32 %v337, %v904
  %v3015 = vadd.f32 %v408, %v1135
  %v3016 = vadd.f32 %v410, %v1137
  %v3017 = vadd.f32 %v341, %v908
  %v3018 = vadd.f32 %v343, %v910
  %v3019 = vadd.f32 %v414, %v1141
  %v3020 = vadd.f32 %v416, %v1143
  %v3021 = vadd.f32 %v345, %v912
  %v3022 = vadd.f32 %v347, %v914
  %v3023 = vadd.f32 %v418, %v1145
  %v3024 = vadd.f32 %v420, %v1147
  %v3025 = vpack.c.bf16 %v2978, %v2977
  %v3026 = vpack.c.bf16 %v2980, %v2979
  %v3027 = vpack.c.bf16 %v2982, %v2981
  %v3028 = vpack.c.bf16 %v2984, %v2983
  %3029 = vmatprep.subr.bf16.mxu0 %v1310
  %3030 = vmatpush1.bf16.msra.mxu0 %v1309
  %3031 = vmatprep.subr.bf16.mxu0 %v1314
  %3032 = vmatpush1.bf16.msra.mxu0 %v1313
  %3033 = vmatprep.subr.bf16.mxu0 %v1318
  %3034 = vmatpush1.bf16.msra.mxu0 %v1317
  %3035 = vmatprep.subr.bf16.mxu0 %v1322
  %3036 = vmatpush1.bf16.msra.mxu0 %v1321
  %3037 = vmatprep.subr.bf16.mxu0 %v1326
  %3038 = vmatpush1.bf16.msra.mxu0 %v1325
  %3039 = vmatprep.subr.bf16.mxu0 %v1330
  %3040 = vmatpush1.bf16.msra.mxu0 %v1329
  %3041 = vmatprep.subr.bf16.mxu0 %v1334
  %3042 = vmatpush1.bf16.msra.mxu0 %v1333
  %3043 = vmatprep.subr.bf16.mxu0 %v1338
  %3044 = vmatpush1.bf16.msra.mxu0 %v1337
  %3045 = vmatprep.subr.bf16.mxu0 0
  %3046 = vmatpush1.bf16.msra.mxu0 0
  %3047 = vmatprep.subr.bf16.mxu0 0
  %3048 = vmatpush1.bf16.msra.mxu0 0
  %3049 = vmatprep.subr.bf16.mxu0 0
  %3050 = vmatpush1.bf16.msra.mxu0 0
  %3051 = vmatprep.subr.bf16.mxu0 0
  %3052 = vmatpush1.bf16.msra.mxu0 0
  %3053 = vmatprep.subr.bf16.mxu0 0
  %3054 = vmatpush1.bf16.msra.mxu0 0
  %3055 = vmatprep.subr.bf16.mxu0 0
  %3056 = vmatpush1.bf16.msra.mxu0 0
  %3057 = vmatprep.subr.bf16.mxu0 0
  %3058 = vmatpush1.bf16.msra.mxu0 0
  %3059 = vmatprep.subr.bf16.mxu0 0
  %3060 = vmatpush1.bf16.msra.mxu0 0
  %3061 = vmatprep.mubr.bf16.mxu0 0
  %3062 = vmatmul.mubr.bf16.gmra.mrb[0].mxu0 %v3025
  %v3063 = vpop.f32.mrb[0].mxu0
  %v3064 = vadd.f32 0.0, %v3063
  %v3065 = vpop.f32.mrb[0].mxu0
  %v3066 = vadd.f32 0.0, %v3065
  %v3067 = vpop.f32.mrb[0].mxu0
  %v3068 = vadd.f32 0.0, %v3067
  %v3069 = vpop.f32.mrb[0].mxu0
  %v3070 = vadd.f32 0.0, %v3069
  %3071 = vmatprep.mubr.bf16.mxu0 0
  %3072 = vmatmul.mubr.bf16.gmra.mrb[0].mxu0 %v3026
  %v3073 = vpop.f32.mrb[0].mxu0
  %v3074 = vadd.f32 0.0, %v3073
  %v3075 = vpop.f32.mrb[0].mxu0
  %v3076 = vadd.f32 0.0, %v3075
  %v3077 = vpop.f32.mrb[0].mxu0
  %v3078 = vadd.f32 0.0, %v3077
  %v3079 = vpop.f32.mrb[0].mxu0
  %v3080 = vadd.f32 0.0, %v3079
  %3081 = vmatprep.mubr.bf16.mxu0 0
  %3082 = vmatmul.mubr.bf16.gmra.mrb[0].mxu0 %v3027
  %v3083 = vpop.f32.mrb[0].mxu0
  %v3084 = vadd.f32 0.0, %v3083
  %v3085 = vpop.f32.mrb[0].mxu0
  %v3086 = vadd.f32 0.0, %v3085
  %v3087 = vpop.f32.mrb[0].mxu0
  %v3088 = vadd.f32 0.0, %v3087
  %v3089 = vpop.f32.mrb[0].mxu0
  %v3090 = vadd.f32 0.0, %v3089
  %3091 = vmatprep.mubr.bf16.mxu0 0
  %3092 = vmatmul.mubr.bf16.gmra.mrb[0].mxu0 %v3028
  %v3093 = vpop.f32.mrb[0].mxu0
  %v3094 = vadd.f32 0.0, %v3093
  %v3095 = vpop.f32.mrb[0].mxu0
  %v3096 = vadd.f32 0.0, %v3095
  %v3097 = vpop.f32.mrb[0].mxu0
  %v3098 = vadd.f32 0.0, %v3097
  %v3099 = vpop.f32.mrb[0].mxu0
  %v3100 = vadd.f32 0.0, %v3099
  %3101 = vdwg.mxu0
  %3102 = vmatprep.subr.bf16.mxu0 %v1312
  %3103 = vmatpush1.bf16.msra.mxu0 %v1311
  %3104 = vmatprep.subr.bf16.mxu0 %v1316
  %3105 = vmatpush1.bf16.msra.mxu0 %v1315
  %3106 = vmatprep.subr.bf16.mxu0 %v1320
  %3107 = vmatpush1.bf16.msra.mxu0 %v1319
  %3108 = vmatprep.subr.bf16.mxu0 %v1324
  %3109 = vmatpush1.bf16.msra.mxu0 %v1323
  %3110 = vmatprep.subr.bf16.mxu0 %v1328
  %3111 = vmatpush1.bf16.msra.mxu0 %v1327
  %3112 = vmatprep.subr.bf16.mxu0 %v1332
  %3113 = vmatpush1.bf16.msra.mxu0 %v1331
  %3114 = vmatprep.subr.bf16.mxu0 %v1336
  %3115 = vmatpush1.bf16.msra.mxu0 %v1335
  %3116 = vmatprep.subr.bf16.mxu0 %v1340
  %3117 = vmatpush1.bf16.msra.mxu0 %v1339
  %3118 = vmatprep.subr.bf16.mxu0 0
  %3119 = vmatpush1.bf16.msra.mxu0 0
  %3120 = vmatprep.subr.bf16.mxu0 0
  %3121 = vmatpush1.bf16.msra.mxu0 0
  %3122 = vmatprep.subr.bf16.mxu0 0
  %3123 = vmatpush1.bf16.msra.mxu0 0
  %3124 = vmatprep.subr.bf16.mxu0 0
  %3125 = vmatpush1.bf16.msra.mxu0 0
  %3126 = vmatprep.subr.bf16.mxu0 0
  %3127 = vmatpush1.bf16.msra.mxu0 0
  %3128 = vmatprep.subr.bf16.mxu0 0
  %3129 = vmatpush1.bf16.msra.mxu0 0
  %3130 = vmatprep.subr.bf16.mxu0 0
  %3131 = vmatpush1.bf16.msra.mxu0 0
  %3132 = vmatprep.subr.bf16.mxu0 0
  %3133 = vmatpush1.bf16.msra.mxu0 0
  %3134 = vmatprep.mubr.bf16.mxu0 0
  %3135 = vmatmul.mubr.bf16.gmra.mrb[0].mxu0 %v3025
  %v3136 = vpop.f32.mrb[0].mxu0
  %v3137 = vadd.f32 0.0, %v3136
  %v3138 = vpop.f32.mrb[0].mxu0
  %v3139 = vadd.f32 0.0, %v3138
  %v3140 = vpop.f32.mrb[0].mxu0
  %v3141 = vadd.f32 0.0, %v3140
  %v3142 = vpop.f32.mrb[0].mxu0
  %v3143 = vadd.f32 0.0, %v3142
  %3144 = vmatprep.mubr.bf16.mxu0 0
  %3145 = vmatmul.mubr.bf16.gmra.mrb[0].mxu0 %v3026
  %v3146 = vpop.f32.mrb[0].mxu0
  %v3147 = vadd.f32 0.0, %v3146
  %v3148 = vpop.f32.mrb[0].mxu0
  %v3149 = vadd.f32 0.0, %v3148
  %v3150 = vpop.f32.mrb[0].mxu0
  %v3151 = vadd.f32 0.0, %v3150
  %v3152 = vpop.f32.mrb[0].mxu0
  %v3153 = vadd.f32 0.0, %v3152
  %3154 = vmatprep.mubr.bf16.mxu0 0
  %3155 = vmatmul.mubr.bf16.gmra.mrb[0].mxu0 %v3027
  %v3156 = vpop.f32.mrb[0].mxu0
  %v3157 = vadd.f32 0.0, %v3156
  %v3158 = vpop.f32.mrb[0].mxu0
  %v3159 = vadd.f32 0.0, %v3158
  %v3160 = vpop.f32.mrb[0].mxu0
  %v3161 = vadd.f32 0.0, %v3160
  %v3162 = vpop.f32.mrb[0].mxu0
  %v3163 = vadd.f32 0.0, %v3162
  %3164 = vmatprep.mubr.bf16.mxu0 0
  %3165 = vmatmul.mubr.bf16.gmra.mrb[0].mxu0 %v3028
  %v3166 = vpop.f32.mrb[0].mxu0
  %v3167 = vadd.f32 0.0, %v3166
  %v3168 = vpop.f32.mrb[0].mxu0
  %v3169 = vadd.f32 0.0, %v3168
  %v3170 = vpop.f32.mrb[0].mxu0
  %v3171 = vadd.f32 0.0, %v3170
  %v3172 = vpop.f32.mrb[0].mxu0
  %v3173 = vadd.f32 0.0, %v3172
  %3174 = vdwg.mxu0
  %v3175 = vadd.f32 %v2993, %v3064
  %v3176 = vadd.f32 %v2994, %v3066
  %v3177 = vadd.f32 %v2995, %v3137
  %v3178 = vadd.f32 %v2996, %v3139
  %v3179 = vadd.f32 %v2997, %v3068
  %v3180 = vadd.f32 %v2998, %v3070
  %v3181 = vadd.f32 %v2999, %v3141
  %v3182 = vadd.f32 %v3000, %v3143
  %v3183 = vadd.f32 %v3001, %v3074
  %v3184 = vadd.f32 %v3002, %v3076
  %v3185 = vadd.f32 %v3003, %v3147
  %v3186 = vadd.f32 %v3004, %v3149
  %v3187 = vadd.f32 %v3005, %v3078
  %v3188 = vadd.f32 %v3006, %v3080
  %v3189 = vadd.f32 %v3007, %v3151
  %v3190 = vadd.f32 %v3008, %v3153
  %v3191 = vadd.f32 %v3009, %v3084
  %v3192 = vadd.f32 %v3010, %v3086
  %v3193 = vadd.f32 %v3011, %v3157
  %v3194 = vadd.f32 %v3012, %v3159
  %v3195 = vadd.f32 %v3013, %v3088
  %v3196 = vadd.f32 %v3014, %v3090
  %v3197 = vadd.f32 %v3015, %v3161
  %v3198 = vadd.f32 %v3016, %v3163
  %v3199 = vadd.f32 %v3017, %v3094
  %v3200 = vadd.f32 %v3018, %v3096
  %v3201 = vadd.f32 %v3019, %v3167
  %v3202 = vadd.f32 %v3020, %v3169
  %v3203 = vadd.f32 %v3021, %v3098
  %v3204 = vadd.f32 %v3022, %v3100
  %v3205 = vadd.f32 %v3023, %v3171
  %v3206 = vadd.f32 %v3024, %v3173
  %v3207 = vxor.u32 %v3175, 2147483648
  %v3208 = vxor.u32 %v3176, 2147483648
  %v3209 = vxor.u32 %v3177, 2147483648
  %v3210 = vxor.u32 %v3179, 2147483648
  %v3211 = vxor.u32 %v3180, 2147483648
  %v3212 = vxor.u32 %v3181, 2147483648
  %v3213 = vxor.u32 %v3183, 2147483648
  %v3214 = vxor.u32 %v3184, 2147483648
  %v3215 = vxor.u32 %v3185, 2147483648
  %v3216 = vxor.u32 %v3187, 2147483648
  %v3217 = vxor.u32 %v3188, 2147483648
  %v3218 = vxor.u32 %v3189, 2147483648
  %v3219 = vxor.u32 %v3191, 2147483648
  %v3220 = vxor.u32 %v3192, 2147483648
  %v3221 = vxor.u32 %v3193, 2147483648
  %v3222 = vxor.u32 %v3195, 2147483648
  %v3223 = vxor.u32 %v3196, 2147483648
  %v3224 = vxor.u32 %v3197, 2147483648
  %v3225 = vxor.u32 %v3199, 2147483648
  %v3226 = vxor.u32 %v3200, 2147483648
  %v3227 = vxor.u32 %v3201, 2147483648
  %v3228 = vxor.u32 %v3203, 2147483648
  %v3229 = vxor.u32 %v3204, 2147483648
  %v3230 = vxor.u32 %v3205, 2147483648
  %v3231 = vmul.f32 %v3207, 1.442695
  %v3232 = vpow.pop %v3231
  %v3233 = vmul.f32 %v3208, 1.442695
  %v3234 = vpow.pop %v3233
  %v3235 = vmul.f32 %v3209, 1.442695
  %v3236 = vpow.pop %v3235
  %v3237 = vmul.f32 %v3210, 1.442695
  %v3238 = vpow.pop %v3237
  %v3239 = vmul.f32 %v3211, 1.442695
  %v3240 = vpow.pop %v3239
  %v3241 = vmul.f32 %v3212, 1.442695
  %v3242 = vpow.pop %v3241
  %v3243 = vmul.f32 %v3213, 1.442695
  %v3244 = vpow.pop %v3243
  %v3245 = vmul.f32 %v3214, 1.442695
  %v3246 = vpow.pop %v3245
  %v3247 = vmul.f32 %v3215, 1.442695
  %v3248 = vpow.pop %v3247
  %v3249 = vmul.f32 %v3216, 1.442695
  %v3250 = vpow.pop %v3249
  %v3251 = vmul.f32 %v3217, 1.442695
  %v3252 = vpow.pop %v3251
  %v3253 = vmul.f32 %v3218, 1.442695
  %v3254 = vpow.pop %v3253
  %v3255 = vmul.f32 %v3219, 1.442695
  %v3256 = vpow.pop %v3255
  %v3257 = vmul.f32 %v3220, 1.442695
  %v3258 = vpow.pop %v3257
  %v3259 = vmul.f32 %v3221, 1.442695
  %v3260 = vpow.pop %v3259
  %v3261 = vmul.f32 %v3222, 1.442695
  %v3262 = vpow.pop %v3261
  %v3263 = vmul.f32 %v3223, 1.442695
  %v3264 = vpow.pop %v3263
  %v3265 = vmul.f32 %v3224, 1.442695
  %v3266 = vpow.pop %v3265
  %v3267 = vmul.f32 %v3225, 1.442695
  %v3268 = vpow.pop %v3267
  %v3269 = vmul.f32 %v3226, 1.442695
  %v3270 = vpow.pop %v3269
  %v3271 = vmul.f32 %v3227, 1.442695
  %v3272 = vpow.pop %v3271
  %v3273 = vmul.f32 %v3228, 1.442695
  %v3274 = vpow.pop %v3273
  %v3275 = vmul.f32 %v3229, 1.442695
  %v3276 = vpow.pop %v3275
  %v3277 = vmul.f32 %v3230, 1.442695
  %v3278 = vpow.pop %v3277
  %v3279 = vadd.f32 %v3232, 1.0
  %v3280 = vadd.f32 %v3234, 1.0
  %v3281 = vadd.f32 %v3236, 1.0
  %v3282 = vadd.f32 %v3238, 1.0
  %v3283 = vadd.f32 %v3240, 1.0
  %v3284 = vadd.f32 %v3242, 1.0
  %v3285 = vadd.f32 %v3244, 1.0
  %v3286 = vadd.f32 %v3246, 1.0
  %v3287 = vadd.f32 %v3248, 1.0
  %v3288 = vadd.f32 %v3250, 1.0
  %v3289 = vadd.f32 %v3252, 1.0
  %v3290 = vadd.f32 %v3254, 1.0
  %v3291 = vadd.f32 %v3256, 1.0
  %v3292 = vadd.f32 %v3258, 1.0
  %v3293 = vadd.f32 %v3260, 1.0
  %v3294 = vadd.f32 %v3262, 1.0
  %v3295 = vadd.f32 %v3264, 1.0
  %v3296 = vadd.f32 %v3266, 1.0
  %v3297 = vadd.f32 %v3268, 1.0
  %v3298 = vadd.f32 %v3270, 1.0
  %v3299 = vadd.f32 %v3272, 1.0
  %v3300 = vadd.f32 %v3274, 1.0
  %v3301 = vadd.f32 %v3276, 1.0
  %v3302 = vadd.f32 %v3278, 1.0
  %v3303 = vrcp.pop %v3279
  %v3304 = vmul.f32 1.0, %v3303
  %v3305 = vrcp.pop %v3280
  %v3306 = vmul.f32 1.0, %v3305
  %v3307 = vrcp.pop %v3281
  %v3308 = vmul.f32 1.0, %v3307
  %v3309 = vrcp.pop %v3282
  %v3310 = vmul.f32 1.0, %v3309
  %v3311 = vrcp.pop %v3283
  %v3312 = vmul.f32 1.0, %v3311
  %v3313 = vrcp.pop %v3284
  %v3314 = vmul.f32 1.0, %v3313
  %v3315 = vrcp.pop %v3285
  %v3316 = vmul.f32 1.0, %v3315
  %v3317 = vrcp.pop %v3286
  %v3318 = vmul.f32 1.0, %v3317
  %v3319 = vrcp.pop %v3287
  %v3320 = vmul.f32 1.0, %v3319
  %v3321 = vrcp.pop %v3288
  %v3322 = vmul.f32 1.0, %v3321
  %v3323 = vrcp.pop %v3289
  %v3324 = vmul.f32 1.0, %v3323
  %v3325 = vrcp.pop %v3290
  %v3326 = vmul.f32 1.0, %v3325
  %v3327 = vrcp.pop %v3291
  %v3328 = vmul.f32 1.0, %v3327
  %v3329 = vrcp.pop %v3292
  %v3330 = vmul.f32 1.0, %v3329
  %v3331 = vrcp.pop %v3293
  %v3332 = vmul.f32 1.0, %v3331
  %v3333 = vrcp.pop %v3294
  %v3334 = vmul.f32 1.0, %v3333
  %v3335 = vrcp.pop %v3295
  %v3336 = vmul.f32 1.0, %v3335
  %v3337 = vrcp.pop %v3296
  %v3338 = vmul.f32 1.0, %v3337
  %v3339 = vrcp.pop %v3297
  %v3340 = vmul.f32 1.0, %v3339
  %v3341 = vrcp.pop %v3298
  %v3342 = vmul.f32 1.0, %v3341
  %v3343 = vrcp.pop %v3299
  %v3344 = vmul.f32 1.0, %v3343
  %v3345 = vrcp.pop %v3300
  %v3346 = vmul.f32 1.0, %v3345
  %v3347 = vrcp.pop %v3301
  %v3348 = vmul.f32 1.0, %v3347
  %v3349 = vrcp.pop %v3302
  %v3350 = vmul.f32 1.0, %v3349
  %v3351 = vtanh.pop %v3178
  %v3352 = vtanh.pop %v3182
  %v3353 = vtanh.pop %v3186
  %v3354 = vtanh.pop %v3190
  %v3355 = vtanh.pop %v3194
  %v3356 = vtanh.pop %v3198
  %v3357 = vtanh.pop %v3202
  %v3358 = vtanh.pop %v3206
  %v3359 = vmul.f32 %v3306, %v2961
  %v3360 = vmul.f32 %v3312, %v2962
  %v3361 = vmul.f32 %v3318, %v2963
  %v3362 = vmul.f32 %v3324, %v2964
  %v3363 = vmul.f32 %v3330, %v2965
  %v3364 = vmul.f32 %v3336, %v2966
  %v3365 = vmul.f32 %v3342, %v2967
  %v3366 = vmul.f32 %v3348, %v2968
  %v3367 = vmul.f32 %v3304, %v3351
  %v3368 = vmul.f32 %v3310, %v3352
  %v3369 = vmul.f32 %v3316, %v3353
  %v3370 = vmul.f32 %v3322, %v3354
  %v3371 = vmul.f32 %v3328, %v3355
  %v3372 = vmul.f32 %v3334, %v3356
  %v3373 = vmul.f32 %v3340, %v3357
  %v3374 = vmul.f32 %v3346, %v3358
  %v3375 = vadd.f32 %v3359, %v3367
  %v3376 = vadd.f32 %v3360, %v3368
  %v3377 = vadd.f32 %v3361, %v3369
  %v3378 = vadd.f32 %v3362, %v3370
  %v3379 = vadd.f32 %v3363, %v3371
  %v3380 = vadd.f32 %v3364, %v3372
  %v3381 = vadd.f32 %v3365, %v3373
  %v3382 = vadd.f32 %v3366, %v3374
  %v3383 = vtanh.pop %v3375
  %v3384 = vtanh.pop %v3376
  %v3385 = vtanh.pop %v3377
  %v3386 = vtanh.pop %v3378
  %v3387 = vtanh.pop %v3379
  %v3388 = vtanh.pop %v3380
  %v3389 = vtanh.pop %v3381
  %v3390 = vtanh.pop %v3382
  %v3391 = vmul.f32 %v3308, %v3383
  %v3392 = vmul.f32 %v3314, %v3384
  %v3393 = vmul.f32 %v3320, %v3385
  %v3394 = vmul.f32 %v3326, %v3386
  %v3395 = vmul.f32 %v3332, %v3387
  %v3396 = vmul.f32 %v3338, %v3388
  %v3397 = vmul.f32 %v3344, %v3389
  %v3398 = vmul.f32 %v3350, %v3390
  %3399 = vst [vmem:[#allocation2 + $0x100] sm:$0xff] %v3391
  %3400 = vst [vmem:[#allocation2 + $0x108] sm:$0xff] %v3392
  %3401 = vst [vmem:[#allocation2 + $0x110] sm:$0xff] %v3393
  %3402 = vst [vmem:[#allocation2 + $0x118] sm:$0xff] %v3394
  %3403 = vst [vmem:[#allocation2 + $0x120] sm:$0xff] %v3395
  %3404 = vst [vmem:[#allocation2 + $0x128] sm:$0xff] %v3396
  %3405 = vst [vmem:[#allocation2 + $0x130] sm:$0xff] %v3397
  %3406 = vst [vmem:[#allocation2 + $0x138] sm:$0xff] %v3398
  %v3407 = vld [vmem:[#allocation2] sm:$0xff]
  %v3408 = vld [vmem:[#allocation2 + $0x8] sm:$0xff]
  %v3409 = vld [vmem:[#allocation2 + $0x10] sm:$0xff]
  %v3410 = vld [vmem:[#allocation2 + $0x18] sm:$0xff]
  %v3411 = vld [vmem:[#allocation2 + $0x20] sm:$0xff]
  %v3412 = vld [vmem:[#allocation2 + $0x28] sm:$0xff]
  %v3413 = vld [vmem:[#allocation2 + $0x30] sm:$0xff]
  %v3414 = vld [vmem:[#allocation2 + $0x38] sm:$0xff]
  %v3415 = vld [vmem:[#allocation2 + $0x40] sm:$0xff]
  %v3416 = vld [vmem:[#allocation2 + $0x48] sm:$0xff]
  %v3417 = vld [vmem:[#allocation2 + $0x50] sm:$0xff]
  %v3418 = vld [vmem:[#allocation2 + $0x58] sm:$0xff]
  %v3419 = vld [vmem:[#allocation2 + $0x60] sm:$0xff]
  %v3420 = vld [vmem:[#allocation2 + $0x68] sm:$0xff]
  %v3421 = vld [vmem:[#allocation2 + $0x70] sm:$0xff]
  %v3422 = vld [vmem:[#allocation2 + $0x78] sm:$0xff]
  %v3423 = vld [vmem:[#allocation2 + $0x80] sm:$0xff]
  %v3424 = vld [vmem:[#allocation2 + $0x88] sm:$0xff]
  %v3425 = vld [vmem:[#allocation2 + $0x90] sm:$0xff]
  %v3426 = vld [vmem:[#allocation2 + $0x98] sm:$0xff]
  %v3427 = vld [vmem:[#allocation2 + $0xa0] sm:$0xff]
  %v3428 = vld [vmem:[#allocation2 + $0xa8] sm:$0xff]
  %v3429 = vld [vmem:[#allocation2 + $0xb0] sm:$0xff]
  %v3430 = vld [vmem:[#allocation2 + $0xb8] sm:$0xff]
  %v3431 = vld [vmem:[#allocation2 + $0xc0] sm:$0xff]
  %v3432 = vld [vmem:[#allocation2 + $0xc8] sm:$0xff]
  %v3433 = vld [vmem:[#allocation2 + $0xd0] sm:$0xff]
  %v3434 = vld [vmem:[#allocation2 + $0xd8] sm:$0xff]
  %v3435 = vld [vmem:[#allocation2 + $0xe0] sm:$0xff]
  %v3436 = vld [vmem:[#allocation2 + $0xe8] sm:$0xff]
  %v3437 = vld [vmem:[#allocation2 + $0xf0] sm:$0xff]
  %v3438 = vld [vmem:[#allocation2 + $0xf8] sm:$0xff]
  %v3439 = vld [vmem:[#allocation2 + $0x100] sm:$0xff]
  %v3440 = vld [vmem:[#allocation2 + $0x108] sm:$0xff]
  %v3441 = vld [vmem:[#allocation2 + $0x110] sm:$0xff]
  %v3442 = vld [vmem:[#allocation2 + $0x118] sm:$0xff]
  %v3443 = vld [vmem:[#allocation2 + $0x120] sm:$0xff]
  %v3444 = vld [vmem:[#allocation2 + $0x128] sm:$0xff]
  %v3445 = vld [vmem:[#allocation2 + $0x130] sm:$0xff]
  %v3446 = vld [vmem:[#allocation2 + $0x138] sm:$0xff]
  %v3447 = vld [vmem:[%s6] sm:$0xf]
  %v3448 = vld [vmem:[%s6 + $0x4] sm:$0xf]
  %v3449 = vld [vmem:[%s6 + $0x8] sm:$0xf]
  %v3450 = vld [vmem:[%s6 + $0xc] sm:$0xf]
  %v3451 = vld [vmem:[%s6 + $0x10] sm:$0xf]
  %v3452 = vld [vmem:[%s6 + $0x14] sm:$0xf]
  %v3453 = vld [vmem:[%s6 + $0x18] sm:$0xf]
  %v3454 = vld [vmem:[%s6 + $0x1c] sm:$0xf]
  %v3455 = vld [vmem:[%s6 + $0x20] sm:$0xf]
  %v3456 = vld [vmem:[%s6 + $0x24] sm:$0xf]
  %v3457 = vld [vmem:[%s6 + $0x28] sm:$0xf]
  %v3458 = vld [vmem:[%s6 + $0x2c] sm:$0xf]
  %v3459 = vld [vmem:[%s6 + $0x30] sm:$0xf]
  %v3460 = vld [vmem:[%s6 + $0x34] sm:$0xf]
  %v3461 = vld [vmem:[%s6 + $0x38] sm:$0xf]
  %v3462 = vld [vmem:[%s6 + $0x3c] sm:$0xf]
  %v3463 = vpack.c.bf16 %v3408, %v3407
  %v3464 = vpack.c.bf16 %v3410, %v3409
  %v3465 = vpack.c.bf16 %v3412, %v3411
  %v3466 = vpack.c.bf16 %v3414, %v3413
  %v3467 = vpack.c.bf16 %v3416, %v3415
  %v3468 = vpack.c.bf16 %v3418, %v3417
  %v3469 = vpack.c.bf16 %v3420, %v3419
  %v3470 = vpack.c.bf16 %v3422, %v3421
  %v3471 = vpack.c.bf16 %v3424, %v3423
  %v3472 = vpack.c.bf16 %v3426, %v3425
  %v3473 = vpack.c.bf16 %v3428, %v3427
  %v3474 = vpack.c.bf16 %v3430, %v3429
  %v3475 = vpack.c.bf16 %v3432, %v3431
  %v3476 = vpack.c.bf16 %v3434, %v3433
  %v3477 = vpack.c.bf16 %v3436, %v3435
  %v3478 = vpack.c.bf16 %v3438, %v3437
  %v3479 = vpack.c.bf16 %v3440, %v3439
  %v3480 = vpack.c.bf16 %v3442, %v3441
  %v3481 = vpack.c.bf16 %v3444, %v3443
  %v3482 = vpack.c.bf16 %v3446, %v3445
  %v3483 = vld [vmem:[%s7] sm:$0x1]
  %v3485 = vlaneseq
  %v3486 = vshrl.u32 %v3485, 7
  %v3487 = vsub.s32 0, %v3486
  %v3488 = vrot.slane %v3483, %v3487
  %v3506 = vunpack.c.l.b16 %v3447
  %v3507 = vunpack.c.l.b16 %v3448
  %v3508 = vunpack.c.l.b16 %v3449
  %v3509 = vunpack.c.l.b16 %v3450
  %v3510 = vunpack.c.l.b16 %v3451
  %v3511 = vunpack.c.l.b16 %v3452
  %v3512 = vunpack.c.l.b16 %v3453
  %v3513 = vunpack.c.l.b16 %v3454
  %v3514 = vunpack.c.l.b16 %v3455
  %v3515 = vunpack.c.l.b16 %v3456
  %v3516 = vunpack.c.l.b16 %v3457
  %v3517 = vunpack.c.l.b16 %v3458
  %v3518 = vunpack.c.l.b16 %v3459
  %v3519 = vunpack.c.l.b16 %v3460
  %v3520 = vunpack.c.l.b16 %v3461
  %v3521 = vunpack.c.l.b16 %v3462
  %v3522 = vpack.c.b16 %v3507, %v3506
  %v3523 = vpack.c.b16 %v3509, %v3508
  %v3524 = vpack.c.b16 %v3511, %v3510
  %v3525 = vpack.c.b16 %v3513, %v3512
  %v3526 = vpack.c.b16 %v3515, %v3514
  %v3527 = vpack.c.b16 %v3517, %v3516
  %v3528 = vpack.c.b16 %v3519, %v3518
  %v3529 = vpack.c.b16 %v3521, %v3520
  %3538 = vmatprep.subr.bf16.mxu0 0
  %3539 = vmatpush1.bf16.msra.mxu0 %v3522
  %3540 = vmatprep.subr.bf16.mxu0 0
  %3541 = vmatpush1.bf16.msra.mxu0 %v3523
  %3542 = vmatprep.subr.bf16.mxu0 0
  %3543 = vmatpush1.bf16.msra.mxu0 %v3524
  %3544 = vmatprep.subr.bf16.mxu0 0
  %3545 = vmatpush1.bf16.msra.mxu0 %v3525
  %3546 = vmatprep.subr.bf16.mxu0 0
  %3547 = vmatpush1.bf16.msra.mxu0 %v3526
  %3548 = vmatprep.subr.bf16.mxu0 0
  %3549 = vmatpush1.bf16.msra.mxu0 %v3527
  %3550 = vmatprep.subr.bf16.mxu0 0
  %3551 = vmatpush1.bf16.msra.mxu0 %v3528
  %3552 = vmatprep.subr.bf16.mxu0 0
  %3553 = vmatpush1.bf16.msra.mxu0 %v3529
  %3554 = vmatprep.subr.bf16.mxu0 0
  %3555 = vmatpush1.bf16.msra.mxu0 0
  %3556 = vmatprep.subr.bf16.mxu0 0
  %3557 = vmatpush1.bf16.msra.mxu0 0
  %3558 = vmatprep.subr.bf16.mxu0 0
  %3559 = vmatpush1.bf16.msra.mxu0 0
  %3560 = vmatprep.subr.bf16.mxu0 0
  %3561 = vmatpush1.bf16.msra.mxu0 0
  %3562 = vmatprep.subr.bf16.mxu0 0
  %3563 = vmatpush1.bf16.msra.mxu0 0
  %3564 = vmatprep.subr.bf16.mxu0 0
  %3565 = vmatpush1.bf16.msra.mxu0 0
  %3566 = vmatprep.subr.bf16.mxu0 0
  %3567 = vmatpush1.bf16.msra.mxu0 0
  %3568 = vmatprep.subr.bf16.mxu0 0
  %3569 = vmatpush1.bf16.msra.mxu0 0
  %3570 = vmatprep.mubr.bf16.mxu0 0
  %3571 = vmatmul.mubr.bf16.gmra.mrb[0].mxu0 %v3463
  %v3572 = vpop.f32.mrb[0].mxu0
  %v3573 = vadd.f32 %v3488, %v3572
  %v3574 = vpop.f32.mrb[0].mxu0
  %v3575 = vpop.f32.mrb[0].mxu0
  %v3576 = vadd.f32 %v3488, %v3575
  %v3577 = vpop.f32.mrb[0].mxu0
  %3578 = vmatprep.mubr.bf16.mxu0 0
  %3579 = vmatmul.mubr.bf16.gmra.mrb[0].mxu0 %v3464
  %v3580 = vpop.f32.mrb[0].mxu0
  %v3581 = vadd.f32 %v3488, %v3580
  %v3582 = vpop.f32.mrb[0].mxu0
  %v3583 = vpop.f32.mrb[0].mxu0
  %v3584 = vadd.f32 %v3488, %v3583
  %v3585 = vpop.f32.mrb[0].mxu0
  %3586 = vmatprep.mubr.bf16.mxu0 0
  %3587 = vmatmul.mubr.bf16.gmra.mrb[0].mxu0 %v3465
  %v3588 = vpop.f32.mrb[0].mxu0
  %v3589 = vadd.f32 %v3488, %v3588
  %v3590 = vpop.f32.mrb[0].mxu0
  %v3591 = vpop.f32.mrb[0].mxu0
  %v3592 = vadd.f32 %v3488, %v3591
  %v3593 = vpop.f32.mrb[0].mxu0
  %3594 = vmatprep.mubr.bf16.mxu0 0
  %3595 = vmatmul.mubr.bf16.gmra.mrb[0].mxu0 %v3466
  %v3596 = vpop.f32.mrb[0].mxu0
  %v3597 = vadd.f32 %v3488, %v3596
  %v3598 = vpop.f32.mrb[0].mxu0
  %v3599 = vpop.f32.mrb[0].mxu0
  %v3600 = vadd.f32 %v3488, %v3599
  %v3601 = vpop.f32.mrb[0].mxu0
  %3602 = vmatprep.mubr.bf16.mxu0 0
  %3603 = vmatmul.mubr.bf16.gmra.mrb[0].mxu0 %v3467
  %v3604 = vpop.f32.mrb[0].mxu0
  %v3605 = vadd.f32 %v3488, %v3604
  %v3606 = vpop.f32.mrb[0].mxu0
  %v3607 = vpop.f32.mrb[0].mxu0
  %v3608 = vadd.f32 %v3488, %v3607
  %v3609 = vpop.f32.mrb[0].mxu0
  %3610 = vmatprep.mubr.bf16.mxu0 0
  %3611 = vmatmul.mubr.bf16.gmra.mrb[0].mxu0 %v3468
  %v3612 = vpop.f32.mrb[0].mxu0
  %v3613 = vadd.f32 %v3488, %v3612
  %v3614 = vpop.f32.mrb[0].mxu0
  %v3615 = vpop.f32.mrb[0].mxu0
  %v3616 = vadd.f32 %v3488, %v3615
  %v3617 = vpop.f32.mrb[0].mxu0
  %3618 = vmatprep.mubr.bf16.mxu0 0
  %3619 = vmatmul.mubr.bf16.gmra.mrb[0].mxu0 %v3469
  %v3620 = vpop.f32.mrb[0].mxu0
  %v3621 = vadd.f32 %v3488, %v3620
  %v3622 = vpop.f32.mrb[0].mxu0
  %v3623 = vpop.f32.mrb[0].mxu0
  %v3624 = vadd.f32 %v3488, %v3623
  %v3625 = vpop.f32.mrb[0].mxu0
  %3626 = vmatprep.mubr.bf16.mxu0 0
  %3627 = vmatmul.mubr.bf16.gmra.mrb[0].mxu0 %v3470
  %v3628 = vpop.f32.mrb[0].mxu0
  %v3629 = vadd.f32 %v3488, %v3628
  %v3630 = vpop.f32.mrb[0].mxu0
  %v3631 = vpop.f32.mrb[0].mxu0
  %v3632 = vadd.f32 %v3488, %v3631
  %v3633 = vpop.f32.mrb[0].mxu0
  %3634 = vmatprep.mubr.bf16.mxu0 0
  %3635 = vmatmul.mubr.bf16.gmra.mrb[0].mxu0 %v3471
  %v3636 = vpop.f32.mrb[0].mxu0
  %v3637 = vadd.f32 %v3488, %v3636
  %v3638 = vpop.f32.mrb[0].mxu0
  %v3639 = vpop.f32.mrb[0].mxu0
  %v3640 = vadd.f32 %v3488, %v3639
  %v3641 = vpop.f32.mrb[0].mxu0
  %3642 = vmatprep.mubr.bf16.mxu0 0
  %3643 = vmatmul.mubr.bf16.gmra.mrb[0].mxu0 %v3472
  %v3644 = vpop.f32.mrb[0].mxu0
  %v3645 = vadd.f32 %v3488, %v3644
  %v3646 = vpop.f32.mrb[0].mxu0
  %v3647 = vpop.f32.mrb[0].mxu0
  %v3648 = vadd.f32 %v3488, %v3647
  %v3649 = vpop.f32.mrb[0].mxu0
  %3650 = vmatprep.mubr.bf16.mxu0 0
  %3651 = vmatmul.mubr.bf16.gmra.mrb[0].mxu0 %v3473
  %v3652 = vpop.f32.mrb[0].mxu0
  %v3653 = vadd.f32 %v3488, %v3652
  %v3654 = vpop.f32.mrb[0].mxu0
  %v3655 = vpop.f32.mrb[0].mxu0
  %v3656 = vadd.f32 %v3488, %v3655
  %v3657 = vpop.f32.mrb[0].mxu0
  %3658 = vmatprep.mubr.bf16.mxu0 0
  %3659 = vmatmul.mubr.bf16.gmra.mrb[0].mxu0 %v3474
  %v3660 = vpop.f32.mrb[0].mxu0
  %v3661 = vadd.f32 %v3488, %v3660
  %v3662 = vpop.f32.mrb[0].mxu0
  %v3663 = vpop.f32.mrb[0].mxu0
  %v3664 = vadd.f32 %v3488, %v3663
  %v3665 = vpop.f32.mrb[0].mxu0
  %3666 = vmatprep.mubr.bf16.mxu0 0
  %3667 = vmatmul.mubr.bf16.gmra.mrb[0].mxu0 %v3475
  %v3668 = vpop.f32.mrb[0].mxu0
  %v3669 = vadd.f32 %v3488, %v3668
  %v3670 = vpop.f32.mrb[0].mxu0
  %v3671 = vpop.f32.mrb[0].mxu0
  %v3672 = vadd.f32 %v3488, %v3671
  %v3673 = vpop.f32.mrb[0].mxu0
  %3674 = vmatprep.mubr.bf16.mxu0 0
  %3675 = vmatmul.mubr.bf16.gmra.mrb[0].mxu0 %v3476
  %v3676 = vpop.f32.mrb[0].mxu0
  %v3677 = vadd.f32 %v3488, %v3676
  %v3678 = vpop.f32.mrb[0].mxu0
  %v3679 = vpop.f32.mrb[0].mxu0
  %v3680 = vadd.f32 %v3488, %v3679
  %v3681 = vpop.f32.mrb[0].mxu0
  %3682 = vmatprep.mubr.bf16.mxu0 0
  %3683 = vmatmul.mubr.bf16.gmra.mrb[0].mxu0 %v3477
  %v3684 = vpop.f32.mrb[0].mxu0
  %v3685 = vadd.f32 %v3488, %v3684
  %v3686 = vpop.f32.mrb[0].mxu0
  %v3687 = vpop.f32.mrb[0].mxu0
  %v3688 = vadd.f32 %v3488, %v3687
  %v3689 = vpop.f32.mrb[0].mxu0
  %3690 = vmatprep.mubr.bf16.mxu0 0
  %3691 = vmatmul.mubr.bf16.gmra.mrb[0].mxu0 %v3478
  %v3692 = vpop.f32.mrb[0].mxu0
  %v3693 = vadd.f32 %v3488, %v3692
  %v3694 = vpop.f32.mrb[0].mxu0
  %v3695 = vpop.f32.mrb[0].mxu0
  %v3696 = vadd.f32 %v3488, %v3695
  %v3697 = vpop.f32.mrb[0].mxu0
  %3698 = vmatprep.mubr.bf16.mxu0 0
  %3699 = vmatmul.mubr.bf16.gmra.mrb[0].mxu0 %v3479
  %v3700 = vpop.f32.mrb[0].mxu0
  %v3701 = vadd.f32 %v3488, %v3700
  %v3702 = vpop.f32.mrb[0].mxu0
  %v3703 = vpop.f32.mrb[0].mxu0
  %v3704 = vadd.f32 %v3488, %v3703
  %v3705 = vpop.f32.mrb[0].mxu0
  %3706 = vmatprep.mubr.bf16.mxu0 0
  %3707 = vmatmul.mubr.bf16.gmra.mrb[0].mxu0 %v3480
  %v3708 = vpop.f32.mrb[0].mxu0
  %v3709 = vadd.f32 %v3488, %v3708
  %v3710 = vpop.f32.mrb[0].mxu0
  %v3711 = vpop.f32.mrb[0].mxu0
  %v3712 = vadd.f32 %v3488, %v3711
  %v3713 = vpop.f32.mrb[0].mxu0
  %3714 = vmatprep.mubr.bf16.mxu0 0
  %3715 = vmatmul.mubr.bf16.gmra.mrb[0].mxu0 %v3481
  %v3716 = vpop.f32.mrb[0].mxu0
  %v3717 = vadd.f32 %v3488, %v3716
  %v3718 = vpop.f32.mrb[0].mxu0
  %v3719 = vpop.f32.mrb[0].mxu0
  %v3720 = vadd.f32 %v3488, %v3719
  %v3721 = vpop.f32.mrb[0].mxu0
  %3722 = vmatprep.mubr.bf16.mxu0 0
  %3723 = vmatmul.mubr.bf16.gmra.mrb[0].mxu0 %v3482
  %v3724 = vpop.f32.mrb[0].mxu0
  %v3725 = vadd.f32 %v3488, %v3724
  %v3726 = vpop.f32.mrb[0].mxu0
  %v3727 = vpop.f32.mrb[0].mxu0
  %v3728 = vadd.f32 %v3488, %v3727
  %v3729 = vpop.f32.mrb[0].mxu0
  %3730 = vdwg.mxu0
  %3731 = vst [vmem:[%s8] sm:$0xff] %v3573
  %3732 = vst [vmem:[%s8 + $0x8] sm:$0xff] %v3576
  %3733 = vst [vmem:[%s8 + $0x10] sm:$0xff] %v3581
  %3734 = vst [vmem:[%s8 + $0x18] sm:$0xff] %v3584
  %3735 = vst [vmem:[%s8 + $0x20] sm:$0xff] %v3589
  %3736 = vst [vmem:[%s8 + $0x28] sm:$0xff] %v3592
  %3737 = vst [vmem:[%s8 + $0x30] sm:$0xff] %v3597
  %3738 = vst [vmem:[%s8 + $0x38] sm:$0xff] %v3600
  %3739 = vst [vmem:[%s8 + $0x40] sm:$0xff] %v3605
  %3740 = vst [vmem:[%s8 + $0x48] sm:$0xff] %v3608
  %3741 = vst [vmem:[%s8 + $0x50] sm:$0xff] %v3613
  %3742 = vst [vmem:[%s8 + $0x58] sm:$0xff] %v3616
  %3743 = vst [vmem:[%s8 + $0x60] sm:$0xff] %v3621
  %3744 = vst [vmem:[%s8 + $0x68] sm:$0xff] %v3624
  %3745 = vst [vmem:[%s8 + $0x70] sm:$0xff] %v3629
  %3746 = vst [vmem:[%s8 + $0x78] sm:$0xff] %v3632
  %3747 = vst [vmem:[%s8 + $0x80] sm:$0xff] %v3637
  %3748 = vst [vmem:[%s8 + $0x88] sm:$0xff] %v3640
  %3749 = vst [vmem:[%s8 + $0x90] sm:$0xff] %v3645
  %3750 = vst [vmem:[%s8 + $0x98] sm:$0xff] %v3648
  %3751 = vst [vmem:[%s8 + $0xa0] sm:$0xff] %v3653
  %3752 = vst [vmem:[%s8 + $0xa8] sm:$0xff] %v3656
  %3753 = vst [vmem:[%s8 + $0xb0] sm:$0xff] %v3661
  %3754 = vst [vmem:[%s8 + $0xb8] sm:$0xff] %v3664
  %3755 = vst [vmem:[%s8 + $0xc0] sm:$0xff] %v3669
  %3756 = vst [vmem:[%s8 + $0xc8] sm:$0xff] %v3672
  %3757 = vst [vmem:[%s8 + $0xd0] sm:$0xff] %v3677
  %3758 = vst [vmem:[%s8 + $0xd8] sm:$0xff] %v3680
  %3759 = vst [vmem:[%s8 + $0xe0] sm:$0xff] %v3685
  %3760 = vst [vmem:[%s8 + $0xe8] sm:$0xff] %v3688
  %3761 = vst [vmem:[%s8 + $0xf0] sm:$0xff] %v3693
  %3762 = vst [vmem:[%s8 + $0xf8] sm:$0xff] %v3696
  %3763 = vst [vmem:[%s8 + $0x100] sm:$0xff] %v3701
  %3764 = vst [vmem:[%s8 + $0x108] sm:$0xff] %v3704
  %3765 = vst [vmem:[%s8 + $0x110] sm:$0xff] %v3709
  %3766 = vst [vmem:[%s8 + $0x118] sm:$0xff] %v3712
  %3767 = vst [vmem:[%s8 + $0x120] sm:$0xff] %v3717
  %3768 = vst [vmem:[%s8 + $0x128] sm:$0xff] %v3720
  %3769 = vst [vmem:[%s8 + $0x130] sm:$0xff] %v3725
  %3770 = vst [vmem:[%s8 + $0x138] sm:$0xff] %v3728
  // Predicated region
  $region34: #{ar_belief_forward.5} parent=0 // pred_check
    _
  $region35: #{ar_belief_forward.5} parent=0 // pred_check_branch
    %3772 = sbr.rel (0) target = $region37
  $region36: #{ar_belief_forward.5} parent=0 // pred_region
    _
  $region37: #{ar_belief_forward.5} parent=0 // pred_fallthru
    _
  // Predicated region
  $region38: #{ar_belief_forward.5} parent=0 // pred_check
    _
  $region39: #{ar_belief_forward.5} parent=0 // pred_check_branch
    %3774 = sbr.rel (0) target = $region41
  $region40: #{ar_belief_forward.5} parent=0 // pred_region
    _
  $region41: #{ar_belief_forward.5} parent=0 // pred_fallthru
    _

</llo_original>
